<compile_context>
chip_gen: v7x
topology: tpu7x:2x2x1
jax: 0.10.0
libtpu: 0.0.40
codegen_flags: <defaults>
</compile_context>

<pallas_src>
import math
import functools

import jax
import jax.numpy as jnp
from jax.experimental import pallas as pl
from jax.experimental.pallas import tpu as pltpu


_LRELU_GAIN = math.sqrt(2.0)                                  # bias_act def_gain for 'lrelu'
_F1 = jnp.array([1.0, 3.0, 3.0, 1.0], jnp.float32) / 8.0      # separable setup_filter([1,3,3,1])


# ----------------------------------------------------------------------------
# Pallas kernels
# ----------------------------------------------------------------------------
def _conv_down_kernel(xph_ref, w_ref, b_ref, out_ref, *, Ho, Wo):
    # xph: (1, 4*Cin, Hh, Wh) bf16  phase-deinterleaved blurred input
    #      channel index = (phase_y*2 + phase_x)*Cin + c,  xph[p, c, m, n] = blur(c, 2m+py, 2n+px)
    # w:   (3, 3, Cout, Cin) bf16   pre-scaled by 1/sqrt(Cin*9)
    # b:   (Cout, 1) f32
    # out: (1, Cout, Ho*Wo) bf16
    C_out = w_ref.shape[2]
    C_in = w_ref.shape[3]
    S = Ho * Wo

    acc = jnp.zeros((C_out, S), jnp.float32)
    # In-kernel im2col: 9 shifted stride-1 slices of the VMEM-resident tile,
    # each contracted on the MXU with f32 accumulation.
    for ky in range(3):
        for kx in range(3):
            pa, da = ky % 2, ky // 2
            pb, db = kx % 2, kx // 2
            pidx = pa * 2 + pb
            patch = xph_ref[0, pidx * C_in:(pidx + 1) * C_in,
                            da:da + Ho, db:db + Wo]            # (Cin, Ho, Wo) bf16
            patch = patch.reshape(C_in, S)
            acc = acc + jnp.dot(w_ref[ky, kx], patch,
                                preferred_element_type=jnp.float32)

    z = acc + b_ref[...]                                        # bias
    z = jnp.where(z >= 0.0, z, 0.2 * z) * _LRELU_GAIN           # bias_act 'lrelu'
    out_ref[0] = z.astype(out_ref.dtype)


def _pool_fc_kernel(x_ref, w_ref, b_ref, out_ref):
    # x: (B, C, S) bf16 ; w: (C, F) bf16 pre-scaled by 1/sqrt(C) ; b: (1, F) f32 ; out: (B, F) f32
    x = x_ref[...].astype(jnp.float32)
    pooled = jnp.mean(x, axis=-1)                               # AdaptiveAvgPool2d(1)
    z = jnp.dot(pooled.astype(jnp.bfloat16), w_ref[...],
                preferred_element_type=jnp.float32)             # FullyConnectedLayer
    z = z + b_ref[...]
    z = jnp.where(z >= 0.0, z, 0.2 * z) * _LRELU_GAIN           # bias_act 'lrelu'
    out_ref[...] = z


# ----------------------------------------------------------------------------
# pallas_call wrappers
# ----------------------------------------------------------------------------
def _conv_down_call(xph, w_taps, bias2d, Ho, Wo):
    B, PC, Hh, Wh = xph.shape
    C_out = w_taps.shape[2]
    C_in = w_taps.shape[3]
    S = Ho * Wo

    flops = 2 * B * C_out * C_in * 9 * S
    bytes_accessed = (xph.size * 2 + w_taps.size * 2 + bias2d.size * 4
                      + B * C_out * S * 2)

    return pl.pallas_call(
        functools.partial(_conv_down_kernel, Ho=Ho, Wo=Wo),
        out_shape=jax.ShapeDtypeStruct((B, C_out, S), jnp.bfloat16),
        grid=(B,),
        in_specs=[
            pl.BlockSpec((1, PC, Hh, Wh), lambda i: (i, 0, 0, 0)),
            pl.BlockSpec((3, 3, C_out, C_in), lambda i: (0, 0, 0, 0)),
            pl.BlockSpec((C_out, 1), lambda i: (0, 0)),
        ],
        out_specs=pl.BlockSpec((1, C_out, S), lambda i: (i, 0, 0)),
        compiler_params=pltpu.CompilerParams(
            dimension_semantics=("parallel",)),
        cost_estimate=pl.CostEstimate(flops=flops, transcendentals=0,
                                      bytes_accessed=bytes_accessed),
    )(xph, w_taps, bias2d)


def _pool_fc_call(x, fc_weight, fc_bias):
    B, C, Hs, Ws = x.shape
    F_out = fc_weight.shape[0]
    x_flat = x.reshape(B, C, Hs * Ws)
    w_t = (fc_weight * (1.0 / math.sqrt(C))).T.astype(jnp.bfloat16)   # (C, F)
    b2d = fc_bias.reshape(1, F_out).astype(jnp.float32)
    return pl.pallas_call(
        _pool_fc_kernel,
        out_shape=jax.ShapeDtypeStruct((B, F_out), jnp.float32),
    )(x_flat, w_t, b2d)


# ----------------------------------------------------------------------------
# Plain-JAX glue: FIR blur (separable, non-duplicating) + phase deinterleave.
# ----------------------------------------------------------------------------
def _conv2d_layer_down2(x, weight, bias):
    """Conv2dLayer(k=3, down=2, activation='lrelu') forward."""
    B, C, H, W = x.shape
    assert H % 2 == 0 and W % 2 == 0
    Ho, Wo = H // 2, W // 2

    # FIR blur: upfirdn2d(f=[1,3,3,1] normalized, pad=2, gain=1), done separably
    # in f32 (cheap VPU work, output ~= input size -> no HBM duplication).
    xpad = jnp.pad(x, ((0, 0), (0, 0), (2, 2), (2, 2)))
    t = sum(_F1[v] * xpad[:, :, :, v:v + W + 1] for v in range(4))     # (B,C,H+4,W+1)
    blur = sum(_F1[u] * t[:, :, u:u + H + 1, :] for u in range(4))     # (B,C,H+1,W+1) f32

    # Space-to-depth phase deinterleave so the stride-2 conv uses only stride-1
    # slices inside the kernel.  Pure reshape/transpose, no duplication.
    blur_p = jnp.pad(blur, ((0, 0), (0, 0), (0, 1), (0, 1)))           # (B,C,2Hh,2Wh)
    Hh, Wh = Ho + 1, Wo + 1
    xph = blur_p.reshape(B, C, Hh, 2, Wh, 2).transpose(0, 3, 5, 1, 2, 4)
    xph = xph.reshape(B, 4 * C, Hh, Wh).astype(jnp.bfloat16)

    # Runtime weight gain, tap-major layout, bf16 matmul operands.
    w_gain = 1.0 / math.sqrt(C * 9)
    w_taps = (weight * w_gain).transpose(2, 3, 0, 1).astype(jnp.bfloat16)  # (3,3,Cout,Cin)
    bias2d = bias.reshape(C, 1).astype(jnp.float32)

    y = _conv_down_call(xph, w_taps, bias2d, Ho, Wo)                   # (B,C,Ho*Wo) bf16
    return y.reshape(B, C, Ho, Wo)


def to_style_forward(params, x):
    """ToStyle.forward: conv(x3 down-conv) -> global avg pool -> fc."""
    for i in range(3):
        x = _conv2d_layer_down2(x, params[f"w{i}"], params[f"b{i}"])
    return _pool_fc_call(x, params["fc_w"], params["fc_b"])


# ----------------------------------------------------------------------------
# Deterministic parameter init (shapes per ToStyle.__init__)
# ----------------------------------------------------------------------------
def init_params(key, in_channels, out_channels):
    ks = jax.random.split(key, 4)
    p = {}
    for i in range(3):
        p[f"w{i}"] = jax.random.normal(
            ks[i], (in_channels, in_channels, 3, 3), jnp.float32)
        p[f"b{i}"] = jnp.zeros((in_channels,), jnp.float32)
    p["fc_w"] = jax.random.normal(ks[3], (out_channels, in_channels), jnp.float32)
    p["fc_b"] = jnp.zeros((out_channels,), jnp.float32)                # bias_init=0
    return p


if __name__ == "__main__":
    key = jax.random.PRNGKey(0)
    B = 2
    in_channels = 16
    out_channels = 32
    H = 16                                    # 16 -> 8 -> 4 -> 2 -> pool -> fc

    kp, kx = jax.random.split(key)
    params = init_params(kp, in_channels, out_channels)
    x = jax.random.normal(kx, (B, in_channels, H, H), jnp.float32)

    fwd = jax.jit(functools.partial(to_style_forward, params))
    out = fwd(x)
    jax.block_until_ready(out)

    assert out.shape == (B, out_channels)
    assert jnp.all(jnp.isfinite(out))
    print("KERNEL_OK")
</pallas_src>

<mosaic_0001>
module attributes {stable_mosaic.version = 11 : i64} {
  func.func @_conv_down_kernel(%arg0: i32, %arg1: memref<1x64x9x9xbf16, #tpu.memory_space<vmem>>, %arg2: memref<3x3x16x16xbf16, #tpu.memory_space<vmem>>, %arg3: memref<16x1xf32, #tpu.memory_space<vmem>>, %arg4: memref<1x16x64xbf16, #tpu.memory_space<vmem>>) attributes {dimension_semantics = [#tpu.dimension_semantics<parallel>], iteration_bounds = array<i64: 2>, scalar_prefetch = 0 : i64, scratch_operands = 0 : i64, tpu.core_type = #tpu.core_type<tc>, window_params = [{transform_indices = @transform_0, window_bounds = array<i64: 1, 64, 9, 9>}, {pipeline_mode = #tpu.pipeline_mode<synchronous>, transform_indices = @transform_1, window_bounds = array<i64: 3, 3, 16, 16>}, {pipeline_mode = #tpu.pipeline_mode<synchronous>, transform_indices = @transform_2, window_bounds = array<i64: 16, 1>}, {transform_indices = @transform_3, window_bounds = array<i64: 1, 16, 64>}]} {
    %cst = arith.constant 0.000000e+00 : f32
    %0 = vector.broadcast %cst : f32 to vector<16x64xf32>
    %c0 = arith.constant 0 : index
    %c0_0 = arith.constant 0 : index
    %c0_1 = arith.constant 0 : index
    %c0_2 = arith.constant 0 : index
    %1 = vector.load %arg1[%c0, %c0_0, %c0_1, %c0_2] : memref<1x64x9x9xbf16, #tpu.memory_space<vmem>>, vector<1x16x8x8xbf16>
    %2 = vector.shape_cast %1 : vector<1x16x8x8xbf16> to vector<16x8x8xbf16>
    %3 = vector.shape_cast %2 : vector<16x8x8xbf16> to vector<16x64xbf16>
    %c0_3 = arith.constant 0 : index
    %c0_4 = arith.constant 0 : index
    %c0_5 = arith.constant 0 : index
    %c0_6 = arith.constant 0 : index
    %4 = vector.load %arg2[%c0_3, %c0_4, %c0_5, %c0_6] : memref<3x3x16x16xbf16, #tpu.memory_space<vmem>>, vector<1x1x16x16xbf16>
    %5 = vector.shape_cast %4 : vector<1x1x16x16xbf16> to vector<16x16xbf16>
    %cst_7 = arith.constant dense<0.000000e+00> : vector<16x64xf32>
    %6 = tpu.matmul %5, %3, %cst_7 {dimension_numbers = #tpu.dot_dimension_numbers<[1], [0], [0], [1], [0, 0, 1, 1], [], []>} : vector<16x16xbf16>, vector<16x64xbf16>, vector<16x64xf32> -> vector<16x64xf32>
    %7 = arith.addf %0, %6 : vector<16x64xf32>
    %c0_8 = arith.constant 0 : index
    %c16 = arith.constant 16 : index
    %c0_9 = arith.constant 0 : index
    %c0_10 = arith.constant 0 : index
    %8 = vector.load %arg1[%c0_8, %c16, %c0_9, %c0_10] : memref<1x64x9x9xbf16, #tpu.memory_space<vmem>>, vector<1x16x8x8xbf16>
    %9 = vector.shape_cast %8 : vector<1x16x8x8xbf16> to vector<16x8x8xbf16>
    %10 = vector.shape_cast %9 : vector<16x8x8xbf16> to vector<16x64xbf16>
    %c0_11 = arith.constant 0 : index
    %c1 = arith.constant 1 : index
    %c0_12 = arith.constant 0 : index
    %c0_13 = arith.constant 0 : index
    %11 = vector.load %arg2[%c0_11, %c1, %c0_12, %c0_13] : memref<3x3x16x16xbf16, #tpu.memory_space<vmem>>, vector<1x1x16x16xbf16>
    %12 = vector.shape_cast %11 : vector<1x1x16x16xbf16> to vector<16x16xbf16>
    %cst_14 = arith.constant dense<0.000000e+00> : vector<16x64xf32>
    %13 = tpu.matmul %12, %10, %cst_14 {dimension_numbers = #tpu.dot_dimension_numbers<[1], [0], [0], [1], [0, 0, 1, 1], [], []>} : vector<16x16xbf16>, vector<16x64xbf16>, vector<16x64xf32> -> vector<16x64xf32>
    %14 = arith.addf %7, %13 : vector<16x64xf32>
    %c0_15 = arith.constant 0 : index
    %c0_16 = arith.constant 0 : index
    %c0_17 = arith.constant 0 : index
    %c1_18 = arith.constant 1 : index
    %15 = vector.load %arg1[%c0_15, %c0_16, %c0_17, %c1_18] : memref<1x64x9x9xbf16, #tpu.memory_space<vmem>>, vector<1x16x8x8xbf16>
    %16 = vector.shape_cast %15 : vector<1x16x8x8xbf16> to vector<16x8x8xbf16>
    %17 = vector.shape_cast %16 : vector<16x8x8xbf16> to vector<16x64xbf16>
    %c0_19 = arith.constant 0 : index
    %c2 = arith.constant 2 : index
    %c0_20 = arith.constant 0 : index
    %c0_21 = arith.constant 0 : index
    %18 = vector.load %arg2[%c0_19, %c2, %c0_20, %c0_21] : memref<3x3x16x16xbf16, #tpu.memory_space<vmem>>, vector<1x1x16x16xbf16>
    %19 = vector.shape_cast %18 : vector<1x1x16x16xbf16> to vector<16x16xbf16>
    %cst_22 = arith.constant dense<0.000000e+00> : vector<16x64xf32>
    %20 = tpu.matmul %19, %17, %cst_22 {dimension_numbers = #tpu.dot_dimension_numbers<[1], [0], [0], [1], [0, 0, 1, 1], [], []>} : vector<16x16xbf16>, vector<16x64xbf16>, vector<16x64xf32> -> vector<16x64xf32>
    %21 = arith.addf %14, %20 : vector<16x64xf32>
    %c0_23 = arith.constant 0 : index
    %c32 = arith.constant 32 : index
    %c0_24 = arith.constant 0 : index
    %c0_25 = arith.constant 0 : index
    %22 = vector.load %arg1[%c0_23, %c32, %c0_24, %c0_25] : memref<1x64x9x9xbf16, #tpu.memory_space<vmem>>, vector<1x16x8x8xbf16>
    %23 = vector.shape_cast %22 : vector<1x16x8x8xbf16> to vector<16x8x8xbf16>
    %24 = vector.shape_cast %23 : vector<16x8x8xbf16> to vector<16x64xbf16>
    %c1_26 = arith.constant 1 : index
    %c0_27 = arith.constant 0 : index
    %c0_28 = arith.constant 0 : index
    %c0_29 = arith.constant 0 : index
    %25 = vector.load %arg2[%c1_26, %c0_27, %c0_28, %c0_29] : memref<3x3x16x16xbf16, #tpu.memory_space<vmem>>, vector<1x1x16x16xbf16>
    %26 = vector.shape_cast %25 : vector<1x1x16x16xbf16> to vector<16x16xbf16>
    %cst_30 = arith.constant dense<0.000000e+00> : vector<16x64xf32>
    %27 = tpu.matmul %26, %24, %cst_30 {dimension_numbers = #tpu.dot_dimension_numbers<[1], [0], [0], [1], [0, 0, 1, 1], [], []>} : vector<16x16xbf16>, vector<16x64xbf16>, vector<16x64xf32> -> vector<16x64xf32>
    %28 = arith.addf %21, %27 : vector<16x64xf32>
    %c0_31 = arith.constant 0 : index
    %c48 = arith.constant 48 : index
    %c0_32 = arith.constant 0 : index
    %c0_33 = arith.constant 0 : index
    %29 = vector.load %arg1[%c0_31, %c48, %c0_32, %c0_33] : memref<1x64x9x9xbf16, #tpu.memory_space<vmem>>, vector<1x16x8x8xbf16>
    %30 = vector.shape_cast %29 : vector<1x16x8x8xbf16> to vector<16x8x8xbf16>
    %31 = vector.shape_cast %30 : vector<16x8x8xbf16> to vector<16x64xbf16>
    %c1_34 = arith.constant 1 : index
    %c1_35 = arith.constant 1 : index
    %c0_36 = arith.constant 0 : index
    %c0_37 = arith.constant 0 : index
    %32 = vector.load %arg2[%c1_34, %c1_35, %c0_36, %c0_37] : memref<3x3x16x16xbf16, #tpu.memory_space<vmem>>, vector<1x1x16x16xbf16>
    %33 = vector.shape_cast %32 : vector<1x1x16x16xbf16> to vector<16x16xbf16>
    %cst_38 = arith.constant dense<0.000000e+00> : vector<16x64xf32>
    %34 = tpu.matmul %33, %31, %cst_38 {dimension_numbers = #tpu.dot_dimension_numbers<[1], [0], [0], [1], [0, 0, 1, 1], [], []>} : vector<16x16xbf16>, vector<16x64xbf16>, vector<16x64xf32> -> vector<16x64xf32>
    %35 = arith.addf %28, %34 : vector<16x64xf32>
    %c0_39 = arith.constant 0 : index
    %c32_40 = arith.constant 32 : index
    %c0_41 = arith.constant 0 : index
    %c1_42 = arith.constant 1 : index
    %36 = vector.load %arg1[%c0_39, %c32_40, %c0_41, %c1_42] : memref<1x64x9x9xbf16, #tpu.memory_space<vmem>>, vector<1x16x8x8xbf16>
    %37 = vector.shape_cast %36 : vector<1x16x8x8xbf16> to vector<16x8x8xbf16>
    %38 = vector.shape_cast %37 : vector<16x8x8xbf16> to vector<16x64xbf16>
    %c1_43 = arith.constant 1 : index
    %c2_44 = arith.constant 2 : index
    %c0_45 = arith.constant 0 : index
    %c0_46 = arith.constant 0 : index
    %39 = vector.load %arg2[%c1_43, %c2_44, %c0_45, %c0_46] : memref<3x3x16x16xbf16, #tpu.memory_space<vmem>>, vector<1x1x16x16xbf16>
    %40 = vector.shape_cast %39 : vector<1x1x16x16xbf16> to vector<16x16xbf16>
    %cst_47 = arith.constant dense<0.000000e+00> : vector<16x64xf32>
    %41 = tpu.matmul %40, %38, %cst_47 {dimension_numbers = #tpu.dot_dimension_numbers<[1], [0], [0], [1], [0, 0, 1, 1], [], []>} : vector<16x16xbf16>, vector<16x64xbf16>, vector<16x64xf32> -> vector<16x64xf32>
    %42 = arith.addf %35, %41 : vector<16x64xf32>
    %c0_48 = arith.constant 0 : index
    %c0_49 = arith.constant 0 : index
    %c1_50 = arith.constant 1 : index
    %c0_51 = arith.constant 0 : index
    %43 = vector.load %arg1[%c0_48, %c0_49, %c1_50, %c0_51] : memref<1x64x9x9xbf16, #tpu.memory_space<vmem>>, vector<1x16x8x8xbf16>
    %44 = vector.shape_cast %43 : vector<1x16x8x8xbf16> to vector<16x8x8xbf16>
    %45 = vector.shape_cast %44 : vector<16x8x8xbf16> to vector<16x64xbf16>
    %c2_52 = arith.constant 2 : index
    %c0_53 = arith.constant 0 : index
    %c0_54 = arith.constant 0 : index
    %c0_55 = arith.constant 0 : index
    %46 = vector.load %arg2[%c2_52, %c0_53, %c0_54, %c0_55] : memref<3x3x16x16xbf16, #tpu.memory_space<vmem>>, vector<1x1x16x16xbf16>
    %47 = vector.shape_cast %46 : vector<1x1x16x16xbf16> to vector<16x16xbf16>
    %cst_56 = arith.constant dense<0.000000e+00> : vector<16x64xf32>
    %48 = tpu.matmul %47, %45, %cst_56 {dimension_numbers = #tpu.dot_dimension_numbers<[1], [0], [0], [1], [0, 0, 1, 1], [], []>} : vector<16x16xbf16>, vector<16x64xbf16>, vector<16x64xf32> -> vector<16x64xf32>
    %49 = arith.addf %42, %48 : vector<16x64xf32>
    %c0_57 = arith.constant 0 : index
    %c16_58 = arith.constant 16 : index
    %c1_59 = arith.constant 1 : index
    %c0_60 = arith.constant 0 : index
    %50 = vector.load %arg1[%c0_57, %c16_58, %c1_59, %c0_60] : memref<1x64x9x9xbf16, #tpu.memory_space<vmem>>, vector<1x16x8x8xbf16>
    %51 = vector.shape_cast %50 : vector<1x16x8x8xbf16> to vector<16x8x8xbf16>
    %52 = vector.shape_cast %51 : vector<16x8x8xbf16> to vector<16x64xbf16>
    %c2_61 = arith.constant 2 : index
    %c1_62 = arith.constant 1 : index
    %c0_63 = arith.constant 0 : index
    %c0_64 = arith.constant 0 : index
    %53 = vector.load %arg2[%c2_61, %c1_62, %c0_63, %c0_64] : memref<3x3x16x16xbf16, #tpu.memory_space<vmem>>, vector<1x1x16x16xbf16>
    %54 = vector.shape_cast %53 : vector<1x1x16x16xbf16> to vector<16x16xbf16>
    %cst_65 = arith.constant dense<0.000000e+00> : vector<16x64xf32>
    %55 = tpu.matmul %54, %52, %cst_65 {dimension_numbers = #tpu.dot_dimension_numbers<[1], [0], [0], [1], [0, 0, 1, 1], [], []>} : vector<16x16xbf16>, vector<16x64xbf16>, vector<16x64xf32> -> vector<16x64xf32>
    %56 = arith.addf %49, %55 : vector<16x64xf32>
    %c0_66 = arith.constant 0 : index
    %c0_67 = arith.constant 0 : index
    %c1_68 = arith.constant 1 : index
    %c1_69 = arith.constant 1 : index
    %57 = vector.load %arg1[%c0_66, %c0_67, %c1_68, %c1_69] : memref<1x64x9x9xbf16, #tpu.memory_space<vmem>>, vector<1x16x8x8xbf16>
    %58 = vector.shape_cast %57 : vector<1x16x8x8xbf16> to vector<16x8x8xbf16>
    %59 = vector.shape_cast %58 : vector<16x8x8xbf16> to vector<16x64xbf16>
    %c2_70 = arith.constant 2 : index
    %c2_71 = arith.constant 2 : index
    %c0_72 = arith.constant 0 : index
    %c0_73 = arith.constant 0 : index
    %60 = vector.load %arg2[%c2_70, %c2_71, %c0_72, %c0_73] : memref<3x3x16x16xbf16, #tpu.memory_space<vmem>>, vector<1x1x16x16xbf16>
    %61 = vector.shape_cast %60 : vector<1x1x16x16xbf16> to vector<16x16xbf16>
    %cst_74 = arith.constant dense<0.000000e+00> : vector<16x64xf32>
    %62 = tpu.matmul %61, %59, %cst_74 {dimension_numbers = #tpu.dot_dimension_numbers<[1], [0], [0], [1], [0, 0, 1, 1], [], []>} : vector<16x16xbf16>, vector<16x64xbf16>, vector<16x64xf32> -> vector<16x64xf32>
    %63 = arith.addf %56, %62 : vector<16x64xf32>
    %c0_75 = arith.constant 0 : index
    %c0_76 = arith.constant 0 : index
    %64 = vector.load %arg3[%c0_75, %c0_76] : memref<16x1xf32, #tpu.memory_space<vmem>>, vector<16x1xf32>
    %65 = vector.broadcast %64 : vector<16x1xf32> to vector<16x64xf32>
    %66 = arith.addf %63, %65 : vector<16x64xf32>
    %cst_77 = arith.constant 0.000000e+00 : f32
    %67 = vector.broadcast %cst_77 : f32 to vector<16x64xf32>
    %68 = arith.cmpf oge, %66, %67 : vector<16x64xf32>
    %cst_78 = arith.constant 2.000000e-01 : f32
    %69 = vector.broadcast %cst_78 : f32 to vector<16x64xf32>
    %70 = arith.mulf %69, %66 : vector<16x64xf32>
    %71 = arith.select %68, %66, %70 : vector<16x64xi1>, vector<16x64xf32>
    %cst_79 = arith.constant 1.41421354 : f32
    %72 = vector.broadcast %cst_79 : f32 to vector<16x64xf32>
    %73 = arith.mulf %71, %72 : vector<16x64xf32>
    %74 = arith.truncf %73 : vector<16x64xf32> to vector<16x64xbf16>
    %c0_80 = arith.constant 0 : index
    %c0_81 = arith.constant 0 : index
    %c0_82 = arith.constant 0 : index
    %75 = vector.load %arg4[%c0_80, %c0_81, %c0_82] : memref<1x16x64xbf16, #tpu.memory_space<vmem>>, vector<1x16x64xbf16>
    %76 = vector.shape_cast %75 : vector<1x16x64xbf16> to vector<16x64xbf16>
    %77 = vector.shape_cast %74 : vector<16x64xbf16> to vector<1x16x64xbf16>
    tpu.vector_store %arg4[%c0_80, %c0_81, %c0_82], %77 {strides = array<i32>} : memref<1x16x64xbf16, #tpu.memory_space<vmem>>, vector<1x16x64xbf16>,
    return
  }
  func.func @transform_0(%arg0: i32) -> (i32, i32, i32, i32) {
    %c0_i32 = arith.constant 0 : i32
    %c0_i32_0 = arith.constant 0 : i32
    %c0_i32_1 = arith.constant 0 : i32
    %c0_i32_2 = arith.constant 0 : i32
    return %arg0, %c0_i32, %c0_i32_0, %c0_i32_1 : i32, i32, i32, i32
  }
  func.func @transform_1(%arg0: i32) -> (i32, i32, i32, i32) {
    %c0_i32 = arith.constant 0 : i32
    %c0_i32_0 = arith.constant 0 : i32
    %c0_i32_1 = arith.constant 0 : i32
    %c0_i32_2 = arith.constant 0 : i32
    %c0_i32_3 = arith.constant 0 : i32
    return %c0_i32, %c0_i32_0, %c0_i32_1, %c0_i32_2 : i32, i32, i32, i32
  }
  func.func @transform_2(%arg0: i32) -> (i32, i32) {
    %c0_i32 = arith.constant 0 : i32
    %c0_i32_0 = arith.constant 0 : i32
    %c0_i32_1 = arith.constant 0 : i32
    return %c0_i32, %c0_i32_0 : i32, i32
  }
  func.func @transform_3(%arg0: i32) -> (i32, i32, i32) {
    %c0_i32 = arith.constant 0 : i32
    %c0_i32_0 = arith.constant 0 : i32
    %c0_i32_1 = arith.constant 0 : i32
    return %arg0, %c0_i32, %c0_i32_0 : i32, i32, i32
  }
}

module attributes {stable_mosaic.version = 11 : i64} {
  func.func @_conv_down_kernel(%arg0: i32, %arg1: memref<1x64x5x5xbf16, #tpu.memory_space<vmem>>, %arg2: memref<3x3x16x16xbf16, #tpu.memory_space<vmem>>, %arg3: memref<16x1xf32, #tpu.memory_space<vmem>>, %arg4: memref<1x16x16xbf16, #tpu.memory_space<vmem>>) attributes {dimension_semantics = [#tpu.dimension_semantics<parallel>], iteration_bounds = array<i64: 2>, scalar_prefetch = 0 : i64, scratch_operands = 0 : i64, tpu.core_type = #tpu.core_type<tc>, window_params = [{transform_indices = @transform_0, window_bounds = array<i64: 1, 64, 5, 5>}, {pipeline_mode = #tpu.pipeline_mode<synchronous>, transform_indices = @transform_1, window_bounds = array<i64: 3, 3, 16, 16>}, {pipeline_mode = #tpu.pipeline_mode<synchronous>, transform_indices = @transform_2, window_bounds = array<i64: 16, 1>}, {transform_indices = @transform_3, window_bounds = array<i64: 1, 16, 16>}]} {
    %cst = arith.constant 0.000000e+00 : f32
    %0 = vector.broadcast %cst : f32 to vector<16x16xf32>
    %c0 = arith.constant 0 : index
    %c0_0 = arith.constant 0 : index
    %c0_1 = arith.constant 0 : index
    %c0_2 = arith.constant 0 : index
    %1 = vector.load %arg1[%c0, %c0_0, %c0_1, %c0_2] : memref<1x64x5x5xbf16, #tpu.memory_space<vmem>>, vector<1x16x4x4xbf16>
    %2 = vector.shape_cast %1 : vector<1x16x4x4xbf16> to vector<16x4x4xbf16>
    %3 = vector.shape_cast %2 : vector<16x4x4xbf16> to vector<16x16xbf16>
    %c0_3 = arith.constant 0 : index
    %c0_4 = arith.constant 0 : index
    %c0_5 = arith.constant 0 : index
    %c0_6 = arith.constant 0 : index
    %4 = vector.load %arg2[%c0_3, %c0_4, %c0_5, %c0_6] : memref<3x3x16x16xbf16, #tpu.memory_space<vmem>>, vector<1x1x16x16xbf16>
    %5 = vector.shape_cast %4 : vector<1x1x16x16xbf16> to vector<16x16xbf16>
    %cst_7 = arith.constant dense<0.000000e+00> : vector<16x16xf32>
    %6 = tpu.matmul %5, %3, %cst_7 {dimension_numbers = #tpu.dot_dimension_numbers<[1], [0], [0], [1], [0, 0, 1, 1], [], []>} : vector<16x16xbf16>, vector<16x16xbf16>, vector<16x16xf32> -> vector<16x16xf32>
    %7 = arith.addf %0, %6 : vector<16x16xf32>
    %c0_8 = arith.constant 0 : index
    %c16 = arith.constant 16 : index
    %c0_9 = arith.constant 0 : index
    %c0_10 = arith.constant 0 : index
    %8 = vector.load %arg1[%c0_8, %c16, %c0_9, %c0_10] : memref<1x64x5x5xbf16, #tpu.memory_space<vmem>>, vector<1x16x4x4xbf16>
    %9 = vector.shape_cast %8 : vector<1x16x4x4xbf16> to vector<16x4x4xbf16>
    %10 = vector.shape_cast %9 : vector<16x4x4xbf16> to vector<16x16xbf16>
    %c0_11 = arith.constant 0 : index
    %c1 = arith.constant 1 : index
    %c0_12 = arith.constant 0 : index
    %c0_13 = arith.constant 0 : index
    %11 = vector.load %arg2[%c0_11, %c1, %c0_12, %c0_13] : memref<3x3x16x16xbf16, #tpu.memory_space<vmem>>, vector<1x1x16x16xbf16>
    %12 = vector.shape_cast %11 : vector<1x1x16x16xbf16> to vector<16x16xbf16>
    %cst_14 = arith.constant dense<0.000000e+00> : vector<16x16xf32>
    %13 = tpu.matmul %12, %10, %cst_14 {dimension_numbers = #tpu.dot_dimension_numbers<[1], [0], [0], [1], [0, 0, 1, 1], [], []>} : vector<16x16xbf16>, vector<16x16xbf16>, vector<16x16xf32> -> vector<16x16xf32>
    %14 = arith.addf %7, %13 : vector<16x16xf32>
    %c0_15 = arith.constant 0 : index
    %c0_16 = arith.constant 0 : index
    %c0_17 = arith.constant 0 : index
    %c1_18 = arith.constant 1 : index
    %15 = vector.load %arg1[%c0_15, %c0_16, %c0_17, %c1_18] : memref<1x64x5x5xbf16, #tpu.memory_space<vmem>>, vector<1x16x4x4xbf16>
    %16 = vector.shape_cast %15 : vector<1x16x4x4xbf16> to vector<16x4x4xbf16>
    %17 = vector.shape_cast %16 : vector<16x4x4xbf16> to vector<16x16xbf16>
    %c0_19 = arith.constant 0 : index
    %c2 = arith.constant 2 : index
    %c0_20 = arith.constant 0 : index
    %c0_21 = arith.constant 0 : index
    %18 = vector.load %arg2[%c0_19, %c2, %c0_20, %c0_21] : memref<3x3x16x16xbf16, #tpu.memory_space<vmem>>, vector<1x1x16x16xbf16>
    %19 = vector.shape_cast %18 : vector<1x1x16x16xbf16> to vector<16x16xbf16>
    %cst_22 = arith.constant dense<0.000000e+00> : vector<16x16xf32>
    %20 = tpu.matmul %19, %17, %cst_22 {dimension_numbers = #tpu.dot_dimension_numbers<[1], [0], [0], [1], [0, 0, 1, 1], [], []>} : vector<16x16xbf16>, vector<16x16xbf16>, vector<16x16xf32> -> vector<16x16xf32>
    %21 = arith.addf %14, %20 : vector<16x16xf32>
    %c0_23 = arith.constant 0 : index
    %c32 = arith.constant 32 : index
    %c0_24 = arith.constant 0 : index
    %c0_25 = arith.constant 0 : index
    %22 = vector.load %arg1[%c0_23, %c32, %c0_24, %c0_25] : memref<1x64x5x5xbf16, #tpu.memory_space<vmem>>, vector<1x16x4x4xbf16>
    %23 = vector.shape_cast %22 : vector<1x16x4x4xbf16> to vector<16x4x4xbf16>
    %24 = vector.shape_cast %23 : vector<16x4x4xbf16> to vector<16x16xbf16>
    %c1_26 = arith.constant 1 : index
    %c0_27 = arith.constant 0 : index
    %c0_28 = arith.constant 0 : index
    %c0_29 = arith.constant 0 : index
    %25 = vector.load %arg2[%c1_26, %c0_27, %c0_28, %c0_29] : memref<3x3x16x16xbf16, #tpu.memory_space<vmem>>, vector<1x1x16x16xbf16>
    %26 = vector.shape_cast %25 : vector<1x1x16x16xbf16> to vector<16x16xbf16>
    %cst_30 = arith.constant dense<0.000000e+00> : vector<16x16xf32>
    %27 = tpu.matmul %26, %24, %cst_30 {dimension_numbers = #tpu.dot_dimension_numbers<[1], [0], [0], [1], [0, 0, 1, 1], [], []>} : vector<16x16xbf16>, vector<16x16xbf16>, vector<16x16xf32> -> vector<16x16xf32>
    %28 = arith.addf %21, %27 : vector<16x16xf32>
    %c0_31 = arith.constant 0 : index
    %c48 = arith.constant 48 : index
    %c0_32 = arith.constant 0 : index
    %c0_33 = arith.constant 0 : index
    %29 = vector.load %arg1[%c0_31, %c48, %c0_32, %c0_33] : memref<1x64x5x5xbf16, #tpu.memory_space<vmem>>, vector<1x16x4x4xbf16>
    %30 = vector.shape_cast %29 : vector<1x16x4x4xbf16> to vector<16x4x4xbf16>
    %31 = vector.shape_cast %30 : vector<16x4x4xbf16> to vector<16x16xbf16>
    %c1_34 = arith.constant 1 : index
    %c1_35 = arith.constant 1 : index
    %c0_36 = arith.constant 0 : index
    %c0_37 = arith.constant 0 : index
    %32 = vector.load %arg2[%c1_34, %c1_35, %c0_36, %c0_37] : memref<3x3x16x16xbf16, #tpu.memory_space<vmem>>, vector<1x1x16x16xbf16>
    %33 = vector.shape_cast %32 : vector<1x1x16x16xbf16> to vector<16x16xbf16>
    %cst_38 = arith.constant dense<0.000000e+00> : vector<16x16xf32>
    %34 = tpu.matmul %33, %31, %cst_38 {dimension_numbers = #tpu.dot_dimension_numbers<[1], [0], [0], [1], [0, 0, 1, 1], [], []>} : vector<16x16xbf16>, vector<16x16xbf16>, vector<16x16xf32> -> vector<16x16xf32>
    %35 = arith.addf %28, %34 : vector<16x16xf32>
    %c0_39 = arith.constant 0 : index
    %c32_40 = arith.constant 32 : index
    %c0_41 = arith.constant 0 : index
    %c1_42 = arith.constant 1 : index
    %36 = vector.load %arg1[%c0_39, %c32_40, %c0_41, %c1_42] : memref<1x64x5x5xbf16, #tpu.memory_space<vmem>>, vector<1x16x4x4xbf16>
    %37 = vector.shape_cast %36 : vector<1x16x4x4xbf16> to vector<16x4x4xbf16>
    %38 = vector.shape_cast %37 : vector<16x4x4xbf16> to vector<16x16xbf16>
    %c1_43 = arith.constant 1 : index
    %c2_44 = arith.constant 2 : index
    %c0_45 = arith.constant 0 : index
    %c0_46 = arith.constant 0 : index
    %39 = vector.load %arg2[%c1_43, %c2_44, %c0_45, %c0_46] : memref<3x3x16x16xbf16, #tpu.memory_space<vmem>>, vector<1x1x16x16xbf16>
    %40 = vector.shape_cast %39 : vector<1x1x16x16xbf16> to vector<16x16xbf16>
    %cst_47 = arith.constant dense<0.000000e+00> : vector<16x16xf32>
    %41 = tpu.matmul %40, %38, %cst_47 {dimension_numbers = #tpu.dot_dimension_numbers<[1], [0], [0], [1], [0, 0, 1, 1], [], []>} : vector<16x16xbf16>, vector<16x16xbf16>, vector<16x16xf32> -> vector<16x16xf32>
    %42 = arith.addf %35, %41 : vector<16x16xf32>
    %c0_48 = arith.constant 0 : index
    %c0_49 = arith.constant 0 : index
    %c1_50 = arith.constant 1 : index
    %c0_51 = arith.constant 0 : index
    %43 = vector.load %arg1[%c0_48, %c0_49, %c1_50, %c0_51] : memref<1x64x5x5xbf16, #tpu.memory_space<vmem>>, vector<1x16x4x4xbf16>
    %44 = vector.shape_cast %43 : vector<1x16x4x4xbf16> to vector<16x4x4xbf16>
    %45 = vector.shape_cast %44 : vector<16x4x4xbf16> to vector<16x16xbf16>
    %c2_52 = arith.constant 2 : index
    %c0_53 = arith.constant 0 : index
    %c0_54 = arith.constant 0 : index
    %c0_55 = arith.constant 0 : index
    %46 = vector.load %arg2[%c2_52, %c0_53, %c0_54, %c0_55] : memref<3x3x16x16xbf16, #tpu.memory_space<vmem>>, vector<1x1x16x16xbf16>
    %47 = vector.shape_cast %46 : vector<1x1x16x16xbf16> to vector<16x16xbf16>
    %cst_56 = arith.constant dense<0.000000e+00> : vector<16x16xf32>
    %48 = tpu.matmul %47, %45, %cst_56 {dimension_numbers = #tpu.dot_dimension_numbers<[1], [0], [0], [1], [0, 0, 1, 1], [], []>} : vector<16x16xbf16>, vector<16x16xbf16>, vector<16x16xf32> -> vector<16x16xf32>
    %49 = arith.addf %42, %48 : vector<16x16xf32>
    %c0_57 = arith.constant 0 : index
    %c16_58 = arith.constant 16 : index
    %c1_59 = arith.constant 1 : index
    %c0_60 = arith.constant 0 : index
    %50 = vector.load %arg1[%c0_57, %c16_58, %c1_59, %c0_60] : memref<1x64x5x5xbf16, #tpu.memory_space<vmem>>, vector<1x16x4x4xbf16>
    %51 = vector.shape_cast %50 : vector<1x16x4x4xbf16> to vector<16x4x4xbf16>
    %52 = vector.shape_cast %51 : vector<16x4x4xbf16> to vector<16x16xbf16>
    %c2_61 = arith.constant 2 : index
    %c1_62 = arith.constant 1 : index
    %c0_63 = arith.constant 0 : index
    %c0_64 = arith.constant 0 : index
    %53 = vector.load %arg2[%c2_61, %c1_62, %c0_63, %c0_64] : memref<3x3x16x16xbf16, #tpu.memory_space<vmem>>, vector<1x1x16x16xbf16>
    %54 = vector.shape_cast %53 : vector<1x1x16x16xbf16> to vector<16x16xbf16>
    %cst_65 = arith.constant dense<0.000000e+00> : vector<16x16xf32>
    %55 = tpu.matmul %54, %52, %cst_65 {dimension_numbers = #tpu.dot_dimension_numbers<[1], [0], [0], [1], [0, 0, 1, 1], [], []>} : vector<16x16xbf16>, vector<16x16xbf16>, vector<16x16xf32> -> vector<16x16xf32>
    %56 = arith.addf %49, %55 : vector<16x16xf32>
    %c0_66 = arith.constant 0 : index
    %c0_67 = arith.constant 0 : index
    %c1_68 = arith.constant 1 : index
    %c1_69 = arith.constant 1 : index
    %57 = vector.load %arg1[%c0_66, %c0_67, %c1_68, %c1_69] : memref<1x64x5x5xbf16, #tpu.memory_space<vmem>>, vector<1x16x4x4xbf16>
    %58 = vector.shape_cast %57 : vector<1x16x4x4xbf16> to vector<16x4x4xbf16>
    %59 = vector.shape_cast %58 : vector<16x4x4xbf16> to vector<16x16xbf16>
    %c2_70 = arith.constant 2 : index
    %c2_71 = arith.constant 2 : index
    %c0_72 = arith.constant 0 : index
    %c0_73 = arith.constant 0 : index
    %60 = vector.load %arg2[%c2_70, %c2_71, %c0_72, %c0_73] : memref<3x3x16x16xbf16, #tpu.memory_space<vmem>>, vector<1x1x16x16xbf16>
    %61 = vector.shape_cast %60 : vector<1x1x16x16xbf16> to vector<16x16xbf16>
    %cst_74 = arith.constant dense<0.000000e+00> : vector<16x16xf32>
    %62 = tpu.matmul %61, %59, %cst_74 {dimension_numbers = #tpu.dot_dimension_numbers<[1], [0], [0], [1], [0, 0, 1, 1], [], []>} : vector<16x16xbf16>, vector<16x16xbf16>, vector<16x16xf32> -> vector<16x16xf32>
    %63 = arith.addf %56, %62 : vector<16x16xf32>
    %c0_75 = arith.constant 0 : index
    %c0_76 = arith.constant 0 : index
    %64 = vector.load %arg3[%c0_75, %c0_76] : memref<16x1xf32, #tpu.memory_space<vmem>>, vector<16x1xf32>
    %65 = vector.broadcast %64 : vector<16x1xf32> to vector<16x16xf32>
    %66 = arith.addf %63, %65 : vector<16x16xf32>
    %cst_77 = arith.constant 0.000000e+00 : f32
    %67 = vector.broadcast %cst_77 : f32 to vector<16x16xf32>
    %68 = arith.cmpf oge, %66, %67 : vector<16x16xf32>
    %cst_78 = arith.constant 2.000000e-01 : f32
    %69 = vector.broadcast %cst_78 : f32 to vector<16x16xf32>
    %70 = arith.mulf %69, %66 : vector<16x16xf32>
    %71 = arith.select %68, %66, %70 : vector<16x16xi1>, vector<16x16xf32>
    %cst_79 = arith.constant 1.41421354 : f32
    %72 = vector.broadcast %cst_79 : f32 to vector<16x16xf32>
    %73 = arith.mulf %71, %72 : vector<16x16xf32>
    %74 = arith.truncf %73 : vector<16x16xf32> to vector<16x16xbf16>
    %c0_80 = arith.constant 0 : index
    %c0_81 = arith.constant 0 : index
    %c0_82 = arith.constant 0 : index
    %75 = vector.load %arg4[%c0_80, %c0_81, %c0_82] : memref<1x16x16xbf16, #tpu.memory_space<vmem>>, vector<1x16x16xbf16>
    %76 = vector.shape_cast %75 : vector<1x16x16xbf16> to vector<16x16xbf16>
    %77 = vector.shape_cast %74 : vector<16x16xbf16> to vector<1x16x16xbf16>
    tpu.vector_store %arg4[%c0_80, %c0_81, %c0_82], %77 {strides = array<i32>} : memref<1x16x16xbf16, #tpu.memory_space<vmem>>, vector<1x16x16xbf16>,
    return
  }
  func.func @transform_0(%arg0: i32) -> (i32, i32, i32, i32) {
    %c0_i32 = arith.constant 0 : i32
    %c0_i32_0 = arith.constant 0 : i32
    %c0_i32_1 = arith.constant 0 : i32
    %c0_i32_2 = arith.constant 0 : i32
    return %arg0, %c0_i32, %c0_i32_0, %c0_i32_1 : i32, i32, i32, i32
  }
  func.func @transform_1(%arg0: i32) -> (i32, i32, i32, i32) {
    %c0_i32 = arith.constant 0 : i32
    %c0_i32_0 = arith.constant 0 : i32
    %c0_i32_1 = arith.constant 0 : i32
    %c0_i32_2 = arith.constant 0 : i32
    %c0_i32_3 = arith.constant 0 : i32
    return %c0_i32, %c0_i32_0, %c0_i32_1, %c0_i32_2 : i32, i32, i32, i32
  }
  func.func @transform_2(%arg0: i32) -> (i32, i32) {
    %c0_i32 = arith.constant 0 : i32
    %c0_i32_0 = arith.constant 0 : i32
    %c0_i32_1 = arith.constant 0 : i32
    return %c0_i32, %c0_i32_0 : i32, i32
  }
  func.func @transform_3(%arg0: i32) -> (i32, i32, i32) {
    %c0_i32 = arith.constant 0 : i32
    %c0_i32_0 = arith.constant 0 : i32
    %c0_i32_1 = arith.constant 0 : i32
    return %arg0, %c0_i32, %c0_i32_0 : i32, i32, i32
  }
}

module attributes {stable_mosaic.version = 11 : i64} {
  func.func @_conv_down_kernel(%arg0: i32, %arg1: memref<1x64x3x3xbf16, #tpu.memory_space<vmem>>, %arg2: memref<3x3x16x16xbf16, #tpu.memory_space<vmem>>, %arg3: memref<16x1xf32, #tpu.memory_space<vmem>>, %arg4: memref<1x16x4xbf16, #tpu.memory_space<vmem>>) attributes {dimension_semantics = [#tpu.dimension_semantics<parallel>], iteration_bounds = array<i64: 2>, scalar_prefetch = 0 : i64, scratch_operands = 0 : i64, tpu.core_type = #tpu.core_type<tc>, window_params = [{transform_indices = @transform_0, window_bounds = array<i64: 1, 64, 3, 3>}, {pipeline_mode = #tpu.pipeline_mode<synchronous>, transform_indices = @transform_1, window_bounds = array<i64: 3, 3, 16, 16>}, {pipeline_mode = #tpu.pipeline_mode<synchronous>, transform_indices = @transform_2, window_bounds = array<i64: 16, 1>}, {transform_indices = @transform_3, window_bounds = array<i64: 1, 16, 4>}]} {
    %cst = arith.constant 0.000000e+00 : f32
    %0 = vector.broadcast %cst : f32 to vector<16x4xf32>
    %c0 = arith.constant 0 : index
    %c0_0 = arith.constant 0 : index
    %c0_1 = arith.constant 0 : index
    %c0_2 = arith.constant 0 : index
    %1 = vector.load %arg1[%c0, %c0_0, %c0_1, %c0_2] : memref<1x64x3x3xbf16, #tpu.memory_space<vmem>>, vector<1x16x2x2xbf16>
    %2 = vector.shape_cast %1 : vector<1x16x2x2xbf16> to vector<16x2x2xbf16>
    %3 = vector.shape_cast %2 : vector<16x2x2xbf16> to vector<16x4xbf16>
    %c0_3 = arith.constant 0 : index
    %c0_4 = arith.constant 0 : index
    %c0_5 = arith.constant 0 : index
    %c0_6 = arith.constant 0 : index
    %4 = vector.load %arg2[%c0_3, %c0_4, %c0_5, %c0_6] : memref<3x3x16x16xbf16, #tpu.memory_space<vmem>>, vector<1x1x16x16xbf16>
    %5 = vector.shape_cast %4 : vector<1x1x16x16xbf16> to vector<16x16xbf16>
    %cst_7 = arith.constant dense<0.000000e+00> : vector<16x4xf32>
    %6 = tpu.matmul %5, %3, %cst_7 {dimension_numbers = #tpu.dot_dimension_numbers<[1], [0], [0], [1], [0, 0, 1, 1], [], []>} : vector<16x16xbf16>, vector<16x4xbf16>, vector<16x4xf32> -> vector<16x4xf32>
    %7 = arith.addf %0, %6 : vector<16x4xf32>
    %c0_8 = arith.constant 0 : index
    %c16 = arith.constant 16 : index
    %c0_9 = arith.constant 0 : index
    %c0_10 = arith.constant 0 : index
    %8 = vector.load %arg1[%c0_8, %c16, %c0_9, %c0_10] : memref<1x64x3x3xbf16, #tpu.memory_space<vmem>>, vector<1x16x2x2xbf16>
    %9 = vector.shape_cast %8 : vector<1x16x2x2xbf16> to vector<16x2x2xbf16>
    %10 = vector.shape_cast %9 : vector<16x2x2xbf16> to vector<16x4xbf16>
    %c0_11 = arith.constant 0 : index
    %c1 = arith.constant 1 : index
    %c0_12 = arith.constant 0 : index
    %c0_13 = arith.constant 0 : index
    %11 = vector.load %arg2[%c0_11, %c1, %c0_12, %c0_13] : memref<3x3x16x16xbf16, #tpu.memory_space<vmem>>, vector<1x1x16x16xbf16>
    %12 = vector.shape_cast %11 : vector<1x1x16x16xbf16> to vector<16x16xbf16>
    %cst_14 = arith.constant dense<0.000000e+00> : vector<16x4xf32>
    %13 = tpu.matmul %12, %10, %cst_14 {dimension_numbers = #tpu.dot_dimension_numbers<[1], [0], [0], [1], [0, 0, 1, 1], [], []>} : vector<16x16xbf16>, vector<16x4xbf16>, vector<16x4xf32> -> vector<16x4xf32>
    %14 = arith.addf %7, %13 : vector<16x4xf32>
    %c0_15 = arith.constant 0 : index
    %c0_16 = arith.constant 0 : index
    %c0_17 = arith.constant 0 : index
    %c1_18 = arith.constant 1 : index
    %15 = vector.load %arg1[%c0_15, %c0_16, %c0_17, %c1_18] : memref<1x64x3x3xbf16, #tpu.memory_space<vmem>>, vector<1x16x2x2xbf16>
    %16 = vector.shape_cast %15 : vector<1x16x2x2xbf16> to vector<16x2x2xbf16>
    %17 = vector.shape_cast %16 : vector<16x2x2xbf16> to vector<16x4xbf16>
    %c0_19 = arith.constant 0 : index
    %c2 = arith.constant 2 : index
    %c0_20 = arith.constant 0 : index
    %c0_21 = arith.constant 0 : index
    %18 = vector.load %arg2[%c0_19, %c2, %c0_20, %c0_21] : memref<3x3x16x16xbf16, #tpu.memory_space<vmem>>, vector<1x1x16x16xbf16>
    %19 = vector.shape_cast %18 : vector<1x1x16x16xbf16> to vector<16x16xbf16>
    %cst_22 = arith.constant dense<0.000000e+00> : vector<16x4xf32>
    %20 = tpu.matmul %19, %17, %cst_22 {dimension_numbers = #tpu.dot_dimension_numbers<[1], [0], [0], [1], [0, 0, 1, 1], [], []>} : vector<16x16xbf16>, vector<16x4xbf16>, vector<16x4xf32> -> vector<16x4xf32>
    %21 = arith.addf %14, %20 : vector<16x4xf32>
    %c0_23 = arith.constant 0 : index
    %c32 = arith.constant 32 : index
    %c0_24 = arith.constant 0 : index
    %c0_25 = arith.constant 0 : index
    %22 = vector.load %arg1[%c0_23, %c32, %c0_24, %c0_25] : memref<1x64x3x3xbf16, #tpu.memory_space<vmem>>, vector<1x16x2x2xbf16>
    %23 = vector.shape_cast %22 : vector<1x16x2x2xbf16> to vector<16x2x2xbf16>
    %24 = vector.shape_cast %23 : vector<16x2x2xbf16> to vector<16x4xbf16>
    %c1_26 = arith.constant 1 : index
    %c0_27 = arith.constant 0 : index
    %c0_28 = arith.constant 0 : index
    %c0_29 = arith.constant 0 : index
    %25 = vector.load %arg2[%c1_26, %c0_27, %c0_28, %c0_29] : memref<3x3x16x16xbf16, #tpu.memory_space<vmem>>, vector<1x1x16x16xbf16>
    %26 = vector.shape_cast %25 : vector<1x1x16x16xbf16> to vector<16x16xbf16>
    %cst_30 = arith.constant dense<0.000000e+00> : vector<16x4xf32>
    %27 = tpu.matmul %26, %24, %cst_30 {dimension_numbers = #tpu.dot_dimension_numbers<[1], [0], [0], [1], [0, 0, 1, 1], [], []>} : vector<16x16xbf16>, vector<16x4xbf16>, vector<16x4xf32> -> vector<16x4xf32>
    %28 = arith.addf %21, %27 : vector<16x4xf32>
    %c0_31 = arith.constant 0 : index
    %c48 = arith.constant 48 : index
    %c0_32 = arith.constant 0 : index
    %c0_33 = arith.constant 0 : index
    %29 = vector.load %arg1[%c0_31, %c48, %c0_32, %c0_33] : memref<1x64x3x3xbf16, #tpu.memory_space<vmem>>, vector<1x16x2x2xbf16>
    %30 = vector.shape_cast %29 : vector<1x16x2x2xbf16> to vector<16x2x2xbf16>
    %31 = vector.shape_cast %30 : vector<16x2x2xbf16> to vector<16x4xbf16>
    %c1_34 = arith.constant 1 : index
    %c1_35 = arith.constant 1 : index
    %c0_36 = arith.constant 0 : index
    %c0_37 = arith.constant 0 : index
    %32 = vector.load %arg2[%c1_34, %c1_35, %c0_36, %c0_37] : memref<3x3x16x16xbf16, #tpu.memory_space<vmem>>, vector<1x1x16x16xbf16>
    %33 = vector.shape_cast %32 : vector<1x1x16x16xbf16> to vector<16x16xbf16>
    %cst_38 = arith.constant dense<0.000000e+00> : vector<16x4xf32>
    %34 = tpu.matmul %33, %31, %cst_38 {dimension_numbers = #tpu.dot_dimension_numbers<[1], [0], [0], [1], [0, 0, 1, 1], [], []>} : vector<16x16xbf16>, vector<16x4xbf16>, vector<16x4xf32> -> vector<16x4xf32>
    %35 = arith.addf %28, %34 : vector<16x4xf32>
    %c0_39 = arith.constant 0 : index
    %c32_40 = arith.constant 32 : index
    %c0_41 = arith.constant 0 : index
    %c1_42 = arith.constant 1 : index
    %36 = vector.load %arg1[%c0_39, %c32_40, %c0_41, %c1_42] : memref<1x64x3x3xbf16, #tpu.memory_space<vmem>>, vector<1x16x2x2xbf16>
    %37 = vector.shape_cast %36 : vector<1x16x2x2xbf16> to vector<16x2x2xbf16>
    %38 = vector.shape_cast %37 : vector<16x2x2xbf16> to vector<16x4xbf16>
    %c1_43 = arith.constant 1 : index
    %c2_44 = arith.constant 2 : index
    %c0_45 = arith.constant 0 : index
    %c0_46 = arith.constant 0 : index
    %39 = vector.load %arg2[%c1_43, %c2_44, %c0_45, %c0_46] : memref<3x3x16x16xbf16, #tpu.memory_space<vmem>>, vector<1x1x16x16xbf16>
    %40 = vector.shape_cast %39 : vector<1x1x16x16xbf16> to vector<16x16xbf16>
    %cst_47 = arith.constant dense<0.000000e+00> : vector<16x4xf32>
    %41 = tpu.matmul %40, %38, %cst_47 {dimension_numbers = #tpu.dot_dimension_numbers<[1], [0], [0], [1], [0, 0, 1, 1], [], []>} : vector<16x16xbf16>, vector<16x4xbf16>, vector<16x4xf32> -> vector<16x4xf32>
    %42 = arith.addf %35, %41 : vector<16x4xf32>
    %c0_48 = arith.constant 0 : index
    %c0_49 = arith.constant 0 : index
    %c1_50 = arith.constant 1 : index
    %c0_51 = arith.constant 0 : index
    %43 = vector.load %arg1[%c0_48, %c0_49, %c1_50, %c0_51] : memref<1x64x3x3xbf16, #tpu.memory_space<vmem>>, vector<1x16x2x2xbf16>
    %44 = vector.shape_cast %43 : vector<1x16x2x2xbf16> to vector<16x2x2xbf16>
    %45 = vector.shape_cast %44 : vector<16x2x2xbf16> to vector<16x4xbf16>
    %c2_52 = arith.constant 2 : index
    %c0_53 = arith.constant 0 : index
    %c0_54 = arith.constant 0 : index
    %c0_55 = arith.constant 0 : index
    %46 = vector.load %arg2[%c2_52, %c0_53, %c0_54, %c0_55] : memref<3x3x16x16xbf16, #tpu.memory_space<vmem>>, vector<1x1x16x16xbf16>
    %47 = vector.shape_cast %46 : vector<1x1x16x16xbf16> to vector<16x16xbf16>
    %cst_56 = arith.constant dense<0.000000e+00> : vector<16x4xf32>
    %48 = tpu.matmul %47, %45, %cst_56 {dimension_numbers = #tpu.dot_dimension_numbers<[1], [0], [0], [1], [0, 0, 1, 1], [], []>} : vector<16x16xbf16>, vector<16x4xbf16>, vector<16x4xf32> -> vector<16x4xf32>
    %49 = arith.addf %42, %48 : vector<16x4xf32>
    %c0_57 = arith.constant 0 : index
    %c16_58 = arith.constant 16 : index
    %c1_59 = arith.constant 1 : index
    %c0_60 = arith.constant 0 : index
    %50 = vector.load %arg1[%c0_57, %c16_58, %c1_59, %c0_60] : memref<1x64x3x3xbf16, #tpu.memory_space<vmem>>, vector<1x16x2x2xbf16>
    %51 = vector.shape_cast %50 : vector<1x16x2x2xbf16> to vector<16x2x2xbf16>
    %52 = vector.shape_cast %51 : vector<16x2x2xbf16> to vector<16x4xbf16>
    %c2_61 = arith.constant 2 : index
    %c1_62 = arith.constant 1 : index
    %c0_63 = arith.constant 0 : index
    %c0_64 = arith.constant 0 : index
    %53 = vector.load %arg2[%c2_61, %c1_62, %c0_63, %c0_64] : memref<3x3x16x16xbf16, #tpu.memory_space<vmem>>, vector<1x1x16x16xbf16>
    %54 = vector.shape_cast %53 : vector<1x1x16x16xbf16> to vector<16x16xbf16>
    %cst_65 = arith.constant dense<0.000000e+00> : vector<16x4xf32>
    %55 = tpu.matmul %54, %52, %cst_65 {dimension_numbers = #tpu.dot_dimension_numbers<[1], [0], [0], [1], [0, 0, 1, 1], [], []>} : vector<16x16xbf16>, vector<16x4xbf16>, vector<16x4xf32> -> vector<16x4xf32>
    %56 = arith.addf %49, %55 : vector<16x4xf32>
    %c0_66 = arith.constant 0 : index
    %c0_67 = arith.constant 0 : index
    %c1_68 = arith.constant 1 : index
    %c1_69 = arith.constant 1 : index
    %57 = vector.load %arg1[%c0_66, %c0_67, %c1_68, %c1_69] : memref<1x64x3x3xbf16, #tpu.memory_space<vmem>>, vector<1x16x2x2xbf16>
    %58 = vector.shape_cast %57 : vector<1x16x2x2xbf16> to vector<16x2x2xbf16>
    %59 = vector.shape_cast %58 : vector<16x2x2xbf16> to vector<16x4xbf16>
    %c2_70 = arith.constant 2 : index
    %c2_71 = arith.constant 2 : index
    %c0_72 = arith.constant 0 : index
    %c0_73 = arith.constant 0 : index
    %60 = vector.load %arg2[%c2_70, %c2_71, %c0_72, %c0_73] : memref<3x3x16x16xbf16, #tpu.memory_space<vmem>>, vector<1x1x16x16xbf16>
    %61 = vector.shape_cast %60 : vector<1x1x16x16xbf16> to vector<16x16xbf16>
    %cst_74 = arith.constant dense<0.000000e+00> : vector<16x4xf32>
    %62 = tpu.matmul %61, %59, %cst_74 {dimension_numbers = #tpu.dot_dimension_numbers<[1], [0], [0], [1], [0, 0, 1, 1], [], []>} : vector<16x16xbf16>, vector<16x4xbf16>, vector<16x4xf32> -> vector<16x4xf32>
    %63 = arith.addf %56, %62 : vector<16x4xf32>
    %c0_75 = arith.constant 0 : index
    %c0_76 = arith.constant 0 : index
    %64 = vector.load %arg3[%c0_75, %c0_76] : memref<16x1xf32, #tpu.memory_space<vmem>>, vector<16x1xf32>
    %65 = vector.broadcast %64 : vector<16x1xf32> to vector<16x4xf32>
    %66 = arith.addf %63, %65 : vector<16x4xf32>
    %cst_77 = arith.constant 0.000000e+00 : f32
    %67 = vector.broadcast %cst_77 : f32 to vector<16x4xf32>
    %68 = arith.cmpf oge, %66, %67 : vector<16x4xf32>
    %cst_78 = arith.constant 2.000000e-01 : f32
    %69 = vector.broadcast %cst_78 : f32 to vector<16x4xf32>
    %70 = arith.mulf %69, %66 : vector<16x4xf32>
    %71 = arith.select %68, %66, %70 : vector<16x4xi1>, vector<16x4xf32>
    %cst_79 = arith.constant 1.41421354 : f32
    %72 = vector.broadcast %cst_79 : f32 to vector<16x4xf32>
    %73 = arith.mulf %71, %72 : vector<16x4xf32>
    %74 = arith.truncf %73 : vector<16x4xf32> to vector<16x4xbf16>
    %c0_80 = arith.constant 0 : index
    %c0_81 = arith.constant 0 : index
    %c0_82 = arith.constant 0 : index
    %75 = vector.load %arg4[%c0_80, %c0_81, %c0_82] : memref<1x16x4xbf16, #tpu.memory_space<vmem>>, vector<1x16x4xbf16>
    %76 = vector.shape_cast %75 : vector<1x16x4xbf16> to vector<16x4xbf16>
    %77 = vector.shape_cast %74 : vector<16x4xbf16> to vector<1x16x4xbf16>
    tpu.vector_store %arg4[%c0_80, %c0_81, %c0_82], %77 {strides = array<i32>} : memref<1x16x4xbf16, #tpu.memory_space<vmem>>, vector<1x16x4xbf16>,
    return
  }
  func.func @transform_0(%arg0: i32) -> (i32, i32, i32, i32) {
    %c0_i32 = arith.constant 0 : i32
    %c0_i32_0 = arith.constant 0 : i32
    %c0_i32_1 = arith.constant 0 : i32
    %c0_i32_2 = arith.constant 0 : i32
    return %arg0, %c0_i32, %c0_i32_0, %c0_i32_1 : i32, i32, i32, i32
  }
  func.func @transform_1(%arg0: i32) -> (i32, i32, i32, i32) {
    %c0_i32 = arith.constant 0 : i32
    %c0_i32_0 = arith.constant 0 : i32
    %c0_i32_1 = arith.constant 0 : i32
    %c0_i32_2 = arith.constant 0 : i32
    %c0_i32_3 = arith.constant 0 : i32
    return %c0_i32, %c0_i32_0, %c0_i32_1, %c0_i32_2 : i32, i32, i32, i32
  }
  func.func @transform_2(%arg0: i32) -> (i32, i32) {
    %c0_i32 = arith.constant 0 : i32
    %c0_i32_0 = arith.constant 0 : i32
    %c0_i32_1 = arith.constant 0 : i32
    return %c0_i32, %c0_i32_0 : i32, i32
  }
  func.func @transform_3(%arg0: i32) -> (i32, i32, i32) {
    %c0_i32 = arith.constant 0 : i32
    %c0_i32_0 = arith.constant 0 : i32
    %c0_i32_1 = arith.constant 0 : i32
    return %arg0, %c0_i32, %c0_i32_0 : i32, i32, i32
  }
}

module attributes {stable_mosaic.version = 11 : i64} {
  func.func @_pool_fc_kernel(%arg0: memref<2x16x4xbf16, #tpu.memory_space<vmem>>, %arg1: memref<16x32xbf16, #tpu.memory_space<vmem>>, %arg2: memref<1x32xf32, #tpu.memory_space<vmem>>, %arg3: memref<2x32xf32, #tpu.memory_space<vmem>>) attributes {dimension_semantics = [], scalar_prefetch = 0 : i64, scratch_operands = 0 : i64, tpu.core_type = #tpu.core_type<tc>} {
    %c0 = arith.constant 0 : index
    %c0_0 = arith.constant 0 : index
    %c0_1 = arith.constant 0 : index
    %0 = vector.load %arg0[%c0, %c0_0, %c0_1] : memref<2x16x4xbf16, #tpu.memory_space<vmem>>, vector<2x16x4xbf16>
    %1 = arith.extf %0 : vector<2x16x4xbf16> to vector<2x16x4xf32>
    %cst = arith.constant dense<0.000000e+00> : vector<2x16xf32>
    %2 = vector.multi_reduction <add>, %1, %cst [2] : vector<2x16x4xf32> to vector<2x16xf32>
    %cst_2 = arith.constant 4.000000e+00 : f32
    %3 = vector.broadcast %cst_2 : f32 to vector<2x16xf32>
    %4 = arith.divf %2, %3 : vector<2x16xf32>
    %5 = arith.truncf %4 : vector<2x16xf32> to vector<2x16xbf16>
    %c0_3 = arith.constant 0 : index
    %c0_4 = arith.constant 0 : index
    %6 = vector.load %arg1[%c0_3, %c0_4] : memref<16x32xbf16, #tpu.memory_space<vmem>>, vector<16x32xbf16>
    %cst_5 = arith.constant dense<0.000000e+00> : vector<2x32xf32>
    %7 = tpu.matmul %5, %6, %cst_5 {dimension_numbers = #tpu.dot_dimension_numbers<[1], [0], [0], [1], [0, 0, 1, 1], [], []>} : vector<2x16xbf16>, vector<16x32xbf16>, vector<2x32xf32> -> vector<2x32xf32>
    %c0_6 = arith.constant 0 : index
    %c0_7 = arith.constant 0 : index
    %8 = vector.load %arg2[%c0_6, %c0_7] : memref<1x32xf32, #tpu.memory_space<vmem>>, vector<1x32xf32>
    %9 = vector.broadcast %8 : vector<1x32xf32> to vector<2x32xf32>
    %10 = arith.addf %7, %9 : vector<2x32xf32>
    %cst_8 = arith.constant 0.000000e+00 : f32
    %11 = vector.broadcast %cst_8 : f32 to vector<2x32xf32>
    %12 = arith.cmpf oge, %10, %11 : vector<2x32xf32>
    %cst_9 = arith.constant 2.000000e-01 : f32
    %13 = vector.broadcast %cst_9 : f32 to vector<2x32xf32>
    %14 = arith.mulf %13, %10 : vector<2x32xf32>
    %15 = arith.select %12, %10, %14 : vector<2x32xi1>, vector<2x32xf32>
    %cst_10 = arith.constant 1.41421354 : f32
    %16 = vector.broadcast %cst_10 : f32 to vector<2x32xf32>
    %17 = arith.mulf %15, %16 : vector<2x32xf32>
    %c0_11 = arith.constant 0 : index
    %c0_12 = arith.constant 0 : index
    %18 = vector.load %arg3[%c0_11, %c0_12] : memref<2x32xf32, #tpu.memory_space<vmem>>, vector<2x32xf32>
    tpu.vector_store %arg3[%c0_11, %c0_12], %17 {strides = array<i32>} : memref<2x32xf32, #tpu.memory_space<vmem>>, vector<2x32xf32>,
    return
  }
}

</mosaic_0001>

<llo_original>
// kernel: to_style_forward.4
$region0: #{to_style_forward.4}
  #allocation0 [shape = 'u32[]', space=smem, size = 0x4, offset = 0x4, fixed_abs, tag = 'smem constant byte address 0x4 - core index']
  #allocation1 [shape = 'u32[144,128]{1,0:T(1,128)}', space=vmem, size = 0x12000, scoped, tag = 'internal scratch']
  %s0 = inlined_call_operand.vmem [shape: bf16[2,64,9,9], index: 0, kind: input, shape index: {}]
  %s1 = inlined_call_operand.vmem [shape: bf16[3,3,16,16], index: 1, kind: input, shape index: {}]
  %s2 = inlined_call_operand.vmem [shape: f32[16,1], index: 2, kind: input, shape index: {}]
  %s3 = inlined_call_operand.vmem [shape: bf16[2,16,64], index: 3, kind: output, shape index: {}]
  %s4 = sld [smem:[#allocation0]]
  $region45: #{to_style_forward.4} parent=0
    _
  %s6 = ssub.s32 1, %s4
  %s7 = scalar_select 0, %s6, %s4
  loop: start=0, step=1, limit=4
  $region2: #{to_style_forward.4} parent=0 // loop_pre_header
    _
  $region3: #{to_style_forward.4} parent=0 // loop_header
    %s9 = sphi 0, %s13
    %p10 = scmp.ge.s32.totalorder %s9, 4
    %s19 = sphi 0, %s21
    %s22 = sphi 0, %s19
    %s23 = sphi 0, %s22
    %s39 = sphi 0, %s23
    %s43 = sphi 0, %s43
    %s45 = sphi 0, %s43
    %s46 = sphi 0, %s45
    %s60 = sphi 0, %s46
    %s64 = sphi 0, %s64
    %s66 = sphi 0, %s64
    %s67 = sphi 0, %s66
    %s81 = sphi 0, %s67
    %s87 = sphi 0, %s89
    %s90 = sphi 0, %s87
    %s91 = sphi 0, %s90
    %s107 = sphi 0, %s91
  $region4: #{to_style_forward.4} parent=0 // loop_header_branch
    %12 = sbr.rel (%p10) target = $region8
  $region5: #{to_style_forward.4} parent=0 // loop_body
    %s14 = ssub.s32 %s9, 1
    %s15 = ssub.s32 %s9, 2
    %s16 = sadd.s32 %s9, 1
    %s17 = ssub.s32 %s9, %s16
    %p18 = scmp.eq.s32.totalorder %s17, 0
    %s20 = sadd.s32 %s19, 1
    %s21 = scalar_select %p18, %s19, %s20
    %p24 = pneg %p18
    %p25 = scmp.eq.s32.totalorder %s9, 1
    %p26 = por %p24, %p25
    %p27 = scmp.ne.s32.totalorder %s19, %s22
    %p28 = scmp.eq.s32.totalorder %s9, 0
    %p29 = por %p27, %p28
    %p30 = scmp.ne.s32.totalorder %s19, %s22
    %p31 = scmp.eq.s32.totalorder %s14, 1
    %p32 = por %p30, %p31
    %p33 = scmp.ne.s32.totalorder %s22, %s23
    %p34 = scmp.eq.s32.totalorder %s14, 0
    %p35 = por %p33, %p34
    %p36 = scmp.ne.s32.totalorder %s22, %s23
    %p37 = scmp.eq.s32.totalorder %s15, 1
    %p38 = por %p36, %p37
    %p40 = scmp.ne.s32.totalorder %s23, %s39
    %p41 = scmp.eq.s32.totalorder %s15, 0
    %p42 = por %p40, %p41
    %s44 = sadd.s32 %s43, 1
    %p47 = scmp.eq.s32.totalorder %s9, 1
    %p48 = scmp.ne.s32.totalorder %s43, %s45
    %p49 = scmp.eq.s32.totalorder %s9, 0
    %p50 = por %p48, %p49
    %p51 = scmp.ne.s32.totalorder %s43, %s45
    %p52 = scmp.eq.s32.totalorder %s14, 1
    %p53 = por %p51, %p52
    %p54 = scmp.ne.s32.totalorder %s45, %s46
    %p55 = scmp.eq.s32.totalorder %s14, 0
    %p56 = por %p54, %p55
    %p57 = scmp.ne.s32.totalorder %s45, %s46
    %p58 = scmp.eq.s32.totalorder %s15, 1
    %p59 = por %p57, %p58
    %p61 = scmp.ne.s32.totalorder %s46, %s60
    %p62 = scmp.eq.s32.totalorder %s15, 0
    %p63 = por %p61, %p62
    %s65 = sadd.s32 %s64, 1
    %p68 = scmp.eq.s32.totalorder %s9, 1
    %p69 = scmp.ne.s32.totalorder %s64, %s66
    %p70 = scmp.eq.s32.totalorder %s9, 0
    %p71 = por %p69, %p70
    %p72 = scmp.ne.s32.totalorder %s64, %s66
    %p73 = scmp.eq.s32.totalorder %s14, 1
    %p74 = por %p72, %p73
    %p75 = scmp.ne.s32.totalorder %s66, %s67
    %p76 = scmp.eq.s32.totalorder %s14, 0
    %p77 = por %p75, %p76
    %p78 = scmp.ne.s32.totalorder %s66, %s67
    %p79 = scmp.eq.s32.totalorder %s15, 1
    %p80 = por %p78, %p79
    %p82 = scmp.ne.s32.totalorder %s67, %s81
    %p83 = scmp.eq.s32.totalorder %s15, 0
    %p84 = por %p82, %p83
    %s85 = ssub.s32 %s9, %s16
    %p86 = scmp.eq.s32.totalorder %s85, 0
    %s88 = sadd.s32 %s87, 1
    %s89 = scalar_select %p86, %s87, %s88
    %p92 = pneg %p86
    %p93 = scmp.eq.s32.totalorder %s9, 1
    %p94 = por %p92, %p93
    %p95 = scmp.ne.s32.totalorder %s87, %s90
    %p96 = scmp.eq.s32.totalorder %s9, 0
    %p97 = por %p95, %p96
    %p98 = scmp.ne.s32.totalorder %s87, %s90
    %p99 = scmp.eq.s32.totalorder %s14, 1
    %p100 = por %p98, %p99
    %p101 = scmp.ne.s32.totalorder %s90, %s91
    %p102 = scmp.eq.s32.totalorder %s14, 0
    %p103 = por %p101, %p102
    %p104 = scmp.ne.s32.totalorder %s90, %s91
    %p105 = scmp.eq.s32.totalorder %s15, 1
    %p106 = por %p104, %p105
    %p108 = scmp.ne.s32.totalorder %s91, %s107
    %p109 = scmp.eq.s32.totalorder %s15, 0
    %p110 = por %p108, %p109
    %p111 = scmp.le.s32.totalorder 1, %s9
    %p112 = scmp.lt.s32.totalorder %s9, 3
    %p113 = pnand %p111, %p112
    %p114 = pneg %p113
    // Predicated region
    $region9: #{to_style_forward.4} parent=5 // pred_check
      _
    $region10: #{to_style_forward.4} parent=5 // pred_check_branch
      %116 = sbr.rel (%p113) target = $region12
    $region11: #{to_style_forward.4} parent=5 // pred_region
      %s117 = ssub.s32 %s9, 1
      // Predicated region
      $region13: #{to_style_forward.4} parent=11 // pred_check
        %p118 = pneg %p56
      $region14: #{to_style_forward.4} parent=11 // pred_check_branch
        %120 = sbr.rel (%p118) target = $region16
      $region15: #{to_style_forward.4} parent=11 // pred_region
        _
      $region16: #{to_style_forward.4} parent=11 // pred_fallthru
        _
      // Predicated region
      $region17: #{to_style_forward.4} parent=11 // pred_check
        %p121 = pneg %p77
      $region18: #{to_style_forward.4} parent=11 // pred_check_branch
        %123 = sbr.rel (%p121) target = $region20
      $region19: #{to_style_forward.4} parent=11 // pred_region
        _
      $region20: #{to_style_forward.4} parent=11 // pred_fallthru
        _
    $region12: #{to_style_forward.4} parent=5 // pred_fallthru
      _
    %p124 = scmp.lt.s32.totalorder %s9, 2
    // Predicated region
    $region21: #{to_style_forward.4} parent=5 // pred_check
      %p125 = pneg %p124
    $region22: #{to_style_forward.4} parent=5 // pred_check_branch
      %127 = sbr.rel (%p125) target = $region24
    $region23: #{to_style_forward.4} parent=5 // pred_region
      // Predicated region
      $region25: #{to_style_forward.4} parent=23 // pred_check
        %p128 = pneg %p29
      $region26: #{to_style_forward.4} parent=23 // pred_check_branch
        %130 = sbr.rel (%p128) target = $region28
      $region27: #{to_style_forward.4} parent=23 // pred_region
        %p131 = scmp.lt.s32.totalorder %s9, 1
        %s132 = scalar_select %p131, %s9, 1
        %s133 = smul.addr %s132, 128
        %s134 = smul.addr %s133, 4
        %s135 = scalar_lea.vmem %s0, %s134
      $region28: #{to_style_forward.4} parent=23 // pred_fallthru
        _
    $region24: #{to_style_forward.4} parent=5 // pred_fallthru
      _
    %p136 = scmp.le.s32.totalorder 1, %s9
    %p137 = scmp.lt.s32.totalorder %s9, 3
    %p138 = pnand %p136, %p137
    %p139 = pneg %p138
    // Predicated region
    $region29: #{to_style_forward.4} parent=5 // pred_check
      _
    $region30: #{to_style_forward.4} parent=5 // pred_check_branch
      %141 = sbr.rel (%p138) target = $region32
    $region31: #{to_style_forward.4} parent=5 // pred_region
      %s142 = ssub.s32 %s9, 1
      %p143 = scmp.lt.s32.totalorder %s14, 1
      %s144 = scalar_select %p143, %s14, 1
      %s145 = smul.addr %s144, 128
      %s146 = smul.addr %s145, 4
      %s147 = scalar_lea.vmem %s0, %s146
      %p148 = pneg %p35
      %p149 = pneg %p32
      %p150 = pneg %p56
      %p151 = pneg %p53
      %p152 = pneg %p77
      %p153 = pneg %p74
      %p154 = pneg %p103
      %p155 = pneg %p100
      %p156 = scmp.lt.s32.totalorder %s14, 1
      %s157 = scalar_select %p156, %s14, 1
      %s158 = smul.addr %s157, 2
      %s159 = smul.addr %s158, 4
      %s160 = scalar_lea.vmem %s3, %s159
      %p161 = scmp.lt.s32.totalorder %s14, 1
      %s162 = scalar_select %p161, %s14, 1
      %s163 = smul.addr %s162, 128
      %s164 = smul.addr %s163, 4
      %s165 = scalar_lea.vmem %s0, %s164
      %p166 = scmp.lt.s32.totalorder %s14, 1
      %s167 = scalar_select %p166, %s14, 1
      %s168 = smul.addr %s167, 2
      %s169 = smul.addr %s168, 4
      %s170 = scalar_lea.vmem %s3, %s169
      %v172 = vld [vmem:[%s165] sm:$0xf]
      %v173 = vld [vmem:[%s165 + $0x8] sm:$0xf]
      %v174 = vld [vmem:[%s165 + $0x10] sm:$0xf]
      %v175 = vld [vmem:[%s165 + $0x18] sm:$0xf]
      %v176 = vld [vmem:[%s165 + $0x20] sm:$0xf]
      %v177 = vld [vmem:[%s165 + $0x28] sm:$0xf]
      %v178 = vld [vmem:[%s165 + $0x30] sm:$0xf]
      %v179 = vld [vmem:[%s165 + $0x38] sm:$0xf]
      %v180 = vld [vmem:[%s165 + $0x40] sm:$0xf]
      %v181 = vld [vmem:[%s165 + $0x48] sm:$0xf]
      %v182 = vld [vmem:[%s165 + $0x50] sm:$0xf]
      %v183 = vld [vmem:[%s165 + $0x58] sm:$0xf]
      %v184 = vld [vmem:[%s165 + $0x60] sm:$0xf]
      %v185 = vld [vmem:[%s165 + $0x68] sm:$0xf]
      %v186 = vld [vmem:[%s165 + $0x70] sm:$0xf]
      %v187 = vld [vmem:[%s165 + $0x78] sm:$0xf]
      %v188 = vcombine.low %v172, %v176
      %v190 = vunpack.c.l.s4 1983009808
      %v191 = vunpack.c.0.s8 %v190
      %v192 = vlaneseq
      %v193 = vshrl.u32 %v192, 7
      %v194 = vsub.s32 %v191, %v193
      %v195 = vrot.slane %v188, %v194
      %v196 = vcombine.low %v174, %v178
      %v198 = vunpack.c.l.s4 1983009808
      %v199 = vunpack.c.0.s8 %v198
      %v200 = vlaneseq
      %v201 = vshrl.u32 %v200, 7
      %v202 = vsub.s32 %v199, %v201
      %v203 = vrot.slane %v196, %v202
      %v204 = vcombine.low %v195, %v203
      %v205 = vcombine.high %v195, %v203
      %v207 = vunpack.c.l.s4 1934713408
      %v208 = vunpack.c.0.s8 %v207
      %v209 = vlaneseq
      %v210 = vshrl.u32 %v209, 7
      %v211 = vsub.s32 %v208, %v210
      %v212 = vrot.slane %v204, %v211
      %v214 = vunpack.c.l.s4 1934713408
      %v215 = vunpack.c.0.s8 %v214
      %v216 = vlaneseq
      %v217 = vshrl.u32 %v216, 7
      %v218 = vsub.s32 %v215, %v217
      %v219 = vrot.slane %v205, %v218
      %v220 = vcombine.high %v212, 0
      %v221 = vcombine.high %v219, 0
      %v222 = vcombine.low %v173, %v177
      %v224 = vunpack.c.l.s4 1983009808
      %v225 = vunpack.c.0.s8 %v224
      %v226 = vlaneseq
      %v227 = vshrl.u32 %v226, 7
      %v228 = vsub.s32 %v225, %v227
      %v229 = vrot.slane %v222, %v228
      %v230 = vcombine.low %v175, %v179
      %v232 = vunpack.c.l.s4 1983009808
      %v233 = vunpack.c.0.s8 %v232
      %v234 = vlaneseq
      %v235 = vshrl.u32 %v234, 7
      %v236 = vsub.s32 %v233, %v235
      %v237 = vrot.slane %v230, %v236
      %v238 = vcombine.low %v229, %v237
      %v239 = vcombine.high %v229, %v237
      %v241 = vunpack.c.l.s4 1934713408
      %v242 = vunpack.c.0.s8 %v241
      %v243 = vlaneseq
      %v244 = vshrl.u32 %v243, 7
      %v245 = vsub.s32 %v242, %v244
      %v246 = vrot.slane %v238, %v245
      %v248 = vunpack.c.l.s4 1934713408
      %v249 = vunpack.c.0.s8 %v248
      %v250 = vlaneseq
      %v251 = vshrl.u32 %v250, 7
      %v252 = vsub.s32 %v249, %v251
      %v253 = vrot.slane %v239, %v252
      %v254 = vcombine.high %v246, 0
      %v255 = vcombine.high %v253, 0
      %v256 = vcombine.low %v180, %v184
      %v258 = vunpack.c.l.s4 1983009808
      %v259 = vunpack.c.0.s8 %v258
      %v260 = vlaneseq
      %v261 = vshrl.u32 %v260, 7
      %v262 = vsub.s32 %v259, %v261
      %v263 = vrot.slane %v256, %v262
      %v264 = vcombine.low %v182, %v186
      %v266 = vunpack.c.l.s4 1983009808
      %v267 = vunpack.c.0.s8 %v266
      %v268 = vlaneseq
      %v269 = vshrl.u32 %v268, 7
      %v270 = vsub.s32 %v267, %v269
      %v271 = vrot.slane %v264, %v270
      %v272 = vcombine.low %v263, %v271
      %v273 = vcombine.high %v263, %v271
      %v275 = vunpack.c.l.s4 1934713408
      %v276 = vunpack.c.0.s8 %v275
      %v277 = vlaneseq
      %v278 = vshrl.u32 %v277, 7
      %v279 = vsub.s32 %v276, %v278
      %v280 = vrot.slane %v272, %v279
      %v282 = vunpack.c.l.s4 1934713408
      %v283 = vunpack.c.0.s8 %v282
      %v284 = vlaneseq
      %v285 = vshrl.u32 %v284, 7
      %v286 = vsub.s32 %v283, %v285
      %v287 = vrot.slane %v273, %v286
      %v288 = vcombine.high %v280, 0
      %v289 = vcombine.high %v287, 0
      %v290 = vcombine.low %v181, %v185
      %v292 = vunpack.c.l.s4 1983009808
      %v293 = vunpack.c.0.s8 %v292
      %v294 = vlaneseq
      %v295 = vshrl.u32 %v294, 7
      %v296 = vsub.s32 %v293, %v295
      %v297 = vrot.slane %v290, %v296
      %v298 = vcombine.low %v183, %v187
      %v300 = vunpack.c.l.s4 1983009808
      %v301 = vunpack.c.0.s8 %v300
      %v302 = vlaneseq
      %v303 = vshrl.u32 %v302, 7
      %v304 = vsub.s32 %v301, %v303
      %v305 = vrot.slane %v298, %v304
      %v306 = vcombine.low %v297, %v305
      %v307 = vcombine.high %v297, %v305
      %v309 = vunpack.c.l.s4 1934713408
      %v310 = vunpack.c.0.s8 %v309
      %v311 = vlaneseq
      %v312 = vshrl.u32 %v311, 7
      %v313 = vsub.s32 %v310, %v312
      %v314 = vrot.slane %v306, %v313
      %v316 = vunpack.c.l.s4 1934713408
      %v317 = vunpack.c.0.s8 %v316
      %v318 = vlaneseq
      %v319 = vshrl.u32 %v318, 7
      %v320 = vsub.s32 %v317, %v319
      %v321 = vrot.slane %v307, %v320
      %v322 = vcombine.high %v314, 0
      %v323 = vcombine.high %v321, 0
      %v326 = vpack.i.b16 %v246, %v212
      %v327 = vshrl.u32 %v212, 16
      %v328 = vshrl.u32 %v246, 16
      %v329 = vpack.i.b16 %v328, %v327
      %v332 = vpack.i.b16 %v254, %v220
      %v333 = vshrl.u32 %v220, 16
      %v334 = vshrl.u32 %v254, 16
      %v335 = vpack.i.b16 %v334, %v333
      %v338 = vpack.i.b16 %v253, %v219
      %v339 = vshrl.u32 %v219, 16
      %v340 = vshrl.u32 %v253, 16
      %v341 = vpack.i.b16 %v340, %v339
      %v344 = vpack.i.b16 %v255, %v221
      %v345 = vshrl.u32 %v221, 16
      %v346 = vshrl.u32 %v255, 16
      %v347 = vpack.i.b16 %v346, %v345
      %v350 = vpack.i.b16 %v314, %v280
      %v351 = vshrl.u32 %v280, 16
      %v352 = vshrl.u32 %v314, 16
      %v353 = vpack.i.b16 %v352, %v351
      %v356 = vpack.i.b16 %v322, %v288
      %v357 = vshrl.u32 %v288, 16
      %v358 = vshrl.u32 %v322, 16
      %v359 = vpack.i.b16 %v358, %v357
      %v362 = vpack.i.b16 %v321, %v287
      %v363 = vshrl.u32 %v287, 16
      %v364 = vshrl.u32 %v321, 16
      %v365 = vpack.i.b16 %v364, %v363
      %v368 = vpack.i.b16 %v323, %v289
      %v369 = vshrl.u32 %v289, 16
      %v370 = vshrl.u32 %v323, 16
      %v371 = vpack.i.b16 %v370, %v369
      %v372 = vunpack.c.l.b16 %v326
      %v373 = vunpack.c.l.b16 %v350
      %v374 = vpack.c.b16 %v373, %v372
      %v375 = vunpack.c.l.b16 %v329
      %v376 = vunpack.c.l.b16 %v353
      %v377 = vpack.c.b16 %v376, %v375
      %378 = vrot.lane.b32.xlu0 %v377, 8
      %v379 = vpop.permute.xlu0 %378
      %v380 = vunpack.c.l.b16 %v332
      %v381 = vunpack.c.l.b16 %v356
      %v382 = vpack.c.b16 %v381, %v380
      %383 = vrot.lane.b32.xlu0 %v382, 16
      %v384 = vpop.permute.xlu0 %383
      %v385 = vunpack.c.l.b16 %v335
      %v386 = vunpack.c.l.b16 %v359
      %v387 = vpack.c.b16 %v386, %v385
      %388 = vrot.lane.b32.xlu0 %v387, 24
      %v389 = vpop.permute.xlu0 %388
      %v390 = vunpack.c.l.b16 %v338
      %v391 = vunpack.c.l.b16 %v362
      %v392 = vpack.c.b16 %v391, %v390
      %393 = vrot.lane.b32.xlu0 %v392, 32
      %v394 = vpop.permute.xlu0 %393
      %v395 = vunpack.c.l.b16 %v341
      %v396 = vunpack.c.l.b16 %v365
      %v397 = vpack.c.b16 %v396, %v395
      %398 = vrot.lane.b32.xlu0 %v397, 40
      %v399 = vpop.permute.xlu0 %398
      %v400 = vunpack.c.l.b16 %v344
      %v401 = vunpack.c.l.b16 %v368
      %v402 = vpack.c.b16 %v401, %v400
      %403 = vrot.lane.b32.xlu0 %v402, 48
      %v404 = vpop.permute.xlu0 %403
      %v405 = vunpack.c.l.b16 %v347
      %v406 = vunpack.c.l.b16 %v371
      %v407 = vpack.c.b16 %v406, %v405
      %408 = vrot.lane.b32.xlu0 %v407, 56
      %v409 = vpop.permute.xlu0 %408
      %vm410 = vcmask 64512
      %v413 = vsel %vm410, %v374, %v379
      %vm414 = vcmask 130048
      %v416 = vsel %vm414, %v413, %v384
      %vm417 = vcmask 195584
      %v419 = vsel %vm417, %v416, %v389
      %vm420 = vcmask 261120
      %v422 = vsel %vm420, %v419, %v394
      %vm423 = vcmask 326656
      %v425 = vsel %vm423, %v422, %v399
      %vm426 = vcmask 392192
      %v428 = vsel %vm426, %v425, %v404
      %vm429 = vcmask 457728
      %v431 = vsel %vm429, %v428, %v409
      %v433 = vld [vmem:[%s1] sm:$0xf]
      %v434 = vld [vmem:[%s1 + $0x4] sm:$0xf]
      %s435 = scalar_lea.vmem %s165, 128
      %v436 = vld [vmem:[%s435] sm:$0xf]
      %v437 = vld [vmem:[%s435 + $0x8] sm:$0xf]
      %v438 = vld [vmem:[%s435 + $0x10] sm:$0xf]
      %v439 = vld [vmem:[%s435 + $0x18] sm:$0xf]
      %v440 = vld [vmem:[%s435 + $0x20] sm:$0xf]
      %v441 = vld [vmem:[%s435 + $0x28] sm:$0xf]
      %v442 = vld [vmem:[%s435 + $0x30] sm:$0xf]
      %v443 = vld [vmem:[%s435 + $0x38] sm:$0xf]
      %v444 = vld [vmem:[%s435 + $0x40] sm:$0xf]
      %v445 = vld [vmem:[%s435 + $0x48] sm:$0xf]
      %v446 = vld [vmem:[%s435 + $0x50] sm:$0xf]
      %v447 = vld [vmem:[%s435 + $0x58] sm:$0xf]
      %v448 = vld [vmem:[%s435 + $0x60] sm:$0xf]
      %v449 = vld [vmem:[%s435 + $0x68] sm:$0xf]
      %v450 = vld [vmem:[%s435 + $0x70] sm:$0xf]
      %v451 = vld [vmem:[%s435 + $0x78] sm:$0xf]
      %v452 = vcombine.low %v436, %v440
      %v454 = vunpack.c.l.s4 1983009808
      %v455 = vunpack.c.0.s8 %v454
      %v456 = vlaneseq
      %v457 = vshrl.u32 %v456, 7
      %v458 = vsub.s32 %v455, %v457
      %v459 = vrot.slane %v452, %v458
      %v460 = vcombine.low %v438, %v442
      %v462 = vunpack.c.l.s4 1983009808
      %v463 = vunpack.c.0.s8 %v462
      %v464 = vlaneseq
      %v465 = vshrl.u32 %v464, 7
      %v466 = vsub.s32 %v463, %v465
      %v467 = vrot.slane %v460, %v466
      %v468 = vcombine.low %v459, %v467
      %v469 = vcombine.high %v459, %v467
      %v471 = vunpack.c.l.s4 1934713408
      %v472 = vunpack.c.0.s8 %v471
      %v473 = vlaneseq
      %v474 = vshrl.u32 %v473, 7
      %v475 = vsub.s32 %v472, %v474
      %v476 = vrot.slane %v468, %v475
      %v478 = vunpack.c.l.s4 1934713408
      %v479 = vunpack.c.0.s8 %v478
      %v480 = vlaneseq
      %v481 = vshrl.u32 %v480, 7
      %v482 = vsub.s32 %v479, %v481
      %v483 = vrot.slane %v469, %v482
      %v484 = vcombine.high %v476, 0
      %v485 = vcombine.high %v483, 0
      %v486 = vcombine.low %v437, %v441
      %v488 = vunpack.c.l.s4 1983009808
      %v489 = vunpack.c.0.s8 %v488
      %v490 = vlaneseq
      %v491 = vshrl.u32 %v490, 7
      %v492 = vsub.s32 %v489, %v491
      %v493 = vrot.slane %v486, %v492
      %v494 = vcombine.low %v439, %v443
      %v496 = vunpack.c.l.s4 1983009808
      %v497 = vunpack.c.0.s8 %v496
      %v498 = vlaneseq
      %v499 = vshrl.u32 %v498, 7
      %v500 = vsub.s32 %v497, %v499
      %v501 = vrot.slane %v494, %v500
      %v502 = vcombine.low %v493, %v501
      %v503 = vcombine.high %v493, %v501
      %v505 = vunpack.c.l.s4 1934713408
      %v506 = vunpack.c.0.s8 %v505
      %v507 = vlaneseq
      %v508 = vshrl.u32 %v507, 7
      %v509 = vsub.s32 %v506, %v508
      %v510 = vrot.slane %v502, %v509
      %v512 = vunpack.c.l.s4 1934713408
      %v513 = vunpack.c.0.s8 %v512
      %v514 = vlaneseq
      %v515 = vshrl.u32 %v514, 7
      %v516 = vsub.s32 %v513, %v515
      %v517 = vrot.slane %v503, %v516
      %v518 = vcombine.high %v510, 0
      %v519 = vcombine.high %v517, 0
      %v520 = vcombine.low %v444, %v448
      %v522 = vunpack.c.l.s4 1983009808
      %v523 = vunpack.c.0.s8 %v522
      %v524 = vlaneseq
      %v525 = vshrl.u32 %v524, 7
      %v526 = vsub.s32 %v523, %v525
      %v527 = vrot.slane %v520, %v526
      %v528 = vcombine.low %v446, %v450
      %v530 = vunpack.c.l.s4 1983009808
      %v531 = vunpack.c.0.s8 %v530
      %v532 = vlaneseq
      %v533 = vshrl.u32 %v532, 7
      %v534 = vsub.s32 %v531, %v533
      %v535 = vrot.slane %v528, %v534
      %v536 = vcombine.low %v527, %v535
      %v537 = vcombine.high %v527, %v535
      %v539 = vunpack.c.l.s4 1934713408
      %v540 = vunpack.c.0.s8 %v539
      %v541 = vlaneseq
      %v542 = vshrl.u32 %v541, 7
      %v543 = vsub.s32 %v540, %v542
      %v544 = vrot.slane %v536, %v543
      %v546 = vunpack.c.l.s4 1934713408
      %v547 = vunpack.c.0.s8 %v546
      %v548 = vlaneseq
      %v549 = vshrl.u32 %v548, 7
      %v550 = vsub.s32 %v547, %v549
      %v551 = vrot.slane %v537, %v550
      %v552 = vcombine.high %v544, 0
      %v553 = vcombine.high %v551, 0
      %v554 = vcombine.low %v445, %v449
      %v556 = vunpack.c.l.s4 1983009808
      %v557 = vunpack.c.0.s8 %v556
      %v558 = vlaneseq
      %v559 = vshrl.u32 %v558, 7
      %v560 = vsub.s32 %v557, %v559
      %v561 = vrot.slane %v554, %v560
      %v562 = vcombine.low %v447, %v451
      %v564 = vunpack.c.l.s4 1983009808
      %v565 = vunpack.c.0.s8 %v564
      %v566 = vlaneseq
      %v567 = vshrl.u32 %v566, 7
      %v568 = vsub.s32 %v565, %v567
      %v569 = vrot.slane %v562, %v568
      %v570 = vcombine.low %v561, %v569
      %v571 = vcombine.high %v561, %v569
      %v573 = vunpack.c.l.s4 1934713408
      %v574 = vunpack.c.0.s8 %v573
      %v575 = vlaneseq
      %v576 = vshrl.u32 %v575, 7
      %v577 = vsub.s32 %v574, %v576
      %v578 = vrot.slane %v570, %v577
      %v580 = vunpack.c.l.s4 1934713408
      %v581 = vunpack.c.0.s8 %v580
      %v582 = vlaneseq
      %v583 = vshrl.u32 %v582, 7
      %v584 = vsub.s32 %v581, %v583
      %v585 = vrot.slane %v571, %v584
      %v586 = vcombine.high %v578, 0
      %v587 = vcombine.high %v585, 0
      %v590 = vpack.i.b16 %v510, %v476
      %v591 = vshrl.u32 %v476, 16
      %v592 = vshrl.u32 %v510, 16
      %v593 = vpack.i.b16 %v592, %v591
      %v596 = vpack.i.b16 %v518, %v484
      %v597 = vshrl.u32 %v484, 16
      %v598 = vshrl.u32 %v518, 16
      %v599 = vpack.i.b16 %v598, %v597
      %v602 = vpack.i.b16 %v517, %v483
      %v603 = vshrl.u32 %v483, 16
      %v604 = vshrl.u32 %v517, 16
      %v605 = vpack.i.b16 %v604, %v603
      %v608 = vpack.i.b16 %v519, %v485
      %v609 = vshrl.u32 %v485, 16
      %v610 = vshrl.u32 %v519, 16
      %v611 = vpack.i.b16 %v610, %v609
      %v614 = vpack.i.b16 %v578, %v544
      %v615 = vshrl.u32 %v544, 16
      %v616 = vshrl.u32 %v578, 16
      %v617 = vpack.i.b16 %v616, %v615
      %v620 = vpack.i.b16 %v586, %v552
      %v621 = vshrl.u32 %v552, 16
      %v622 = vshrl.u32 %v586, 16
      %v623 = vpack.i.b16 %v622, %v621
      %v626 = vpack.i.b16 %v585, %v551
      %v627 = vshrl.u32 %v551, 16
      %v628 = vshrl.u32 %v585, 16
      %v629 = vpack.i.b16 %v628, %v627
      %v632 = vpack.i.b16 %v587, %v553
      %v633 = vshrl.u32 %v553, 16
      %v634 = vshrl.u32 %v587, 16
      %v635 = vpack.i.b16 %v634, %v633
      %v636 = vunpack.c.l.b16 %v590
      %v637 = vunpack.c.l.b16 %v614
      %v638 = vpack.c.b16 %v637, %v636
      %v639 = vunpack.c.l.b16 %v593
      %v640 = vunpack.c.l.b16 %v617
      %v641 = vpack.c.b16 %v640, %v639
      %642 = vrot.lane.b32.xlu0 %v641, 8
      %v643 = vpop.permute.xlu0 %642
      %v644 = vunpack.c.l.b16 %v596
      %v645 = vunpack.c.l.b16 %v620
      %v646 = vpack.c.b16 %v645, %v644
      %647 = vrot.lane.b32.xlu0 %v646, 16
      %v648 = vpop.permute.xlu0 %647
      %v649 = vunpack.c.l.b16 %v599
      %v650 = vunpack.c.l.b16 %v623
      %v651 = vpack.c.b16 %v650, %v649
      %652 = vrot.lane.b32.xlu0 %v651, 24
      %v653 = vpop.permute.xlu0 %652
      %v654 = vunpack.c.l.b16 %v602
      %v655 = vunpack.c.l.b16 %v626
      %v656 = vpack.c.b16 %v655, %v654
      %657 = vrot.lane.b32.xlu0 %v656, 32
      %v658 = vpop.permute.xlu0 %657
      %v659 = vunpack.c.l.b16 %v605
      %v660 = vunpack.c.l.b16 %v629
      %v661 = vpack.c.b16 %v660, %v659
      %662 = vrot.lane.b32.xlu0 %v661, 40
      %v663 = vpop.permute.xlu0 %662
      %v664 = vunpack.c.l.b16 %v608
      %v665 = vunpack.c.l.b16 %v632
      %v666 = vpack.c.b16 %v665, %v664
      %667 = vrot.lane.b32.xlu0 %v666, 48
      %v668 = vpop.permute.xlu0 %667
      %v669 = vunpack.c.l.b16 %v611
      %v670 = vunpack.c.l.b16 %v635
      %v671 = vpack.c.b16 %v670, %v669
      %672 = vrot.lane.b32.xlu0 %v671, 56
      %v673 = vpop.permute.xlu0 %672
      %v676 = vsel %vm410, %v638, %v643
      %v678 = vsel %vm414, %v676, %v648
      %v680 = vsel %vm417, %v678, %v653
      %v682 = vsel %vm420, %v680, %v658
      %v684 = vsel %vm423, %v682, %v663
      %v686 = vsel %vm426, %v684, %v668
      %v688 = vsel %vm429, %v686, %v673
      %s690 = scalar_lea.vmem %s1, 8
      %v691 = vld [vmem:[%s690] sm:$0xf]
      %v692 = vld [vmem:[%s690 + $0x4] sm:$0xf]
      %v695 = vunpack.c.l.b16 %v691
      %v696 = vunpack.c.l.b16 %v692
      %v697 = vpack.c.b16 %v696, %v695
      %v699 = vsel %vm414, %v697, 0
      %701 = vmatprep.subr.bf16.mxu0 0
      %702 = vmatpush1.bf16.msra.mxu0 %v688
      %703 = vmatprep.subr.bf16.mxu0 0
      %704 = vmatpush1.bf16.msra.mxu0 0
      %705 = vmatprep.subr.bf16.mxu0 0
      %706 = vmatpush1.bf16.msra.mxu0 0
      %707 = vmatprep.subr.bf16.mxu0 0
      %708 = vmatpush1.bf16.msra.mxu0 0
      %709 = vmatprep.subr.bf16.mxu0 0
      %710 = vmatpush1.bf16.msra.mxu0 0
      %711 = vmatprep.subr.bf16.mxu0 0
      %712 = vmatpush1.bf16.msra.mxu0 0
      %713 = vmatprep.subr.bf16.mxu0 0
      %714 = vmatpush1.bf16.msra.mxu0 0
      %715 = vmatprep.subr.bf16.mxu0 0
      %716 = vmatpush1.bf16.msra.mxu0 0
      %717 = vmatprep.subr.bf16.mxu0 0
      %718 = vmatpush1.bf16.msra.mxu0 0
      %719 = vmatprep.subr.bf16.mxu0 0
      %720 = vmatpush1.bf16.msra.mxu0 0
      %721 = vmatprep.subr.bf16.mxu0 0
      %722 = vmatpush1.bf16.msra.mxu0 0
      %723 = vmatprep.subr.bf16.mxu0 0
      %724 = vmatpush1.bf16.msra.mxu0 0
      %725 = vmatprep.subr.bf16.mxu0 0
      %726 = vmatpush1.bf16.msra.mxu0 0
      %727 = vmatprep.subr.bf16.mxu0 0
      %728 = vmatpush1.bf16.msra.mxu0 0
      %729 = vmatprep.subr.bf16.mxu0 0
      %730 = vmatpush1.bf16.msra.mxu0 0
      %731 = vmatprep.subr.bf16.mxu0 0
      %732 = vmatpush1.bf16.msra.mxu0 0
      %733 = vmatprep.mubr.bf16.mxu0 0
      %734 = vmatmul.mubr.bf16.gmra.mrb[0].mxu0 %v699
      %v735 = vpop.f32.mrb[0].mxu0
      %v736 = vadd.f32 0.0, %v735
      %v737 = vpop.f32.mrb[0].mxu0
      %v738 = vpop.f32.mrb[0].mxu0
      %v739 = vadd.f32 0.0, %v738
      %v740 = vpop.f32.mrb[0].mxu0
      %741 = vdwg.mxu0
      %v744 = vunpack.c.l.b16 %v433
      %v745 = vunpack.c.l.b16 %v434
      %v746 = vpack.c.b16 %v745, %v744
      %v748 = vsel %vm414, %v746, 0
      %750 = vmatprep.subr.bf16.mxu0 0
      %751 = vmatpush1.bf16.msra.mxu0 %v431
      %752 = vmatprep.subr.bf16.mxu0 0
      %753 = vmatpush1.bf16.msra.mxu0 0
      %754 = vmatprep.subr.bf16.mxu0 0
      %755 = vmatpush1.bf16.msra.mxu0 0
      %756 = vmatprep.subr.bf16.mxu0 0
      %757 = vmatpush1.bf16.msra.mxu0 0
      %758 = vmatprep.subr.bf16.mxu0 0
      %759 = vmatpush1.bf16.msra.mxu0 0
      %760 = vmatprep.subr.bf16.mxu0 0
      %761 = vmatpush1.bf16.msra.mxu0 0
      %762 = vmatprep.subr.bf16.mxu0 0
      %763 = vmatpush1.bf16.msra.mxu0 0
      %764 = vmatprep.subr.bf16.mxu0 0
      %765 = vmatpush1.bf16.msra.mxu0 0
      %766 = vmatprep.subr.bf16.mxu0 0
      %767 = vmatpush1.bf16.msra.mxu0 0
      %768 = vmatprep.subr.bf16.mxu0 0
      %769 = vmatpush1.bf16.msra.mxu0 0
      %770 = vmatprep.subr.bf16.mxu0 0
      %771 = vmatpush1.bf16.msra.mxu0 0
      %772 = vmatprep.subr.bf16.mxu0 0
      %773 = vmatpush1.bf16.msra.mxu0 0
      %774 = vmatprep.subr.bf16.mxu0 0
      %775 = vmatpush1.bf16.msra.mxu0 0
      %776 = vmatprep.subr.bf16.mxu0 0
      %777 = vmatpush1.bf16.msra.mxu0 0
      %778 = vmatprep.subr.bf16.mxu0 0
      %779 = vmatpush1.bf16.msra.mxu0 0
      %780 = vmatprep.subr.bf16.mxu0 0
      %781 = vmatpush1.bf16.msra.mxu0 0
      %782 = vmatprep.mubr.bf16.mxu0 0
      %783 = vmatmul.mubr.bf16.gmra.mrb[0].mxu0 %v748
      %v784 = vpop.f32.mrb[0].mxu0
      %v785 = vadd.f32 %v736, %v784
      %v786 = vpop.f32.mrb[0].mxu0
      %v787 = vpop.f32.mrb[0].mxu0
      %v788 = vadd.f32 %v739, %v787
      %v789 = vpop.f32.mrb[0].mxu0
      %790 = vdwg.mxu0
      %v791 = vld [vmem:[%s165] sm:$0xf]
      %v792 = vld [vmem:[%s165 + $0x8] sm:$0xf]
      %v793 = vld [vmem:[%s165 + $0x10] sm:$0xf]
      %v794 = vld [vmem:[%s165 + $0x18] sm:$0xf]
      %v795 = vld [vmem:[%s165 + $0x20] sm:$0xf]
      %v796 = vld [vmem:[%s165 + $0x28] sm:$0xf]
      %v797 = vld [vmem:[%s165 + $0x30] sm:$0xf]
      %v798 = vld [vmem:[%s165 + $0x38] sm:$0xf]
      %v799 = vld [vmem:[%s165 + $0x40] sm:$0xf]
      %v800 = vld [vmem:[%s165 + $0x48] sm:$0xf]
      %v801 = vld [vmem:[%s165 + $0x50] sm:$0xf]
      %v802 = vld [vmem:[%s165 + $0x58] sm:$0xf]
      %v803 = vld [vmem:[%s165 + $0x60] sm:$0xf]
      %v804 = vld [vmem:[%s165 + $0x68] sm:$0xf]
      %v805 = vld [vmem:[%s165 + $0x70] sm:$0xf]
      %v806 = vld [vmem:[%s165 + $0x78] sm:$0xf]
      %823 = vrot.lane.b32.xlu0 %v791, 127
      %v824 = vpop.permute.xlu0 %823
      %825 = vrot.lane.b32.xlu0 %v792, 127
      %v826 = vpop.permute.xlu0 %825
      %827 = vrot.lane.b32.xlu0 %v793, 127
      %v828 = vpop.permute.xlu0 %827
      %829 = vrot.lane.b32.xlu0 %v794, 127
      %v830 = vpop.permute.xlu0 %829
      %831 = vrot.lane.b32.xlu0 %v795, 127
      %v832 = vpop.permute.xlu0 %831
      %833 = vrot.lane.b32.xlu0 %v796, 127
      %v834 = vpop.permute.xlu0 %833
      %835 = vrot.lane.b32.xlu0 %v797, 127
      %v836 = vpop.permute.xlu0 %835
      %837 = vrot.lane.b32.xlu0 %v798, 127
      %v838 = vpop.permute.xlu0 %837
      %839 = vrot.lane.b32.xlu0 %v799, 127
      %v840 = vpop.permute.xlu0 %839
      %841 = vrot.lane.b32.xlu0 %v800, 127
      %v842 = vpop.permute.xlu0 %841
      %843 = vrot.lane.b32.xlu0 %v801, 127
      %v844 = vpop.permute.xlu0 %843
      %845 = vrot.lane.b32.xlu0 %v802, 127
      %v846 = vpop.permute.xlu0 %845
      %847 = vrot.lane.b32.xlu0 %v803, 127
      %v848 = vpop.permute.xlu0 %847
      %849 = vrot.lane.b32.xlu0 %v804, 127
      %v850 = vpop.permute.xlu0 %849
      %851 = vrot.lane.b32.xlu0 %v805, 127
      %v852 = vpop.permute.xlu0 %851
      %853 = vrot.lane.b32.xlu0 %v806, 127
      %v854 = vpop.permute.xlu0 %853
      %v871 = vcombine.low %v824, %v832
      %v873 = vunpack.c.l.s4 1983009808
      %v874 = vunpack.c.0.s8 %v873
      %v875 = vlaneseq
      %v876 = vshrl.u32 %v875, 7
      %v877 = vsub.s32 %v874, %v876
      %v878 = vrot.slane %v871, %v877
      %v879 = vcombine.low %v828, %v836
      %v881 = vunpack.c.l.s4 1983009808
      %v882 = vunpack.c.0.s8 %v881
      %v883 = vlaneseq
      %v884 = vshrl.u32 %v883, 7
      %v885 = vsub.s32 %v882, %v884
      %v886 = vrot.slane %v879, %v885
      %v887 = vcombine.low %v878, %v886
      %v888 = vcombine.high %v878, %v886
      %v890 = vunpack.c.l.s4 1934713408
      %v891 = vunpack.c.0.s8 %v890
      %v892 = vlaneseq
      %v893 = vshrl.u32 %v892, 7
      %v894 = vsub.s32 %v891, %v893
      %v895 = vrot.slane %v887, %v894
      %v897 = vunpack.c.l.s4 1934713408
      %v898 = vunpack.c.0.s8 %v897
      %v899 = vlaneseq
      %v900 = vshrl.u32 %v899, 7
      %v901 = vsub.s32 %v898, %v900
      %v902 = vrot.slane %v888, %v901
      %v903 = vcombine.high %v895, 0
      %v904 = vcombine.high %v902, 0
      %v905 = vcombine.low %v826, %v834
      %v907 = vunpack.c.l.s4 1983009808
      %v908 = vunpack.c.0.s8 %v907
      %v909 = vlaneseq
      %v910 = vshrl.u32 %v909, 7
      %v911 = vsub.s32 %v908, %v910
      %v912 = vrot.slane %v905, %v911
      %v913 = vcombine.low %v830, %v838
      %v915 = vunpack.c.l.s4 1983009808
      %v916 = vunpack.c.0.s8 %v915
      %v917 = vlaneseq
      %v918 = vshrl.u32 %v917, 7
      %v919 = vsub.s32 %v916, %v918
      %v920 = vrot.slane %v913, %v919
      %v921 = vcombine.low %v912, %v920
      %v922 = vcombine.high %v912, %v920
      %v924 = vunpack.c.l.s4 1934713408
      %v925 = vunpack.c.0.s8 %v924
      %v926 = vlaneseq
      %v927 = vshrl.u32 %v926, 7
      %v928 = vsub.s32 %v925, %v927
      %v929 = vrot.slane %v921, %v928
      %v931 = vunpack.c.l.s4 1934713408
      %v932 = vunpack.c.0.s8 %v931
      %v933 = vlaneseq
      %v934 = vshrl.u32 %v933, 7
      %v935 = vsub.s32 %v932, %v934
      %v936 = vrot.slane %v922, %v935
      %v937 = vcombine.high %v929, 0
      %v938 = vcombine.high %v936, 0
      %v939 = vcombine.low %v840, %v848
      %v941 = vunpack.c.l.s4 1983009808
      %v942 = vunpack.c.0.s8 %v941
      %v943 = vlaneseq
      %v944 = vshrl.u32 %v943, 7
      %v945 = vsub.s32 %v942, %v944
      %v946 = vrot.slane %v939, %v945
      %v947 = vcombine.low %v844, %v852
      %v949 = vunpack.c.l.s4 1983009808
      %v950 = vunpack.c.0.s8 %v949
      %v951 = vlaneseq
      %v952 = vshrl.u32 %v951, 7
      %v953 = vsub.s32 %v950, %v952
      %v954 = vrot.slane %v947, %v953
      %v955 = vcombine.low %v946, %v954
      %v956 = vcombine.high %v946, %v954
      %v958 = vunpack.c.l.s4 1934713408
      %v959 = vunpack.c.0.s8 %v958
      %v960 = vlaneseq
      %v961 = vshrl.u32 %v960, 7
      %v962 = vsub.s32 %v959, %v961
      %v963 = vrot.slane %v955, %v962
      %v965 = vunpack.c.l.s4 1934713408
      %v966 = vunpack.c.0.s8 %v965
      %v967 = vlaneseq
      %v968 = vshrl.u32 %v967, 7
      %v969 = vsub.s32 %v966, %v968
      %v970 = vrot.slane %v956, %v969
      %v971 = vcombine.high %v963, 0
      %v972 = vcombine.high %v970, 0
      %v973 = vcombine.low %v842, %v850
      %v975 = vunpack.c.l.s4 1983009808
      %v976 = vunpack.c.0.s8 %v975
      %v977 = vlaneseq
      %v978 = vshrl.u32 %v977, 7
      %v979 = vsub.s32 %v976, %v978
      %v980 = vrot.slane %v973, %v979
      %v981 = vcombine.low %v846, %v854
      %v983 = vunpack.c.l.s4 1983009808
      %v984 = vunpack.c.0.s8 %v983
      %v985 = vlaneseq
      %v986 = vshrl.u32 %v985, 7
      %v987 = vsub.s32 %v984, %v986
      %v988 = vrot.slane %v981, %v987
      %v989 = vcombine.low %v980, %v988
      %v990 = vcombine.high %v980, %v988
      %v992 = vunpack.c.l.s4 1934713408
      %v993 = vunpack.c.0.s8 %v992
      %v994 = vlaneseq
      %v995 = vshrl.u32 %v994, 7
      %v996 = vsub.s32 %v993, %v995
      %v997 = vrot.slane %v989, %v996
      %v999 = vunpack.c.l.s4 1934713408
      %v1000 = vunpack.c.0.s8 %v999
      %v1001 = vlaneseq
      %v1002 = vshrl.u32 %v1001, 7
      %v1003 = vsub.s32 %v1000, %v1002
      %v1004 = vrot.slane %v990, %v1003
      %v1005 = vcombine.high %v997, 0
      %v1006 = vcombine.high %v1004, 0
      %v1009 = vpack.i.b16 %v929, %v895
      %v1010 = vshrl.u32 %v895, 16
      %v1011 = vshrl.u32 %v929, 16
      %v1012 = vpack.i.b16 %v1011, %v1010
      %v1015 = vpack.i.b16 %v937, %v903
      %v1016 = vshrl.u32 %v903, 16
      %v1017 = vshrl.u32 %v937, 16
      %v1018 = vpack.i.b16 %v1017, %v1016
      %v1021 = vpack.i.b16 %v936, %v902
      %v1022 = vshrl.u32 %v902, 16
      %v1023 = vshrl.u32 %v936, 16
      %v1024 = vpack.i.b16 %v1023, %v1022
      %v1027 = vpack.i.b16 %v938, %v904
      %v1028 = vshrl.u32 %v904, 16
      %v1029 = vshrl.u32 %v938, 16
      %v1030 = vpack.i.b16 %v1029, %v1028
      %v1033 = vpack.i.b16 %v997, %v963
      %v1034 = vshrl.u32 %v963, 16
      %v1035 = vshrl.u32 %v997, 16
      %v1036 = vpack.i.b16 %v1035, %v1034
      %v1039 = vpack.i.b16 %v1005, %v971
      %v1040 = vshrl.u32 %v971, 16
      %v1041 = vshrl.u32 %v1005, 16
      %v1042 = vpack.i.b16 %v1041, %v1040
      %v1045 = vpack.i.b16 %v1004, %v970
      %v1046 = vshrl.u32 %v970, 16
      %v1047 = vshrl.u32 %v1004, 16
      %v1048 = vpack.i.b16 %v1047, %v1046
      %v1051 = vpack.i.b16 %v1006, %v972
      %v1052 = vshrl.u32 %v972, 16
      %v1053 = vshrl.u32 %v1006, 16
      %v1054 = vpack.i.b16 %v1053, %v1052
      %v1055 = vunpack.c.l.b16 %v1009
      %v1056 = vunpack.c.l.b16 %v1033
      %v1057 = vpack.c.b16 %v1056, %v1055
      %v1058 = vunpack.c.l.b16 %v1012
      %v1059 = vunpack.c.l.b16 %v1036
      %v1060 = vpack.c.b16 %v1059, %v1058
      %1061 = vrot.lane.b32.xlu0 %v1060, 8
      %v1062 = vpop.permute.xlu0 %1061
      %v1063 = vunpack.c.l.b16 %v1015
      %v1064 = vunpack.c.l.b16 %v1039
      %v1065 = vpack.c.b16 %v1064, %v1063
      %1066 = vrot.lane.b32.xlu0 %v1065, 16
      %v1067 = vpop.permute.xlu0 %1066
      %v1068 = vunpack.c.l.b16 %v1018
      %v1069 = vunpack.c.l.b16 %v1042
      %v1070 = vpack.c.b16 %v1069, %v1068
      %1071 = vrot.lane.b32.xlu0 %v1070, 24
      %v1072 = vpop.permute.xlu0 %1071
      %v1073 = vunpack.c.l.b16 %v1021
      %v1074 = vunpack.c.l.b16 %v1045
      %v1075 = vpack.c.b16 %v1074, %v1073
      %1076 = vrot.lane.b32.xlu0 %v1075, 32
      %v1077 = vpop.permute.xlu0 %1076
      %v1078 = vunpack.c.l.b16 %v1024
      %v1079 = vunpack.c.l.b16 %v1048
      %v1080 = vpack.c.b16 %v1079, %v1078
      %1081 = vrot.lane.b32.xlu0 %v1080, 40
      %v1082 = vpop.permute.xlu0 %1081
      %v1083 = vunpack.c.l.b16 %v1027
      %v1084 = vunpack.c.l.b16 %v1051
      %v1085 = vpack.c.b16 %v1084, %v1083
      %1086 = vrot.lane.b32.xlu0 %v1085, 48
      %v1087 = vpop.permute.xlu0 %1086
      %v1088 = vunpack.c.l.b16 %v1030
      %v1089 = vunpack.c.l.b16 %v1054
      %v1090 = vpack.c.b16 %v1089, %v1088
      %1091 = vrot.lane.b32.xlu0 %v1090, 56
      %v1092 = vpop.permute.xlu0 %1091
      %v1095 = vsel %vm410, %v1057, %v1062
      %v1097 = vsel %vm414, %v1095, %v1067
      %v1099 = vsel %vm417, %v1097, %v1072
      %v1101 = vsel %vm420, %v1099, %v1077
      %v1103 = vsel %vm423, %v1101, %v1082
      %v1105 = vsel %vm426, %v1103, %v1087
      %v1107 = vsel %vm429, %v1105, %v1092
      %s1109 = scalar_lea.vmem %s1, 16
      %v1110 = vld [vmem:[%s1109] sm:$0xf]
      %v1111 = vld [vmem:[%s1109 + $0x4] sm:$0xf]
      %v1114 = vunpack.c.l.b16 %v1110
      %v1115 = vunpack.c.l.b16 %v1111
      %v1116 = vpack.c.b16 %v1115, %v1114
      %v1118 = vsel %vm414, %v1116, 0
      %1120 = vmatprep.subr.bf16.mxu0 0
      %1121 = vmatpush1.bf16.msra.mxu0 %v1107
      %1122 = vmatprep.subr.bf16.mxu0 0
      %1123 = vmatpush1.bf16.msra.mxu0 0
      %1124 = vmatprep.subr.bf16.mxu0 0
      %1125 = vmatpush1.bf16.msra.mxu0 0
      %1126 = vmatprep.subr.bf16.mxu0 0
      %1127 = vmatpush1.bf16.msra.mxu0 0
      %1128 = vmatprep.subr.bf16.mxu0 0
      %1129 = vmatpush1.bf16.msra.mxu0 0
      %1130 = vmatprep.subr.bf16.mxu0 0
      %1131 = vmatpush1.bf16.msra.mxu0 0
      %1132 = vmatprep.subr.bf16.mxu0 0
      %1133 = vmatpush1.bf16.msra.mxu0 0
      %1134 = vmatprep.subr.bf16.mxu0 0
      %1135 = vmatpush1.bf16.msra.mxu0 0
      %1136 = vmatprep.subr.bf16.mxu0 0
      %1137 = vmatpush1.bf16.msra.mxu0 0
      %1138 = vmatprep.subr.bf16.mxu0 0
      %1139 = vmatpush1.bf16.msra.mxu0 0
      %1140 = vmatprep.subr.bf16.mxu0 0
      %1141 = vmatpush1.bf16.msra.mxu0 0
      %1142 = vmatprep.subr.bf16.mxu0 0
      %1143 = vmatpush1.bf16.msra.mxu0 0
      %1144 = vmatprep.subr.bf16.mxu0 0
      %1145 = vmatpush1.bf16.msra.mxu0 0
      %1146 = vmatprep.subr.bf16.mxu0 0
      %1147 = vmatpush1.bf16.msra.mxu0 0
      %1148 = vmatprep.subr.bf16.mxu0 0
      %1149 = vmatpush1.bf16.msra.mxu0 0
      %1150 = vmatprep.subr.bf16.mxu0 0
      %1151 = vmatpush1.bf16.msra.mxu0 0
      %1152 = vmatprep.mubr.bf16.mxu0 0
      %1153 = vmatmul.mubr.bf16.gmra.mrb[0].mxu0 %v1118
      %v1154 = vpop.f32.mrb[0].mxu0
      %v1155 = vadd.f32 0.0, %v1154
      %v1156 = vpop.f32.mrb[0].mxu0
      %v1157 = vpop.f32.mrb[0].mxu0
      %v1158 = vadd.f32 0.0, %v1157
      %v1159 = vpop.f32.mrb[0].mxu0
      %1160 = vdwg.mxu0
      %v1161 = vadd.f32 %v785, %v1155
      %v1162 = vadd.f32 %v788, %v1158
      %s1163 = scalar_lea.vmem %s165, 256
      %v1164 = vld [vmem:[%s1163] sm:$0xf]
      %v1165 = vld [vmem:[%s1163 + $0x8] sm:$0xf]
      %v1166 = vld [vmem:[%s1163 + $0x10] sm:$0xf]
      %v1167 = vld [vmem:[%s1163 + $0x18] sm:$0xf]
      %v1168 = vld [vmem:[%s1163 + $0x20] sm:$0xf]
      %v1169 = vld [vmem:[%s1163 + $0x28] sm:$0xf]
      %v1170 = vld [vmem:[%s1163 + $0x30] sm:$0xf]
      %v1171 = vld [vmem:[%s1163 + $0x38] sm:$0xf]
      %v1172 = vld [vmem:[%s1163 + $0x40] sm:$0xf]
      %v1173 = vld [vmem:[%s1163 + $0x48] sm:$0xf]
      %v1174 = vld [vmem:[%s1163 + $0x50] sm:$0xf]
      %v1175 = vld [vmem:[%s1163 + $0x58] sm:$0xf]
      %v1176 = vld [vmem:[%s1163 + $0x60] sm:$0xf]
      %v1177 = vld [vmem:[%s1163 + $0x68] sm:$0xf]
      %v1178 = vld [vmem:[%s1163 + $0x70] sm:$0xf]
      %v1179 = vld [vmem:[%s1163 + $0x78] sm:$0xf]
      %v1180 = vcombine.low %v1164, %v1168
      %v1182 = vunpack.c.l.s4 1983009808
      %v1183 = vunpack.c.0.s8 %v1182
      %v1184 = vlaneseq
      %v1185 = vshrl.u32 %v1184, 7
      %v1186 = vsub.s32 %v1183, %v1185
      %v1187 = vrot.slane %v1180, %v1186
      %v1188 = vcombine.low %v1166, %v1170
      %v1190 = vunpack.c.l.s4 1983009808
      %v1191 = vunpack.c.0.s8 %v1190
      %v1192 = vlaneseq
      %v1193 = vshrl.u32 %v1192, 7
      %v1194 = vsub.s32 %v1191, %v1193
      %v1195 = vrot.slane %v1188, %v1194
      %v1196 = vcombine.low %v1187, %v1195
      %v1197 = vcombine.high %v1187, %v1195
      %v1199 = vunpack.c.l.s4 1934713408
      %v1200 = vunpack.c.0.s8 %v1199
      %v1201 = vlaneseq
      %v1202 = vshrl.u32 %v1201, 7
      %v1203 = vsub.s32 %v1200, %v1202
      %v1204 = vrot.slane %v1196, %v1203
      %v1206 = vunpack.c.l.s4 1934713408
      %v1207 = vunpack.c.0.s8 %v1206
      %v1208 = vlaneseq
      %v1209 = vshrl.u32 %v1208, 7
      %v1210 = vsub.s32 %v1207, %v1209
      %v1211 = vrot.slane %v1197, %v1210
      %v1212 = vcombine.high %v1204, 0
      %v1213 = vcombine.high %v1211, 0
      %v1214 = vcombine.low %v1165, %v1169
      %v1216 = vunpack.c.l.s4 1983009808
      %v1217 = vunpack.c.0.s8 %v1216
      %v1218 = vlaneseq
      %v1219 = vshrl.u32 %v1218, 7
      %v1220 = vsub.s32 %v1217, %v1219
      %v1221 = vrot.slane %v1214, %v1220
      %v1222 = vcombine.low %v1167, %v1171
      %v1224 = vunpack.c.l.s4 1983009808
      %v1225 = vunpack.c.0.s8 %v1224
      %v1226 = vlaneseq
      %v1227 = vshrl.u32 %v1226, 7
      %v1228 = vsub.s32 %v1225, %v1227
      %v1229 = vrot.slane %v1222, %v1228
      %v1230 = vcombine.low %v1221, %v1229
      %v1231 = vcombine.high %v1221, %v1229
      %v1233 = vunpack.c.l.s4 1934713408
      %v1234 = vunpack.c.0.s8 %v1233
      %v1235 = vlaneseq
      %v1236 = vshrl.u32 %v1235, 7
      %v1237 = vsub.s32 %v1234, %v1236
      %v1238 = vrot.slane %v1230, %v1237
      %v1240 = vunpack.c.l.s4 1934713408
      %v1241 = vunpack.c.0.s8 %v1240
      %v1242 = vlaneseq
      %v1243 = vshrl.u32 %v1242, 7
      %v1244 = vsub.s32 %v1241, %v1243
      %v1245 = vrot.slane %v1231, %v1244
      %v1246 = vcombine.high %v1238, 0
      %v1247 = vcombine.high %v1245, 0
      %v1248 = vcombine.low %v1172, %v1176
      %v1250 = vunpack.c.l.s4 1983009808
      %v1251 = vunpack.c.0.s8 %v1250
      %v1252 = vlaneseq
      %v1253 = vshrl.u32 %v1252, 7
      %v1254 = vsub.s32 %v1251, %v1253
      %v1255 = vrot.slane %v1248, %v1254
      %v1256 = vcombine.low %v1174, %v1178
      %v1258 = vunpack.c.l.s4 1983009808
      %v1259 = vunpack.c.0.s8 %v1258
      %v1260 = vlaneseq
      %v1261 = vshrl.u32 %v1260, 7
      %v1262 = vsub.s32 %v1259, %v1261
      %v1263 = vrot.slane %v1256, %v1262
      %v1264 = vcombine.low %v1255, %v1263
      %v1265 = vcombine.high %v1255, %v1263
      %v1267 = vunpack.c.l.s4 1934713408
      %v1268 = vunpack.c.0.s8 %v1267
      %v1269 = vlaneseq
      %v1270 = vshrl.u32 %v1269, 7
      %v1271 = vsub.s32 %v1268, %v1270
      %v1272 = vrot.slane %v1264, %v1271
      %v1274 = vunpack.c.l.s4 1934713408
      %v1275 = vunpack.c.0.s8 %v1274
      %v1276 = vlaneseq
      %v1277 = vshrl.u32 %v1276, 7
      %v1278 = vsub.s32 %v1275, %v1277
      %v1279 = vrot.slane %v1265, %v1278
      %v1280 = vcombine.high %v1272, 0
      %v1281 = vcombine.high %v1279, 0
      %v1282 = vcombine.low %v1173, %v1177
      %v1284 = vunpack.c.l.s4 1983009808
      %v1285 = vunpack.c.0.s8 %v1284
      %v1286 = vlaneseq
      %v1287 = vshrl.u32 %v1286, 7
      %v1288 = vsub.s32 %v1285, %v1287
      %v1289 = vrot.slane %v1282, %v1288
      %v1290 = vcombine.low %v1175, %v1179
      %v1292 = vunpack.c.l.s4 1983009808
      %v1293 = vunpack.c.0.s8 %v1292
      %v1294 = vlaneseq
      %v1295 = vshrl.u32 %v1294, 7
      %v1296 = vsub.s32 %v1293, %v1295
      %v1297 = vrot.slane %v1290, %v1296
      %v1298 = vcombine.low %v1289, %v1297
      %v1299 = vcombine.high %v1289, %v1297
      %v1301 = vunpack.c.l.s4 1934713408
      %v1302 = vunpack.c.0.s8 %v1301
      %v1303 = vlaneseq
      %v1304 = vshrl.u32 %v1303, 7
      %v1305 = vsub.s32 %v1302, %v1304
      %v1306 = vrot.slane %v1298, %v1305
      %v1308 = vunpack.c.l.s4 1934713408
      %v1309 = vunpack.c.0.s8 %v1308
      %v1310 = vlaneseq
      %v1311 = vshrl.u32 %v1310, 7
      %v1312 = vsub.s32 %v1309, %v1311
      %v1313 = vrot.slane %v1299, %v1312
      %v1314 = vcombine.high %v1306, 0
      %v1315 = vcombine.high %v1313, 0
      %v1318 = vpack.i.b16 %v1238, %v1204
      %v1319 = vshrl.u32 %v1204, 16
      %v1320 = vshrl.u32 %v1238, 16
      %v1321 = vpack.i.b16 %v1320, %v1319
      %v1324 = vpack.i.b16 %v1246, %v1212
      %v1325 = vshrl.u32 %v1212, 16
      %v1326 = vshrl.u32 %v1246, 16
      %v1327 = vpack.i.b16 %v1326, %v1325
      %v1330 = vpack.i.b16 %v1245, %v1211
      %v1331 = vshrl.u32 %v1211, 16
      %v1332 = vshrl.u32 %v1245, 16
      %v1333 = vpack.i.b16 %v1332, %v1331
      %v1336 = vpack.i.b16 %v1247, %v1213
      %v1337 = vshrl.u32 %v1213, 16
      %v1338 = vshrl.u32 %v1247, 16
      %v1339 = vpack.i.b16 %v1338, %v1337
      %v1342 = vpack.i.b16 %v1306, %v1272
      %v1343 = vshrl.u32 %v1272, 16
      %v1344 = vshrl.u32 %v1306, 16
      %v1345 = vpack.i.b16 %v1344, %v1343
      %v1348 = vpack.i.b16 %v1314, %v1280
      %v1349 = vshrl.u32 %v1280, 16
      %v1350 = vshrl.u32 %v1314, 16
      %v1351 = vpack.i.b16 %v1350, %v1349
      %v1354 = vpack.i.b16 %v1313, %v1279
      %v1355 = vshrl.u32 %v1279, 16
      %v1356 = vshrl.u32 %v1313, 16
      %v1357 = vpack.i.b16 %v1356, %v1355
      %v1360 = vpack.i.b16 %v1315, %v1281
      %v1361 = vshrl.u32 %v1281, 16
      %v1362 = vshrl.u32 %v1315, 16
      %v1363 = vpack.i.b16 %v1362, %v1361
      %v1364 = vunpack.c.l.b16 %v1318
      %v1365 = vunpack.c.l.b16 %v1342
      %v1366 = vpack.c.b16 %v1365, %v1364
      %v1367 = vunpack.c.l.b16 %v1321
      %v1368 = vunpack.c.l.b16 %v1345
      %v1369 = vpack.c.b16 %v1368, %v1367
      %1370 = vrot.lane.b32.xlu0 %v1369, 8
      %v1371 = vpop.permute.xlu0 %1370
      %v1372 = vunpack.c.l.b16 %v1324
      %v1373 = vunpack.c.l.b16 %v1348
      %v1374 = vpack.c.b16 %v1373, %v1372
      %1375 = vrot.lane.b32.xlu0 %v1374, 16
      %v1376 = vpop.permute.xlu0 %1375
      %v1377 = vunpack.c.l.b16 %v1327
      %v1378 = vunpack.c.l.b16 %v1351
      %v1379 = vpack.c.b16 %v1378, %v1377
      %1380 = vrot.lane.b32.xlu0 %v1379, 24
      %v1381 = vpop.permute.xlu0 %1380
      %v1382 = vunpack.c.l.b16 %v1330
      %v1383 = vunpack.c.l.b16 %v1354
      %v1384 = vpack.c.b16 %v1383, %v1382
      %1385 = vrot.lane.b32.xlu0 %v1384, 32
      %v1386 = vpop.permute.xlu0 %1385
      %v1387 = vunpack.c.l.b16 %v1333
      %v1388 = vunpack.c.l.b16 %v1357
      %v1389 = vpack.c.b16 %v1388, %v1387
      %1390 = vrot.lane.b32.xlu0 %v1389, 40
      %v1391 = vpop.permute.xlu0 %1390
      %v1392 = vunpack.c.l.b16 %v1336
      %v1393 = vunpack.c.l.b16 %v1360
      %v1394 = vpack.c.b16 %v1393, %v1392
      %1395 = vrot.lane.b32.xlu0 %v1394, 48
      %v1396 = vpop.permute.xlu0 %1395
      %v1397 = vunpack.c.l.b16 %v1339
      %v1398 = vunpack.c.l.b16 %v1363
      %v1399 = vpack.c.b16 %v1398, %v1397
      %1400 = vrot.lane.b32.xlu0 %v1399, 56
      %v1401 = vpop.permute.xlu0 %1400
      %v1404 = vsel %vm410, %v1366, %v1371
      %v1406 = vsel %vm414, %v1404, %v1376
      %v1408 = vsel %vm417, %v1406, %v1381
      %v1410 = vsel %vm420, %v1408, %v1386
      %v1412 = vsel %vm423, %v1410, %v1391
      %v1414 = vsel %vm426, %v1412, %v1396
      %v1416 = vsel %vm429, %v1414, %v1401
      %s1418 = scalar_lea.vmem %s1, 24
      %v1419 = vld [vmem:[%s1418] sm:$0xf]
      %v1420 = vld [vmem:[%s1418 + $0x4] sm:$0xf]
      %v1423 = vunpack.c.l.b16 %v1419
      %v1424 = vunpack.c.l.b16 %v1420
      %v1425 = vpack.c.b16 %v1424, %v1423
      %v1427 = vsel %vm414, %v1425, 0
      %1429 = vmatprep.subr.bf16.mxu0 0
      %1430 = vmatpush1.bf16.msra.mxu0 %v1416
      %1431 = vmatprep.subr.bf16.mxu0 0
      %1432 = vmatpush1.bf16.msra.mxu0 0
      %1433 = vmatprep.subr.bf16.mxu0 0
      %1434 = vmatpush1.bf16.msra.mxu0 0
      %1435 = vmatprep.subr.bf16.mxu0 0
      %1436 = vmatpush1.bf16.msra.mxu0 0
      %1437 = vmatprep.subr.bf16.mxu0 0
      %1438 = vmatpush1.bf16.msra.mxu0 0
      %1439 = vmatprep.subr.bf16.mxu0 0
      %1440 = vmatpush1.bf16.msra.mxu0 0
      %1441 = vmatprep.subr.bf16.mxu0 0
      %1442 = vmatpush1.bf16.msra.mxu0 0
      %1443 = vmatprep.subr.bf16.mxu0 0
      %1444 = vmatpush1.bf16.msra.mxu0 0
      %1445 = vmatprep.subr.bf16.mxu0 0
      %1446 = vmatpush1.bf16.msra.mxu0 0
      %1447 = vmatprep.subr.bf16.mxu0 0
      %1448 = vmatpush1.bf16.msra.mxu0 0
      %1449 = vmatprep.subr.bf16.mxu0 0
      %1450 = vmatpush1.bf16.msra.mxu0 0
      %1451 = vmatprep.subr.bf16.mxu0 0
      %1452 = vmatpush1.bf16.msra.mxu0 0
      %1453 = vmatprep.subr.bf16.mxu0 0
      %1454 = vmatpush1.bf16.msra.mxu0 0
      %1455 = vmatprep.subr.bf16.mxu0 0
      %1456 = vmatpush1.bf16.msra.mxu0 0
      %1457 = vmatprep.subr.bf16.mxu0 0
      %1458 = vmatpush1.bf16.msra.mxu0 0
      %1459 = vmatprep.subr.bf16.mxu0 0
      %1460 = vmatpush1.bf16.msra.mxu0 0
      %1461 = vmatprep.mubr.bf16.mxu0 0
      %1462 = vmatmul.mubr.bf16.gmra.mrb[0].mxu0 %v1427
      %v1463 = vpop.f32.mrb[0].mxu0
      %v1464 = vadd.f32 0.0, %v1463
      %v1465 = vpop.f32.mrb[0].mxu0
      %v1466 = vpop.f32.mrb[0].mxu0
      %v1467 = vadd.f32 0.0, %v1466
      %v1468 = vpop.f32.mrb[0].mxu0
      %1469 = vdwg.mxu0
      %v1470 = vadd.f32 %v1161, %v1464
      %v1471 = vadd.f32 %v1162, %v1467
      %s1472 = scalar_lea.vmem %s165, 384
      %v1473 = vld [vmem:[%s1472] sm:$0xf]
      %v1474 = vld [vmem:[%s1472 + $0x8] sm:$0xf]
      %v1475 = vld [vmem:[%s1472 + $0x10] sm:$0xf]
      %v1476 = vld [vmem:[%s1472 + $0x18] sm:$0xf]
      %v1477 = vld [vmem:[%s1472 + $0x20] sm:$0xf]
      %v1478 = vld [vmem:[%s1472 + $0x28] sm:$0xf]
      %v1479 = vld [vmem:[%s1472 + $0x30] sm:$0xf]
      %v1480 = vld [vmem:[%s1472 + $0x38] sm:$0xf]
      %v1481 = vld [vmem:[%s1472 + $0x40] sm:$0xf]
      %v1482 = vld [vmem:[%s1472 + $0x48] sm:$0xf]
      %v1483 = vld [vmem:[%s1472 + $0x50] sm:$0xf]
      %v1484 = vld [vmem:[%s1472 + $0x58] sm:$0xf]
      %v1485 = vld [vmem:[%s1472 + $0x60] sm:$0xf]
      %v1486 = vld [vmem:[%s1472 + $0x68] sm:$0xf]
      %v1487 = vld [vmem:[%s1472 + $0x70] sm:$0xf]
      %v1488 = vld [vmem:[%s1472 + $0x78] sm:$0xf]
      %v1489 = vcombine.low %v1473, %v1477
      %v1491 = vunpack.c.l.s4 1983009808
      %v1492 = vunpack.c.0.s8 %v1491
      %v1493 = vlaneseq
      %v1494 = vshrl.u32 %v1493, 7
      %v1495 = vsub.s32 %v1492, %v1494
      %v1496 = vrot.slane %v1489, %v1495
      %v1497 = vcombine.low %v1475, %v1479
      %v1499 = vunpack.c.l.s4 1983009808
      %v1500 = vunpack.c.0.s8 %v1499
      %v1501 = vlaneseq
      %v1502 = vshrl.u32 %v1501, 7
      %v1503 = vsub.s32 %v1500, %v1502
      %v1504 = vrot.slane %v1497, %v1503
      %v1505 = vcombine.low %v1496, %v1504
      %v1506 = vcombine.high %v1496, %v1504
      %v1508 = vunpack.c.l.s4 1934713408
      %v1509 = vunpack.c.0.s8 %v1508
      %v1510 = vlaneseq
      %v1511 = vshrl.u32 %v1510, 7
      %v1512 = vsub.s32 %v1509, %v1511
      %v1513 = vrot.slane %v1505, %v1512
      %v1515 = vunpack.c.l.s4 1934713408
      %v1516 = vunpack.c.0.s8 %v1515
      %v1517 = vlaneseq
      %v1518 = vshrl.u32 %v1517, 7
      %v1519 = vsub.s32 %v1516, %v1518
      %v1520 = vrot.slane %v1506, %v1519
      %v1521 = vcombine.high %v1513, 0
      %v1522 = vcombine.high %v1520, 0
      %v1523 = vcombine.low %v1474, %v1478
      %v1525 = vunpack.c.l.s4 1983009808
      %v1526 = vunpack.c.0.s8 %v1525
      %v1527 = vlaneseq
      %v1528 = vshrl.u32 %v1527, 7
      %v1529 = vsub.s32 %v1526, %v1528
      %v1530 = vrot.slane %v1523, %v1529
      %v1531 = vcombine.low %v1476, %v1480
      %v1533 = vunpack.c.l.s4 1983009808
      %v1534 = vunpack.c.0.s8 %v1533
      %v1535 = vlaneseq
      %v1536 = vshrl.u32 %v1535, 7
      %v1537 = vsub.s32 %v1534, %v1536
      %v1538 = vrot.slane %v1531, %v1537
      %v1539 = vcombine.low %v1530, %v1538
      %v1540 = vcombine.high %v1530, %v1538
      %v1542 = vunpack.c.l.s4 1934713408
      %v1543 = vunpack.c.0.s8 %v1542
      %v1544 = vlaneseq
      %v1545 = vshrl.u32 %v1544, 7
      %v1546 = vsub.s32 %v1543, %v1545
      %v1547 = vrot.slane %v1539, %v1546
      %v1549 = vunpack.c.l.s4 1934713408
      %v1550 = vunpack.c.0.s8 %v1549
      %v1551 = vlaneseq
      %v1552 = vshrl.u32 %v1551, 7
      %v1553 = vsub.s32 %v1550, %v1552
      %v1554 = vrot.slane %v1540, %v1553
      %v1555 = vcombine.high %v1547, 0
      %v1556 = vcombine.high %v1554, 0
      %v1557 = vcombine.low %v1481, %v1485
      %v1559 = vunpack.c.l.s4 1983009808
      %v1560 = vunpack.c.0.s8 %v1559
      %v1561 = vlaneseq
      %v1562 = vshrl.u32 %v1561, 7
      %v1563 = vsub.s32 %v1560, %v1562
      %v1564 = vrot.slane %v1557, %v1563
      %v1565 = vcombine.low %v1483, %v1487
      %v1567 = vunpack.c.l.s4 1983009808
      %v1568 = vunpack.c.0.s8 %v1567
      %v1569 = vlaneseq
      %v1570 = vshrl.u32 %v1569, 7
      %v1571 = vsub.s32 %v1568, %v1570
      %v1572 = vrot.slane %v1565, %v1571
      %v1573 = vcombine.low %v1564, %v1572
      %v1574 = vcombine.high %v1564, %v1572
      %v1576 = vunpack.c.l.s4 1934713408
      %v1577 = vunpack.c.0.s8 %v1576
      %v1578 = vlaneseq
      %v1579 = vshrl.u32 %v1578, 7
      %v1580 = vsub.s32 %v1577, %v1579
      %v1581 = vrot.slane %v1573, %v1580
      %v1583 = vunpack.c.l.s4 1934713408
      %v1584 = vunpack.c.0.s8 %v1583
      %v1585 = vlaneseq
      %v1586 = vshrl.u32 %v1585, 7
      %v1587 = vsub.s32 %v1584, %v1586
      %v1588 = vrot.slane %v1574, %v1587
      %v1589 = vcombine.high %v1581, 0
      %v1590 = vcombine.high %v1588, 0
      %v1591 = vcombine.low %v1482, %v1486
      %v1593 = vunpack.c.l.s4 1983009808
      %v1594 = vunpack.c.0.s8 %v1593
      %v1595 = vlaneseq
      %v1596 = vshrl.u32 %v1595, 7
      %v1597 = vsub.s32 %v1594, %v1596
      %v1598 = vrot.slane %v1591, %v1597
      %v1599 = vcombine.low %v1484, %v1488
      %v1601 = vunpack.c.l.s4 1983009808
      %v1602 = vunpack.c.0.s8 %v1601
      %v1603 = vlaneseq
      %v1604 = vshrl.u32 %v1603, 7
      %v1605 = vsub.s32 %v1602, %v1604
      %v1606 = vrot.slane %v1599, %v1605
      %v1607 = vcombine.low %v1598, %v1606
      %v1608 = vcombine.high %v1598, %v1606
      %v1610 = vunpack.c.l.s4 1934713408
      %v1611 = vunpack.c.0.s8 %v1610
      %v1612 = vlaneseq
      %v1613 = vshrl.u32 %v1612, 7
      %v1614 = vsub.s32 %v1611, %v1613
      %v1615 = vrot.slane %v1607, %v1614
      %v1617 = vunpack.c.l.s4 1934713408
      %v1618 = vunpack.c.0.s8 %v1617
      %v1619 = vlaneseq
      %v1620 = vshrl.u32 %v1619, 7
      %v1621 = vsub.s32 %v1618, %v1620
      %v1622 = vrot.slane %v1608, %v1621
      %v1623 = vcombine.high %v1615, 0
      %v1624 = vcombine.high %v1622, 0
      %v1627 = vpack.i.b16 %v1547, %v1513
      %v1628 = vshrl.u32 %v1513, 16
      %v1629 = vshrl.u32 %v1547, 16
      %v1630 = vpack.i.b16 %v1629, %v1628
      %v1633 = vpack.i.b16 %v1555, %v1521
      %v1634 = vshrl.u32 %v1521, 16
      %v1635 = vshrl.u32 %v1555, 16
      %v1636 = vpack.i.b16 %v1635, %v1634
      %v1639 = vpack.i.b16 %v1554, %v1520
      %v1640 = vshrl.u32 %v1520, 16
      %v1641 = vshrl.u32 %v1554, 16
      %v1642 = vpack.i.b16 %v1641, %v1640
      %v1645 = vpack.i.b16 %v1556, %v1522
      %v1646 = vshrl.u32 %v1522, 16
      %v1647 = vshrl.u32 %v1556, 16
      %v1648 = vpack.i.b16 %v1647, %v1646
      %v1651 = vpack.i.b16 %v1615, %v1581
      %v1652 = vshrl.u32 %v1581, 16
      %v1653 = vshrl.u32 %v1615, 16
      %v1654 = vpack.i.b16 %v1653, %v1652
      %v1657 = vpack.i.b16 %v1623, %v1589
      %v1658 = vshrl.u32 %v1589, 16
      %v1659 = vshrl.u32 %v1623, 16
      %v1660 = vpack.i.b16 %v1659, %v1658
      %v1663 = vpack.i.b16 %v1622, %v1588
      %v1664 = vshrl.u32 %v1588, 16
      %v1665 = vshrl.u32 %v1622, 16
      %v1666 = vpack.i.b16 %v1665, %v1664
      %v1669 = vpack.i.b16 %v1624, %v1590
      %v1670 = vshrl.u32 %v1590, 16
      %v1671 = vshrl.u32 %v1624, 16
      %v1672 = vpack.i.b16 %v1671, %v1670
      %v1673 = vunpack.c.l.b16 %v1627
      %v1674 = vunpack.c.l.b16 %v1651
      %v1675 = vpack.c.b16 %v1674, %v1673
      %v1676 = vunpack.c.l.b16 %v1630
      %v1677 = vunpack.c.l.b16 %v1654
      %v1678 = vpack.c.b16 %v1677, %v1676
      %1679 = vrot.lane.b32.xlu0 %v1678, 8
      %v1680 = vpop.permute.xlu0 %1679
      %v1681 = vunpack.c.l.b16 %v1633
      %v1682 = vunpack.c.l.b16 %v1657
      %v1683 = vpack.c.b16 %v1682, %v1681
      %1684 = vrot.lane.b32.xlu0 %v1683, 16
      %v1685 = vpop.permute.xlu0 %1684
      %v1686 = vunpack.c.l.b16 %v1636
      %v1687 = vunpack.c.l.b16 %v1660
      %v1688 = vpack.c.b16 %v1687, %v1686
      %1689 = vrot.lane.b32.xlu0 %v1688, 24
      %v1690 = vpop.permute.xlu0 %1689
      %v1691 = vunpack.c.l.b16 %v1639
      %v1692 = vunpack.c.l.b16 %v1663
      %v1693 = vpack.c.b16 %v1692, %v1691
      %1694 = vrot.lane.b32.xlu0 %v1693, 32
      %v1695 = vpop.permute.xlu0 %1694
      %v1696 = vunpack.c.l.b16 %v1642
      %v1697 = vunpack.c.l.b16 %v1666
      %v1698 = vpack.c.b16 %v1697, %v1696
      %1699 = vrot.lane.b32.xlu0 %v1698, 40
      %v1700 = vpop.permute.xlu0 %1699
      %v1701 = vunpack.c.l.b16 %v1645
      %v1702 = vunpack.c.l.b16 %v1669
      %v1703 = vpack.c.b16 %v1702, %v1701
      %1704 = vrot.lane.b32.xlu0 %v1703, 48
      %v1705 = vpop.permute.xlu0 %1704
      %v1706 = vunpack.c.l.b16 %v1648
      %v1707 = vunpack.c.l.b16 %v1672
      %v1708 = vpack.c.b16 %v1707, %v1706
      %1709 = vrot.lane.b32.xlu0 %v1708, 56
      %v1710 = vpop.permute.xlu0 %1709
      %v1713 = vsel %vm410, %v1675, %v1680
      %v1715 = vsel %vm414, %v1713, %v1685
      %v1717 = vsel %vm417, %v1715, %v1690
      %v1719 = vsel %vm420, %v1717, %v1695
      %v1721 = vsel %vm423, %v1719, %v1700
      %v1723 = vsel %vm426, %v1721, %v1705
      %v1725 = vsel %vm429, %v1723, %v1710
      %s1727 = scalar_lea.vmem %s1, 32
      %v1728 = vld [vmem:[%s1727] sm:$0xf]
      %v1729 = vld [vmem:[%s1727 + $0x4] sm:$0xf]
      %v1732 = vunpack.c.l.b16 %v1728
      %v1733 = vunpack.c.l.b16 %v1729
      %v1734 = vpack.c.b16 %v1733, %v1732
      %v1736 = vsel %vm414, %v1734, 0
      %1738 = vmatprep.subr.bf16.mxu0 0
      %1739 = vmatpush1.bf16.msra.mxu0 %v1725
      %1740 = vmatprep.subr.bf16.mxu0 0
      %1741 = vmatpush1.bf16.msra.mxu0 0
      %1742 = vmatprep.subr.bf16.mxu0 0
      %1743 = vmatpush1.bf16.msra.mxu0 0
      %1744 = vmatprep.subr.bf16.mxu0 0
      %1745 = vmatpush1.bf16.msra.mxu0 0
      %1746 = vmatprep.subr.bf16.mxu0 0
      %1747 = vmatpush1.bf16.msra.mxu0 0
      %1748 = vmatprep.subr.bf16.mxu0 0
      %1749 = vmatpush1.bf16.msra.mxu0 0
      %1750 = vmatprep.subr.bf16.mxu0 0
      %1751 = vmatpush1.bf16.msra.mxu0 0
      %1752 = vmatprep.subr.bf16.mxu0 0
      %1753 = vmatpush1.bf16.msra.mxu0 0
      %1754 = vmatprep.subr.bf16.mxu0 0
      %1755 = vmatpush1.bf16.msra.mxu0 0
      %1756 = vmatprep.subr.bf16.mxu0 0
      %1757 = vmatpush1.bf16.msra.mxu0 0
      %1758 = vmatprep.subr.bf16.mxu0 0
      %1759 = vmatpush1.bf16.msra.mxu0 0
      %1760 = vmatprep.subr.bf16.mxu0 0
      %1761 = vmatpush1.bf16.msra.mxu0 0
      %1762 = vmatprep.subr.bf16.mxu0 0
      %1763 = vmatpush1.bf16.msra.mxu0 0
      %1764 = vmatprep.subr.bf16.mxu0 0
      %1765 = vmatpush1.bf16.msra.mxu0 0
      %1766 = vmatprep.subr.bf16.mxu0 0
      %1767 = vmatpush1.bf16.msra.mxu0 0
      %1768 = vmatprep.subr.bf16.mxu0 0
      %1769 = vmatpush1.bf16.msra.mxu0 0
      %1770 = vmatprep.mubr.bf16.mxu0 0
      %1771 = vmatmul.mubr.bf16.gmra.mrb[0].mxu0 %v1736
      %v1772 = vpop.f32.mrb[0].mxu0
      %v1773 = vadd.f32 0.0, %v1772
      %v1774 = vpop.f32.mrb[0].mxu0
      %v1775 = vpop.f32.mrb[0].mxu0
      %v1776 = vadd.f32 0.0, %v1775
      %v1777 = vpop.f32.mrb[0].mxu0
      %1778 = vdwg.mxu0
      %v1779 = vadd.f32 %v1470, %v1773
      %v1780 = vadd.f32 %v1471, %v1776
      %v1781 = vld [vmem:[%s1163] sm:$0xf]
      %v1782 = vld [vmem:[%s1163 + $0x8] sm:$0xf]
      %v1783 = vld [vmem:[%s1163 + $0x10] sm:$0xf]
      %v1784 = vld [vmem:[%s1163 + $0x18] sm:$0xf]
      %v1785 = vld [vmem:[%s1163 + $0x20] sm:$0xf]
      %v1786 = vld [vmem:[%s1163 + $0x28] sm:$0xf]
      %v1787 = vld [vmem:[%s1163 + $0x30] sm:$0xf]
      %v1788 = vld [vmem:[%s1163 + $0x38] sm:$0xf]
      %v1789 = vld [vmem:[%s1163 + $0x40] sm:$0xf]
      %v1790 = vld [vmem:[%s1163 + $0x48] sm:$0xf]
      %v1791 = vld [vmem:[%s1163 + $0x50] sm:$0xf]
      %v1792 = vld [vmem:[%s1163 + $0x58] sm:$0xf]
      %v1793 = vld [vmem:[%s1163 + $0x60] sm:$0xf]
      %v1794 = vld [vmem:[%s1163 + $0x68] sm:$0xf]
      %v1795 = vld [vmem:[%s1163 + $0x70] sm:$0xf]
      %v1796 = vld [vmem:[%s1163 + $0x78] sm:$0xf]
      %1813 = vrot.lane.b32.xlu0 %v1781, 127
      %v1814 = vpop.permute.xlu0 %1813
      %1815 = vrot.lane.b32.xlu0 %v1782, 127
      %v1816 = vpop.permute.xlu0 %1815
      %1817 = vrot.lane.b32.xlu0 %v1783, 127
      %v1818 = vpop.permute.xlu0 %1817
      %1819 = vrot.lane.b32.xlu0 %v1784, 127
      %v1820 = vpop.permute.xlu0 %1819
      %1821 = vrot.lane.b32.xlu0 %v1785, 127
      %v1822 = vpop.permute.xlu0 %1821
      %1823 = vrot.lane.b32.xlu0 %v1786, 127
      %v1824 = vpop.permute.xlu0 %1823
      %1825 = vrot.lane.b32.xlu0 %v1787, 127
      %v1826 = vpop.permute.xlu0 %1825
      %1827 = vrot.lane.b32.xlu0 %v1788, 127
      %v1828 = vpop.permute.xlu0 %1827
      %1829 = vrot.lane.b32.xlu0 %v1789, 127
      %v1830 = vpop.permute.xlu0 %1829
      %1831 = vrot.lane.b32.xlu0 %v1790, 127
      %v1832 = vpop.permute.xlu0 %1831
      %1833 = vrot.lane.b32.xlu0 %v1791, 127
      %v1834 = vpop.permute.xlu0 %1833
      %1835 = vrot.lane.b32.xlu0 %v1792, 127
      %v1836 = vpop.permute.xlu0 %1835
      %1837 = vrot.lane.b32.xlu0 %v1793, 127
      %v1838 = vpop.permute.xlu0 %1837
      %1839 = vrot.lane.b32.xlu0 %v1794, 127
      %v1840 = vpop.permute.xlu0 %1839
      %1841 = vrot.lane.b32.xlu0 %v1795, 127
      %v1842 = vpop.permute.xlu0 %1841
      %1843 = vrot.lane.b32.xlu0 %v1796, 127
      %v1844 = vpop.permute.xlu0 %1843
      %v1861 = vcombine.low %v1814, %v1822
      %v1863 = vunpack.c.l.s4 1983009808
      %v1864 = vunpack.c.0.s8 %v1863
      %v1865 = vlaneseq
      %v1866 = vshrl.u32 %v1865, 7
      %v1867 = vsub.s32 %v1864, %v1866
      %v1868 = vrot.slane %v1861, %v1867
      %v1869 = vcombine.low %v1818, %v1826
      %v1871 = vunpack.c.l.s4 1983009808
      %v1872 = vunpack.c.0.s8 %v1871
      %v1873 = vlaneseq
      %v1874 = vshrl.u32 %v1873, 7
      %v1875 = vsub.s32 %v1872, %v1874
      %v1876 = vrot.slane %v1869, %v1875
      %v1877 = vcombine.low %v1868, %v1876
      %v1878 = vcombine.high %v1868, %v1876
      %v1880 = vunpack.c.l.s4 1934713408
      %v1881 = vunpack.c.0.s8 %v1880
      %v1882 = vlaneseq
      %v1883 = vshrl.u32 %v1882, 7
      %v1884 = vsub.s32 %v1881, %v1883
      %v1885 = vrot.slane %v1877, %v1884
      %v1887 = vunpack.c.l.s4 1934713408
      %v1888 = vunpack.c.0.s8 %v1887
      %v1889 = vlaneseq
      %v1890 = vshrl.u32 %v1889, 7
      %v1891 = vsub.s32 %v1888, %v1890
      %v1892 = vrot.slane %v1878, %v1891
      %v1893 = vcombine.high %v1885, 0
      %v1894 = vcombine.high %v1892, 0
      %v1895 = vcombine.low %v1816, %v1824
      %v1897 = vunpack.c.l.s4 1983009808
      %v1898 = vunpack.c.0.s8 %v1897
      %v1899 = vlaneseq
      %v1900 = vshrl.u32 %v1899, 7
      %v1901 = vsub.s32 %v1898, %v1900
      %v1902 = vrot.slane %v1895, %v1901
      %v1903 = vcombine.low %v1820, %v1828
      %v1905 = vunpack.c.l.s4 1983009808
      %v1906 = vunpack.c.0.s8 %v1905
      %v1907 = vlaneseq
      %v1908 = vshrl.u32 %v1907, 7
      %v1909 = vsub.s32 %v1906, %v1908
      %v1910 = vrot.slane %v1903, %v1909
      %v1911 = vcombine.low %v1902, %v1910
      %v1912 = vcombine.high %v1902, %v1910
      %v1914 = vunpack.c.l.s4 1934713408
      %v1915 = vunpack.c.0.s8 %v1914
      %v1916 = vlaneseq
      %v1917 = vshrl.u32 %v1916, 7
      %v1918 = vsub.s32 %v1915, %v1917
      %v1919 = vrot.slane %v1911, %v1918
      %v1921 = vunpack.c.l.s4 1934713408
      %v1922 = vunpack.c.0.s8 %v1921
      %v1923 = vlaneseq
      %v1924 = vshrl.u32 %v1923, 7
      %v1925 = vsub.s32 %v1922, %v1924
      %v1926 = vrot.slane %v1912, %v1925
      %v1927 = vcombine.high %v1919, 0
      %v1928 = vcombine.high %v1926, 0
      %v1929 = vcombine.low %v1830, %v1838
      %v1931 = vunpack.c.l.s4 1983009808
      %v1932 = vunpack.c.0.s8 %v1931
      %v1933 = vlaneseq
      %v1934 = vshrl.u32 %v1933, 7
      %v1935 = vsub.s32 %v1932, %v1934
      %v1936 = vrot.slane %v1929, %v1935
      %v1937 = vcombine.low %v1834, %v1842
      %v1939 = vunpack.c.l.s4 1983009808
      %v1940 = vunpack.c.0.s8 %v1939
      %v1941 = vlaneseq
      %v1942 = vshrl.u32 %v1941, 7
      %v1943 = vsub.s32 %v1940, %v1942
      %v1944 = vrot.slane %v1937, %v1943
      %v1945 = vcombine.low %v1936, %v1944
      %v1946 = vcombine.high %v1936, %v1944
      %v1948 = vunpack.c.l.s4 1934713408
      %v1949 = vunpack.c.0.s8 %v1948
      %v1950 = vlaneseq
      %v1951 = vshrl.u32 %v1950, 7
      %v1952 = vsub.s32 %v1949, %v1951
      %v1953 = vrot.slane %v1945, %v1952
      %v1955 = vunpack.c.l.s4 1934713408
      %v1956 = vunpack.c.0.s8 %v1955
      %v1957 = vlaneseq
      %v1958 = vshrl.u32 %v1957, 7
      %v1959 = vsub.s32 %v1956, %v1958
      %v1960 = vrot.slane %v1946, %v1959
      %v1961 = vcombine.high %v1953, 0
      %v1962 = vcombine.high %v1960, 0
      %v1963 = vcombine.low %v1832, %v1840
      %v1965 = vunpack.c.l.s4 1983009808
      %v1966 = vunpack.c.0.s8 %v1965
      %v1967 = vlaneseq
      %v1968 = vshrl.u32 %v1967, 7
      %v1969 = vsub.s32 %v1966, %v1968
      %v1970 = vrot.slane %v1963, %v1969
      %v1971 = vcombine.low %v1836, %v1844
      %v1973 = vunpack.c.l.s4 1983009808
      %v1974 = vunpack.c.0.s8 %v1973
      %v1975 = vlaneseq
      %v1976 = vshrl.u32 %v1975, 7
      %v1977 = vsub.s32 %v1974, %v1976
      %v1978 = vrot.slane %v1971, %v1977
      %v1979 = vcombine.low %v1970, %v1978
      %v1980 = vcombine.high %v1970, %v1978
      %v1982 = vunpack.c.l.s4 1934713408
      %v1983 = vunpack.c.0.s8 %v1982
      %v1984 = vlaneseq
      %v1985 = vshrl.u32 %v1984, 7
      %v1986 = vsub.s32 %v1983, %v1985
      %v1987 = vrot.slane %v1979, %v1986
      %v1989 = vunpack.c.l.s4 1934713408
      %v1990 = vunpack.c.0.s8 %v1989
      %v1991 = vlaneseq
      %v1992 = vshrl.u32 %v1991, 7
      %v1993 = vsub.s32 %v1990, %v1992
      %v1994 = vrot.slane %v1980, %v1993
      %v1995 = vcombine.high %v1987, 0
      %v1996 = vcombine.high %v1994, 0
      %v1999 = vpack.i.b16 %v1919, %v1885
      %v2000 = vshrl.u32 %v1885, 16
      %v2001 = vshrl.u32 %v1919, 16
      %v2002 = vpack.i.b16 %v2001, %v2000
      %v2005 = vpack.i.b16 %v1927, %v1893
      %v2006 = vshrl.u32 %v1893, 16
      %v2007 = vshrl.u32 %v1927, 16
      %v2008 = vpack.i.b16 %v2007, %v2006
      %v2011 = vpack.i.b16 %v1926, %v1892
      %v2012 = vshrl.u32 %v1892, 16
      %v2013 = vshrl.u32 %v1926, 16
      %v2014 = vpack.i.b16 %v2013, %v2012
      %v2017 = vpack.i.b16 %v1928, %v1894
      %v2018 = vshrl.u32 %v1894, 16
      %v2019 = vshrl.u32 %v1928, 16
      %v2020 = vpack.i.b16 %v2019, %v2018
      %v2023 = vpack.i.b16 %v1987, %v1953
      %v2024 = vshrl.u32 %v1953, 16
      %v2025 = vshrl.u32 %v1987, 16
      %v2026 = vpack.i.b16 %v2025, %v2024
      %v2029 = vpack.i.b16 %v1995, %v1961
      %v2030 = vshrl.u32 %v1961, 16
      %v2031 = vshrl.u32 %v1995, 16
      %v2032 = vpack.i.b16 %v2031, %v2030
      %v2035 = vpack.i.b16 %v1994, %v1960
      %v2036 = vshrl.u32 %v1960, 16
      %v2037 = vshrl.u32 %v1994, 16
      %v2038 = vpack.i.b16 %v2037, %v2036
      %v2041 = vpack.i.b16 %v1996, %v1962
      %v2042 = vshrl.u32 %v1962, 16
      %v2043 = vshrl.u32 %v1996, 16
      %v2044 = vpack.i.b16 %v2043, %v2042
      %v2045 = vunpack.c.l.b16 %v1999
      %v2046 = vunpack.c.l.b16 %v2023
      %v2047 = vpack.c.b16 %v2046, %v2045
      %v2048 = vunpack.c.l.b16 %v2002
      %v2049 = vunpack.c.l.b16 %v2026
      %v2050 = vpack.c.b16 %v2049, %v2048
      %2051 = vrot.lane.b32.xlu0 %v2050, 8
      %v2052 = vpop.permute.xlu0 %2051
      %v2053 = vunpack.c.l.b16 %v2005
      %v2054 = vunpack.c.l.b16 %v2029
      %v2055 = vpack.c.b16 %v2054, %v2053
      %2056 = vrot.lane.b32.xlu0 %v2055, 16
      %v2057 = vpop.permute.xlu0 %2056
      %v2058 = vunpack.c.l.b16 %v2008
      %v2059 = vunpack.c.l.b16 %v2032
      %v2060 = vpack.c.b16 %v2059, %v2058
      %2061 = vrot.lane.b32.xlu0 %v2060, 24
      %v2062 = vpop.permute.xlu0 %2061
      %v2063 = vunpack.c.l.b16 %v2011
      %v2064 = vunpack.c.l.b16 %v2035
      %v2065 = vpack.c.b16 %v2064, %v2063
      %2066 = vrot.lane.b32.xlu0 %v2065, 32
      %v2067 = vpop.permute.xlu0 %2066
      %v2068 = vunpack.c.l.b16 %v2014
      %v2069 = vunpack.c.l.b16 %v2038
      %v2070 = vpack.c.b16 %v2069, %v2068
      %2071 = vrot.lane.b32.xlu0 %v2070, 40
      %v2072 = vpop.permute.xlu0 %2071
      %v2073 = vunpack.c.l.b16 %v2017
      %v2074 = vunpack.c.l.b16 %v2041
      %v2075 = vpack.c.b16 %v2074, %v2073
      %2076 = vrot.lane.b32.xlu0 %v2075, 48
      %v2077 = vpop.permute.xlu0 %2076
      %v2078 = vunpack.c.l.b16 %v2020
      %v2079 = vunpack.c.l.b16 %v2044
      %v2080 = vpack.c.b16 %v2079, %v2078
      %2081 = vrot.lane.b32.xlu0 %v2080, 56
      %v2082 = vpop.permute.xlu0 %2081
      %v2085 = vsel %vm410, %v2047, %v2052
      %v2087 = vsel %vm414, %v2085, %v2057
      %v2089 = vsel %vm417, %v2087, %v2062
      %v2091 = vsel %vm420, %v2089, %v2067
      %v2093 = vsel %vm423, %v2091, %v2072
      %v2095 = vsel %vm426, %v2093, %v2077
      %v2097 = vsel %vm429, %v2095, %v2082
      %s2099 = scalar_lea.vmem %s1, 40
      %v2100 = vld [vmem:[%s2099] sm:$0xf]
      %v2101 = vld [vmem:[%s2099 + $0x4] sm:$0xf]
      %v2104 = vunpack.c.l.b16 %v2100
      %v2105 = vunpack.c.l.b16 %v2101
      %v2106 = vpack.c.b16 %v2105, %v2104
      %v2108 = vsel %vm414, %v2106, 0
      %2110 = vmatprep.subr.bf16.mxu0 0
      %2111 = vmatpush1.bf16.msra.mxu0 %v2097
      %2112 = vmatprep.subr.bf16.mxu0 0
      %2113 = vmatpush1.bf16.msra.mxu0 0
      %2114 = vmatprep.subr.bf16.mxu0 0
      %2115 = vmatpush1.bf16.msra.mxu0 0
      %2116 = vmatprep.subr.bf16.mxu0 0
      %2117 = vmatpush1.bf16.msra.mxu0 0
      %2118 = vmatprep.subr.bf16.mxu0 0
      %2119 = vmatpush1.bf16.msra.mxu0 0
      %2120 = vmatprep.subr.bf16.mxu0 0
      %2121 = vmatpush1.bf16.msra.mxu0 0
      %2122 = vmatprep.subr.bf16.mxu0 0
      %2123 = vmatpush1.bf16.msra.mxu0 0
      %2124 = vmatprep.subr.bf16.mxu0 0
      %2125 = vmatpush1.bf16.msra.mxu0 0
      %2126 = vmatprep.subr.bf16.mxu0 0
      %2127 = vmatpush1.bf16.msra.mxu0 0
      %2128 = vmatprep.subr.bf16.mxu0 0
      %2129 = vmatpush1.bf16.msra.mxu0 0
      %2130 = vmatprep.subr.bf16.mxu0 0
      %2131 = vmatpush1.bf16.msra.mxu0 0
      %2132 = vmatprep.subr.bf16.mxu0 0
      %2133 = vmatpush1.bf16.msra.mxu0 0
      %2134 = vmatprep.subr.bf16.mxu0 0
      %2135 = vmatpush1.bf16.msra.mxu0 0
      %2136 = vmatprep.subr.bf16.mxu0 0
      %2137 = vmatpush1.bf16.msra.mxu0 0
      %2138 = vmatprep.subr.bf16.mxu0 0
      %2139 = vmatpush1.bf16.msra.mxu0 0
      %2140 = vmatprep.subr.bf16.mxu0 0
      %2141 = vmatpush1.bf16.msra.mxu0 0
      %2142 = vmatprep.mubr.bf16.mxu0 0
      %2143 = vmatmul.mubr.bf16.gmra.mrb[0].mxu0 %v2108
      %v2144 = vpop.f32.mrb[0].mxu0
      %v2145 = vadd.f32 0.0, %v2144
      %v2146 = vpop.f32.mrb[0].mxu0
      %v2147 = vpop.f32.mrb[0].mxu0
      %v2148 = vadd.f32 0.0, %v2147
      %v2149 = vpop.f32.mrb[0].mxu0
      %2150 = vdwg.mxu0
      %v2151 = vadd.f32 %v1779, %v2145
      %v2152 = vadd.f32 %v1780, %v2148
      %v2153 = vld [vmem:[%s165] sm:$0xf]
      %v2154 = vld [vmem:[%s165 + $0x4] sm:$0x1]
      %v2155 = vld [vmem:[%s165 + $0x8] sm:$0xf]
      %v2156 = vld [vmem:[%s165 + $0xc] sm:$0x1]
      %v2157 = vld [vmem:[%s165 + $0x10] sm:$0xf]
      %v2158 = vld [vmem:[%s165 + $0x14] sm:$0x1]
      %v2159 = vld [vmem:[%s165 + $0x18] sm:$0xf]
      %v2160 = vld [vmem:[%s165 + $0x1c] sm:$0x1]
      %v2161 = vld [vmem:[%s165 + $0x20] sm:$0xf]
      %v2162 = vld [vmem:[%s165 + $0x24] sm:$0x1]
      %v2163 = vld [vmem:[%s165 + $0x28] sm:$0xf]
      %v2164 = vld [vmem:[%s165 + $0x2c] sm:$0x1]
      %v2165 = vld [vmem:[%s165 + $0x30] sm:$0xf]
      %v2166 = vld [vmem:[%s165 + $0x34] sm:$0x1]
      %v2167 = vld [vmem:[%s165 + $0x38] sm:$0xf]
      %v2168 = vld [vmem:[%s165 + $0x3c] sm:$0x1]
      %v2169 = vld [vmem:[%s165 + $0x40] sm:$0xf]
      %v2170 = vld [vmem:[%s165 + $0x44] sm:$0x1]
      %v2171 = vld [vmem:[%s165 + $0x48] sm:$0xf]
      %v2172 = vld [vmem:[%s165 + $0x4c] sm:$0x1]
      %v2173 = vld [vmem:[%s165 + $0x50] sm:$0xf]
      %v2174 = vld [vmem:[%s165 + $0x54] sm:$0x1]
      %v2175 = vld [vmem:[%s165 + $0x58] sm:$0xf]
      %v2176 = vld [vmem:[%s165 + $0x5c] sm:$0x1]
      %v2177 = vld [vmem:[%s165 + $0x60] sm:$0xf]
      %v2178 = vld [vmem:[%s165 + $0x64] sm:$0x1]
      %v2179 = vld [vmem:[%s165 + $0x68] sm:$0xf]
      %v2180 = vld [vmem:[%s165 + $0x6c] sm:$0x1]
      %v2181 = vld [vmem:[%s165 + $0x70] sm:$0xf]
      %v2182 = vld [vmem:[%s165 + $0x74] sm:$0x1]
      %v2183 = vld [vmem:[%s165 + $0x78] sm:$0xf]
      %v2184 = vld [vmem:[%s165 + $0x7c] sm:$0x1]
      %vm2185 = vsmask.f32 3328
      %vm2186 = vsmask.f32 7440
      %vm2187 = vmor %vm2185, %vm2186
      %v2189 = vshrl.u32 %v2153, 16
      %v2191 = vrot.slane %v2189, 4
      %v2192 = vshll.u32 %v2153, 16
      %v2194 = vrot.slane %v2192, 5
      %v2195 = vor.u32 %v2191, %v2194
      %v2196 = vrot.slane %v2195, 4
      %v2198 = vshll.u32 %v2154, 16
      %v2200 = vrot.slane %v2198, 5
      %v2201 = vsel %vm2187, %v2196, %v2200
      %v2203 = vshrl.u32 %v2155, 16
      %v2205 = vrot.slane %v2203, 4
      %v2206 = vshll.u32 %v2155, 16
      %v2208 = vrot.slane %v2206, 5
      %v2209 = vor.u32 %v2205, %v2208
      %v2210 = vrot.slane %v2209, 4
      %v2212 = vshll.u32 %v2156, 16
      %v2214 = vrot.slane %v2212, 5
      %v2215 = vsel %vm2187, %v2210, %v2214
      %v2217 = vshrl.u32 %v2157, 16
      %v2219 = vrot.slane %v2217, 4
      %v2220 = vshll.u32 %v2157, 16
      %v2222 = vrot.slane %v2220, 5
      %v2223 = vor.u32 %v2219, %v2222
      %v2224 = vrot.slane %v2223, 4
      %v2226 = vshll.u32 %v2158, 16
      %v2228 = vrot.slane %v2226, 5
      %v2229 = vsel %vm2187, %v2224, %v2228
      %v2231 = vshrl.u32 %v2159, 16
      %v2233 = vrot.slane %v2231, 4
      %v2234 = vshll.u32 %v2159, 16
      %v2236 = vrot.slane %v2234, 5
      %v2237 = vor.u32 %v2233, %v2236
      %v2238 = vrot.slane %v2237, 4
      %v2240 = vshll.u32 %v2160, 16
      %v2242 = vrot.slane %v2240, 5
      %v2243 = vsel %vm2187, %v2238, %v2242
      %v2245 = vshrl.u32 %v2161, 16
      %v2247 = vrot.slane %v2245, 4
      %v2248 = vshll.u32 %v2161, 16
      %v2250 = vrot.slane %v2248, 5
      %v2251 = vor.u32 %v2247, %v2250
      %v2252 = vrot.slane %v2251, 4
      %v2254 = vshll.u32 %v2162, 16
      %v2256 = vrot.slane %v2254, 5
      %v2257 = vsel %vm2187, %v2252, %v2256
      %v2259 = vshrl.u32 %v2163, 16
      %v2261 = vrot.slane %v2259, 4
      %v2262 = vshll.u32 %v2163, 16
      %v2264 = vrot.slane %v2262, 5
      %v2265 = vor.u32 %v2261, %v2264
      %v2266 = vrot.slane %v2265, 4
      %v2268 = vshll.u32 %v2164, 16
      %v2270 = vrot.slane %v2268, 5
      %v2271 = vsel %vm2187, %v2266, %v2270
      %v2273 = vshrl.u32 %v2165, 16
      %v2275 = vrot.slane %v2273, 4
      %v2276 = vshll.u32 %v2165, 16
      %v2278 = vrot.slane %v2276, 5
      %v2279 = vor.u32 %v2275, %v2278
      %v2280 = vrot.slane %v2279, 4
      %v2282 = vshll.u32 %v2166, 16
      %v2284 = vrot.slane %v2282, 5
      %v2285 = vsel %vm2187, %v2280, %v2284
      %v2287 = vshrl.u32 %v2167, 16
      %v2289 = vrot.slane %v2287, 4
      %v2290 = vshll.u32 %v2167, 16
      %v2292 = vrot.slane %v2290, 5
      %v2293 = vor.u32 %v2289, %v2292
      %v2294 = vrot.slane %v2293, 4
      %v2296 = vshll.u32 %v2168, 16
      %v2298 = vrot.slane %v2296, 5
      %v2299 = vsel %vm2187, %v2294, %v2298
      %v2301 = vshrl.u32 %v2169, 16
      %v2303 = vrot.slane %v2301, 4
      %v2304 = vshll.u32 %v2169, 16
      %v2306 = vrot.slane %v2304, 5
      %v2307 = vor.u32 %v2303, %v2306
      %v2308 = vrot.slane %v2307, 4
      %v2310 = vshll.u32 %v2170, 16
      %v2312 = vrot.slane %v2310, 5
      %v2313 = vsel %vm2187, %v2308, %v2312
      %v2315 = vshrl.u32 %v2171, 16
      %v2317 = vrot.slane %v2315, 4
      %v2318 = vshll.u32 %v2171, 16
      %v2320 = vrot.slane %v2318, 5
      %v2321 = vor.u32 %v2317, %v2320
      %v2322 = vrot.slane %v2321, 4
      %v2324 = vshll.u32 %v2172, 16
      %v2326 = vrot.slane %v2324, 5
      %v2327 = vsel %vm2187, %v2322, %v2326
      %v2329 = vshrl.u32 %v2173, 16
      %v2331 = vrot.slane %v2329, 4
      %v2332 = vshll.u32 %v2173, 16
      %v2334 = vrot.slane %v2332, 5
      %v2335 = vor.u32 %v2331, %v2334
      %v2336 = vrot.slane %v2335, 4
      %v2338 = vshll.u32 %v2174, 16
      %v2340 = vrot.slane %v2338, 5
      %v2341 = vsel %vm2187, %v2336, %v2340
      %v2343 = vshrl.u32 %v2175, 16
      %v2345 = vrot.slane %v2343, 4
      %v2346 = vshll.u32 %v2175, 16
      %v2348 = vrot.slane %v2346, 5
      %v2349 = vor.u32 %v2345, %v2348
      %v2350 = vrot.slane %v2349, 4
      %v2352 = vshll.u32 %v2176, 16
      %v2354 = vrot.slane %v2352, 5
      %v2355 = vsel %vm2187, %v2350, %v2354
      %v2357 = vshrl.u32 %v2177, 16
      %v2359 = vrot.slane %v2357, 4
      %v2360 = vshll.u32 %v2177, 16
      %v2362 = vrot.slane %v2360, 5
      %v2363 = vor.u32 %v2359, %v2362
      %v2364 = vrot.slane %v2363, 4
      %v2366 = vshll.u32 %v2178, 16
      %v2368 = vrot.slane %v2366, 5
      %v2369 = vsel %vm2187, %v2364, %v2368
      %v2371 = vshrl.u32 %v2179, 16
      %v2373 = vrot.slane %v2371, 4
      %v2374 = vshll.u32 %v2179, 16
      %v2376 = vrot.slane %v2374, 5
      %v2377 = vor.u32 %v2373, %v2376
      %v2378 = vrot.slane %v2377, 4
      %v2380 = vshll.u32 %v2180, 16
      %v2382 = vrot.slane %v2380, 5
      %v2383 = vsel %vm2187, %v2378, %v2382
      %v2385 = vshrl.u32 %v2181, 16
      %v2387 = vrot.slane %v2385, 4
      %v2388 = vshll.u32 %v2181, 16
      %v2390 = vrot.slane %v2388, 5
      %v2391 = vor.u32 %v2387, %v2390
      %v2392 = vrot.slane %v2391, 4
      %v2394 = vshll.u32 %v2182, 16
      %v2396 = vrot.slane %v2394, 5
      %v2397 = vsel %vm2187, %v2392, %v2396
      %v2399 = vshrl.u32 %v2183, 16
      %v2401 = vrot.slane %v2399, 4
      %v2402 = vshll.u32 %v2183, 16
      %v2404 = vrot.slane %v2402, 5
      %v2405 = vor.u32 %v2401, %v2404
      %v2406 = vrot.slane %v2405, 4
      %v2408 = vshll.u32 %v2184, 16
      %v2410 = vrot.slane %v2408, 5
      %v2411 = vsel %vm2187, %v2406, %v2410
      %v2428 = vcombine.low %v2201, %v2257
      %v2430 = vunpack.c.l.s4 1983009808
      %v2431 = vunpack.c.0.s8 %v2430
      %v2432 = vlaneseq
      %v2433 = vshrl.u32 %v2432, 7
      %v2434 = vsub.s32 %v2431, %v2433
      %v2435 = vrot.slane %v2428, %v2434
      %v2436 = vcombine.low %v2229, %v2285
      %v2438 = vunpack.c.l.s4 1983009808
      %v2439 = vunpack.c.0.s8 %v2438
      %v2440 = vlaneseq
      %v2441 = vshrl.u32 %v2440, 7
      %v2442 = vsub.s32 %v2439, %v2441
      %v2443 = vrot.slane %v2436, %v2442
      %v2444 = vcombine.low %v2435, %v2443
      %v2445 = vcombine.high %v2435, %v2443
      %v2447 = vunpack.c.l.s4 1934713408
      %v2448 = vunpack.c.0.s8 %v2447
      %v2449 = vlaneseq
      %v2450 = vshrl.u32 %v2449, 7
      %v2451 = vsub.s32 %v2448, %v2450
      %v2452 = vrot.slane %v2444, %v2451
      %v2454 = vunpack.c.l.s4 1934713408
      %v2455 = vunpack.c.0.s8 %v2454
      %v2456 = vlaneseq
      %v2457 = vshrl.u32 %v2456, 7
      %v2458 = vsub.s32 %v2455, %v2457
      %v2459 = vrot.slane %v2445, %v2458
      %v2460 = vcombine.high %v2452, 0
      %v2461 = vcombine.high %v2459, 0
      %v2462 = vcombine.low %v2215, %v2271
      %v2464 = vunpack.c.l.s4 1983009808
      %v2465 = vunpack.c.0.s8 %v2464
      %v2466 = vlaneseq
      %v2467 = vshrl.u32 %v2466, 7
      %v2468 = vsub.s32 %v2465, %v2467
      %v2469 = vrot.slane %v2462, %v2468
      %v2470 = vcombine.low %v2243, %v2299
      %v2472 = vunpack.c.l.s4 1983009808
      %v2473 = vunpack.c.0.s8 %v2472
      %v2474 = vlaneseq
      %v2475 = vshrl.u32 %v2474, 7
      %v2476 = vsub.s32 %v2473, %v2475
      %v2477 = vrot.slane %v2470, %v2476
      %v2478 = vcombine.low %v2469, %v2477
      %v2479 = vcombine.high %v2469, %v2477
      %v2481 = vunpack.c.l.s4 1934713408
      %v2482 = vunpack.c.0.s8 %v2481
      %v2483 = vlaneseq
      %v2484 = vshrl.u32 %v2483, 7
      %v2485 = vsub.s32 %v2482, %v2484
      %v2486 = vrot.slane %v2478, %v2485
      %v2488 = vunpack.c.l.s4 1934713408
      %v2489 = vunpack.c.0.s8 %v2488
      %v2490 = vlaneseq
      %v2491 = vshrl.u32 %v2490, 7
      %v2492 = vsub.s32 %v2489, %v2491
      %v2493 = vrot.slane %v2479, %v2492
      %v2494 = vcombine.high %v2486, 0
      %v2495 = vcombine.high %v2493, 0
      %v2496 = vcombine.low %v2313, %v2369
      %v2498 = vunpack.c.l.s4 1983009808
      %v2499 = vunpack.c.0.s8 %v2498
      %v2500 = vlaneseq
      %v2501 = vshrl.u32 %v2500, 7
      %v2502 = vsub.s32 %v2499, %v2501
      %v2503 = vrot.slane %v2496, %v2502
      %v2504 = vcombine.low %v2341, %v2397
      %v2506 = vunpack.c.l.s4 1983009808
      %v2507 = vunpack.c.0.s8 %v2506
      %v2508 = vlaneseq
      %v2509 = vshrl.u32 %v2508, 7
      %v2510 = vsub.s32 %v2507, %v2509
      %v2511 = vrot.slane %v2504, %v2510
      %v2512 = vcombine.low %v2503, %v2511
      %v2513 = vcombine.high %v2503, %v2511
      %v2515 = vunpack.c.l.s4 1934713408
      %v2516 = vunpack.c.0.s8 %v2515
      %v2517 = vlaneseq
      %v2518 = vshrl.u32 %v2517, 7
      %v2519 = vsub.s32 %v2516, %v2518
      %v2520 = vrot.slane %v2512, %v2519
      %v2522 = vunpack.c.l.s4 1934713408
      %v2523 = vunpack.c.0.s8 %v2522
      %v2524 = vlaneseq
      %v2525 = vshrl.u32 %v2524, 7
      %v2526 = vsub.s32 %v2523, %v2525
      %v2527 = vrot.slane %v2513, %v2526
      %v2528 = vcombine.high %v2520, 0
      %v2529 = vcombine.high %v2527, 0
      %v2530 = vcombine.low %v2327, %v2383
      %v2532 = vunpack.c.l.s4 1983009808
      %v2533 = vunpack.c.0.s8 %v2532
      %v2534 = vlaneseq
      %v2535 = vshrl.u32 %v2534, 7
      %v2536 = vsub.s32 %v2533, %v2535
      %v2537 = vrot.slane %v2530, %v2536
      %v2538 = vcombine.low %v2355, %v2411
      %v2540 = vunpack.c.l.s4 1983009808
      %v2541 = vunpack.c.0.s8 %v2540
      %v2542 = vlaneseq
      %v2543 = vshrl.u32 %v2542, 7
      %v2544 = vsub.s32 %v2541, %v2543
      %v2545 = vrot.slane %v2538, %v2544
      %v2546 = vcombine.low %v2537, %v2545
      %v2547 = vcombine.high %v2537, %v2545
      %v2549 = vunpack.c.l.s4 1934713408
      %v2550 = vunpack.c.0.s8 %v2549
      %v2551 = vlaneseq
      %v2552 = vshrl.u32 %v2551, 7
      %v2553 = vsub.s32 %v2550, %v2552
      %v2554 = vrot.slane %v2546, %v2553
      %v2556 = vunpack.c.l.s4 1934713408
      %v2557 = vunpack.c.0.s8 %v2556
      %v2558 = vlaneseq
      %v2559 = vshrl.u32 %v2558, 7
      %v2560 = vsub.s32 %v2557, %v2559
      %v2561 = vrot.slane %v2547, %v2560
      %v2562 = vcombine.high %v2554, 0
      %v2563 = vcombine.high %v2561, 0
      %v2566 = vpack.i.b16 %v2486, %v2452
      %v2567 = vshrl.u32 %v2452, 16
      %v2568 = vshrl.u32 %v2486, 16
      %v2569 = vpack.i.b16 %v2568, %v2567
      %v2572 = vpack.i.b16 %v2494, %v2460
      %v2573 = vshrl.u32 %v2460, 16
      %v2574 = vshrl.u32 %v2494, 16
      %v2575 = vpack.i.b16 %v2574, %v2573
      %v2578 = vpack.i.b16 %v2493, %v2459
      %v2579 = vshrl.u32 %v2459, 16
      %v2580 = vshrl.u32 %v2493, 16
      %v2581 = vpack.i.b16 %v2580, %v2579
      %v2584 = vpack.i.b16 %v2495, %v2461
      %v2585 = vshrl.u32 %v2461, 16
      %v2586 = vshrl.u32 %v2495, 16
      %v2587 = vpack.i.b16 %v2586, %v2585
      %v2590 = vpack.i.b16 %v2554, %v2520
      %v2591 = vshrl.u32 %v2520, 16
      %v2592 = vshrl.u32 %v2554, 16
      %v2593 = vpack.i.b16 %v2592, %v2591
      %v2596 = vpack.i.b16 %v2562, %v2528
      %v2597 = vshrl.u32 %v2528, 16
      %v2598 = vshrl.u32 %v2562, 16
      %v2599 = vpack.i.b16 %v2598, %v2597
      %v2602 = vpack.i.b16 %v2561, %v2527
      %v2603 = vshrl.u32 %v2527, 16
      %v2604 = vshrl.u32 %v2561, 16
      %v2605 = vpack.i.b16 %v2604, %v2603
      %v2608 = vpack.i.b16 %v2563, %v2529
      %v2609 = vshrl.u32 %v2529, 16
      %v2610 = vshrl.u32 %v2563, 16
      %v2611 = vpack.i.b16 %v2610, %v2609
      %v2612 = vunpack.c.l.b16 %v2566
      %v2613 = vunpack.c.l.b16 %v2590
      %v2614 = vpack.c.b16 %v2613, %v2612
      %v2615 = vunpack.c.l.b16 %v2569
      %v2616 = vunpack.c.l.b16 %v2593
      %v2617 = vpack.c.b16 %v2616, %v2615
      %2618 = vrot.lane.b32.xlu0 %v2617, 8
      %v2619 = vpop.permute.xlu0 %2618
      %v2620 = vunpack.c.l.b16 %v2572
      %v2621 = vunpack.c.l.b16 %v2596
      %v2622 = vpack.c.b16 %v2621, %v2620
      %2623 = vrot.lane.b32.xlu0 %v2622, 16
      %v2624 = vpop.permute.xlu0 %2623
      %v2625 = vunpack.c.l.b16 %v2575
      %v2626 = vunpack.c.l.b16 %v2599
      %v2627 = vpack.c.b16 %v2626, %v2625
      %2628 = vrot.lane.b32.xlu0 %v2627, 24
      %v2629 = vpop.permute.xlu0 %2628
      %v2630 = vunpack.c.l.b16 %v2578
      %v2631 = vunpack.c.l.b16 %v2602
      %v2632 = vpack.c.b16 %v2631, %v2630
      %2633 = vrot.lane.b32.xlu0 %v2632, 32
      %v2634 = vpop.permute.xlu0 %2633
      %v2635 = vunpack.c.l.b16 %v2581
      %v2636 = vunpack.c.l.b16 %v2605
      %v2637 = vpack.c.b16 %v2636, %v2635
      %2638 = vrot.lane.b32.xlu0 %v2637, 40
      %v2639 = vpop.permute.xlu0 %2638
      %v2640 = vunpack.c.l.b16 %v2584
      %v2641 = vunpack.c.l.b16 %v2608
      %v2642 = vpack.c.b16 %v2641, %v2640
      %2643 = vrot.lane.b32.xlu0 %v2642, 48
      %v2644 = vpop.permute.xlu0 %2643
      %v2645 = vunpack.c.l.b16 %v2587
      %v2646 = vunpack.c.l.b16 %v2611
      %v2647 = vpack.c.b16 %v2646, %v2645
      %2648 = vrot.lane.b32.xlu0 %v2647, 56
      %v2649 = vpop.permute.xlu0 %2648
      %v2652 = vsel %vm410, %v2614, %v2619
      %v2654 = vsel %vm414, %v2652, %v2624
      %v2656 = vsel %vm417, %v2654, %v2629
      %v2658 = vsel %vm420, %v2656, %v2634
      %v2660 = vsel %vm423, %v2658, %v2639
      %v2662 = vsel %vm426, %v2660, %v2644
      %v2664 = vsel %vm429, %v2662, %v2649
      %s2666 = scalar_lea.vmem %s1, 48
      %v2667 = vld [vmem:[%s2666] sm:$0xf]
      %v2668 = vld [vmem:[%s2666 + $0x4] sm:$0xf]
      %v2671 = vunpack.c.l.b16 %v2667
      %v2672 = vunpack.c.l.b16 %v2668
      %v2673 = vpack.c.b16 %v2672, %v2671
      %v2675 = vsel %vm414, %v2673, 0
      %2677 = vmatprep.subr.bf16.mxu0 0
      %2678 = vmatpush1.bf16.msra.mxu0 %v2664
      %2679 = vmatprep.subr.bf16.mxu0 0
      %2680 = vmatpush1.bf16.msra.mxu0 0
      %2681 = vmatprep.subr.bf16.mxu0 0
      %2682 = vmatpush1.bf16.msra.mxu0 0
      %2683 = vmatprep.subr.bf16.mxu0 0
      %2684 = vmatpush1.bf16.msra.mxu0 0
      %2685 = vmatprep.subr.bf16.mxu0 0
      %2686 = vmatpush1.bf16.msra.mxu0 0
      %2687 = vmatprep.subr.bf16.mxu0 0
      %2688 = vmatpush1.bf16.msra.mxu0 0
      %2689 = vmatprep.subr.bf16.mxu0 0
      %2690 = vmatpush1.bf16.msra.mxu0 0
      %2691 = vmatprep.subr.bf16.mxu0 0
      %2692 = vmatpush1.bf16.msra.mxu0 0
      %2693 = vmatprep.subr.bf16.mxu0 0
      %2694 = vmatpush1.bf16.msra.mxu0 0
      %2695 = vmatprep.subr.bf16.mxu0 0
      %2696 = vmatpush1.bf16.msra.mxu0 0
      %2697 = vmatprep.subr.bf16.mxu0 0
      %2698 = vmatpush1.bf16.msra.mxu0 0
      %2699 = vmatprep.subr.bf16.mxu0 0
      %2700 = vmatpush1.bf16.msra.mxu0 0
      %2701 = vmatprep.subr.bf16.mxu0 0
      %2702 = vmatpush1.bf16.msra.mxu0 0
      %2703 = vmatprep.subr.bf16.mxu0 0
      %2704 = vmatpush1.bf16.msra.mxu0 0
      %2705 = vmatprep.subr.bf16.mxu0 0
      %2706 = vmatpush1.bf16.msra.mxu0 0
      %2707 = vmatprep.subr.bf16.mxu0 0
      %2708 = vmatpush1.bf16.msra.mxu0 0
      %2709 = vmatprep.mubr.bf16.mxu0 0
      %2710 = vmatmul.mubr.bf16.gmra.mrb[0].mxu0 %v2675
      %v2711 = vpop.f32.mrb[0].mxu0
      %v2712 = vadd.f32 0.0, %v2711
      %v2713 = vpop.f32.mrb[0].mxu0
      %v2714 = vpop.f32.mrb[0].mxu0
      %v2715 = vadd.f32 0.0, %v2714
      %v2716 = vpop.f32.mrb[0].mxu0
      %2717 = vdwg.mxu0
      %v2718 = vadd.f32 %v2151, %v2712
      %v2719 = vadd.f32 %v2152, %v2715
      %v2720 = vld [vmem:[%s435] sm:$0xf]
      %v2721 = vld [vmem:[%s435 + $0x4] sm:$0x1]
      %v2722 = vld [vmem:[%s435 + $0x8] sm:$0xf]
      %v2723 = vld [vmem:[%s435 + $0xc] sm:$0x1]
      %v2724 = vld [vmem:[%s435 + $0x10] sm:$0xf]
      %v2725 = vld [vmem:[%s435 + $0x14] sm:$0x1]
      %v2726 = vld [vmem:[%s435 + $0x18] sm:$0xf]
      %v2727 = vld [vmem:[%s435 + $0x1c] sm:$0x1]
      %v2728 = vld [vmem:[%s435 + $0x20] sm:$0xf]
      %v2729 = vld [vmem:[%s435 + $0x24] sm:$0x1]
      %v2730 = vld [vmem:[%s435 + $0x28] sm:$0xf]
      %v2731 = vld [vmem:[%s435 + $0x2c] sm:$0x1]
      %v2732 = vld [vmem:[%s435 + $0x30] sm:$0xf]
      %v2733 = vld [vmem:[%s435 + $0x34] sm:$0x1]
      %v2734 = vld [vmem:[%s435 + $0x38] sm:$0xf]
      %v2735 = vld [vmem:[%s435 + $0x3c] sm:$0x1]
      %v2736 = vld [vmem:[%s435 + $0x40] sm:$0xf]
      %v2737 = vld [vmem:[%s435 + $0x44] sm:$0x1]
      %v2738 = vld [vmem:[%s435 + $0x48] sm:$0xf]
      %v2739 = vld [vmem:[%s435 + $0x4c] sm:$0x1]
      %v2740 = vld [vmem:[%s435 + $0x50] sm:$0xf]
      %v2741 = vld [vmem:[%s435 + $0x54] sm:$0x1]
      %v2742 = vld [vmem:[%s435 + $0x58] sm:$0xf]
      %v2743 = vld [vmem:[%s435 + $0x5c] sm:$0x1]
      %v2744 = vld [vmem:[%s435 + $0x60] sm:$0xf]
      %v2745 = vld [vmem:[%s435 + $0x64] sm:$0x1]
      %v2746 = vld [vmem:[%s435 + $0x68] sm:$0xf]
      %v2747 = vld [vmem:[%s435 + $0x6c] sm:$0x1]
      %v2748 = vld [vmem:[%s435 + $0x70] sm:$0xf]
      %v2749 = vld [vmem:[%s435 + $0x74] sm:$0x1]
      %v2750 = vld [vmem:[%s435 + $0x78] sm:$0xf]
      %v2751 = vld [vmem:[%s435 + $0x7c] sm:$0x1]
      %v2753 = vshrl.u32 %v2720, 16
      %v2755 = vrot.slane %v2753, 4
      %v2756 = vshll.u32 %v2720, 16
      %v2758 = vrot.slane %v2756, 5
      %v2759 = vor.u32 %v2755, %v2758
      %v2760 = vrot.slane %v2759, 4
      %v2762 = vshll.u32 %v2721, 16
      %v2764 = vrot.slane %v2762, 5
      %v2765 = vsel %vm2187, %v2760, %v2764
      %v2767 = vshrl.u32 %v2722, 16
      %v2769 = vrot.slane %v2767, 4
      %v2770 = vshll.u32 %v2722, 16
      %v2772 = vrot.slane %v2770, 5
      %v2773 = vor.u32 %v2769, %v2772
      %v2774 = vrot.slane %v2773, 4
      %v2776 = vshll.u32 %v2723, 16
      %v2778 = vrot.slane %v2776, 5
      %v2779 = vsel %vm2187, %v2774, %v2778
      %v2781 = vshrl.u32 %v2724, 16
      %v2783 = vrot.slane %v2781, 4
      %v2784 = vshll.u32 %v2724, 16
      %v2786 = vrot.slane %v2784, 5
      %v2787 = vor.u32 %v2783, %v2786
      %v2788 = vrot.slane %v2787, 4
      %v2790 = vshll.u32 %v2725, 16
      %v2792 = vrot.slane %v2790, 5
      %v2793 = vsel %vm2187, %v2788, %v2792
      %v2795 = vshrl.u32 %v2726, 16
      %v2797 = vrot.slane %v2795, 4
      %v2798 = vshll.u32 %v2726, 16
      %v2800 = vrot.slane %v2798, 5
      %v2801 = vor.u32 %v2797, %v2800
      %v2802 = vrot.slane %v2801, 4
      %v2804 = vshll.u32 %v2727, 16
      %v2806 = vrot.slane %v2804, 5
      %v2807 = vsel %vm2187, %v2802, %v2806
      %v2809 = vshrl.u32 %v2728, 16
      %v2811 = vrot.slane %v2809, 4
      %v2812 = vshll.u32 %v2728, 16
      %v2814 = vrot.slane %v2812, 5
      %v2815 = vor.u32 %v2811, %v2814
      %v2816 = vrot.slane %v2815, 4
      %v2818 = vshll.u32 %v2729, 16
      %v2820 = vrot.slane %v2818, 5
      %v2821 = vsel %vm2187, %v2816, %v2820
      %v2823 = vshrl.u32 %v2730, 16
      %v2825 = vrot.slane %v2823, 4
      %v2826 = vshll.u32 %v2730, 16
      %v2828 = vrot.slane %v2826, 5
      %v2829 = vor.u32 %v2825, %v2828
      %v2830 = vrot.slane %v2829, 4
      %v2832 = vshll.u32 %v2731, 16
      %v2834 = vrot.slane %v2832, 5
      %v2835 = vsel %vm2187, %v2830, %v2834
      %v2837 = vshrl.u32 %v2732, 16
      %v2839 = vrot.slane %v2837, 4
      %v2840 = vshll.u32 %v2732, 16
      %v2842 = vrot.slane %v2840, 5
      %v2843 = vor.u32 %v2839, %v2842
      %v2844 = vrot.slane %v2843, 4
      %v2846 = vshll.u32 %v2733, 16
      %v2848 = vrot.slane %v2846, 5
      %v2849 = vsel %vm2187, %v2844, %v2848
      %v2851 = vshrl.u32 %v2734, 16
      %v2853 = vrot.slane %v2851, 4
      %v2854 = vshll.u32 %v2734, 16
      %v2856 = vrot.slane %v2854, 5
      %v2857 = vor.u32 %v2853, %v2856
      %v2858 = vrot.slane %v2857, 4
      %v2860 = vshll.u32 %v2735, 16
      %v2862 = vrot.slane %v2860, 5
      %v2863 = vsel %vm2187, %v2858, %v2862
      %v2865 = vshrl.u32 %v2736, 16
      %v2867 = vrot.slane %v2865, 4
      %v2868 = vshll.u32 %v2736, 16
      %v2870 = vrot.slane %v2868, 5
      %v2871 = vor.u32 %v2867, %v2870
      %v2872 = vrot.slane %v2871, 4
      %v2874 = vshll.u32 %v2737, 16
      %v2876 = vrot.slane %v2874, 5
      %v2877 = vsel %vm2187, %v2872, %v2876
      %v2879 = vshrl.u32 %v2738, 16
      %v2881 = vrot.slane %v2879, 4
      %v2882 = vshll.u32 %v2738, 16
      %v2884 = vrot.slane %v2882, 5
      %v2885 = vor.u32 %v2881, %v2884
      %v2886 = vrot.slane %v2885, 4
      %v2888 = vshll.u32 %v2739, 16
      %v2890 = vrot.slane %v2888, 5
      %v2891 = vsel %vm2187, %v2886, %v2890
      %v2893 = vshrl.u32 %v2740, 16
      %v2895 = vrot.slane %v2893, 4
      %v2896 = vshll.u32 %v2740, 16
      %v2898 = vrot.slane %v2896, 5
      %v2899 = vor.u32 %v2895, %v2898
      %v2900 = vrot.slane %v2899, 4
      %v2902 = vshll.u32 %v2741, 16
      %v2904 = vrot.slane %v2902, 5
      %v2905 = vsel %vm2187, %v2900, %v2904
      %v2907 = vshrl.u32 %v2742, 16
      %v2909 = vrot.slane %v2907, 4
      %v2910 = vshll.u32 %v2742, 16
      %v2912 = vrot.slane %v2910, 5
      %v2913 = vor.u32 %v2909, %v2912
      %v2914 = vrot.slane %v2913, 4
      %v2916 = vshll.u32 %v2743, 16
      %v2918 = vrot.slane %v2916, 5
      %v2919 = vsel %vm2187, %v2914, %v2918
      %v2921 = vshrl.u32 %v2744, 16
      %v2923 = vrot.slane %v2921, 4
      %v2924 = vshll.u32 %v2744, 16
      %v2926 = vrot.slane %v2924, 5
      %v2927 = vor.u32 %v2923, %v2926
      %v2928 = vrot.slane %v2927, 4
      %v2930 = vshll.u32 %v2745, 16
      %v2932 = vrot.slane %v2930, 5
      %v2933 = vsel %vm2187, %v2928, %v2932
      %v2935 = vshrl.u32 %v2746, 16
      %v2937 = vrot.slane %v2935, 4
      %v2938 = vshll.u32 %v2746, 16
      %v2940 = vrot.slane %v2938, 5
      %v2941 = vor.u32 %v2937, %v2940
      %v2942 = vrot.slane %v2941, 4
      %v2944 = vshll.u32 %v2747, 16
      %v2946 = vrot.slane %v2944, 5
      %v2947 = vsel %vm2187, %v2942, %v2946
      %v2949 = vshrl.u32 %v2748, 16
      %v2951 = vrot.slane %v2949, 4
      %v2952 = vshll.u32 %v2748, 16
      %v2954 = vrot.slane %v2952, 5
      %v2955 = vor.u32 %v2951, %v2954
      %v2956 = vrot.slane %v2955, 4
      %v2958 = vshll.u32 %v2749, 16
      %v2960 = vrot.slane %v2958, 5
      %v2961 = vsel %vm2187, %v2956, %v2960
      %v2963 = vshrl.u32 %v2750, 16
      %v2965 = vrot.slane %v2963, 4
      %v2966 = vshll.u32 %v2750, 16
      %v2968 = vrot.slane %v2966, 5
      %v2969 = vor.u32 %v2965, %v2968
      %v2970 = vrot.slane %v2969, 4
      %v2972 = vshll.u32 %v2751, 16
      %v2974 = vrot.slane %v2972, 5
      %v2975 = vsel %vm2187, %v2970, %v2974
      %v2992 = vcombine.low %v2765, %v2821
      %v2994 = vunpack.c.l.s4 1983009808
      %v2995 = vunpack.c.0.s8 %v2994
      %v2996 = vlaneseq
      %v2997 = vshrl.u32 %v2996, 7
      %v2998 = vsub.s32 %v2995, %v2997
      %v2999 = vrot.slane %v2992, %v2998
      %v3000 = vcombine.low %v2793, %v2849
      %v3002 = vunpack.c.l.s4 1983009808
      %v3003 = vunpack.c.0.s8 %v3002
      %v3004 = vlaneseq
      %v3005 = vshrl.u32 %v3004, 7
      %v3006 = vsub.s32 %v3003, %v3005
      %v3007 = vrot.slane %v3000, %v3006
      %v3008 = vcombine.low %v2999, %v3007
      %v3009 = vcombine.high %v2999, %v3007
      %v3011 = vunpack.c.l.s4 1934713408
      %v3012 = vunpack.c.0.s8 %v3011
      %v3013 = vlaneseq
      %v3014 = vshrl.u32 %v3013, 7
      %v3015 = vsub.s32 %v3012, %v3014
      %v3016 = vrot.slane %v3008, %v3015
      %v3018 = vunpack.c.l.s4 1934713408
      %v3019 = vunpack.c.0.s8 %v3018
      %v3020 = vlaneseq
      %v3021 = vshrl.u32 %v3020, 7
      %v3022 = vsub.s32 %v3019, %v3021
      %v3023 = vrot.slane %v3009, %v3022
      %v3024 = vcombine.high %v3016, 0
      %v3025 = vcombine.high %v3023, 0
      %v3026 = vcombine.low %v2779, %v2835
      %v3028 = vunpack.c.l.s4 1983009808
      %v3029 = vunpack.c.0.s8 %v3028
      %v3030 = vlaneseq
      %v3031 = vshrl.u32 %v3030, 7
      %v3032 = vsub.s32 %v3029, %v3031
      %v3033 = vrot.slane %v3026, %v3032
      %v3034 = vcombine.low %v2807, %v2863
      %v3036 = vunpack.c.l.s4 1983009808
      %v3037 = vunpack.c.0.s8 %v3036
      %v3038 = vlaneseq
      %v3039 = vshrl.u32 %v3038, 7
      %v3040 = vsub.s32 %v3037, %v3039
      %v3041 = vrot.slane %v3034, %v3040
      %v3042 = vcombine.low %v3033, %v3041
      %v3043 = vcombine.high %v3033, %v3041
      %v3045 = vunpack.c.l.s4 1934713408
      %v3046 = vunpack.c.0.s8 %v3045
      %v3047 = vlaneseq
      %v3048 = vshrl.u32 %v3047, 7
      %v3049 = vsub.s32 %v3046, %v3048
      %v3050 = vrot.slane %v3042, %v3049
      %v3052 = vunpack.c.l.s4 1934713408
      %v3053 = vunpack.c.0.s8 %v3052
      %v3054 = vlaneseq
      %v3055 = vshrl.u32 %v3054, 7
      %v3056 = vsub.s32 %v3053, %v3055
      %v3057 = vrot.slane %v3043, %v3056
      %v3058 = vcombine.high %v3050, 0
      %v3059 = vcombine.high %v3057, 0
      %v3060 = vcombine.low %v2877, %v2933
      %v3062 = vunpack.c.l.s4 1983009808
      %v3063 = vunpack.c.0.s8 %v3062
      %v3064 = vlaneseq
      %v3065 = vshrl.u32 %v3064, 7
      %v3066 = vsub.s32 %v3063, %v3065
      %v3067 = vrot.slane %v3060, %v3066
      %v3068 = vcombine.low %v2905, %v2961
      %v3070 = vunpack.c.l.s4 1983009808
      %v3071 = vunpack.c.0.s8 %v3070
      %v3072 = vlaneseq
      %v3073 = vshrl.u32 %v3072, 7
      %v3074 = vsub.s32 %v3071, %v3073
      %v3075 = vrot.slane %v3068, %v3074
      %v3076 = vcombine.low %v3067, %v3075
      %v3077 = vcombine.high %v3067, %v3075
      %v3079 = vunpack.c.l.s4 1934713408
      %v3080 = vunpack.c.0.s8 %v3079
      %v3081 = vlaneseq
      %v3082 = vshrl.u32 %v3081, 7
      %v3083 = vsub.s32 %v3080, %v3082
      %v3084 = vrot.slane %v3076, %v3083
      %v3086 = vunpack.c.l.s4 1934713408
      %v3087 = vunpack.c.0.s8 %v3086
      %v3088 = vlaneseq
      %v3089 = vshrl.u32 %v3088, 7
      %v3090 = vsub.s32 %v3087, %v3089
      %v3091 = vrot.slane %v3077, %v3090
      %v3092 = vcombine.high %v3084, 0
      %v3093 = vcombine.high %v3091, 0
      %v3094 = vcombine.low %v2891, %v2947
      %v3096 = vunpack.c.l.s4 1983009808
      %v3097 = vunpack.c.0.s8 %v3096
      %v3098 = vlaneseq
      %v3099 = vshrl.u32 %v3098, 7
      %v3100 = vsub.s32 %v3097, %v3099
      %v3101 = vrot.slane %v3094, %v3100
      %v3102 = vcombine.low %v2919, %v2975
      %v3104 = vunpack.c.l.s4 1983009808
      %v3105 = vunpack.c.0.s8 %v3104
      %v3106 = vlaneseq
      %v3107 = vshrl.u32 %v3106, 7
      %v3108 = vsub.s32 %v3105, %v3107
      %v3109 = vrot.slane %v3102, %v3108
      %v3110 = vcombine.low %v3101, %v3109
      %v3111 = vcombine.high %v3101, %v3109
      %v3113 = vunpack.c.l.s4 1934713408
      %v3114 = vunpack.c.0.s8 %v3113
      %v3115 = vlaneseq
      %v3116 = vshrl.u32 %v3115, 7
      %v3117 = vsub.s32 %v3114, %v3116
      %v3118 = vrot.slane %v3110, %v3117
      %v3120 = vunpack.c.l.s4 1934713408
      %v3121 = vunpack.c.0.s8 %v3120
      %v3122 = vlaneseq
      %v3123 = vshrl.u32 %v3122, 7
      %v3124 = vsub.s32 %v3121, %v3123
      %v3125 = vrot.slane %v3111, %v3124
      %v3126 = vcombine.high %v3118, 0
      %v3127 = vcombine.high %v3125, 0
      %v3130 = vpack.i.b16 %v3050, %v3016
      %v3131 = vshrl.u32 %v3016, 16
      %v3132 = vshrl.u32 %v3050, 16
      %v3133 = vpack.i.b16 %v3132, %v3131
      %v3136 = vpack.i.b16 %v3058, %v3024
      %v3137 = vshrl.u32 %v3024, 16
      %v3138 = vshrl.u32 %v3058, 16
      %v3139 = vpack.i.b16 %v3138, %v3137
      %v3142 = vpack.i.b16 %v3057, %v3023
      %v3143 = vshrl.u32 %v3023, 16
      %v3144 = vshrl.u32 %v3057, 16
      %v3145 = vpack.i.b16 %v3144, %v3143
      %v3148 = vpack.i.b16 %v3059, %v3025
      %v3149 = vshrl.u32 %v3025, 16
      %v3150 = vshrl.u32 %v3059, 16
      %v3151 = vpack.i.b16 %v3150, %v3149
      %v3154 = vpack.i.b16 %v3118, %v3084
      %v3155 = vshrl.u32 %v3084, 16
      %v3156 = vshrl.u32 %v3118, 16
      %v3157 = vpack.i.b16 %v3156, %v3155
      %v3160 = vpack.i.b16 %v3126, %v3092
      %v3161 = vshrl.u32 %v3092, 16
      %v3162 = vshrl.u32 %v3126, 16
      %v3163 = vpack.i.b16 %v3162, %v3161
      %v3166 = vpack.i.b16 %v3125, %v3091
      %v3167 = vshrl.u32 %v3091, 16
      %v3168 = vshrl.u32 %v3125, 16
      %v3169 = vpack.i.b16 %v3168, %v3167
      %v3172 = vpack.i.b16 %v3127, %v3093
      %v3173 = vshrl.u32 %v3093, 16
      %v3174 = vshrl.u32 %v3127, 16
      %v3175 = vpack.i.b16 %v3174, %v3173
      %v3176 = vunpack.c.l.b16 %v3130
      %v3177 = vunpack.c.l.b16 %v3154
      %v3178 = vpack.c.b16 %v3177, %v3176
      %v3179 = vunpack.c.l.b16 %v3133
      %v3180 = vunpack.c.l.b16 %v3157
      %v3181 = vpack.c.b16 %v3180, %v3179
      %3182 = vrot.lane.b32.xlu0 %v3181, 8
      %v3183 = vpop.permute.xlu0 %3182
      %v3184 = vunpack.c.l.b16 %v3136
      %v3185 = vunpack.c.l.b16 %v3160
      %v3186 = vpack.c.b16 %v3185, %v3184
      %3187 = vrot.lane.b32.xlu0 %v3186, 16
      %v3188 = vpop.permute.xlu0 %3187
      %v3189 = vunpack.c.l.b16 %v3139
      %v3190 = vunpack.c.l.b16 %v3163
      %v3191 = vpack.c.b16 %v3190, %v3189
      %3192 = vrot.lane.b32.xlu0 %v3191, 24
      %v3193 = vpop.permute.xlu0 %3192
      %v3194 = vunpack.c.l.b16 %v3142
      %v3195 = vunpack.c.l.b16 %v3166
      %v3196 = vpack.c.b16 %v3195, %v3194
      %3197 = vrot.lane.b32.xlu0 %v3196, 32
      %v3198 = vpop.permute.xlu0 %3197
      %v3199 = vunpack.c.l.b16 %v3145
      %v3200 = vunpack.c.l.b16 %v3169
      %v3201 = vpack.c.b16 %v3200, %v3199
      %3202 = vrot.lane.b32.xlu0 %v3201, 40
      %v3203 = vpop.permute.xlu0 %3202
      %v3204 = vunpack.c.l.b16 %v3148
      %v3205 = vunpack.c.l.b16 %v3172
      %v3206 = vpack.c.b16 %v3205, %v3204
      %3207 = vrot.lane.b32.xlu0 %v3206, 48
      %v3208 = vpop.permute.xlu0 %3207
      %v3209 = vunpack.c.l.b16 %v3151
      %v3210 = vunpack.c.l.b16 %v3175
      %v3211 = vpack.c.b16 %v3210, %v3209
      %3212 = vrot.lane.b32.xlu0 %v3211, 56
      %v3213 = vpop.permute.xlu0 %3212
      %v3216 = vsel %vm410, %v3178, %v3183
      %v3218 = vsel %vm414, %v3216, %v3188
      %v3220 = vsel %vm417, %v3218, %v3193
      %v3222 = vsel %vm420, %v3220, %v3198
      %v3224 = vsel %vm423, %v3222, %v3203
      %v3226 = vsel %vm426, %v3224, %v3208
      %v3228 = vsel %vm429, %v3226, %v3213
      %s3230 = scalar_lea.vmem %s1, 56
      %v3231 = vld [vmem:[%s3230] sm:$0xf]
      %v3232 = vld [vmem:[%s3230 + $0x4] sm:$0xf]
      %v3235 = vunpack.c.l.b16 %v3231
      %v3236 = vunpack.c.l.b16 %v3232
      %v3237 = vpack.c.b16 %v3236, %v3235
      %v3239 = vsel %vm414, %v3237, 0
      %3241 = vmatprep.subr.bf16.mxu0 0
      %3242 = vmatpush1.bf16.msra.mxu0 %v3228
      %3243 = vmatprep.subr.bf16.mxu0 0
      %3244 = vmatpush1.bf16.msra.mxu0 0
      %3245 = vmatprep.subr.bf16.mxu0 0
      %3246 = vmatpush1.bf16.msra.mxu0 0
      %3247 = vmatprep.subr.bf16.mxu0 0
      %3248 = vmatpush1.bf16.msra.mxu0 0
      %3249 = vmatprep.subr.bf16.mxu0 0
      %3250 = vmatpush1.bf16.msra.mxu0 0
      %3251 = vmatprep.subr.bf16.mxu0 0
      %3252 = vmatpush1.bf16.msra.mxu0 0
      %3253 = vmatprep.subr.bf16.mxu0 0
      %3254 = vmatpush1.bf16.msra.mxu0 0
      %3255 = vmatprep.subr.bf16.mxu0 0
      %3256 = vmatpush1.bf16.msra.mxu0 0
      %3257 = vmatprep.subr.bf16.mxu0 0
      %3258 = vmatpush1.bf16.msra.mxu0 0
      %3259 = vmatprep.subr.bf16.mxu0 0
      %3260 = vmatpush1.bf16.msra.mxu0 0
      %3261 = vmatprep.subr.bf16.mxu0 0
      %3262 = vmatpush1.bf16.msra.mxu0 0
      %3263 = vmatprep.subr.bf16.mxu0 0
      %3264 = vmatpush1.bf16.msra.mxu0 0
      %3265 = vmatprep.subr.bf16.mxu0 0
      %3266 = vmatpush1.bf16.msra.mxu0 0
      %3267 = vmatprep.subr.bf16.mxu0 0
      %3268 = vmatpush1.bf16.msra.mxu0 0
      %3269 = vmatprep.subr.bf16.mxu0 0
      %3270 = vmatpush1.bf16.msra.mxu0 0
      %3271 = vmatprep.subr.bf16.mxu0 0
      %3272 = vmatpush1.bf16.msra.mxu0 0
      %3273 = vmatprep.mubr.bf16.mxu0 0
      %3274 = vmatmul.mubr.bf16.gmra.mrb[0].mxu0 %v3239
      %v3275 = vpop.f32.mrb[0].mxu0
      %v3276 = vadd.f32 0.0, %v3275
      %v3277 = vpop.f32.mrb[0].mxu0
      %v3278 = vpop.f32.mrb[0].mxu0
      %v3279 = vadd.f32 0.0, %v3278
      %v3280 = vpop.f32.mrb[0].mxu0
      %3281 = vdwg.mxu0
      %v3282 = vadd.f32 %v2718, %v3276
      %v3283 = vadd.f32 %v2719, %v3279
      %v3284 = vld [vmem:[%s165] sm:$0xf]
      %v3285 = vld [vmem:[%s165 + $0x4] sm:$0x1]
      %v3286 = vld [vmem:[%s165 + $0x8] sm:$0xf]
      %v3287 = vld [vmem:[%s165 + $0xc] sm:$0x1]
      %v3288 = vld [vmem:[%s165 + $0x10] sm:$0xf]
      %v3289 = vld [vmem:[%s165 + $0x14] sm:$0x1]
      %v3290 = vld [vmem:[%s165 + $0x18] sm:$0xf]
      %v3291 = vld [vmem:[%s165 + $0x1c] sm:$0x1]
      %v3292 = vld [vmem:[%s165 + $0x20] sm:$0xf]
      %v3293 = vld [vmem:[%s165 + $0x24] sm:$0x1]
      %v3294 = vld [vmem:[%s165 + $0x28] sm:$0xf]
      %v3295 = vld [vmem:[%s165 + $0x2c] sm:$0x1]
      %v3296 = vld [vmem:[%s165 + $0x30] sm:$0xf]
      %v3297 = vld [vmem:[%s165 + $0x34] sm:$0x1]
      %v3298 = vld [vmem:[%s165 + $0x38] sm:$0xf]
      %v3299 = vld [vmem:[%s165 + $0x3c] sm:$0x1]
      %v3300 = vld [vmem:[%s165 + $0x40] sm:$0xf]
      %v3301 = vld [vmem:[%s165 + $0x44] sm:$0x1]
      %v3302 = vld [vmem:[%s165 + $0x48] sm:$0xf]
      %v3303 = vld [vmem:[%s165 + $0x4c] sm:$0x1]
      %v3304 = vld [vmem:[%s165 + $0x50] sm:$0xf]
      %v3305 = vld [vmem:[%s165 + $0x54] sm:$0x1]
      %v3306 = vld [vmem:[%s165 + $0x58] sm:$0xf]
      %v3307 = vld [vmem:[%s165 + $0x5c] sm:$0x1]
      %v3308 = vld [vmem:[%s165 + $0x60] sm:$0xf]
      %v3309 = vld [vmem:[%s165 + $0x64] sm:$0x1]
      %v3310 = vld [vmem:[%s165 + $0x68] sm:$0xf]
      %v3311 = vld [vmem:[%s165 + $0x6c] sm:$0x1]
      %v3312 = vld [vmem:[%s165 + $0x70] sm:$0xf]
      %v3313 = vld [vmem:[%s165 + $0x74] sm:$0x1]
      %v3314 = vld [vmem:[%s165 + $0x78] sm:$0xf]
      %v3315 = vld [vmem:[%s165 + $0x7c] sm:$0x1]
      %v3317 = vshrl.u32 %v3284, 16
      %v3319 = vrot.slane %v3317, 4
      %v3320 = vshll.u32 %v3284, 16
      %v3322 = vrot.slane %v3320, 5
      %v3323 = vor.u32 %v3319, %v3322
      %v3324 = vrot.slane %v3323, 4
      %v3326 = vshll.u32 %v3285, 16
      %v3328 = vrot.slane %v3326, 5
      %v3329 = vsel %vm2187, %v3324, %v3328
      %v3331 = vshrl.u32 %v3286, 16
      %v3333 = vrot.slane %v3331, 4
      %v3334 = vshll.u32 %v3286, 16
      %v3336 = vrot.slane %v3334, 5
      %v3337 = vor.u32 %v3333, %v3336
      %v3338 = vrot.slane %v3337, 4
      %v3340 = vshll.u32 %v3287, 16
      %v3342 = vrot.slane %v3340, 5
      %v3343 = vsel %vm2187, %v3338, %v3342
      %v3345 = vshrl.u32 %v3288, 16
      %v3347 = vrot.slane %v3345, 4
      %v3348 = vshll.u32 %v3288, 16
      %v3350 = vrot.slane %v3348, 5
      %v3351 = vor.u32 %v3347, %v3350
      %v3352 = vrot.slane %v3351, 4
      %v3354 = vshll.u32 %v3289, 16
      %v3356 = vrot.slane %v3354, 5
      %v3357 = vsel %vm2187, %v3352, %v3356
      %v3359 = vshrl.u32 %v3290, 16
      %v3361 = vrot.slane %v3359, 4
      %v3362 = vshll.u32 %v3290, 16
      %v3364 = vrot.slane %v3362, 5
      %v3365 = vor.u32 %v3361, %v3364
      %v3366 = vrot.slane %v3365, 4
      %v3368 = vshll.u32 %v3291, 16
      %v3370 = vrot.slane %v3368, 5
      %v3371 = vsel %vm2187, %v3366, %v3370
      %v3373 = vshrl.u32 %v3292, 16
      %v3375 = vrot.slane %v3373, 4
      %v3376 = vshll.u32 %v3292, 16
      %v3378 = vrot.slane %v3376, 5
      %v3379 = vor.u32 %v3375, %v3378
      %v3380 = vrot.slane %v3379, 4
      %v3382 = vshll.u32 %v3293, 16
      %v3384 = vrot.slane %v3382, 5
      %v3385 = vsel %vm2187, %v3380, %v3384
      %v3387 = vshrl.u32 %v3294, 16
      %v3389 = vrot.slane %v3387, 4
      %v3390 = vshll.u32 %v3294, 16
      %v3392 = vrot.slane %v3390, 5
      %v3393 = vor.u32 %v3389, %v3392
      %v3394 = vrot.slane %v3393, 4
      %v3396 = vshll.u32 %v3295, 16
      %v3398 = vrot.slane %v3396, 5
      %v3399 = vsel %vm2187, %v3394, %v3398
      %v3401 = vshrl.u32 %v3296, 16
      %v3403 = vrot.slane %v3401, 4
      %v3404 = vshll.u32 %v3296, 16
      %v3406 = vrot.slane %v3404, 5
      %v3407 = vor.u32 %v3403, %v3406
      %v3408 = vrot.slane %v3407, 4
      %v3410 = vshll.u32 %v3297, 16
      %v3412 = vrot.slane %v3410, 5
      %v3413 = vsel %vm2187, %v3408, %v3412
      %v3415 = vshrl.u32 %v3298, 16
      %v3417 = vrot.slane %v3415, 4
      %v3418 = vshll.u32 %v3298, 16
      %v3420 = vrot.slane %v3418, 5
      %v3421 = vor.u32 %v3417, %v3420
      %v3422 = vrot.slane %v3421, 4
      %v3424 = vshll.u32 %v3299, 16
      %v3426 = vrot.slane %v3424, 5
      %v3427 = vsel %vm2187, %v3422, %v3426
      %v3429 = vshrl.u32 %v3300, 16
      %v3431 = vrot.slane %v3429, 4
      %v3432 = vshll.u32 %v3300, 16
      %v3434 = vrot.slane %v3432, 5
      %v3435 = vor.u32 %v3431, %v3434
      %v3436 = vrot.slane %v3435, 4
      %v3438 = vshll.u32 %v3301, 16
      %v3440 = vrot.slane %v3438, 5
      %v3441 = vsel %vm2187, %v3436, %v3440
      %v3443 = vshrl.u32 %v3302, 16
      %v3445 = vrot.slane %v3443, 4
      %v3446 = vshll.u32 %v3302, 16
      %v3448 = vrot.slane %v3446, 5
      %v3449 = vor.u32 %v3445, %v3448
      %v3450 = vrot.slane %v3449, 4
      %v3452 = vshll.u32 %v3303, 16
      %v3454 = vrot.slane %v3452, 5
      %v3455 = vsel %vm2187, %v3450, %v3454
      %v3457 = vshrl.u32 %v3304, 16
      %v3459 = vrot.slane %v3457, 4
      %v3460 = vshll.u32 %v3304, 16
      %v3462 = vrot.slane %v3460, 5
      %v3463 = vor.u32 %v3459, %v3462
      %v3464 = vrot.slane %v3463, 4
      %v3466 = vshll.u32 %v3305, 16
      %v3468 = vrot.slane %v3466, 5
      %v3469 = vsel %vm2187, %v3464, %v3468
      %v3471 = vshrl.u32 %v3306, 16
      %v3473 = vrot.slane %v3471, 4
      %v3474 = vshll.u32 %v3306, 16
      %v3476 = vrot.slane %v3474, 5
      %v3477 = vor.u32 %v3473, %v3476
      %v3478 = vrot.slane %v3477, 4
      %v3480 = vshll.u32 %v3307, 16
      %v3482 = vrot.slane %v3480, 5
      %v3483 = vsel %vm2187, %v3478, %v3482
      %v3485 = vshrl.u32 %v3308, 16
      %v3487 = vrot.slane %v3485, 4
      %v3488 = vshll.u32 %v3308, 16
      %v3490 = vrot.slane %v3488, 5
      %v3491 = vor.u32 %v3487, %v3490
      %v3492 = vrot.slane %v3491, 4
      %v3494 = vshll.u32 %v3309, 16
      %v3496 = vrot.slane %v3494, 5
      %v3497 = vsel %vm2187, %v3492, %v3496
      %v3499 = vshrl.u32 %v3310, 16
      %v3501 = vrot.slane %v3499, 4
      %v3502 = vshll.u32 %v3310, 16
      %v3504 = vrot.slane %v3502, 5
      %v3505 = vor.u32 %v3501, %v3504
      %v3506 = vrot.slane %v3505, 4
      %v3508 = vshll.u32 %v3311, 16
      %v3510 = vrot.slane %v3508, 5
      %v3511 = vsel %vm2187, %v3506, %v3510
      %v3513 = vshrl.u32 %v3312, 16
      %v3515 = vrot.slane %v3513, 4
      %v3516 = vshll.u32 %v3312, 16
      %v3518 = vrot.slane %v3516, 5
      %v3519 = vor.u32 %v3515, %v3518
      %v3520 = vrot.slane %v3519, 4
      %v3522 = vshll.u32 %v3313, 16
      %v3524 = vrot.slane %v3522, 5
      %v3525 = vsel %vm2187, %v3520, %v3524
      %v3527 = vshrl.u32 %v3314, 16
      %v3529 = vrot.slane %v3527, 4
      %v3530 = vshll.u32 %v3314, 16
      %v3532 = vrot.slane %v3530, 5
      %v3533 = vor.u32 %v3529, %v3532
      %v3534 = vrot.slane %v3533, 4
      %v3536 = vshll.u32 %v3315, 16
      %v3538 = vrot.slane %v3536, 5
      %v3539 = vsel %vm2187, %v3534, %v3538
      %3540 = vrot.lane.b32.xlu0 %v3329, 127
      %v3541 = vpop.permute.xlu0 %3540
      %3542 = vrot.lane.b32.xlu0 %v3343, 127
      %v3543 = vpop.permute.xlu0 %3542
      %3544 = vrot.lane.b32.xlu0 %v3357, 127
      %v3545 = vpop.permute.xlu0 %3544
      %3546 = vrot.lane.b32.xlu0 %v3371, 127
      %v3547 = vpop.permute.xlu0 %3546
      %3548 = vrot.lane.b32.xlu0 %v3385, 127
      %v3549 = vpop.permute.xlu0 %3548
      %3550 = vrot.lane.b32.xlu0 %v3399, 127
      %v3551 = vpop.permute.xlu0 %3550
      %3552 = vrot.lane.b32.xlu0 %v3413, 127
      %v3553 = vpop.permute.xlu0 %3552
      %3554 = vrot.lane.b32.xlu0 %v3427, 127
      %v3555 = vpop.permute.xlu0 %3554
      %3556 = vrot.lane.b32.xlu0 %v3441, 127
      %v3557 = vpop.permute.xlu0 %3556
      %3558 = vrot.lane.b32.xlu0 %v3455, 127
      %v3559 = vpop.permute.xlu0 %3558
      %3560 = vrot.lane.b32.xlu0 %v3469, 127
      %v3561 = vpop.permute.xlu0 %3560
      %3562 = vrot.lane.b32.xlu0 %v3483, 127
      %v3563 = vpop.permute.xlu0 %3562
      %3564 = vrot.lane.b32.xlu0 %v3497, 127
      %v3565 = vpop.permute.xlu0 %3564
      %3566 = vrot.lane.b32.xlu0 %v3511, 127
      %v3567 = vpop.permute.xlu0 %3566
      %3568 = vrot.lane.b32.xlu0 %v3525, 127
      %v3569 = vpop.permute.xlu0 %3568
      %3570 = vrot.lane.b32.xlu0 %v3539, 127
      %v3571 = vpop.permute.xlu0 %3570
      %v3588 = vcombine.low %v3541, %v3549
      %v3590 = vunpack.c.l.s4 1983009808
      %v3591 = vunpack.c.0.s8 %v3590
      %v3592 = vlaneseq
      %v3593 = vshrl.u32 %v3592, 7
      %v3594 = vsub.s32 %v3591, %v3593
      %v3595 = vrot.slane %v3588, %v3594
      %v3596 = vcombine.low %v3545, %v3553
      %v3598 = vunpack.c.l.s4 1983009808
      %v3599 = vunpack.c.0.s8 %v3598
      %v3600 = vlaneseq
      %v3601 = vshrl.u32 %v3600, 7
      %v3602 = vsub.s32 %v3599, %v3601
      %v3603 = vrot.slane %v3596, %v3602
      %v3604 = vcombine.low %v3595, %v3603
      %v3605 = vcombine.high %v3595, %v3603
      %v3607 = vunpack.c.l.s4 1934713408
      %v3608 = vunpack.c.0.s8 %v3607
      %v3609 = vlaneseq
      %v3610 = vshrl.u32 %v3609, 7
      %v3611 = vsub.s32 %v3608, %v3610
      %v3612 = vrot.slane %v3604, %v3611
      %v3614 = vunpack.c.l.s4 1934713408
      %v3615 = vunpack.c.0.s8 %v3614
      %v3616 = vlaneseq
      %v3617 = vshrl.u32 %v3616, 7
      %v3618 = vsub.s32 %v3615, %v3617
      %v3619 = vrot.slane %v3605, %v3618
      %v3620 = vcombine.high %v3612, 0
      %v3621 = vcombine.high %v3619, 0
      %v3622 = vcombine.low %v3543, %v3551
      %v3624 = vunpack.c.l.s4 1983009808
      %v3625 = vunpack.c.0.s8 %v3624
      %v3626 = vlaneseq
      %v3627 = vshrl.u32 %v3626, 7
      %v3628 = vsub.s32 %v3625, %v3627
      %v3629 = vrot.slane %v3622, %v3628
      %v3630 = vcombine.low %v3547, %v3555
      %v3632 = vunpack.c.l.s4 1983009808
      %v3633 = vunpack.c.0.s8 %v3632
      %v3634 = vlaneseq
      %v3635 = vshrl.u32 %v3634, 7
      %v3636 = vsub.s32 %v3633, %v3635
      %v3637 = vrot.slane %v3630, %v3636
      %v3638 = vcombine.low %v3629, %v3637
      %v3639 = vcombine.high %v3629, %v3637
      %v3641 = vunpack.c.l.s4 1934713408
      %v3642 = vunpack.c.0.s8 %v3641
      %v3643 = vlaneseq
      %v3644 = vshrl.u32 %v3643, 7
      %v3645 = vsub.s32 %v3642, %v3644
      %v3646 = vrot.slane %v3638, %v3645
      %v3648 = vunpack.c.l.s4 1934713408
      %v3649 = vunpack.c.0.s8 %v3648
      %v3650 = vlaneseq
      %v3651 = vshrl.u32 %v3650, 7
      %v3652 = vsub.s32 %v3649, %v3651
      %v3653 = vrot.slane %v3639, %v3652
      %v3654 = vcombine.high %v3646, 0
      %v3655 = vcombine.high %v3653, 0
      %v3656 = vcombine.low %v3557, %v3565
      %v3658 = vunpack.c.l.s4 1983009808
      %v3659 = vunpack.c.0.s8 %v3658
      %v3660 = vlaneseq
      %v3661 = vshrl.u32 %v3660, 7
      %v3662 = vsub.s32 %v3659, %v3661
      %v3663 = vrot.slane %v3656, %v3662
      %v3664 = vcombine.low %v3561, %v3569
      %v3666 = vunpack.c.l.s4 1983009808
      %v3667 = vunpack.c.0.s8 %v3666
      %v3668 = vlaneseq
      %v3669 = vshrl.u32 %v3668, 7
      %v3670 = vsub.s32 %v3667, %v3669
      %v3671 = vrot.slane %v3664, %v3670
      %v3672 = vcombine.low %v3663, %v3671
      %v3673 = vcombine.high %v3663, %v3671
      %v3675 = vunpack.c.l.s4 1934713408
      %v3676 = vunpack.c.0.s8 %v3675
      %v3677 = vlaneseq
      %v3678 = vshrl.u32 %v3677, 7
      %v3679 = vsub.s32 %v3676, %v3678
      %v3680 = vrot.slane %v3672, %v3679
      %v3682 = vunpack.c.l.s4 1934713408
      %v3683 = vunpack.c.0.s8 %v3682
      %v3684 = vlaneseq
      %v3685 = vshrl.u32 %v3684, 7
      %v3686 = vsub.s32 %v3683, %v3685
      %v3687 = vrot.slane %v3673, %v3686
      %v3688 = vcombine.high %v3680, 0
      %v3689 = vcombine.high %v3687, 0
      %v3690 = vcombine.low %v3559, %v3567
      %v3692 = vunpack.c.l.s4 1983009808
      %v3693 = vunpack.c.0.s8 %v3692
      %v3694 = vlaneseq
      %v3695 = vshrl.u32 %v3694, 7
      %v3696 = vsub.s32 %v3693, %v3695
      %v3697 = vrot.slane %v3690, %v3696
      %v3698 = vcombine.low %v3563, %v3571
      %v3700 = vunpack.c.l.s4 1983009808
      %v3701 = vunpack.c.0.s8 %v3700
      %v3702 = vlaneseq
      %v3703 = vshrl.u32 %v3702, 7
      %v3704 = vsub.s32 %v3701, %v3703
      %v3705 = vrot.slane %v3698, %v3704
      %v3706 = vcombine.low %v3697, %v3705
      %v3707 = vcombine.high %v3697, %v3705
      %v3709 = vunpack.c.l.s4 1934713408
      %v3710 = vunpack.c.0.s8 %v3709
      %v3711 = vlaneseq
      %v3712 = vshrl.u32 %v3711, 7
      %v3713 = vsub.s32 %v3710, %v3712
      %v3714 = vrot.slane %v3706, %v3713
      %v3716 = vunpack.c.l.s4 1934713408
      %v3717 = vunpack.c.0.s8 %v3716
      %v3718 = vlaneseq
      %v3719 = vshrl.u32 %v3718, 7
      %v3720 = vsub.s32 %v3717, %v3719
      %v3721 = vrot.slane %v3707, %v3720
      %v3722 = vcombine.high %v3714, 0
      %v3723 = vcombine.high %v3721, 0
      %v3726 = vpack.i.b16 %v3646, %v3612
      %v3727 = vshrl.u32 %v3612, 16
      %v3728 = vshrl.u32 %v3646, 16
      %v3729 = vpack.i.b16 %v3728, %v3727
      %v3732 = vpack.i.b16 %v3654, %v3620
      %v3733 = vshrl.u32 %v3620, 16
      %v3734 = vshrl.u32 %v3654, 16
      %v3735 = vpack.i.b16 %v3734, %v3733
      %v3738 = vpack.i.b16 %v3653, %v3619
      %v3739 = vshrl.u32 %v3619, 16
      %v3740 = vshrl.u32 %v3653, 16
      %v3741 = vpack.i.b16 %v3740, %v3739
      %v3744 = vpack.i.b16 %v3655, %v3621
      %v3745 = vshrl.u32 %v3621, 16
      %v3746 = vshrl.u32 %v3655, 16
      %v3747 = vpack.i.b16 %v3746, %v3745
      %v3750 = vpack.i.b16 %v3714, %v3680
      %v3751 = vshrl.u32 %v3680, 16
      %v3752 = vshrl.u32 %v3714, 16
      %v3753 = vpack.i.b16 %v3752, %v3751
      %v3756 = vpack.i.b16 %v3722, %v3688
      %v3757 = vshrl.u32 %v3688, 16
      %v3758 = vshrl.u32 %v3722, 16
      %v3759 = vpack.i.b16 %v3758, %v3757
      %v3762 = vpack.i.b16 %v3721, %v3687
      %v3763 = vshrl.u32 %v3687, 16
      %v3764 = vshrl.u32 %v3721, 16
      %v3765 = vpack.i.b16 %v3764, %v3763
      %v3768 = vpack.i.b16 %v3723, %v3689
      %v3769 = vshrl.u32 %v3689, 16
      %v3770 = vshrl.u32 %v3723, 16
      %v3771 = vpack.i.b16 %v3770, %v3769
      %v3772 = vunpack.c.l.b16 %v3726
      %v3773 = vunpack.c.l.b16 %v3750
      %v3774 = vpack.c.b16 %v3773, %v3772
      %v3775 = vunpack.c.l.b16 %v3729
      %v3776 = vunpack.c.l.b16 %v3753
      %v3777 = vpack.c.b16 %v3776, %v3775
      %3778 = vrot.lane.b32.xlu0 %v3777, 8
      %v3779 = vpop.permute.xlu0 %3778
      %v3780 = vunpack.c.l.b16 %v3732
      %v3781 = vunpack.c.l.b16 %v3756
      %v3782 = vpack.c.b16 %v3781, %v3780
      %3783 = vrot.lane.b32.xlu0 %v3782, 16
      %v3784 = vpop.permute.xlu0 %3783
      %v3785 = vunpack.c.l.b16 %v3735
      %v3786 = vunpack.c.l.b16 %v3759
      %v3787 = vpack.c.b16 %v3786, %v3785
      %3788 = vrot.lane.b32.xlu0 %v3787, 24
      %v3789 = vpop.permute.xlu0 %3788
      %v3790 = vunpack.c.l.b16 %v3738
      %v3791 = vunpack.c.l.b16 %v3762
      %v3792 = vpack.c.b16 %v3791, %v3790
      %3793 = vrot.lane.b32.xlu0 %v3792, 32
      %v3794 = vpop.permute.xlu0 %3793
      %v3795 = vunpack.c.l.b16 %v3741
      %v3796 = vunpack.c.l.b16 %v3765
      %v3797 = vpack.c.b16 %v3796, %v3795
      %3798 = vrot.lane.b32.xlu0 %v3797, 40
      %v3799 = vpop.permute.xlu0 %3798
      %v3800 = vunpack.c.l.b16 %v3744
      %v3801 = vunpack.c.l.b16 %v3768
      %v3802 = vpack.c.b16 %v3801, %v3800
      %3803 = vrot.lane.b32.xlu0 %v3802, 48
      %v3804 = vpop.permute.xlu0 %3803
      %v3805 = vunpack.c.l.b16 %v3747
      %v3806 = vunpack.c.l.b16 %v3771
      %v3807 = vpack.c.b16 %v3806, %v3805
      %3808 = vrot.lane.b32.xlu0 %v3807, 56
      %v3809 = vpop.permute.xlu0 %3808
      %v3812 = vsel %vm410, %v3774, %v3779
      %v3814 = vsel %vm414, %v3812, %v3784
      %v3816 = vsel %vm417, %v3814, %v3789
      %v3818 = vsel %vm420, %v3816, %v3794
      %v3820 = vsel %vm423, %v3818, %v3799
      %v3822 = vsel %vm426, %v3820, %v3804
      %v3824 = vsel %vm429, %v3822, %v3809
      %s3826 = scalar_lea.vmem %s1, 64
      %v3827 = vld [vmem:[%s3826] sm:$0xf]
      %v3828 = vld [vmem:[%s3826 + $0x4] sm:$0xf]
      %v3831 = vunpack.c.l.b16 %v3827
      %v3832 = vunpack.c.l.b16 %v3828
      %v3833 = vpack.c.b16 %v3832, %v3831
      %v3835 = vsel %vm414, %v3833, 0
      %3837 = vmatprep.subr.bf16.mxu0 0
      %3838 = vmatpush1.bf16.msra.mxu0 %v3824
      %3839 = vmatprep.subr.bf16.mxu0 0
      %3840 = vmatpush1.bf16.msra.mxu0 0
      %3841 = vmatprep.subr.bf16.mxu0 0
      %3842 = vmatpush1.bf16.msra.mxu0 0
      %3843 = vmatprep.subr.bf16.mxu0 0
      %3844 = vmatpush1.bf16.msra.mxu0 0
      %3845 = vmatprep.subr.bf16.mxu0 0
      %3846 = vmatpush1.bf16.msra.mxu0 0
      %3847 = vmatprep.subr.bf16.mxu0 0
      %3848 = vmatpush1.bf16.msra.mxu0 0
      %3849 = vmatprep.subr.bf16.mxu0 0
      %3850 = vmatpush1.bf16.msra.mxu0 0
      %3851 = vmatprep.subr.bf16.mxu0 0
      %3852 = vmatpush1.bf16.msra.mxu0 0
      %3853 = vmatprep.subr.bf16.mxu0 0
      %3854 = vmatpush1.bf16.msra.mxu0 0
      %3855 = vmatprep.subr.bf16.mxu0 0
      %3856 = vmatpush1.bf16.msra.mxu0 0
      %3857 = vmatprep.subr.bf16.mxu0 0
      %3858 = vmatpush1.bf16.msra.mxu0 0
      %3859 = vmatprep.subr.bf16.mxu0 0
      %3860 = vmatpush1.bf16.msra.mxu0 0
      %3861 = vmatprep.subr.bf16.mxu0 0
      %3862 = vmatpush1.bf16.msra.mxu0 0
      %3863 = vmatprep.subr.bf16.mxu0 0
      %3864 = vmatpush1.bf16.msra.mxu0 0
      %3865 = vmatprep.subr.bf16.mxu0 0
      %3866 = vmatpush1.bf16.msra.mxu0 0
      %3867 = vmatprep.subr.bf16.mxu0 0
      %3868 = vmatpush1.bf16.msra.mxu0 0
      %3869 = vmatprep.mubr.bf16.mxu0 0
      %3870 = vmatmul.mubr.bf16.gmra.mrb[0].mxu0 %v3835
      %v3871 = vpop.f32.mrb[0].mxu0
      %v3872 = vadd.f32 0.0, %v3871
      %v3873 = vpop.f32.mrb[0].mxu0
      %v3874 = vpop.f32.mrb[0].mxu0
      %v3875 = vadd.f32 0.0, %v3874
      %v3876 = vpop.f32.mrb[0].mxu0
      %3877 = vdwg.mxu0
      %v3878 = vadd.f32 %v3282, %v3872
      %v3879 = vadd.f32 %v3283, %v3875
      %v3880 = vld [vmem:[%s2] sm:$0xff]
      %v3881 = vld [vmem:[%s2 + $0x8] sm:$0xff]
      %3883 = vset.pattern.permute.xlu0 0
      %3884 = vperm.xlu0 %3883, %v3880
      %v3885 = vpop.permute.xlu0 %3884
      %3888 = vset.pattern.permute.xlu0 0
      %3889 = vperm.xlu0 %3888, %v3881
      %v3890 = vpop.permute.xlu0 %3889
      %v3892 = vadd.f32 %v3878, %v3885
      %v3893 = vadd.f32 %v3879, %v3890
      %vm3894 = vcmp.ge.f32.partialorder %v3892, 0.0
      %vm3895 = vcmp.ge.f32.partialorder %v3893, 0.0
      %v3896 = vmul.f32 %v3892, 0.2
      %v3897 = vmul.f32 %v3893, 0.2
      %v3898 = vsel %vm3894, %v3892, %v3896
      %v3899 = vsel %vm3895, %v3893, %v3897
      %v3900 = vmul.f32 %v3898, 1.4142135
      %v3901 = vmul.f32 %v3899, 1.4142135
      %v3902 = vpack.c.bf16 %v3901, %v3900
      %v3904 = vunpack.c.l.b16 %v3902
      %v3905 = vunpack.c.h.b16 %v3902
      %v3906 = vpack.c.b16 %v3904, %v3904
      %v3907 = vpack.c.b16 %v3905, %v3905
      %vm3910 = vcmask 519168
      %3911 = vst.msk [vmem:[%s170] sm:$0xf] %vm3910, %v3906
      %3912 = vst.msk [vmem:[%s170 + $0x4] sm:$0xf] %vm3910, %v3907
      %p3913 = scmp.lt.s32.totalorder %s14, 1
      %s3914 = scalar_select %p3913, %s14, 1
      %s3915 = smul.addr %s3914, 2
      %s3916 = smul.addr %s3915, 4
      %s3917 = scalar_lea.vmem %s3, %s3916
      // Predicated region
      $region33: #{to_style_forward.4} parent=31 // pred_check
        %p3918 = pneg %p100
      $region34: #{to_style_forward.4} parent=31 // pred_check_branch
        %3920 = sbr.rel (%p3918) target = $region36
      $region35: #{to_style_forward.4} parent=31 // pred_region
        _
      $region36: #{to_style_forward.4} parent=31 // pred_fallthru
        _
    $region32: #{to_style_forward.4} parent=5 // pred_fallthru
      _
    %p3921 = scmp.le.s32.totalorder 2, %s9
    // Predicated region
    $region37: #{to_style_forward.4} parent=5 // pred_check
      %p3922 = pneg %p3921
    $region38: #{to_style_forward.4} parent=5 // pred_check_branch
      %3924 = sbr.rel (%p3922) target = $region40
    $region39: #{to_style_forward.4} parent=5 // pred_region
      %s3925 = ssub.s32 %s9, 2
      // Predicated region
      $region41: #{to_style_forward.4} parent=39 // pred_check
        %p3926 = pneg %p106
      $region42: #{to_style_forward.4} parent=39 // pred_check_branch
        %3928 = sbr.rel (%p3926) target = $region44
      $region43: #{to_style_forward.4} parent=39 // pred_region
        %p3929 = scmp.lt.s32.totalorder %s15, 1
        %s3930 = scalar_select %p3929, %s15, 1
        %s3931 = smul.addr %s3930, 2
        %s3932 = smul.addr %s3931, 4
        %s3933 = scalar_lea.vmem %s3, %s3932
      $region44: #{to_style_forward.4} parent=39 // pred_fallthru
        _
    $region40: #{to_style_forward.4} parent=5 // pred_fallthru
      _
  $region6: #{to_style_forward.4} parent=0 // loop_footer
    %s13 = sadd.s32 1, %s9
  $region7: #{to_style_forward.4} parent=0 // loop_footer_branch
    %8 = sbr.rel target = $region3
  $region8: #{to_style_forward.4} parent=0 // loop_exit
    _

// kernel: to_style_forward.5
$region0: #{to_style_forward.5}
  #allocation0 [shape = 'u32[]', space=smem, size = 0x4, offset = 0x4, fixed_abs, tag = 'smem constant byte address 0x4 - core index']
  #allocation1 [shape = 'u32[144,128]{1,0:T(1,128)}', space=vmem, size = 0x12000, scoped, tag = 'internal scratch']
  %s0 = inlined_call_operand.vmem [shape: bf16[2,64,5,5], index: 0, kind: input, shape index: {}]
  %s1 = inlined_call_operand.vmem [shape: bf16[3,3,16,16], index: 1, kind: input, shape index: {}]
  %s2 = inlined_call_operand.vmem [shape: f32[16,1], index: 2, kind: input, shape index: {}]
  %s3 = inlined_call_operand.vmem [shape: bf16[2,16,16], index: 3, kind: output, shape index: {}]
  %s4 = sld [smem:[#allocation0]]
  $region45: #{to_style_forward.5} parent=0
    _
  %s6 = ssub.s32 1, %s4
  %s7 = scalar_select 0, %s6, %s4
  loop: start=0, step=1, limit=4
  $region2: #{to_style_forward.5} parent=0 // loop_pre_header
    _
  $region3: #{to_style_forward.5} parent=0 // loop_header
    %s9 = sphi 0, %s13
    %p10 = scmp.ge.s32.totalorder %s9, 4
    %s19 = sphi 0, %s21
    %s22 = sphi 0, %s19
    %s23 = sphi 0, %s22
    %s39 = sphi 0, %s23
    %s43 = sphi 0, %s43
    %s45 = sphi 0, %s43
    %s46 = sphi 0, %s45
    %s60 = sphi 0, %s46
    %s64 = sphi 0, %s64
    %s66 = sphi 0, %s64
    %s67 = sphi 0, %s66
    %s81 = sphi 0, %s67
    %s87 = sphi 0, %s89
    %s90 = sphi 0, %s87
    %s91 = sphi 0, %s90
    %s107 = sphi 0, %s91
  $region4: #{to_style_forward.5} parent=0 // loop_header_branch
    %12 = sbr.rel (%p10) target = $region8
  $region5: #{to_style_forward.5} parent=0 // loop_body
    %s14 = ssub.s32 %s9, 1
    %s15 = ssub.s32 %s9, 2
    %s16 = sadd.s32 %s9, 1
    %s17 = ssub.s32 %s9, %s16
    %p18 = scmp.eq.s32.totalorder %s17, 0
    %s20 = sadd.s32 %s19, 1
    %s21 = scalar_select %p18, %s19, %s20
    %p24 = pneg %p18
    %p25 = scmp.eq.s32.totalorder %s9, 1
    %p26 = por %p24, %p25
    %p27 = scmp.ne.s32.totalorder %s19, %s22
    %p28 = scmp.eq.s32.totalorder %s9, 0
    %p29 = por %p27, %p28
    %p30 = scmp.ne.s32.totalorder %s19, %s22
    %p31 = scmp.eq.s32.totalorder %s14, 1
    %p32 = por %p30, %p31
    %p33 = scmp.ne.s32.totalorder %s22, %s23
    %p34 = scmp.eq.s32.totalorder %s14, 0
    %p35 = por %p33, %p34
    %p36 = scmp.ne.s32.totalorder %s22, %s23
    %p37 = scmp.eq.s32.totalorder %s15, 1
    %p38 = por %p36, %p37
    %p40 = scmp.ne.s32.totalorder %s23, %s39
    %p41 = scmp.eq.s32.totalorder %s15, 0
    %p42 = por %p40, %p41
    %s44 = sadd.s32 %s43, 1
    %p47 = scmp.eq.s32.totalorder %s9, 1
    %p48 = scmp.ne.s32.totalorder %s43, %s45
    %p49 = scmp.eq.s32.totalorder %s9, 0
    %p50 = por %p48, %p49
    %p51 = scmp.ne.s32.totalorder %s43, %s45
    %p52 = scmp.eq.s32.totalorder %s14, 1
    %p53 = por %p51, %p52
    %p54 = scmp.ne.s32.totalorder %s45, %s46
    %p55 = scmp.eq.s32.totalorder %s14, 0
    %p56 = por %p54, %p55
    %p57 = scmp.ne.s32.totalorder %s45, %s46
    %p58 = scmp.eq.s32.totalorder %s15, 1
    %p59 = por %p57, %p58
    %p61 = scmp.ne.s32.totalorder %s46, %s60
    %p62 = scmp.eq.s32.totalorder %s15, 0
    %p63 = por %p61, %p62
    %s65 = sadd.s32 %s64, 1
    %p68 = scmp.eq.s32.totalorder %s9, 1
    %p69 = scmp.ne.s32.totalorder %s64, %s66
    %p70 = scmp.eq.s32.totalorder %s9, 0
    %p71 = por %p69, %p70
    %p72 = scmp.ne.s32.totalorder %s64, %s66
    %p73 = scmp.eq.s32.totalorder %s14, 1
    %p74 = por %p72, %p73
    %p75 = scmp.ne.s32.totalorder %s66, %s67
    %p76 = scmp.eq.s32.totalorder %s14, 0
    %p77 = por %p75, %p76
    %p78 = scmp.ne.s32.totalorder %s66, %s67
    %p79 = scmp.eq.s32.totalorder %s15, 1
    %p80 = por %p78, %p79
    %p82 = scmp.ne.s32.totalorder %s67, %s81
    %p83 = scmp.eq.s32.totalorder %s15, 0
    %p84 = por %p82, %p83
    %s85 = ssub.s32 %s9, %s16
    %p86 = scmp.eq.s32.totalorder %s85, 0
    %s88 = sadd.s32 %s87, 1
    %s89 = scalar_select %p86, %s87, %s88
    %p92 = pneg %p86
    %p93 = scmp.eq.s32.totalorder %s9, 1
    %p94 = por %p92, %p93
    %p95 = scmp.ne.s32.totalorder %s87, %s90
    %p96 = scmp.eq.s32.totalorder %s9, 0
    %p97 = por %p95, %p96
    %p98 = scmp.ne.s32.totalorder %s87, %s90
    %p99 = scmp.eq.s32.totalorder %s14, 1
    %p100 = por %p98, %p99
    %p101 = scmp.ne.s32.totalorder %s90, %s91
    %p102 = scmp.eq.s32.totalorder %s14, 0
    %p103 = por %p101, %p102
    %p104 = scmp.ne.s32.totalorder %s90, %s91
    %p105 = scmp.eq.s32.totalorder %s15, 1
    %p106 = por %p104, %p105
    %p108 = scmp.ne.s32.totalorder %s91, %s107
    %p109 = scmp.eq.s32.totalorder %s15, 0
    %p110 = por %p108, %p109
    %p111 = scmp.le.s32.totalorder 1, %s9
    %p112 = scmp.lt.s32.totalorder %s9, 3
    %p113 = pnand %p111, %p112
    %p114 = pneg %p113
    // Predicated region
    $region9: #{to_style_forward.5} parent=5 // pred_check
      _
    $region10: #{to_style_forward.5} parent=5 // pred_check_branch
      %116 = sbr.rel (%p113) target = $region12
    $region11: #{to_style_forward.5} parent=5 // pred_region
      %s117 = ssub.s32 %s9, 1
      // Predicated region
      $region13: #{to_style_forward.5} parent=11 // pred_check
        %p118 = pneg %p56
      $region14: #{to_style_forward.5} parent=11 // pred_check_branch
        %120 = sbr.rel (%p118) target = $region16
      $region15: #{to_style_forward.5} parent=11 // pred_region
        _
      $region16: #{to_style_forward.5} parent=11 // pred_fallthru
        _
      // Predicated region
      $region17: #{to_style_forward.5} parent=11 // pred_check
        %p121 = pneg %p77
      $region18: #{to_style_forward.5} parent=11 // pred_check_branch
        %123 = sbr.rel (%p121) target = $region20
      $region19: #{to_style_forward.5} parent=11 // pred_region
        _
      $region20: #{to_style_forward.5} parent=11 // pred_fallthru
        _
    $region12: #{to_style_forward.5} parent=5 // pred_fallthru
      _
    %p124 = scmp.lt.s32.totalorder %s9, 2
    // Predicated region
    $region21: #{to_style_forward.5} parent=5 // pred_check
      %p125 = pneg %p124
    $region22: #{to_style_forward.5} parent=5 // pred_check_branch
      %127 = sbr.rel (%p125) target = $region24
    $region23: #{to_style_forward.5} parent=5 // pred_region
      // Predicated region
      $region25: #{to_style_forward.5} parent=23 // pred_check
        %p128 = pneg %p29
      $region26: #{to_style_forward.5} parent=23 // pred_check_branch
        %130 = sbr.rel (%p128) target = $region28
      $region27: #{to_style_forward.5} parent=23 // pred_region
        %p131 = scmp.lt.s32.totalorder %s9, 1
        %s132 = scalar_select %p131, %s9, 1
        %s133 = smul.addr %s132, 64
        %s134 = smul.addr %s133, 4
        %s135 = scalar_lea.vmem %s0, %s134
      $region28: #{to_style_forward.5} parent=23 // pred_fallthru
        _
    $region24: #{to_style_forward.5} parent=5 // pred_fallthru
      _
    %p136 = scmp.le.s32.totalorder 1, %s9
    %p137 = scmp.lt.s32.totalorder %s9, 3
    %p138 = pnand %p136, %p137
    %p139 = pneg %p138
    // Predicated region
    $region29: #{to_style_forward.5} parent=5 // pred_check
      _
    $region30: #{to_style_forward.5} parent=5 // pred_check_branch
      %141 = sbr.rel (%p138) target = $region32
    $region31: #{to_style_forward.5} parent=5 // pred_region
      %s142 = ssub.s32 %s9, 1
      %p143 = scmp.lt.s32.totalorder %s14, 1
      %s144 = scalar_select %p143, %s14, 1
      %s145 = smul.addr %s144, 64
      %s146 = smul.addr %s145, 4
      %s147 = scalar_lea.vmem %s0, %s146
      %p148 = pneg %p35
      %p149 = pneg %p32
      %p150 = pneg %p56
      %p151 = pneg %p53
      %p152 = pneg %p77
      %p153 = pneg %p74
      %p154 = pneg %p103
      %p155 = pneg %p100
      %p156 = scmp.lt.s32.totalorder %s14, 1
      %s157 = scalar_select %p156, %s14, 1
      %s158 = smul.addr %s157, 2
      %s159 = smul.addr %s158, 4
      %s160 = scalar_lea.vmem %s3, %s159
      %p161 = scmp.lt.s32.totalorder %s14, 1
      %s162 = scalar_select %p161, %s14, 1
      %s163 = smul.addr %s162, 64
      %s164 = smul.addr %s163, 4
      %s165 = scalar_lea.vmem %s0, %s164
      %p166 = scmp.lt.s32.totalorder %s14, 1
      %s167 = scalar_select %p166, %s14, 1
      %s168 = smul.addr %s167, 2
      %s169 = smul.addr %s168, 4
      %s170 = scalar_lea.vmem %s3, %s169
      %v172 = vld [vmem:[%s165] sm:$0x3]
      %v173 = vld [vmem:[%s165 + $0x4] sm:$0x3]
      %v174 = vld [vmem:[%s165 + $0x8] sm:$0x3]
      %v175 = vld [vmem:[%s165 + $0xc] sm:$0x3]
      %v176 = vld [vmem:[%s165 + $0x10] sm:$0x3]
      %v177 = vld [vmem:[%s165 + $0x14] sm:$0x3]
      %v178 = vld [vmem:[%s165 + $0x18] sm:$0x3]
      %v179 = vld [vmem:[%s165 + $0x1c] sm:$0x3]
      %v180 = vld [vmem:[%s165 + $0x20] sm:$0x3]
      %v181 = vld [vmem:[%s165 + $0x24] sm:$0x3]
      %v182 = vld [vmem:[%s165 + $0x28] sm:$0x3]
      %v183 = vld [vmem:[%s165 + $0x2c] sm:$0x3]
      %v184 = vld [vmem:[%s165 + $0x30] sm:$0x3]
      %v185 = vld [vmem:[%s165 + $0x34] sm:$0x3]
      %v186 = vld [vmem:[%s165 + $0x38] sm:$0x3]
      %v187 = vld [vmem:[%s165 + $0x3c] sm:$0x3]
      %v188 = vcombine.low %v172, %v176
      %v190 = vunpack.c.l.s4 1983009808
      %v191 = vunpack.c.0.s8 %v190
      %v192 = vlaneseq
      %v193 = vshrl.u32 %v192, 7
      %v194 = vsub.s32 %v191, %v193
      %v195 = vrot.slane %v188, %v194
      %v196 = vcombine.low %v174, %v178
      %v198 = vunpack.c.l.s4 1983009808
      %v199 = vunpack.c.0.s8 %v198
      %v200 = vlaneseq
      %v201 = vshrl.u32 %v200, 7
      %v202 = vsub.s32 %v199, %v201
      %v203 = vrot.slane %v196, %v202
      %v204 = vcombine.low %v195, %v203
      %v206 = vunpack.c.l.s4 1934713408
      %v207 = vunpack.c.0.s8 %v206
      %v208 = vlaneseq
      %v209 = vshrl.u32 %v208, 7
      %v210 = vsub.s32 %v207, %v209
      %v211 = vrot.slane %v204, %v210
      %v212 = vcombine.high %v211, 0
      %v213 = vcombine.low %v173, %v177
      %v215 = vunpack.c.l.s4 1983009808
      %v216 = vunpack.c.0.s8 %v215
      %v217 = vlaneseq
      %v218 = vshrl.u32 %v217, 7
      %v219 = vsub.s32 %v216, %v218
      %v220 = vrot.slane %v213, %v219
      %v221 = vcombine.low %v175, %v179
      %v223 = vunpack.c.l.s4 1983009808
      %v224 = vunpack.c.0.s8 %v223
      %v225 = vlaneseq
      %v226 = vshrl.u32 %v225, 7
      %v227 = vsub.s32 %v224, %v226
      %v228 = vrot.slane %v221, %v227
      %v229 = vcombine.low %v220, %v228
      %v231 = vunpack.c.l.s4 1934713408
      %v232 = vunpack.c.0.s8 %v231
      %v233 = vlaneseq
      %v234 = vshrl.u32 %v233, 7
      %v235 = vsub.s32 %v232, %v234
      %v236 = vrot.slane %v229, %v235
      %v237 = vcombine.high %v236, 0
      %v238 = vcombine.low %v180, %v184
      %v240 = vunpack.c.l.s4 1983009808
      %v241 = vunpack.c.0.s8 %v240
      %v242 = vlaneseq
      %v243 = vshrl.u32 %v242, 7
      %v244 = vsub.s32 %v241, %v243
      %v245 = vrot.slane %v238, %v244
      %v246 = vcombine.low %v182, %v186
      %v248 = vunpack.c.l.s4 1983009808
      %v249 = vunpack.c.0.s8 %v248
      %v250 = vlaneseq
      %v251 = vshrl.u32 %v250, 7
      %v252 = vsub.s32 %v249, %v251
      %v253 = vrot.slane %v246, %v252
      %v254 = vcombine.low %v245, %v253
      %v256 = vunpack.c.l.s4 1934713408
      %v257 = vunpack.c.0.s8 %v256
      %v258 = vlaneseq
      %v259 = vshrl.u32 %v258, 7
      %v260 = vsub.s32 %v257, %v259
      %v261 = vrot.slane %v254, %v260
      %v262 = vcombine.high %v261, 0
      %v263 = vcombine.low %v181, %v185
      %v265 = vunpack.c.l.s4 1983009808
      %v266 = vunpack.c.0.s8 %v265
      %v267 = vlaneseq
      %v268 = vshrl.u32 %v267, 7
      %v269 = vsub.s32 %v266, %v268
      %v270 = vrot.slane %v263, %v269
      %v271 = vcombine.low %v183, %v187
      %v273 = vunpack.c.l.s4 1983009808
      %v274 = vunpack.c.0.s8 %v273
      %v275 = vlaneseq
      %v276 = vshrl.u32 %v275, 7
      %v277 = vsub.s32 %v274, %v276
      %v278 = vrot.slane %v271, %v277
      %v279 = vcombine.low %v270, %v278
      %v281 = vunpack.c.l.s4 1934713408
      %v282 = vunpack.c.0.s8 %v281
      %v283 = vlaneseq
      %v284 = vshrl.u32 %v283, 7
      %v285 = vsub.s32 %v282, %v284
      %v286 = vrot.slane %v279, %v285
      %v287 = vcombine.high %v286, 0
      %v290 = vpack.i.b16 %v236, %v211
      %v291 = vshrl.u32 %v211, 16
      %v292 = vshrl.u32 %v236, 16
      %v293 = vpack.i.b16 %v292, %v291
      %v296 = vpack.i.b16 %v237, %v212
      %v297 = vshrl.u32 %v212, 16
      %v298 = vshrl.u32 %v237, 16
      %v299 = vpack.i.b16 %v298, %v297
      %v302 = vpack.i.b16 %v286, %v261
      %v303 = vshrl.u32 %v261, 16
      %v304 = vshrl.u32 %v286, 16
      %v305 = vpack.i.b16 %v304, %v303
      %v308 = vpack.i.b16 %v287, %v262
      %v309 = vshrl.u32 %v262, 16
      %v310 = vshrl.u32 %v287, 16
      %v311 = vpack.i.b16 %v310, %v309
      %v312 = vunpack.c.l.b16 %v290
      %v313 = vunpack.c.l.b16 %v302
      %v314 = vpack.c.b16 %v313, %v312
      %v315 = vunpack.c.l.b16 %v293
      %v316 = vunpack.c.l.b16 %v305
      %v317 = vpack.c.b16 %v316, %v315
      %318 = vrot.lane.b32.xlu0 %v317, 4
      %v319 = vpop.permute.xlu0 %318
      %v320 = vunpack.c.l.b16 %v296
      %v321 = vunpack.c.l.b16 %v308
      %v322 = vpack.c.b16 %v321, %v320
      %323 = vrot.lane.b32.xlu0 %v322, 8
      %v324 = vpop.permute.xlu0 %323
      %v325 = vunpack.c.l.b16 %v299
      %v326 = vunpack.c.l.b16 %v311
      %v327 = vpack.c.b16 %v326, %v325
      %328 = vrot.lane.b32.xlu0 %v327, 12
      %v329 = vpop.permute.xlu0 %328
      %vm330 = vcmask 31744
      %v333 = vsel %vm330, %v314, %v319
      %vm334 = vcmask 64512
      %v336 = vsel %vm334, %v333, %v324
      %vm337 = vcmask 97280
      %v339 = vsel %vm337, %v336, %v329
      %v341 = vld [vmem:[%s1] sm:$0xf]
      %v342 = vld [vmem:[%s1 + $0x4] sm:$0xf]
      %s343 = scalar_lea.vmem %s165, 64
      %v344 = vld [vmem:[%s343] sm:$0x3]
      %v345 = vld [vmem:[%s343 + $0x4] sm:$0x3]
      %v346 = vld [vmem:[%s343 + $0x8] sm:$0x3]
      %v347 = vld [vmem:[%s343 + $0xc] sm:$0x3]
      %v348 = vld [vmem:[%s343 + $0x10] sm:$0x3]
      %v349 = vld [vmem:[%s343 + $0x14] sm:$0x3]
      %v350 = vld [vmem:[%s343 + $0x18] sm:$0x3]
      %v351 = vld [vmem:[%s343 + $0x1c] sm:$0x3]
      %v352 = vld [vmem:[%s343 + $0x20] sm:$0x3]
      %v353 = vld [vmem:[%s343 + $0x24] sm:$0x3]
      %v354 = vld [vmem:[%s343 + $0x28] sm:$0x3]
      %v355 = vld [vmem:[%s343 + $0x2c] sm:$0x3]
      %v356 = vld [vmem:[%s343 + $0x30] sm:$0x3]
      %v357 = vld [vmem:[%s343 + $0x34] sm:$0x3]
      %v358 = vld [vmem:[%s343 + $0x38] sm:$0x3]
      %v359 = vld [vmem:[%s343 + $0x3c] sm:$0x3]
      %v360 = vcombine.low %v344, %v348
      %v362 = vunpack.c.l.s4 1983009808
      %v363 = vunpack.c.0.s8 %v362
      %v364 = vlaneseq
      %v365 = vshrl.u32 %v364, 7
      %v366 = vsub.s32 %v363, %v365
      %v367 = vrot.slane %v360, %v366
      %v368 = vcombine.low %v346, %v350
      %v370 = vunpack.c.l.s4 1983009808
      %v371 = vunpack.c.0.s8 %v370
      %v372 = vlaneseq
      %v373 = vshrl.u32 %v372, 7
      %v374 = vsub.s32 %v371, %v373
      %v375 = vrot.slane %v368, %v374
      %v376 = vcombine.low %v367, %v375
      %v378 = vunpack.c.l.s4 1934713408
      %v379 = vunpack.c.0.s8 %v378
      %v380 = vlaneseq
      %v381 = vshrl.u32 %v380, 7
      %v382 = vsub.s32 %v379, %v381
      %v383 = vrot.slane %v376, %v382
      %v384 = vcombine.high %v383, 0
      %v385 = vcombine.low %v345, %v349
      %v387 = vunpack.c.l.s4 1983009808
      %v388 = vunpack.c.0.s8 %v387
      %v389 = vlaneseq
      %v390 = vshrl.u32 %v389, 7
      %v391 = vsub.s32 %v388, %v390
      %v392 = vrot.slane %v385, %v391
      %v393 = vcombine.low %v347, %v351
      %v395 = vunpack.c.l.s4 1983009808
      %v396 = vunpack.c.0.s8 %v395
      %v397 = vlaneseq
      %v398 = vshrl.u32 %v397, 7
      %v399 = vsub.s32 %v396, %v398
      %v400 = vrot.slane %v393, %v399
      %v401 = vcombine.low %v392, %v400
      %v403 = vunpack.c.l.s4 1934713408
      %v404 = vunpack.c.0.s8 %v403
      %v405 = vlaneseq
      %v406 = vshrl.u32 %v405, 7
      %v407 = vsub.s32 %v404, %v406
      %v408 = vrot.slane %v401, %v407
      %v409 = vcombine.high %v408, 0
      %v410 = vcombine.low %v352, %v356
      %v412 = vunpack.c.l.s4 1983009808
      %v413 = vunpack.c.0.s8 %v412
      %v414 = vlaneseq
      %v415 = vshrl.u32 %v414, 7
      %v416 = vsub.s32 %v413, %v415
      %v417 = vrot.slane %v410, %v416
      %v418 = vcombine.low %v354, %v358
      %v420 = vunpack.c.l.s4 1983009808
      %v421 = vunpack.c.0.s8 %v420
      %v422 = vlaneseq
      %v423 = vshrl.u32 %v422, 7
      %v424 = vsub.s32 %v421, %v423
      %v425 = vrot.slane %v418, %v424
      %v426 = vcombine.low %v417, %v425
      %v428 = vunpack.c.l.s4 1934713408
      %v429 = vunpack.c.0.s8 %v428
      %v430 = vlaneseq
      %v431 = vshrl.u32 %v430, 7
      %v432 = vsub.s32 %v429, %v431
      %v433 = vrot.slane %v426, %v432
      %v434 = vcombine.high %v433, 0
      %v435 = vcombine.low %v353, %v357
      %v437 = vunpack.c.l.s4 1983009808
      %v438 = vunpack.c.0.s8 %v437
      %v439 = vlaneseq
      %v440 = vshrl.u32 %v439, 7
      %v441 = vsub.s32 %v438, %v440
      %v442 = vrot.slane %v435, %v441
      %v443 = vcombine.low %v355, %v359
      %v445 = vunpack.c.l.s4 1983009808
      %v446 = vunpack.c.0.s8 %v445
      %v447 = vlaneseq
      %v448 = vshrl.u32 %v447, 7
      %v449 = vsub.s32 %v446, %v448
      %v450 = vrot.slane %v443, %v449
      %v451 = vcombine.low %v442, %v450
      %v453 = vunpack.c.l.s4 1934713408
      %v454 = vunpack.c.0.s8 %v453
      %v455 = vlaneseq
      %v456 = vshrl.u32 %v455, 7
      %v457 = vsub.s32 %v454, %v456
      %v458 = vrot.slane %v451, %v457
      %v459 = vcombine.high %v458, 0
      %v462 = vpack.i.b16 %v408, %v383
      %v463 = vshrl.u32 %v383, 16
      %v464 = vshrl.u32 %v408, 16
      %v465 = vpack.i.b16 %v464, %v463
      %v468 = vpack.i.b16 %v409, %v384
      %v469 = vshrl.u32 %v384, 16
      %v470 = vshrl.u32 %v409, 16
      %v471 = vpack.i.b16 %v470, %v469
      %v474 = vpack.i.b16 %v458, %v433
      %v475 = vshrl.u32 %v433, 16
      %v476 = vshrl.u32 %v458, 16
      %v477 = vpack.i.b16 %v476, %v475
      %v480 = vpack.i.b16 %v459, %v434
      %v481 = vshrl.u32 %v434, 16
      %v482 = vshrl.u32 %v459, 16
      %v483 = vpack.i.b16 %v482, %v481
      %v484 = vunpack.c.l.b16 %v462
      %v485 = vunpack.c.l.b16 %v474
      %v486 = vpack.c.b16 %v485, %v484
      %v487 = vunpack.c.l.b16 %v465
      %v488 = vunpack.c.l.b16 %v477
      %v489 = vpack.c.b16 %v488, %v487
      %490 = vrot.lane.b32.xlu0 %v489, 4
      %v491 = vpop.permute.xlu0 %490
      %v492 = vunpack.c.l.b16 %v468
      %v493 = vunpack.c.l.b16 %v480
      %v494 = vpack.c.b16 %v493, %v492
      %495 = vrot.lane.b32.xlu0 %v494, 8
      %v496 = vpop.permute.xlu0 %495
      %v497 = vunpack.c.l.b16 %v471
      %v498 = vunpack.c.l.b16 %v483
      %v499 = vpack.c.b16 %v498, %v497
      %500 = vrot.lane.b32.xlu0 %v499, 12
      %v501 = vpop.permute.xlu0 %500
      %v504 = vsel %vm330, %v486, %v491
      %v506 = vsel %vm334, %v504, %v496
      %v508 = vsel %vm337, %v506, %v501
      %s510 = scalar_lea.vmem %s1, 8
      %v511 = vld [vmem:[%s510] sm:$0xf]
      %v512 = vld [vmem:[%s510 + $0x4] sm:$0xf]
      %v515 = vunpack.c.l.b16 %v511
      %v516 = vunpack.c.l.b16 %v512
      %v517 = vpack.c.b16 %v516, %v515
      %vm518 = vcmask 130048
      %v520 = vsel %vm518, %v517, 0
      %522 = vmatprep.subr.bf16.mxu0 0
      %523 = vmatpush1.bf16.msra.mxu0 %v508
      %524 = vmatprep.subr.bf16.mxu0 0
      %525 = vmatpush1.bf16.msra.mxu0 0
      %526 = vmatprep.subr.bf16.mxu0 0
      %527 = vmatpush1.bf16.msra.mxu0 0
      %528 = vmatprep.subr.bf16.mxu0 0
      %529 = vmatpush1.bf16.msra.mxu0 0
      %530 = vmatprep.subr.bf16.mxu0 0
      %531 = vmatpush1.bf16.msra.mxu0 0
      %532 = vmatprep.subr.bf16.mxu0 0
      %533 = vmatpush1.bf16.msra.mxu0 0
      %534 = vmatprep.subr.bf16.mxu0 0
      %535 = vmatpush1.bf16.msra.mxu0 0
      %536 = vmatprep.subr.bf16.mxu0 0
      %537 = vmatpush1.bf16.msra.mxu0 0
      %538 = vmatprep.subr.bf16.mxu0 0
      %539 = vmatpush1.bf16.msra.mxu0 0
      %540 = vmatprep.subr.bf16.mxu0 0
      %541 = vmatpush1.bf16.msra.mxu0 0
      %542 = vmatprep.subr.bf16.mxu0 0
      %543 = vmatpush1.bf16.msra.mxu0 0
      %544 = vmatprep.subr.bf16.mxu0 0
      %545 = vmatpush1.bf16.msra.mxu0 0
      %546 = vmatprep.subr.bf16.mxu0 0
      %547 = vmatpush1.bf16.msra.mxu0 0
      %548 = vmatprep.subr.bf16.mxu0 0
      %549 = vmatpush1.bf16.msra.mxu0 0
      %550 = vmatprep.subr.bf16.mxu0 0
      %551 = vmatpush1.bf16.msra.mxu0 0
      %552 = vmatprep.subr.bf16.mxu0 0
      %553 = vmatpush1.bf16.msra.mxu0 0
      %554 = vmatprep.mubr.bf16.mxu0 0
      %555 = vmatmul.mubr.bf16.gmra.mrb[0].mxu0 %v520
      %v556 = vpop.f32.mrb[0].mxu0
      %v557 = vadd.f32 0.0, %v556
      %v558 = vpop.f32.mrb[0].mxu0
      %v559 = vpop.f32.mrb[0].mxu0
      %v560 = vadd.f32 0.0, %v559
      %v561 = vpop.f32.mrb[0].mxu0
      %562 = vdwg.mxu0
      %v565 = vunpack.c.l.b16 %v341
      %v566 = vunpack.c.l.b16 %v342
      %v567 = vpack.c.b16 %v566, %v565
      %v569 = vsel %vm518, %v567, 0
      %571 = vmatprep.subr.bf16.mxu0 0
      %572 = vmatpush1.bf16.msra.mxu0 %v339
      %573 = vmatprep.subr.bf16.mxu0 0
      %574 = vmatpush1.bf16.msra.mxu0 0
      %575 = vmatprep.subr.bf16.mxu0 0
      %576 = vmatpush1.bf16.msra.mxu0 0
      %577 = vmatprep.subr.bf16.mxu0 0
      %578 = vmatpush1.bf16.msra.mxu0 0
      %579 = vmatprep.subr.bf16.mxu0 0
      %580 = vmatpush1.bf16.msra.mxu0 0
      %581 = vmatprep.subr.bf16.mxu0 0
      %582 = vmatpush1.bf16.msra.mxu0 0
      %583 = vmatprep.subr.bf16.mxu0 0
      %584 = vmatpush1.bf16.msra.mxu0 0
      %585 = vmatprep.subr.bf16.mxu0 0
      %586 = vmatpush1.bf16.msra.mxu0 0
      %587 = vmatprep.subr.bf16.mxu0 0
      %588 = vmatpush1.bf16.msra.mxu0 0
      %589 = vmatprep.subr.bf16.mxu0 0
      %590 = vmatpush1.bf16.msra.mxu0 0
      %591 = vmatprep.subr.bf16.mxu0 0
      %592 = vmatpush1.bf16.msra.mxu0 0
      %593 = vmatprep.subr.bf16.mxu0 0
      %594 = vmatpush1.bf16.msra.mxu0 0
      %595 = vmatprep.subr.bf16.mxu0 0
      %596 = vmatpush1.bf16.msra.mxu0 0
      %597 = vmatprep.subr.bf16.mxu0 0
      %598 = vmatpush1.bf16.msra.mxu0 0
      %599 = vmatprep.subr.bf16.mxu0 0
      %600 = vmatpush1.bf16.msra.mxu0 0
      %601 = vmatprep.subr.bf16.mxu0 0
      %602 = vmatpush1.bf16.msra.mxu0 0
      %603 = vmatprep.mubr.bf16.mxu0 0
      %604 = vmatmul.mubr.bf16.gmra.mrb[0].mxu0 %v569
      %v605 = vpop.f32.mrb[0].mxu0
      %v606 = vadd.f32 %v557, %v605
      %v607 = vpop.f32.mrb[0].mxu0
      %v608 = vpop.f32.mrb[0].mxu0
      %v609 = vadd.f32 %v560, %v608
      %v610 = vpop.f32.mrb[0].mxu0
      %611 = vdwg.mxu0
      %v612 = vld [vmem:[%s165] sm:$0x3]
      %v613 = vld [vmem:[%s165 + $0x4] sm:$0x3]
      %v614 = vld [vmem:[%s165 + $0x8] sm:$0x3]
      %v615 = vld [vmem:[%s165 + $0xc] sm:$0x3]
      %v616 = vld [vmem:[%s165 + $0x10] sm:$0x3]
      %v617 = vld [vmem:[%s165 + $0x14] sm:$0x3]
      %v618 = vld [vmem:[%s165 + $0x18] sm:$0x3]
      %v619 = vld [vmem:[%s165 + $0x1c] sm:$0x3]
      %v620 = vld [vmem:[%s165 + $0x20] sm:$0x3]
      %v621 = vld [vmem:[%s165 + $0x24] sm:$0x3]
      %v622 = vld [vmem:[%s165 + $0x28] sm:$0x3]
      %v623 = vld [vmem:[%s165 + $0x2c] sm:$0x3]
      %v624 = vld [vmem:[%s165 + $0x30] sm:$0x3]
      %v625 = vld [vmem:[%s165 + $0x34] sm:$0x3]
      %v626 = vld [vmem:[%s165 + $0x38] sm:$0x3]
      %v627 = vld [vmem:[%s165 + $0x3c] sm:$0x3]
      %644 = vrot.lane.b32.xlu0 %v612, 127
      %v645 = vpop.permute.xlu0 %644
      %646 = vrot.lane.b32.xlu0 %v613, 127
      %v647 = vpop.permute.xlu0 %646
      %648 = vrot.lane.b32.xlu0 %v614, 127
      %v649 = vpop.permute.xlu0 %648
      %650 = vrot.lane.b32.xlu0 %v615, 127
      %v651 = vpop.permute.xlu0 %650
      %652 = vrot.lane.b32.xlu0 %v616, 127
      %v653 = vpop.permute.xlu0 %652
      %654 = vrot.lane.b32.xlu0 %v617, 127
      %v655 = vpop.permute.xlu0 %654
      %656 = vrot.lane.b32.xlu0 %v618, 127
      %v657 = vpop.permute.xlu0 %656
      %658 = vrot.lane.b32.xlu0 %v619, 127
      %v659 = vpop.permute.xlu0 %658
      %660 = vrot.lane.b32.xlu0 %v620, 127
      %v661 = vpop.permute.xlu0 %660
      %662 = vrot.lane.b32.xlu0 %v621, 127
      %v663 = vpop.permute.xlu0 %662
      %664 = vrot.lane.b32.xlu0 %v622, 127
      %v665 = vpop.permute.xlu0 %664
      %666 = vrot.lane.b32.xlu0 %v623, 127
      %v667 = vpop.permute.xlu0 %666
      %668 = vrot.lane.b32.xlu0 %v624, 127
      %v669 = vpop.permute.xlu0 %668
      %670 = vrot.lane.b32.xlu0 %v625, 127
      %v671 = vpop.permute.xlu0 %670
      %672 = vrot.lane.b32.xlu0 %v626, 127
      %v673 = vpop.permute.xlu0 %672
      %674 = vrot.lane.b32.xlu0 %v627, 127
      %v675 = vpop.permute.xlu0 %674
      %v692 = vcombine.low %v645, %v653
      %v694 = vunpack.c.l.s4 1983009808
      %v695 = vunpack.c.0.s8 %v694
      %v696 = vlaneseq
      %v697 = vshrl.u32 %v696, 7
      %v698 = vsub.s32 %v695, %v697
      %v699 = vrot.slane %v692, %v698
      %v700 = vcombine.low %v649, %v657
      %v702 = vunpack.c.l.s4 1983009808
      %v703 = vunpack.c.0.s8 %v702
      %v704 = vlaneseq
      %v705 = vshrl.u32 %v704, 7
      %v706 = vsub.s32 %v703, %v705
      %v707 = vrot.slane %v700, %v706
      %v708 = vcombine.low %v699, %v707
      %v710 = vunpack.c.l.s4 1934713408
      %v711 = vunpack.c.0.s8 %v710
      %v712 = vlaneseq
      %v713 = vshrl.u32 %v712, 7
      %v714 = vsub.s32 %v711, %v713
      %v715 = vrot.slane %v708, %v714
      %v716 = vcombine.high %v715, 0
      %v717 = vcombine.low %v647, %v655
      %v719 = vunpack.c.l.s4 1983009808
      %v720 = vunpack.c.0.s8 %v719
      %v721 = vlaneseq
      %v722 = vshrl.u32 %v721, 7
      %v723 = vsub.s32 %v720, %v722
      %v724 = vrot.slane %v717, %v723
      %v725 = vcombine.low %v651, %v659
      %v727 = vunpack.c.l.s4 1983009808
      %v728 = vunpack.c.0.s8 %v727
      %v729 = vlaneseq
      %v730 = vshrl.u32 %v729, 7
      %v731 = vsub.s32 %v728, %v730
      %v732 = vrot.slane %v725, %v731
      %v733 = vcombine.low %v724, %v732
      %v735 = vunpack.c.l.s4 1934713408
      %v736 = vunpack.c.0.s8 %v735
      %v737 = vlaneseq
      %v738 = vshrl.u32 %v737, 7
      %v739 = vsub.s32 %v736, %v738
      %v740 = vrot.slane %v733, %v739
      %v741 = vcombine.high %v740, 0
      %v742 = vcombine.low %v661, %v669
      %v744 = vunpack.c.l.s4 1983009808
      %v745 = vunpack.c.0.s8 %v744
      %v746 = vlaneseq
      %v747 = vshrl.u32 %v746, 7
      %v748 = vsub.s32 %v745, %v747
      %v749 = vrot.slane %v742, %v748
      %v750 = vcombine.low %v665, %v673
      %v752 = vunpack.c.l.s4 1983009808
      %v753 = vunpack.c.0.s8 %v752
      %v754 = vlaneseq
      %v755 = vshrl.u32 %v754, 7
      %v756 = vsub.s32 %v753, %v755
      %v757 = vrot.slane %v750, %v756
      %v758 = vcombine.low %v749, %v757
      %v760 = vunpack.c.l.s4 1934713408
      %v761 = vunpack.c.0.s8 %v760
      %v762 = vlaneseq
      %v763 = vshrl.u32 %v762, 7
      %v764 = vsub.s32 %v761, %v763
      %v765 = vrot.slane %v758, %v764
      %v766 = vcombine.high %v765, 0
      %v767 = vcombine.low %v663, %v671
      %v769 = vunpack.c.l.s4 1983009808
      %v770 = vunpack.c.0.s8 %v769
      %v771 = vlaneseq
      %v772 = vshrl.u32 %v771, 7
      %v773 = vsub.s32 %v770, %v772
      %v774 = vrot.slane %v767, %v773
      %v775 = vcombine.low %v667, %v675
      %v777 = vunpack.c.l.s4 1983009808
      %v778 = vunpack.c.0.s8 %v777
      %v779 = vlaneseq
      %v780 = vshrl.u32 %v779, 7
      %v781 = vsub.s32 %v778, %v780
      %v782 = vrot.slane %v775, %v781
      %v783 = vcombine.low %v774, %v782
      %v785 = vunpack.c.l.s4 1934713408
      %v786 = vunpack.c.0.s8 %v785
      %v787 = vlaneseq
      %v788 = vshrl.u32 %v787, 7
      %v789 = vsub.s32 %v786, %v788
      %v790 = vrot.slane %v783, %v789
      %v791 = vcombine.high %v790, 0
      %v794 = vpack.i.b16 %v740, %v715
      %v795 = vshrl.u32 %v715, 16
      %v796 = vshrl.u32 %v740, 16
      %v797 = vpack.i.b16 %v796, %v795
      %v800 = vpack.i.b16 %v741, %v716
      %v801 = vshrl.u32 %v716, 16
      %v802 = vshrl.u32 %v741, 16
      %v803 = vpack.i.b16 %v802, %v801
      %v806 = vpack.i.b16 %v790, %v765
      %v807 = vshrl.u32 %v765, 16
      %v808 = vshrl.u32 %v790, 16
      %v809 = vpack.i.b16 %v808, %v807
      %v812 = vpack.i.b16 %v791, %v766
      %v813 = vshrl.u32 %v766, 16
      %v814 = vshrl.u32 %v791, 16
      %v815 = vpack.i.b16 %v814, %v813
      %v816 = vunpack.c.l.b16 %v794
      %v817 = vunpack.c.l.b16 %v806
      %v818 = vpack.c.b16 %v817, %v816
      %v819 = vunpack.c.l.b16 %v797
      %v820 = vunpack.c.l.b16 %v809
      %v821 = vpack.c.b16 %v820, %v819
      %822 = vrot.lane.b32.xlu0 %v821, 4
      %v823 = vpop.permute.xlu0 %822
      %v824 = vunpack.c.l.b16 %v800
      %v825 = vunpack.c.l.b16 %v812
      %v826 = vpack.c.b16 %v825, %v824
      %827 = vrot.lane.b32.xlu0 %v826, 8
      %v828 = vpop.permute.xlu0 %827
      %v829 = vunpack.c.l.b16 %v803
      %v830 = vunpack.c.l.b16 %v815
      %v831 = vpack.c.b16 %v830, %v829
      %832 = vrot.lane.b32.xlu0 %v831, 12
      %v833 = vpop.permute.xlu0 %832
      %v836 = vsel %vm330, %v818, %v823
      %v838 = vsel %vm334, %v836, %v828
      %v840 = vsel %vm337, %v838, %v833
      %s842 = scalar_lea.vmem %s1, 16
      %v843 = vld [vmem:[%s842] sm:$0xf]
      %v844 = vld [vmem:[%s842 + $0x4] sm:$0xf]
      %v847 = vunpack.c.l.b16 %v843
      %v848 = vunpack.c.l.b16 %v844
      %v849 = vpack.c.b16 %v848, %v847
      %v851 = vsel %vm518, %v849, 0
      %853 = vmatprep.subr.bf16.mxu0 0
      %854 = vmatpush1.bf16.msra.mxu0 %v840
      %855 = vmatprep.subr.bf16.mxu0 0
      %856 = vmatpush1.bf16.msra.mxu0 0
      %857 = vmatprep.subr.bf16.mxu0 0
      %858 = vmatpush1.bf16.msra.mxu0 0
      %859 = vmatprep.subr.bf16.mxu0 0
      %860 = vmatpush1.bf16.msra.mxu0 0
      %861 = vmatprep.subr.bf16.mxu0 0
      %862 = vmatpush1.bf16.msra.mxu0 0
      %863 = vmatprep.subr.bf16.mxu0 0
      %864 = vmatpush1.bf16.msra.mxu0 0
      %865 = vmatprep.subr.bf16.mxu0 0
      %866 = vmatpush1.bf16.msra.mxu0 0
      %867 = vmatprep.subr.bf16.mxu0 0
      %868 = vmatpush1.bf16.msra.mxu0 0
      %869 = vmatprep.subr.bf16.mxu0 0
      %870 = vmatpush1.bf16.msra.mxu0 0
      %871 = vmatprep.subr.bf16.mxu0 0
      %872 = vmatpush1.bf16.msra.mxu0 0
      %873 = vmatprep.subr.bf16.mxu0 0
      %874 = vmatpush1.bf16.msra.mxu0 0
      %875 = vmatprep.subr.bf16.mxu0 0
      %876 = vmatpush1.bf16.msra.mxu0 0
      %877 = vmatprep.subr.bf16.mxu0 0
      %878 = vmatpush1.bf16.msra.mxu0 0
      %879 = vmatprep.subr.bf16.mxu0 0
      %880 = vmatpush1.bf16.msra.mxu0 0
      %881 = vmatprep.subr.bf16.mxu0 0
      %882 = vmatpush1.bf16.msra.mxu0 0
      %883 = vmatprep.subr.bf16.mxu0 0
      %884 = vmatpush1.bf16.msra.mxu0 0
      %885 = vmatprep.mubr.bf16.mxu0 0
      %886 = vmatmul.mubr.bf16.gmra.mrb[0].mxu0 %v851
      %v887 = vpop.f32.mrb[0].mxu0
      %v888 = vadd.f32 0.0, %v887
      %v889 = vpop.f32.mrb[0].mxu0
      %v890 = vpop.f32.mrb[0].mxu0
      %v891 = vadd.f32 0.0, %v890
      %v892 = vpop.f32.mrb[0].mxu0
      %893 = vdwg.mxu0
      %v894 = vadd.f32 %v606, %v888
      %v895 = vadd.f32 %v609, %v891
      %s896 = scalar_lea.vmem %s165, 128
      %v897 = vld [vmem:[%s896] sm:$0x3]
      %v898 = vld [vmem:[%s896 + $0x4] sm:$0x3]
      %v899 = vld [vmem:[%s896 + $0x8] sm:$0x3]
      %v900 = vld [vmem:[%s896 + $0xc] sm:$0x3]
      %v901 = vld [vmem:[%s896 + $0x10] sm:$0x3]
      %v902 = vld [vmem:[%s896 + $0x14] sm:$0x3]
      %v903 = vld [vmem:[%s896 + $0x18] sm:$0x3]
      %v904 = vld [vmem:[%s896 + $0x1c] sm:$0x3]
      %v905 = vld [vmem:[%s896 + $0x20] sm:$0x3]
      %v906 = vld [vmem:[%s896 + $0x24] sm:$0x3]
      %v907 = vld [vmem:[%s896 + $0x28] sm:$0x3]
      %v908 = vld [vmem:[%s896 + $0x2c] sm:$0x3]
      %v909 = vld [vmem:[%s896 + $0x30] sm:$0x3]
      %v910 = vld [vmem:[%s896 + $0x34] sm:$0x3]
      %v911 = vld [vmem:[%s896 + $0x38] sm:$0x3]
      %v912 = vld [vmem:[%s896 + $0x3c] sm:$0x3]
      %v913 = vcombine.low %v897, %v901
      %v915 = vunpack.c.l.s4 1983009808
      %v916 = vunpack.c.0.s8 %v915
      %v917 = vlaneseq
      %v918 = vshrl.u32 %v917, 7
      %v919 = vsub.s32 %v916, %v918
      %v920 = vrot.slane %v913, %v919
      %v921 = vcombine.low %v899, %v903
      %v923 = vunpack.c.l.s4 1983009808
      %v924 = vunpack.c.0.s8 %v923
      %v925 = vlaneseq
      %v926 = vshrl.u32 %v925, 7
      %v927 = vsub.s32 %v924, %v926
      %v928 = vrot.slane %v921, %v927
      %v929 = vcombine.low %v920, %v928
      %v931 = vunpack.c.l.s4 1934713408
      %v932 = vunpack.c.0.s8 %v931
      %v933 = vlaneseq
      %v934 = vshrl.u32 %v933, 7
      %v935 = vsub.s32 %v932, %v934
      %v936 = vrot.slane %v929, %v935
      %v937 = vcombine.high %v936, 0
      %v938 = vcombine.low %v898, %v902
      %v940 = vunpack.c.l.s4 1983009808
      %v941 = vunpack.c.0.s8 %v940
      %v942 = vlaneseq
      %v943 = vshrl.u32 %v942, 7
      %v944 = vsub.s32 %v941, %v943
      %v945 = vrot.slane %v938, %v944
      %v946 = vcombine.low %v900, %v904
      %v948 = vunpack.c.l.s4 1983009808
      %v949 = vunpack.c.0.s8 %v948
      %v950 = vlaneseq
      %v951 = vshrl.u32 %v950, 7
      %v952 = vsub.s32 %v949, %v951
      %v953 = vrot.slane %v946, %v952
      %v954 = vcombine.low %v945, %v953
      %v956 = vunpack.c.l.s4 1934713408
      %v957 = vunpack.c.0.s8 %v956
      %v958 = vlaneseq
      %v959 = vshrl.u32 %v958, 7
      %v960 = vsub.s32 %v957, %v959
      %v961 = vrot.slane %v954, %v960
      %v962 = vcombine.high %v961, 0
      %v963 = vcombine.low %v905, %v909
      %v965 = vunpack.c.l.s4 1983009808
      %v966 = vunpack.c.0.s8 %v965
      %v967 = vlaneseq
      %v968 = vshrl.u32 %v967, 7
      %v969 = vsub.s32 %v966, %v968
      %v970 = vrot.slane %v963, %v969
      %v971 = vcombine.low %v907, %v911
      %v973 = vunpack.c.l.s4 1983009808
      %v974 = vunpack.c.0.s8 %v973
      %v975 = vlaneseq
      %v976 = vshrl.u32 %v975, 7
      %v977 = vsub.s32 %v974, %v976
      %v978 = vrot.slane %v971, %v977
      %v979 = vcombine.low %v970, %v978
      %v981 = vunpack.c.l.s4 1934713408
      %v982 = vunpack.c.0.s8 %v981
      %v983 = vlaneseq
      %v984 = vshrl.u32 %v983, 7
      %v985 = vsub.s32 %v982, %v984
      %v986 = vrot.slane %v979, %v985
      %v987 = vcombine.high %v986, 0
      %v988 = vcombine.low %v906, %v910
      %v990 = vunpack.c.l.s4 1983009808
      %v991 = vunpack.c.0.s8 %v990
      %v992 = vlaneseq
      %v993 = vshrl.u32 %v992, 7
      %v994 = vsub.s32 %v991, %v993
      %v995 = vrot.slane %v988, %v994
      %v996 = vcombine.low %v908, %v912
      %v998 = vunpack.c.l.s4 1983009808
      %v999 = vunpack.c.0.s8 %v998
      %v1000 = vlaneseq
      %v1001 = vshrl.u32 %v1000, 7
      %v1002 = vsub.s32 %v999, %v1001
      %v1003 = vrot.slane %v996, %v1002
      %v1004 = vcombine.low %v995, %v1003
      %v1006 = vunpack.c.l.s4 1934713408
      %v1007 = vunpack.c.0.s8 %v1006
      %v1008 = vlaneseq
      %v1009 = vshrl.u32 %v1008, 7
      %v1010 = vsub.s32 %v1007, %v1009
      %v1011 = vrot.slane %v1004, %v1010
      %v1012 = vcombine.high %v1011, 0
      %v1015 = vpack.i.b16 %v961, %v936
      %v1016 = vshrl.u32 %v936, 16
      %v1017 = vshrl.u32 %v961, 16
      %v1018 = vpack.i.b16 %v1017, %v1016
      %v1021 = vpack.i.b16 %v962, %v937
      %v1022 = vshrl.u32 %v937, 16
      %v1023 = vshrl.u32 %v962, 16
      %v1024 = vpack.i.b16 %v1023, %v1022
      %v1027 = vpack.i.b16 %v1011, %v986
      %v1028 = vshrl.u32 %v986, 16
      %v1029 = vshrl.u32 %v1011, 16
      %v1030 = vpack.i.b16 %v1029, %v1028
      %v1033 = vpack.i.b16 %v1012, %v987
      %v1034 = vshrl.u32 %v987, 16
      %v1035 = vshrl.u32 %v1012, 16
      %v1036 = vpack.i.b16 %v1035, %v1034
      %v1037 = vunpack.c.l.b16 %v1015
      %v1038 = vunpack.c.l.b16 %v1027
      %v1039 = vpack.c.b16 %v1038, %v1037
      %v1040 = vunpack.c.l.b16 %v1018
      %v1041 = vunpack.c.l.b16 %v1030
      %v1042 = vpack.c.b16 %v1041, %v1040
      %1043 = vrot.lane.b32.xlu0 %v1042, 4
      %v1044 = vpop.permute.xlu0 %1043
      %v1045 = vunpack.c.l.b16 %v1021
      %v1046 = vunpack.c.l.b16 %v1033
      %v1047 = vpack.c.b16 %v1046, %v1045
      %1048 = vrot.lane.b32.xlu0 %v1047, 8
      %v1049 = vpop.permute.xlu0 %1048
      %v1050 = vunpack.c.l.b16 %v1024
      %v1051 = vunpack.c.l.b16 %v1036
      %v1052 = vpack.c.b16 %v1051, %v1050
      %1053 = vrot.lane.b32.xlu0 %v1052, 12
      %v1054 = vpop.permute.xlu0 %1053
      %v1057 = vsel %vm330, %v1039, %v1044
      %v1059 = vsel %vm334, %v1057, %v1049
      %v1061 = vsel %vm337, %v1059, %v1054
      %s1063 = scalar_lea.vmem %s1, 24
      %v1064 = vld [vmem:[%s1063] sm:$0xf]
      %v1065 = vld [vmem:[%s1063 + $0x4] sm:$0xf]
      %v1068 = vunpack.c.l.b16 %v1064
      %v1069 = vunpack.c.l.b16 %v1065
      %v1070 = vpack.c.b16 %v1069, %v1068
      %v1072 = vsel %vm518, %v1070, 0
      %1074 = vmatprep.subr.bf16.mxu0 0
      %1075 = vmatpush1.bf16.msra.mxu0 %v1061
      %1076 = vmatprep.subr.bf16.mxu0 0
      %1077 = vmatpush1.bf16.msra.mxu0 0
      %1078 = vmatprep.subr.bf16.mxu0 0
      %1079 = vmatpush1.bf16.msra.mxu0 0
      %1080 = vmatprep.subr.bf16.mxu0 0
      %1081 = vmatpush1.bf16.msra.mxu0 0
      %1082 = vmatprep.subr.bf16.mxu0 0
      %1083 = vmatpush1.bf16.msra.mxu0 0
      %1084 = vmatprep.subr.bf16.mxu0 0
      %1085 = vmatpush1.bf16.msra.mxu0 0
      %1086 = vmatprep.subr.bf16.mxu0 0
      %1087 = vmatpush1.bf16.msra.mxu0 0
      %1088 = vmatprep.subr.bf16.mxu0 0
      %1089 = vmatpush1.bf16.msra.mxu0 0
      %1090 = vmatprep.subr.bf16.mxu0 0
      %1091 = vmatpush1.bf16.msra.mxu0 0
      %1092 = vmatprep.subr.bf16.mxu0 0
      %1093 = vmatpush1.bf16.msra.mxu0 0
      %1094 = vmatprep.subr.bf16.mxu0 0
      %1095 = vmatpush1.bf16.msra.mxu0 0
      %1096 = vmatprep.subr.bf16.mxu0 0
      %1097 = vmatpush1.bf16.msra.mxu0 0
      %1098 = vmatprep.subr.bf16.mxu0 0
      %1099 = vmatpush1.bf16.msra.mxu0 0
      %1100 = vmatprep.subr.bf16.mxu0 0
      %1101 = vmatpush1.bf16.msra.mxu0 0
      %1102 = vmatprep.subr.bf16.mxu0 0
      %1103 = vmatpush1.bf16.msra.mxu0 0
      %1104 = vmatprep.subr.bf16.mxu0 0
      %1105 = vmatpush1.bf16.msra.mxu0 0
      %1106 = vmatprep.mubr.bf16.mxu0 0
      %1107 = vmatmul.mubr.bf16.gmra.mrb[0].mxu0 %v1072
      %v1108 = vpop.f32.mrb[0].mxu0
      %v1109 = vadd.f32 0.0, %v1108
      %v1110 = vpop.f32.mrb[0].mxu0
      %v1111 = vpop.f32.mrb[0].mxu0
      %v1112 = vadd.f32 0.0, %v1111
      %v1113 = vpop.f32.mrb[0].mxu0
      %1114 = vdwg.mxu0
      %v1115 = vadd.f32 %v894, %v1109
      %v1116 = vadd.f32 %v895, %v1112
      %s1117 = scalar_lea.vmem %s165, 192
      %v1118 = vld [vmem:[%s1117] sm:$0x3]
      %v1119 = vld [vmem:[%s1117 + $0x4] sm:$0x3]
      %v1120 = vld [vmem:[%s1117 + $0x8] sm:$0x3]
      %v1121 = vld [vmem:[%s1117 + $0xc] sm:$0x3]
      %v1122 = vld [vmem:[%s1117 + $0x10] sm:$0x3]
      %v1123 = vld [vmem:[%s1117 + $0x14] sm:$0x3]
      %v1124 = vld [vmem:[%s1117 + $0x18] sm:$0x3]
      %v1125 = vld [vmem:[%s1117 + $0x1c] sm:$0x3]
      %v1126 = vld [vmem:[%s1117 + $0x20] sm:$0x3]
      %v1127 = vld [vmem:[%s1117 + $0x24] sm:$0x3]
      %v1128 = vld [vmem:[%s1117 + $0x28] sm:$0x3]
      %v1129 = vld [vmem:[%s1117 + $0x2c] sm:$0x3]
      %v1130 = vld [vmem:[%s1117 + $0x30] sm:$0x3]
      %v1131 = vld [vmem:[%s1117 + $0x34] sm:$0x3]
      %v1132 = vld [vmem:[%s1117 + $0x38] sm:$0x3]
      %v1133 = vld [vmem:[%s1117 + $0x3c] sm:$0x3]
      %v1134 = vcombine.low %v1118, %v1122
      %v1136 = vunpack.c.l.s4 1983009808
      %v1137 = vunpack.c.0.s8 %v1136
      %v1138 = vlaneseq
      %v1139 = vshrl.u32 %v1138, 7
      %v1140 = vsub.s32 %v1137, %v1139
      %v1141 = vrot.slane %v1134, %v1140
      %v1142 = vcombine.low %v1120, %v1124
      %v1144 = vunpack.c.l.s4 1983009808
      %v1145 = vunpack.c.0.s8 %v1144
      %v1146 = vlaneseq
      %v1147 = vshrl.u32 %v1146, 7
      %v1148 = vsub.s32 %v1145, %v1147
      %v1149 = vrot.slane %v1142, %v1148
      %v1150 = vcombine.low %v1141, %v1149
      %v1152 = vunpack.c.l.s4 1934713408
      %v1153 = vunpack.c.0.s8 %v1152
      %v1154 = vlaneseq
      %v1155 = vshrl.u32 %v1154, 7
      %v1156 = vsub.s32 %v1153, %v1155
      %v1157 = vrot.slane %v1150, %v1156
      %v1158 = vcombine.high %v1157, 0
      %v1159 = vcombine.low %v1119, %v1123
      %v1161 = vunpack.c.l.s4 1983009808
      %v1162 = vunpack.c.0.s8 %v1161
      %v1163 = vlaneseq
      %v1164 = vshrl.u32 %v1163, 7
      %v1165 = vsub.s32 %v1162, %v1164
      %v1166 = vrot.slane %v1159, %v1165
      %v1167 = vcombine.low %v1121, %v1125
      %v1169 = vunpack.c.l.s4 1983009808
      %v1170 = vunpack.c.0.s8 %v1169
      %v1171 = vlaneseq
      %v1172 = vshrl.u32 %v1171, 7
      %v1173 = vsub.s32 %v1170, %v1172
      %v1174 = vrot.slane %v1167, %v1173
      %v1175 = vcombine.low %v1166, %v1174
      %v1177 = vunpack.c.l.s4 1934713408
      %v1178 = vunpack.c.0.s8 %v1177
      %v1179 = vlaneseq
      %v1180 = vshrl.u32 %v1179, 7
      %v1181 = vsub.s32 %v1178, %v1180
      %v1182 = vrot.slane %v1175, %v1181
      %v1183 = vcombine.high %v1182, 0
      %v1184 = vcombine.low %v1126, %v1130
      %v1186 = vunpack.c.l.s4 1983009808
      %v1187 = vunpack.c.0.s8 %v1186
      %v1188 = vlaneseq
      %v1189 = vshrl.u32 %v1188, 7
      %v1190 = vsub.s32 %v1187, %v1189
      %v1191 = vrot.slane %v1184, %v1190
      %v1192 = vcombine.low %v1128, %v1132
      %v1194 = vunpack.c.l.s4 1983009808
      %v1195 = vunpack.c.0.s8 %v1194
      %v1196 = vlaneseq
      %v1197 = vshrl.u32 %v1196, 7
      %v1198 = vsub.s32 %v1195, %v1197
      %v1199 = vrot.slane %v1192, %v1198
      %v1200 = vcombine.low %v1191, %v1199
      %v1202 = vunpack.c.l.s4 1934713408
      %v1203 = vunpack.c.0.s8 %v1202
      %v1204 = vlaneseq
      %v1205 = vshrl.u32 %v1204, 7
      %v1206 = vsub.s32 %v1203, %v1205
      %v1207 = vrot.slane %v1200, %v1206
      %v1208 = vcombine.high %v1207, 0
      %v1209 = vcombine.low %v1127, %v1131
      %v1211 = vunpack.c.l.s4 1983009808
      %v1212 = vunpack.c.0.s8 %v1211
      %v1213 = vlaneseq
      %v1214 = vshrl.u32 %v1213, 7
      %v1215 = vsub.s32 %v1212, %v1214
      %v1216 = vrot.slane %v1209, %v1215
      %v1217 = vcombine.low %v1129, %v1133
      %v1219 = vunpack.c.l.s4 1983009808
      %v1220 = vunpack.c.0.s8 %v1219
      %v1221 = vlaneseq
      %v1222 = vshrl.u32 %v1221, 7
      %v1223 = vsub.s32 %v1220, %v1222
      %v1224 = vrot.slane %v1217, %v1223
      %v1225 = vcombine.low %v1216, %v1224
      %v1227 = vunpack.c.l.s4 1934713408
      %v1228 = vunpack.c.0.s8 %v1227
      %v1229 = vlaneseq
      %v1230 = vshrl.u32 %v1229, 7
      %v1231 = vsub.s32 %v1228, %v1230
      %v1232 = vrot.slane %v1225, %v1231
      %v1233 = vcombine.high %v1232, 0
      %v1236 = vpack.i.b16 %v1182, %v1157
      %v1237 = vshrl.u32 %v1157, 16
      %v1238 = vshrl.u32 %v1182, 16
      %v1239 = vpack.i.b16 %v1238, %v1237
      %v1242 = vpack.i.b16 %v1183, %v1158
      %v1243 = vshrl.u32 %v1158, 16
      %v1244 = vshrl.u32 %v1183, 16
      %v1245 = vpack.i.b16 %v1244, %v1243
      %v1248 = vpack.i.b16 %v1232, %v1207
      %v1249 = vshrl.u32 %v1207, 16
      %v1250 = vshrl.u32 %v1232, 16
      %v1251 = vpack.i.b16 %v1250, %v1249
      %v1254 = vpack.i.b16 %v1233, %v1208
      %v1255 = vshrl.u32 %v1208, 16
      %v1256 = vshrl.u32 %v1233, 16
      %v1257 = vpack.i.b16 %v1256, %v1255
      %v1258 = vunpack.c.l.b16 %v1236
      %v1259 = vunpack.c.l.b16 %v1248
      %v1260 = vpack.c.b16 %v1259, %v1258
      %v1261 = vunpack.c.l.b16 %v1239
      %v1262 = vunpack.c.l.b16 %v1251
      %v1263 = vpack.c.b16 %v1262, %v1261
      %1264 = vrot.lane.b32.xlu0 %v1263, 4
      %v1265 = vpop.permute.xlu0 %1264
      %v1266 = vunpack.c.l.b16 %v1242
      %v1267 = vunpack.c.l.b16 %v1254
      %v1268 = vpack.c.b16 %v1267, %v1266
      %1269 = vrot.lane.b32.xlu0 %v1268, 8
      %v1270 = vpop.permute.xlu0 %1269
      %v1271 = vunpack.c.l.b16 %v1245
      %v1272 = vunpack.c.l.b16 %v1257
      %v1273 = vpack.c.b16 %v1272, %v1271
      %1274 = vrot.lane.b32.xlu0 %v1273, 12
      %v1275 = vpop.permute.xlu0 %1274
      %v1278 = vsel %vm330, %v1260, %v1265
      %v1280 = vsel %vm334, %v1278, %v1270
      %v1282 = vsel %vm337, %v1280, %v1275
      %s1284 = scalar_lea.vmem %s1, 32
      %v1285 = vld [vmem:[%s1284] sm:$0xf]
      %v1286 = vld [vmem:[%s1284 + $0x4] sm:$0xf]
      %v1289 = vunpack.c.l.b16 %v1285
      %v1290 = vunpack.c.l.b16 %v1286
      %v1291 = vpack.c.b16 %v1290, %v1289
      %v1293 = vsel %vm518, %v1291, 0
      %1295 = vmatprep.subr.bf16.mxu0 0
      %1296 = vmatpush1.bf16.msra.mxu0 %v1282
      %1297 = vmatprep.subr.bf16.mxu0 0
      %1298 = vmatpush1.bf16.msra.mxu0 0
      %1299 = vmatprep.subr.bf16.mxu0 0
      %1300 = vmatpush1.bf16.msra.mxu0 0
      %1301 = vmatprep.subr.bf16.mxu0 0
      %1302 = vmatpush1.bf16.msra.mxu0 0
      %1303 = vmatprep.subr.bf16.mxu0 0
      %1304 = vmatpush1.bf16.msra.mxu0 0
      %1305 = vmatprep.subr.bf16.mxu0 0
      %1306 = vmatpush1.bf16.msra.mxu0 0
      %1307 = vmatprep.subr.bf16.mxu0 0
      %1308 = vmatpush1.bf16.msra.mxu0 0
      %1309 = vmatprep.subr.bf16.mxu0 0
      %1310 = vmatpush1.bf16.msra.mxu0 0
      %1311 = vmatprep.subr.bf16.mxu0 0
      %1312 = vmatpush1.bf16.msra.mxu0 0
      %1313 = vmatprep.subr.bf16.mxu0 0
      %1314 = vmatpush1.bf16.msra.mxu0 0
      %1315 = vmatprep.subr.bf16.mxu0 0
      %1316 = vmatpush1.bf16.msra.mxu0 0
      %1317 = vmatprep.subr.bf16.mxu0 0
      %1318 = vmatpush1.bf16.msra.mxu0 0
      %1319 = vmatprep.subr.bf16.mxu0 0
      %1320 = vmatpush1.bf16.msra.mxu0 0
      %1321 = vmatprep.subr.bf16.mxu0 0
      %1322 = vmatpush1.bf16.msra.mxu0 0
      %1323 = vmatprep.subr.bf16.mxu0 0
      %1324 = vmatpush1.bf16.msra.mxu0 0
      %1325 = vmatprep.subr.bf16.mxu0 0
      %1326 = vmatpush1.bf16.msra.mxu0 0
      %1327 = vmatprep.mubr.bf16.mxu0 0
      %1328 = vmatmul.mubr.bf16.gmra.mrb[0].mxu0 %v1293
      %v1329 = vpop.f32.mrb[0].mxu0
      %v1330 = vadd.f32 0.0, %v1329
      %v1331 = vpop.f32.mrb[0].mxu0
      %v1332 = vpop.f32.mrb[0].mxu0
      %v1333 = vadd.f32 0.0, %v1332
      %v1334 = vpop.f32.mrb[0].mxu0
      %1335 = vdwg.mxu0
      %v1336 = vadd.f32 %v1115, %v1330
      %v1337 = vadd.f32 %v1116, %v1333
      %v1338 = vld [vmem:[%s896] sm:$0x3]
      %v1339 = vld [vmem:[%s896 + $0x4] sm:$0x3]
      %v1340 = vld [vmem:[%s896 + $0x8] sm:$0x3]
      %v1341 = vld [vmem:[%s896 + $0xc] sm:$0x3]
      %v1342 = vld [vmem:[%s896 + $0x10] sm:$0x3]
      %v1343 = vld [vmem:[%s896 + $0x14] sm:$0x3]
      %v1344 = vld [vmem:[%s896 + $0x18] sm:$0x3]
      %v1345 = vld [vmem:[%s896 + $0x1c] sm:$0x3]
      %v1346 = vld [vmem:[%s896 + $0x20] sm:$0x3]
      %v1347 = vld [vmem:[%s896 + $0x24] sm:$0x3]
      %v1348 = vld [vmem:[%s896 + $0x28] sm:$0x3]
      %v1349 = vld [vmem:[%s896 + $0x2c] sm:$0x3]
      %v1350 = vld [vmem:[%s896 + $0x30] sm:$0x3]
      %v1351 = vld [vmem:[%s896 + $0x34] sm:$0x3]
      %v1352 = vld [vmem:[%s896 + $0x38] sm:$0x3]
      %v1353 = vld [vmem:[%s896 + $0x3c] sm:$0x3]
      %1370 = vrot.lane.b32.xlu0 %v1338, 127
      %v1371 = vpop.permute.xlu0 %1370
      %1372 = vrot.lane.b32.xlu0 %v1339, 127
      %v1373 = vpop.permute.xlu0 %1372
      %1374 = vrot.lane.b32.xlu0 %v1340, 127
      %v1375 = vpop.permute.xlu0 %1374
      %1376 = vrot.lane.b32.xlu0 %v1341, 127
      %v1377 = vpop.permute.xlu0 %1376
      %1378 = vrot.lane.b32.xlu0 %v1342, 127
      %v1379 = vpop.permute.xlu0 %1378
      %1380 = vrot.lane.b32.xlu0 %v1343, 127
      %v1381 = vpop.permute.xlu0 %1380
      %1382 = vrot.lane.b32.xlu0 %v1344, 127
      %v1383 = vpop.permute.xlu0 %1382
      %1384 = vrot.lane.b32.xlu0 %v1345, 127
      %v1385 = vpop.permute.xlu0 %1384
      %1386 = vrot.lane.b32.xlu0 %v1346, 127
      %v1387 = vpop.permute.xlu0 %1386
      %1388 = vrot.lane.b32.xlu0 %v1347, 127
      %v1389 = vpop.permute.xlu0 %1388
      %1390 = vrot.lane.b32.xlu0 %v1348, 127
      %v1391 = vpop.permute.xlu0 %1390
      %1392 = vrot.lane.b32.xlu0 %v1349, 127
      %v1393 = vpop.permute.xlu0 %1392
      %1394 = vrot.lane.b32.xlu0 %v1350, 127
      %v1395 = vpop.permute.xlu0 %1394
      %1396 = vrot.lane.b32.xlu0 %v1351, 127
      %v1397 = vpop.permute.xlu0 %1396
      %1398 = vrot.lane.b32.xlu0 %v1352, 127
      %v1399 = vpop.permute.xlu0 %1398
      %1400 = vrot.lane.b32.xlu0 %v1353, 127
      %v1401 = vpop.permute.xlu0 %1400
      %v1418 = vcombine.low %v1371, %v1379
      %v1420 = vunpack.c.l.s4 1983009808
      %v1421 = vunpack.c.0.s8 %v1420
      %v1422 = vlaneseq
      %v1423 = vshrl.u32 %v1422, 7
      %v1424 = vsub.s32 %v1421, %v1423
      %v1425 = vrot.slane %v1418, %v1424
      %v1426 = vcombine.low %v1375, %v1383
      %v1428 = vunpack.c.l.s4 1983009808
      %v1429 = vunpack.c.0.s8 %v1428
      %v1430 = vlaneseq
      %v1431 = vshrl.u32 %v1430, 7
      %v1432 = vsub.s32 %v1429, %v1431
      %v1433 = vrot.slane %v1426, %v1432
      %v1434 = vcombine.low %v1425, %v1433
      %v1436 = vunpack.c.l.s4 1934713408
      %v1437 = vunpack.c.0.s8 %v1436
      %v1438 = vlaneseq
      %v1439 = vshrl.u32 %v1438, 7
      %v1440 = vsub.s32 %v1437, %v1439
      %v1441 = vrot.slane %v1434, %v1440
      %v1442 = vcombine.high %v1441, 0
      %v1443 = vcombine.low %v1373, %v1381
      %v1445 = vunpack.c.l.s4 1983009808
      %v1446 = vunpack.c.0.s8 %v1445
      %v1447 = vlaneseq
      %v1448 = vshrl.u32 %v1447, 7
      %v1449 = vsub.s32 %v1446, %v1448
      %v1450 = vrot.slane %v1443, %v1449
      %v1451 = vcombine.low %v1377, %v1385
      %v1453 = vunpack.c.l.s4 1983009808
      %v1454 = vunpack.c.0.s8 %v1453
      %v1455 = vlaneseq
      %v1456 = vshrl.u32 %v1455, 7
      %v1457 = vsub.s32 %v1454, %v1456
      %v1458 = vrot.slane %v1451, %v1457
      %v1459 = vcombine.low %v1450, %v1458
      %v1461 = vunpack.c.l.s4 1934713408
      %v1462 = vunpack.c.0.s8 %v1461
      %v1463 = vlaneseq
      %v1464 = vshrl.u32 %v1463, 7
      %v1465 = vsub.s32 %v1462, %v1464
      %v1466 = vrot.slane %v1459, %v1465
      %v1467 = vcombine.high %v1466, 0
      %v1468 = vcombine.low %v1387, %v1395
      %v1470 = vunpack.c.l.s4 1983009808
      %v1471 = vunpack.c.0.s8 %v1470
      %v1472 = vlaneseq
      %v1473 = vshrl.u32 %v1472, 7
      %v1474 = vsub.s32 %v1471, %v1473
      %v1475 = vrot.slane %v1468, %v1474
      %v1476 = vcombine.low %v1391, %v1399
      %v1478 = vunpack.c.l.s4 1983009808
      %v1479 = vunpack.c.0.s8 %v1478
      %v1480 = vlaneseq
      %v1481 = vshrl.u32 %v1480, 7
      %v1482 = vsub.s32 %v1479, %v1481
      %v1483 = vrot.slane %v1476, %v1482
      %v1484 = vcombine.low %v1475, %v1483
      %v1486 = vunpack.c.l.s4 1934713408
      %v1487 = vunpack.c.0.s8 %v1486
      %v1488 = vlaneseq
      %v1489 = vshrl.u32 %v1488, 7
      %v1490 = vsub.s32 %v1487, %v1489
      %v1491 = vrot.slane %v1484, %v1490
      %v1492 = vcombine.high %v1491, 0
      %v1493 = vcombine.low %v1389, %v1397
      %v1495 = vunpack.c.l.s4 1983009808
      %v1496 = vunpack.c.0.s8 %v1495
      %v1497 = vlaneseq
      %v1498 = vshrl.u32 %v1497, 7
      %v1499 = vsub.s32 %v1496, %v1498
      %v1500 = vrot.slane %v1493, %v1499
      %v1501 = vcombine.low %v1393, %v1401
      %v1503 = vunpack.c.l.s4 1983009808
      %v1504 = vunpack.c.0.s8 %v1503
      %v1505 = vlaneseq
      %v1506 = vshrl.u32 %v1505, 7
      %v1507 = vsub.s32 %v1504, %v1506
      %v1508 = vrot.slane %v1501, %v1507
      %v1509 = vcombine.low %v1500, %v1508
      %v1511 = vunpack.c.l.s4 1934713408
      %v1512 = vunpack.c.0.s8 %v1511
      %v1513 = vlaneseq
      %v1514 = vshrl.u32 %v1513, 7
      %v1515 = vsub.s32 %v1512, %v1514
      %v1516 = vrot.slane %v1509, %v1515
      %v1517 = vcombine.high %v1516, 0
      %v1520 = vpack.i.b16 %v1466, %v1441
      %v1521 = vshrl.u32 %v1441, 16
      %v1522 = vshrl.u32 %v1466, 16
      %v1523 = vpack.i.b16 %v1522, %v1521
      %v1526 = vpack.i.b16 %v1467, %v1442
      %v1527 = vshrl.u32 %v1442, 16
      %v1528 = vshrl.u32 %v1467, 16
      %v1529 = vpack.i.b16 %v1528, %v1527
      %v1532 = vpack.i.b16 %v1516, %v1491
      %v1533 = vshrl.u32 %v1491, 16
      %v1534 = vshrl.u32 %v1516, 16
      %v1535 = vpack.i.b16 %v1534, %v1533
      %v1538 = vpack.i.b16 %v1517, %v1492
      %v1539 = vshrl.u32 %v1492, 16
      %v1540 = vshrl.u32 %v1517, 16
      %v1541 = vpack.i.b16 %v1540, %v1539
      %v1542 = vunpack.c.l.b16 %v1520
      %v1543 = vunpack.c.l.b16 %v1532
      %v1544 = vpack.c.b16 %v1543, %v1542
      %v1545 = vunpack.c.l.b16 %v1523
      %v1546 = vunpack.c.l.b16 %v1535
      %v1547 = vpack.c.b16 %v1546, %v1545
      %1548 = vrot.lane.b32.xlu0 %v1547, 4
      %v1549 = vpop.permute.xlu0 %1548
      %v1550 = vunpack.c.l.b16 %v1526
      %v1551 = vunpack.c.l.b16 %v1538
      %v1552 = vpack.c.b16 %v1551, %v1550
      %1553 = vrot.lane.b32.xlu0 %v1552, 8
      %v1554 = vpop.permute.xlu0 %1553
      %v1555 = vunpack.c.l.b16 %v1529
      %v1556 = vunpack.c.l.b16 %v1541
      %v1557 = vpack.c.b16 %v1556, %v1555
      %1558 = vrot.lane.b32.xlu0 %v1557, 12
      %v1559 = vpop.permute.xlu0 %1558
      %v1562 = vsel %vm330, %v1544, %v1549
      %v1564 = vsel %vm334, %v1562, %v1554
      %v1566 = vsel %vm337, %v1564, %v1559
      %s1568 = scalar_lea.vmem %s1, 40
      %v1569 = vld [vmem:[%s1568] sm:$0xf]
      %v1570 = vld [vmem:[%s1568 + $0x4] sm:$0xf]
      %v1573 = vunpack.c.l.b16 %v1569
      %v1574 = vunpack.c.l.b16 %v1570
      %v1575 = vpack.c.b16 %v1574, %v1573
      %v1577 = vsel %vm518, %v1575, 0
      %1579 = vmatprep.subr.bf16.mxu0 0
      %1580 = vmatpush1.bf16.msra.mxu0 %v1566
      %1581 = vmatprep.subr.bf16.mxu0 0
      %1582 = vmatpush1.bf16.msra.mxu0 0
      %1583 = vmatprep.subr.bf16.mxu0 0
      %1584 = vmatpush1.bf16.msra.mxu0 0
      %1585 = vmatprep.subr.bf16.mxu0 0
      %1586 = vmatpush1.bf16.msra.mxu0 0
      %1587 = vmatprep.subr.bf16.mxu0 0
      %1588 = vmatpush1.bf16.msra.mxu0 0
      %1589 = vmatprep.subr.bf16.mxu0 0
      %1590 = vmatpush1.bf16.msra.mxu0 0
      %1591 = vmatprep.subr.bf16.mxu0 0
      %1592 = vmatpush1.bf16.msra.mxu0 0
      %1593 = vmatprep.subr.bf16.mxu0 0
      %1594 = vmatpush1.bf16.msra.mxu0 0
      %1595 = vmatprep.subr.bf16.mxu0 0
      %1596 = vmatpush1.bf16.msra.mxu0 0
      %1597 = vmatprep.subr.bf16.mxu0 0
      %1598 = vmatpush1.bf16.msra.mxu0 0
      %1599 = vmatprep.subr.bf16.mxu0 0
      %1600 = vmatpush1.bf16.msra.mxu0 0
      %1601 = vmatprep.subr.bf16.mxu0 0
      %1602 = vmatpush1.bf16.msra.mxu0 0
      %1603 = vmatprep.subr.bf16.mxu0 0
      %1604 = vmatpush1.bf16.msra.mxu0 0
      %1605 = vmatprep.subr.bf16.mxu0 0
      %1606 = vmatpush1.bf16.msra.mxu0 0
      %1607 = vmatprep.subr.bf16.mxu0 0
      %1608 = vmatpush1.bf16.msra.mxu0 0
      %1609 = vmatprep.subr.bf16.mxu0 0
      %1610 = vmatpush1.bf16.msra.mxu0 0
      %1611 = vmatprep.mubr.bf16.mxu0 0
      %1612 = vmatmul.mubr.bf16.gmra.mrb[0].mxu0 %v1577
      %v1613 = vpop.f32.mrb[0].mxu0
      %v1614 = vadd.f32 0.0, %v1613
      %v1615 = vpop.f32.mrb[0].mxu0
      %v1616 = vpop.f32.mrb[0].mxu0
      %v1617 = vadd.f32 0.0, %v1616
      %v1618 = vpop.f32.mrb[0].mxu0
      %1619 = vdwg.mxu0
      %v1620 = vadd.f32 %v1336, %v1614
      %v1621 = vadd.f32 %v1337, %v1617
      %v1622 = vld [vmem:[%s165] sm:$0x7]
      %v1623 = vld [vmem:[%s165 + $0x4] sm:$0x7]
      %v1624 = vld [vmem:[%s165 + $0x8] sm:$0x7]
      %v1625 = vld [vmem:[%s165 + $0xc] sm:$0x7]
      %v1626 = vld [vmem:[%s165 + $0x10] sm:$0x7]
      %v1627 = vld [vmem:[%s165 + $0x14] sm:$0x7]
      %v1628 = vld [vmem:[%s165 + $0x18] sm:$0x7]
      %v1629 = vld [vmem:[%s165 + $0x1c] sm:$0x7]
      %v1630 = vld [vmem:[%s165 + $0x20] sm:$0x7]
      %v1631 = vld [vmem:[%s165 + $0x24] sm:$0x7]
      %v1632 = vld [vmem:[%s165 + $0x28] sm:$0x7]
      %v1633 = vld [vmem:[%s165 + $0x2c] sm:$0x7]
      %v1634 = vld [vmem:[%s165 + $0x30] sm:$0x7]
      %v1635 = vld [vmem:[%s165 + $0x34] sm:$0x7]
      %v1636 = vld [vmem:[%s165 + $0x38] sm:$0x7]
      %v1637 = vld [vmem:[%s165 + $0x3c] sm:$0x7]
      %v1639 = vshrl.u32 %v1622, 16
      %v1641 = vrot.slane %v1639, 4
      %v1642 = vshll.u32 %v1622, 16
      %v1644 = vrot.slane %v1642, 5
      %v1645 = vor.u32 %v1641, %v1644
      %v1646 = vrot.slane %v1645, 4
      %v1648 = vshrl.u32 %v1623, 16
      %v1650 = vrot.slane %v1648, 4
      %v1651 = vshll.u32 %v1623, 16
      %v1653 = vrot.slane %v1651, 5
      %v1654 = vor.u32 %v1650, %v1653
      %v1655 = vrot.slane %v1654, 4
      %v1657 = vshrl.u32 %v1624, 16
      %v1659 = vrot.slane %v1657, 4
      %v1660 = vshll.u32 %v1624, 16
      %v1662 = vrot.slane %v1660, 5
      %v1663 = vor.u32 %v1659, %v1662
      %v1664 = vrot.slane %v1663, 4
      %v1666 = vshrl.u32 %v1625, 16
      %v1668 = vrot.slane %v1666, 4
      %v1669 = vshll.u32 %v1625, 16
      %v1671 = vrot.slane %v1669, 5
      %v1672 = vor.u32 %v1668, %v1671
      %v1673 = vrot.slane %v1672, 4
      %v1675 = vshrl.u32 %v1626, 16
      %v1677 = vrot.slane %v1675, 4
      %v1678 = vshll.u32 %v1626, 16
      %v1680 = vrot.slane %v1678, 5
      %v1681 = vor.u32 %v1677, %v1680
      %v1682 = vrot.slane %v1681, 4
      %v1684 = vshrl.u32 %v1627, 16
      %v1686 = vrot.slane %v1684, 4
      %v1687 = vshll.u32 %v1627, 16
      %v1689 = vrot.slane %v1687, 5
      %v1690 = vor.u32 %v1686, %v1689
      %v1691 = vrot.slane %v1690, 4
      %v1693 = vshrl.u32 %v1628, 16
      %v1695 = vrot.slane %v1693, 4
      %v1696 = vshll.u32 %v1628, 16
      %v1698 = vrot.slane %v1696, 5
      %v1699 = vor.u32 %v1695, %v1698
      %v1700 = vrot.slane %v1699, 4
      %v1702 = vshrl.u32 %v1629, 16
      %v1704 = vrot.slane %v1702, 4
      %v1705 = vshll.u32 %v1629, 16
      %v1707 = vrot.slane %v1705, 5
      %v1708 = vor.u32 %v1704, %v1707
      %v1709 = vrot.slane %v1708, 4
      %v1711 = vshrl.u32 %v1630, 16
      %v1713 = vrot.slane %v1711, 4
      %v1714 = vshll.u32 %v1630, 16
      %v1716 = vrot.slane %v1714, 5
      %v1717 = vor.u32 %v1713, %v1716
      %v1718 = vrot.slane %v1717, 4
      %v1720 = vshrl.u32 %v1631, 16
      %v1722 = vrot.slane %v1720, 4
      %v1723 = vshll.u32 %v1631, 16
      %v1725 = vrot.slane %v1723, 5
      %v1726 = vor.u32 %v1722, %v1725
      %v1727 = vrot.slane %v1726, 4
      %v1729 = vshrl.u32 %v1632, 16
      %v1731 = vrot.slane %v1729, 4
      %v1732 = vshll.u32 %v1632, 16
      %v1734 = vrot.slane %v1732, 5
      %v1735 = vor.u32 %v1731, %v1734
      %v1736 = vrot.slane %v1735, 4
      %v1738 = vshrl.u32 %v1633, 16
      %v1740 = vrot.slane %v1738, 4
      %v1741 = vshll.u32 %v1633, 16
      %v1743 = vrot.slane %v1741, 5
      %v1744 = vor.u32 %v1740, %v1743
      %v1745 = vrot.slane %v1744, 4
      %v1747 = vshrl.u32 %v1634, 16
      %v1749 = vrot.slane %v1747, 4
      %v1750 = vshll.u32 %v1634, 16
      %v1752 = vrot.slane %v1750, 5
      %v1753 = vor.u32 %v1749, %v1752
      %v1754 = vrot.slane %v1753, 4
      %v1756 = vshrl.u32 %v1635, 16
      %v1758 = vrot.slane %v1756, 4
      %v1759 = vshll.u32 %v1635, 16
      %v1761 = vrot.slane %v1759, 5
      %v1762 = vor.u32 %v1758, %v1761
      %v1763 = vrot.slane %v1762, 4
      %v1765 = vshrl.u32 %v1636, 16
      %v1767 = vrot.slane %v1765, 4
      %v1768 = vshll.u32 %v1636, 16
      %v1770 = vrot.slane %v1768, 5
      %v1771 = vor.u32 %v1767, %v1770
      %v1772 = vrot.slane %v1771, 4
      %v1774 = vshrl.u32 %v1637, 16
      %v1776 = vrot.slane %v1774, 4
      %v1777 = vshll.u32 %v1637, 16
      %v1779 = vrot.slane %v1777, 5
      %v1780 = vor.u32 %v1776, %v1779
      %v1781 = vrot.slane %v1780, 4
      %v1798 = vcombine.low %v1646, %v1682
      %v1800 = vunpack.c.l.s4 1983009808
      %v1801 = vunpack.c.0.s8 %v1800
      %v1802 = vlaneseq
      %v1803 = vshrl.u32 %v1802, 7
      %v1804 = vsub.s32 %v1801, %v1803
      %v1805 = vrot.slane %v1798, %v1804
      %v1806 = vcombine.low %v1664, %v1700
      %v1808 = vunpack.c.l.s4 1983009808
      %v1809 = vunpack.c.0.s8 %v1808
      %v1810 = vlaneseq
      %v1811 = vshrl.u32 %v1810, 7
      %v1812 = vsub.s32 %v1809, %v1811
      %v1813 = vrot.slane %v1806, %v1812
      %v1814 = vcombine.low %v1805, %v1813
      %v1816 = vunpack.c.l.s4 1934713408
      %v1817 = vunpack.c.0.s8 %v1816
      %v1818 = vlaneseq
      %v1819 = vshrl.u32 %v1818, 7
      %v1820 = vsub.s32 %v1817, %v1819
      %v1821 = vrot.slane %v1814, %v1820
      %v1822 = vcombine.high %v1821, 0
      %v1823 = vcombine.low %v1655, %v1691
      %v1825 = vunpack.c.l.s4 1983009808
      %v1826 = vunpack.c.0.s8 %v1825
      %v1827 = vlaneseq
      %v1828 = vshrl.u32 %v1827, 7
      %v1829 = vsub.s32 %v1826, %v1828
      %v1830 = vrot.slane %v1823, %v1829
      %v1831 = vcombine.low %v1673, %v1709
      %v1833 = vunpack.c.l.s4 1983009808
      %v1834 = vunpack.c.0.s8 %v1833
      %v1835 = vlaneseq
      %v1836 = vshrl.u32 %v1835, 7
      %v1837 = vsub.s32 %v1834, %v1836
      %v1838 = vrot.slane %v1831, %v1837
      %v1839 = vcombine.low %v1830, %v1838
      %v1841 = vunpack.c.l.s4 1934713408
      %v1842 = vunpack.c.0.s8 %v1841
      %v1843 = vlaneseq
      %v1844 = vshrl.u32 %v1843, 7
      %v1845 = vsub.s32 %v1842, %v1844
      %v1846 = vrot.slane %v1839, %v1845
      %v1847 = vcombine.high %v1846, 0
      %v1848 = vcombine.low %v1718, %v1754
      %v1850 = vunpack.c.l.s4 1983009808
      %v1851 = vunpack.c.0.s8 %v1850
      %v1852 = vlaneseq
      %v1853 = vshrl.u32 %v1852, 7
      %v1854 = vsub.s32 %v1851, %v1853
      %v1855 = vrot.slane %v1848, %v1854
      %v1856 = vcombine.low %v1736, %v1772
      %v1858 = vunpack.c.l.s4 1983009808
      %v1859 = vunpack.c.0.s8 %v1858
      %v1860 = vlaneseq
      %v1861 = vshrl.u32 %v1860, 7
      %v1862 = vsub.s32 %v1859, %v1861
      %v1863 = vrot.slane %v1856, %v1862
      %v1864 = vcombine.low %v1855, %v1863
      %v1866 = vunpack.c.l.s4 1934713408
      %v1867 = vunpack.c.0.s8 %v1866
      %v1868 = vlaneseq
      %v1869 = vshrl.u32 %v1868, 7
      %v1870 = vsub.s32 %v1867, %v1869
      %v1871 = vrot.slane %v1864, %v1870
      %v1872 = vcombine.high %v1871, 0
      %v1873 = vcombine.low %v1727, %v1763
      %v1875 = vunpack.c.l.s4 1983009808
      %v1876 = vunpack.c.0.s8 %v1875
      %v1877 = vlaneseq
      %v1878 = vshrl.u32 %v1877, 7
      %v1879 = vsub.s32 %v1876, %v1878
      %v1880 = vrot.slane %v1873, %v1879
      %v1881 = vcombine.low %v1745, %v1781
      %v1883 = vunpack.c.l.s4 1983009808
      %v1884 = vunpack.c.0.s8 %v1883
      %v1885 = vlaneseq
      %v1886 = vshrl.u32 %v1885, 7
      %v1887 = vsub.s32 %v1884, %v1886
      %v1888 = vrot.slane %v1881, %v1887
      %v1889 = vcombine.low %v1880, %v1888
      %v1891 = vunpack.c.l.s4 1934713408
      %v1892 = vunpack.c.0.s8 %v1891
      %v1893 = vlaneseq
      %v1894 = vshrl.u32 %v1893, 7
      %v1895 = vsub.s32 %v1892, %v1894
      %v1896 = vrot.slane %v1889, %v1895
      %v1897 = vcombine.high %v1896, 0
      %v1900 = vpack.i.b16 %v1846, %v1821
      %v1901 = vshrl.u32 %v1821, 16
      %v1902 = vshrl.u32 %v1846, 16
      %v1903 = vpack.i.b16 %v1902, %v1901
      %v1906 = vpack.i.b16 %v1847, %v1822
      %v1907 = vshrl.u32 %v1822, 16
      %v1908 = vshrl.u32 %v1847, 16
      %v1909 = vpack.i.b16 %v1908, %v1907
      %v1912 = vpack.i.b16 %v1896, %v1871
      %v1913 = vshrl.u32 %v1871, 16
      %v1914 = vshrl.u32 %v1896, 16
      %v1915 = vpack.i.b16 %v1914, %v1913
      %v1918 = vpack.i.b16 %v1897, %v1872
      %v1919 = vshrl.u32 %v1872, 16
      %v1920 = vshrl.u32 %v1897, 16
      %v1921 = vpack.i.b16 %v1920, %v1919
      %v1922 = vunpack.c.l.b16 %v1900
      %v1923 = vunpack.c.l.b16 %v1912
      %v1924 = vpack.c.b16 %v1923, %v1922
      %v1925 = vunpack.c.l.b16 %v1903
      %v1926 = vunpack.c.l.b16 %v1915
      %v1927 = vpack.c.b16 %v1926, %v1925
      %1928 = vrot.lane.b32.xlu0 %v1927, 4
      %v1929 = vpop.permute.xlu0 %1928
      %v1930 = vunpack.c.l.b16 %v1906
      %v1931 = vunpack.c.l.b16 %v1918
      %v1932 = vpack.c.b16 %v1931, %v1930
      %1933 = vrot.lane.b32.xlu0 %v1932, 8
      %v1934 = vpop.permute.xlu0 %1933
      %v1935 = vunpack.c.l.b16 %v1909
      %v1936 = vunpack.c.l.b16 %v1921
      %v1937 = vpack.c.b16 %v1936, %v1935
      %1938 = vrot.lane.b32.xlu0 %v1937, 12
      %v1939 = vpop.permute.xlu0 %1938
      %v1942 = vsel %vm330, %v1924, %v1929
      %v1944 = vsel %vm334, %v1942, %v1934
      %v1946 = vsel %vm337, %v1944, %v1939
      %s1948 = scalar_lea.vmem %s1, 48
      %v1949 = vld [vmem:[%s1948] sm:$0xf]
      %v1950 = vld [vmem:[%s1948 + $0x4] sm:$0xf]
      %v1953 = vunpack.c.l.b16 %v1949
      %v1954 = vunpack.c.l.b16 %v1950
      %v1955 = vpack.c.b16 %v1954, %v1953
      %v1957 = vsel %vm518, %v1955, 0
      %1959 = vmatprep.subr.bf16.mxu0 0
      %1960 = vmatpush1.bf16.msra.mxu0 %v1946
      %1961 = vmatprep.subr.bf16.mxu0 0
      %1962 = vmatpush1.bf16.msra.mxu0 0
      %1963 = vmatprep.subr.bf16.mxu0 0
      %1964 = vmatpush1.bf16.msra.mxu0 0
      %1965 = vmatprep.subr.bf16.mxu0 0
      %1966 = vmatpush1.bf16.msra.mxu0 0
      %1967 = vmatprep.subr.bf16.mxu0 0
      %1968 = vmatpush1.bf16.msra.mxu0 0
      %1969 = vmatprep.subr.bf16.mxu0 0
      %1970 = vmatpush1.bf16.msra.mxu0 0
      %1971 = vmatprep.subr.bf16.mxu0 0
      %1972 = vmatpush1.bf16.msra.mxu0 0
      %1973 = vmatprep.subr.bf16.mxu0 0
      %1974 = vmatpush1.bf16.msra.mxu0 0
      %1975 = vmatprep.subr.bf16.mxu0 0
      %1976 = vmatpush1.bf16.msra.mxu0 0
      %1977 = vmatprep.subr.bf16.mxu0 0
      %1978 = vmatpush1.bf16.msra.mxu0 0
      %1979 = vmatprep.subr.bf16.mxu0 0
      %1980 = vmatpush1.bf16.msra.mxu0 0
      %1981 = vmatprep.subr.bf16.mxu0 0
      %1982 = vmatpush1.bf16.msra.mxu0 0
      %1983 = vmatprep.subr.bf16.mxu0 0
      %1984 = vmatpush1.bf16.msra.mxu0 0
      %1985 = vmatprep.subr.bf16.mxu0 0
      %1986 = vmatpush1.bf16.msra.mxu0 0
      %1987 = vmatprep.subr.bf16.mxu0 0
      %1988 = vmatpush1.bf16.msra.mxu0 0
      %1989 = vmatprep.subr.bf16.mxu0 0
      %1990 = vmatpush1.bf16.msra.mxu0 0
      %1991 = vmatprep.mubr.bf16.mxu0 0
      %1992 = vmatmul.mubr.bf16.gmra.mrb[0].mxu0 %v1957
      %v1993 = vpop.f32.mrb[0].mxu0
      %v1994 = vadd.f32 0.0, %v1993
      %v1995 = vpop.f32.mrb[0].mxu0
      %v1996 = vpop.f32.mrb[0].mxu0
      %v1997 = vadd.f32 0.0, %v1996
      %v1998 = vpop.f32.mrb[0].mxu0
      %1999 = vdwg.mxu0
      %v2000 = vadd.f32 %v1620, %v1994
      %v2001 = vadd.f32 %v1621, %v1997
      %v2002 = vld [vmem:[%s343] sm:$0x7]
      %v2003 = vld [vmem:[%s343 + $0x4] sm:$0x7]
      %v2004 = vld [vmem:[%s343 + $0x8] sm:$0x7]
      %v2005 = vld [vmem:[%s343 + $0xc] sm:$0x7]
      %v2006 = vld [vmem:[%s343 + $0x10] sm:$0x7]
      %v2007 = vld [vmem:[%s343 + $0x14] sm:$0x7]
      %v2008 = vld [vmem:[%s343 + $0x18] sm:$0x7]
      %v2009 = vld [vmem:[%s343 + $0x1c] sm:$0x7]
      %v2010 = vld [vmem:[%s343 + $0x20] sm:$0x7]
      %v2011 = vld [vmem:[%s343 + $0x24] sm:$0x7]
      %v2012 = vld [vmem:[%s343 + $0x28] sm:$0x7]
      %v2013 = vld [vmem:[%s343 + $0x2c] sm:$0x7]
      %v2014 = vld [vmem:[%s343 + $0x30] sm:$0x7]
      %v2015 = vld [vmem:[%s343 + $0x34] sm:$0x7]
      %v2016 = vld [vmem:[%s343 + $0x38] sm:$0x7]
      %v2017 = vld [vmem:[%s343 + $0x3c] sm:$0x7]
      %v2019 = vshrl.u32 %v2002, 16
      %v2021 = vrot.slane %v2019, 4
      %v2022 = vshll.u32 %v2002, 16
      %v2024 = vrot.slane %v2022, 5
      %v2025 = vor.u32 %v2021, %v2024
      %v2026 = vrot.slane %v2025, 4
      %v2028 = vshrl.u32 %v2003, 16
      %v2030 = vrot.slane %v2028, 4
      %v2031 = vshll.u32 %v2003, 16
      %v2033 = vrot.slane %v2031, 5
      %v2034 = vor.u32 %v2030, %v2033
      %v2035 = vrot.slane %v2034, 4
      %v2037 = vshrl.u32 %v2004, 16
      %v2039 = vrot.slane %v2037, 4
      %v2040 = vshll.u32 %v2004, 16
      %v2042 = vrot.slane %v2040, 5
      %v2043 = vor.u32 %v2039, %v2042
      %v2044 = vrot.slane %v2043, 4
      %v2046 = vshrl.u32 %v2005, 16
      %v2048 = vrot.slane %v2046, 4
      %v2049 = vshll.u32 %v2005, 16
      %v2051 = vrot.slane %v2049, 5
      %v2052 = vor.u32 %v2048, %v2051
      %v2053 = vrot.slane %v2052, 4
      %v2055 = vshrl.u32 %v2006, 16
      %v2057 = vrot.slane %v2055, 4
      %v2058 = vshll.u32 %v2006, 16
      %v2060 = vrot.slane %v2058, 5
      %v2061 = vor.u32 %v2057, %v2060
      %v2062 = vrot.slane %v2061, 4
      %v2064 = vshrl.u32 %v2007, 16
      %v2066 = vrot.slane %v2064, 4
      %v2067 = vshll.u32 %v2007, 16
      %v2069 = vrot.slane %v2067, 5
      %v2070 = vor.u32 %v2066, %v2069
      %v2071 = vrot.slane %v2070, 4
      %v2073 = vshrl.u32 %v2008, 16
      %v2075 = vrot.slane %v2073, 4
      %v2076 = vshll.u32 %v2008, 16
      %v2078 = vrot.slane %v2076, 5
      %v2079 = vor.u32 %v2075, %v2078
      %v2080 = vrot.slane %v2079, 4
      %v2082 = vshrl.u32 %v2009, 16
      %v2084 = vrot.slane %v2082, 4
      %v2085 = vshll.u32 %v2009, 16
      %v2087 = vrot.slane %v2085, 5
      %v2088 = vor.u32 %v2084, %v2087
      %v2089 = vrot.slane %v2088, 4
      %v2091 = vshrl.u32 %v2010, 16
      %v2093 = vrot.slane %v2091, 4
      %v2094 = vshll.u32 %v2010, 16
      %v2096 = vrot.slane %v2094, 5
      %v2097 = vor.u32 %v2093, %v2096
      %v2098 = vrot.slane %v2097, 4
      %v2100 = vshrl.u32 %v2011, 16
      %v2102 = vrot.slane %v2100, 4
      %v2103 = vshll.u32 %v2011, 16
      %v2105 = vrot.slane %v2103, 5
      %v2106 = vor.u32 %v2102, %v2105
      %v2107 = vrot.slane %v2106, 4
      %v2109 = vshrl.u32 %v2012, 16
      %v2111 = vrot.slane %v2109, 4
      %v2112 = vshll.u32 %v2012, 16
      %v2114 = vrot.slane %v2112, 5
      %v2115 = vor.u32 %v2111, %v2114
      %v2116 = vrot.slane %v2115, 4
      %v2118 = vshrl.u32 %v2013, 16
      %v2120 = vrot.slane %v2118, 4
      %v2121 = vshll.u32 %v2013, 16
      %v2123 = vrot.slane %v2121, 5
      %v2124 = vor.u32 %v2120, %v2123
      %v2125 = vrot.slane %v2124, 4
      %v2127 = vshrl.u32 %v2014, 16
      %v2129 = vrot.slane %v2127, 4
      %v2130 = vshll.u32 %v2014, 16
      %v2132 = vrot.slane %v2130, 5
      %v2133 = vor.u32 %v2129, %v2132
      %v2134 = vrot.slane %v2133, 4
      %v2136 = vshrl.u32 %v2015, 16
      %v2138 = vrot.slane %v2136, 4
      %v2139 = vshll.u32 %v2015, 16
      %v2141 = vrot.slane %v2139, 5
      %v2142 = vor.u32 %v2138, %v2141
      %v2143 = vrot.slane %v2142, 4
      %v2145 = vshrl.u32 %v2016, 16
      %v2147 = vrot.slane %v2145, 4
      %v2148 = vshll.u32 %v2016, 16
      %v2150 = vrot.slane %v2148, 5
      %v2151 = vor.u32 %v2147, %v2150
      %v2152 = vrot.slane %v2151, 4
      %v2154 = vshrl.u32 %v2017, 16
      %v2156 = vrot.slane %v2154, 4
      %v2157 = vshll.u32 %v2017, 16
      %v2159 = vrot.slane %v2157, 5
      %v2160 = vor.u32 %v2156, %v2159
      %v2161 = vrot.slane %v2160, 4
      %v2178 = vcombine.low %v2026, %v2062
      %v2180 = vunpack.c.l.s4 1983009808
      %v2181 = vunpack.c.0.s8 %v2180
      %v2182 = vlaneseq
      %v2183 = vshrl.u32 %v2182, 7
      %v2184 = vsub.s32 %v2181, %v2183
      %v2185 = vrot.slane %v2178, %v2184
      %v2186 = vcombine.low %v2044, %v2080
      %v2188 = vunpack.c.l.s4 1983009808
      %v2189 = vunpack.c.0.s8 %v2188
      %v2190 = vlaneseq
      %v2191 = vshrl.u32 %v2190, 7
      %v2192 = vsub.s32 %v2189, %v2191
      %v2193 = vrot.slane %v2186, %v2192
      %v2194 = vcombine.low %v2185, %v2193
      %v2196 = vunpack.c.l.s4 1934713408
      %v2197 = vunpack.c.0.s8 %v2196
      %v2198 = vlaneseq
      %v2199 = vshrl.u32 %v2198, 7
      %v2200 = vsub.s32 %v2197, %v2199
      %v2201 = vrot.slane %v2194, %v2200
      %v2202 = vcombine.high %v2201, 0
      %v2203 = vcombine.low %v2035, %v2071
      %v2205 = vunpack.c.l.s4 1983009808
      %v2206 = vunpack.c.0.s8 %v2205
      %v2207 = vlaneseq
      %v2208 = vshrl.u32 %v2207, 7
      %v2209 = vsub.s32 %v2206, %v2208
      %v2210 = vrot.slane %v2203, %v2209
      %v2211 = vcombine.low %v2053, %v2089
      %v2213 = vunpack.c.l.s4 1983009808
      %v2214 = vunpack.c.0.s8 %v2213
      %v2215 = vlaneseq
      %v2216 = vshrl.u32 %v2215, 7
      %v2217 = vsub.s32 %v2214, %v2216
      %v2218 = vrot.slane %v2211, %v2217
      %v2219 = vcombine.low %v2210, %v2218
      %v2221 = vunpack.c.l.s4 1934713408
      %v2222 = vunpack.c.0.s8 %v2221
      %v2223 = vlaneseq
      %v2224 = vshrl.u32 %v2223, 7
      %v2225 = vsub.s32 %v2222, %v2224
      %v2226 = vrot.slane %v2219, %v2225
      %v2227 = vcombine.high %v2226, 0
      %v2228 = vcombine.low %v2098, %v2134
      %v2230 = vunpack.c.l.s4 1983009808
      %v2231 = vunpack.c.0.s8 %v2230
      %v2232 = vlaneseq
      %v2233 = vshrl.u32 %v2232, 7
      %v2234 = vsub.s32 %v2231, %v2233
      %v2235 = vrot.slane %v2228, %v2234
      %v2236 = vcombine.low %v2116, %v2152
      %v2238 = vunpack.c.l.s4 1983009808
      %v2239 = vunpack.c.0.s8 %v2238
      %v2240 = vlaneseq
      %v2241 = vshrl.u32 %v2240, 7
      %v2242 = vsub.s32 %v2239, %v2241
      %v2243 = vrot.slane %v2236, %v2242
      %v2244 = vcombine.low %v2235, %v2243
      %v2246 = vunpack.c.l.s4 1934713408
      %v2247 = vunpack.c.0.s8 %v2246
      %v2248 = vlaneseq
      %v2249 = vshrl.u32 %v2248, 7
      %v2250 = vsub.s32 %v2247, %v2249
      %v2251 = vrot.slane %v2244, %v2250
      %v2252 = vcombine.high %v2251, 0
      %v2253 = vcombine.low %v2107, %v2143
      %v2255 = vunpack.c.l.s4 1983009808
      %v2256 = vunpack.c.0.s8 %v2255
      %v2257 = vlaneseq
      %v2258 = vshrl.u32 %v2257, 7
      %v2259 = vsub.s32 %v2256, %v2258
      %v2260 = vrot.slane %v2253, %v2259
      %v2261 = vcombine.low %v2125, %v2161
      %v2263 = vunpack.c.l.s4 1983009808
      %v2264 = vunpack.c.0.s8 %v2263
      %v2265 = vlaneseq
      %v2266 = vshrl.u32 %v2265, 7
      %v2267 = vsub.s32 %v2264, %v2266
      %v2268 = vrot.slane %v2261, %v2267
      %v2269 = vcombine.low %v2260, %v2268
      %v2271 = vunpack.c.l.s4 1934713408
      %v2272 = vunpack.c.0.s8 %v2271
      %v2273 = vlaneseq
      %v2274 = vshrl.u32 %v2273, 7
      %v2275 = vsub.s32 %v2272, %v2274
      %v2276 = vrot.slane %v2269, %v2275
      %v2277 = vcombine.high %v2276, 0
      %v2280 = vpack.i.b16 %v2226, %v2201
      %v2281 = vshrl.u32 %v2201, 16
      %v2282 = vshrl.u32 %v2226, 16
      %v2283 = vpack.i.b16 %v2282, %v2281
      %v2286 = vpack.i.b16 %v2227, %v2202
      %v2287 = vshrl.u32 %v2202, 16
      %v2288 = vshrl.u32 %v2227, 16
      %v2289 = vpack.i.b16 %v2288, %v2287
      %v2292 = vpack.i.b16 %v2276, %v2251
      %v2293 = vshrl.u32 %v2251, 16
      %v2294 = vshrl.u32 %v2276, 16
      %v2295 = vpack.i.b16 %v2294, %v2293
      %v2298 = vpack.i.b16 %v2277, %v2252
      %v2299 = vshrl.u32 %v2252, 16
      %v2300 = vshrl.u32 %v2277, 16
      %v2301 = vpack.i.b16 %v2300, %v2299
      %v2302 = vunpack.c.l.b16 %v2280
      %v2303 = vunpack.c.l.b16 %v2292
      %v2304 = vpack.c.b16 %v2303, %v2302
      %v2305 = vunpack.c.l.b16 %v2283
      %v2306 = vunpack.c.l.b16 %v2295
      %v2307 = vpack.c.b16 %v2306, %v2305
      %2308 = vrot.lane.b32.xlu0 %v2307, 4
      %v2309 = vpop.permute.xlu0 %2308
      %v2310 = vunpack.c.l.b16 %v2286
      %v2311 = vunpack.c.l.b16 %v2298
      %v2312 = vpack.c.b16 %v2311, %v2310
      %2313 = vrot.lane.b32.xlu0 %v2312, 8
      %v2314 = vpop.permute.xlu0 %2313
      %v2315 = vunpack.c.l.b16 %v2289
      %v2316 = vunpack.c.l.b16 %v2301
      %v2317 = vpack.c.b16 %v2316, %v2315
      %2318 = vrot.lane.b32.xlu0 %v2317, 12
      %v2319 = vpop.permute.xlu0 %2318
      %v2322 = vsel %vm330, %v2304, %v2309
      %v2324 = vsel %vm334, %v2322, %v2314
      %v2326 = vsel %vm337, %v2324, %v2319
      %s2328 = scalar_lea.vmem %s1, 56
      %v2329 = vld [vmem:[%s2328] sm:$0xf]
      %v2330 = vld [vmem:[%s2328 + $0x4] sm:$0xf]
      %v2333 = vunpack.c.l.b16 %v2329
      %v2334 = vunpack.c.l.b16 %v2330
      %v2335 = vpack.c.b16 %v2334, %v2333
      %v2337 = vsel %vm518, %v2335, 0
      %2339 = vmatprep.subr.bf16.mxu0 0
      %2340 = vmatpush1.bf16.msra.mxu0 %v2326
      %2341 = vmatprep.subr.bf16.mxu0 0
      %2342 = vmatpush1.bf16.msra.mxu0 0
      %2343 = vmatprep.subr.bf16.mxu0 0
      %2344 = vmatpush1.bf16.msra.mxu0 0
      %2345 = vmatprep.subr.bf16.mxu0 0
      %2346 = vmatpush1.bf16.msra.mxu0 0
      %2347 = vmatprep.subr.bf16.mxu0 0
      %2348 = vmatpush1.bf16.msra.mxu0 0
      %2349 = vmatprep.subr.bf16.mxu0 0
      %2350 = vmatpush1.bf16.msra.mxu0 0
      %2351 = vmatprep.subr.bf16.mxu0 0
      %2352 = vmatpush1.bf16.msra.mxu0 0
      %2353 = vmatprep.subr.bf16.mxu0 0
      %2354 = vmatpush1.bf16.msra.mxu0 0
      %2355 = vmatprep.subr.bf16.mxu0 0
      %2356 = vmatpush1.bf16.msra.mxu0 0
      %2357 = vmatprep.subr.bf16.mxu0 0
      %2358 = vmatpush1.bf16.msra.mxu0 0
      %2359 = vmatprep.subr.bf16.mxu0 0
      %2360 = vmatpush1.bf16.msra.mxu0 0
      %2361 = vmatprep.subr.bf16.mxu0 0
      %2362 = vmatpush1.bf16.msra.mxu0 0
      %2363 = vmatprep.subr.bf16.mxu0 0
      %2364 = vmatpush1.bf16.msra.mxu0 0
      %2365 = vmatprep.subr.bf16.mxu0 0
      %2366 = vmatpush1.bf16.msra.mxu0 0
      %2367 = vmatprep.subr.bf16.mxu0 0
      %2368 = vmatpush1.bf16.msra.mxu0 0
      %2369 = vmatprep.subr.bf16.mxu0 0
      %2370 = vmatpush1.bf16.msra.mxu0 0
      %2371 = vmatprep.mubr.bf16.mxu0 0
      %2372 = vmatmul.mubr.bf16.gmra.mrb[0].mxu0 %v2337
      %v2373 = vpop.f32.mrb[0].mxu0
      %v2374 = vadd.f32 0.0, %v2373
      %v2375 = vpop.f32.mrb[0].mxu0
      %v2376 = vpop.f32.mrb[0].mxu0
      %v2377 = vadd.f32 0.0, %v2376
      %v2378 = vpop.f32.mrb[0].mxu0
      %2379 = vdwg.mxu0
      %v2380 = vadd.f32 %v2000, %v2374
      %v2381 = vadd.f32 %v2001, %v2377
      %v2382 = vld [vmem:[%s165] sm:$0x7]
      %v2383 = vld [vmem:[%s165 + $0x4] sm:$0x7]
      %v2384 = vld [vmem:[%s165 + $0x8] sm:$0x7]
      %v2385 = vld [vmem:[%s165 + $0xc] sm:$0x7]
      %v2386 = vld [vmem:[%s165 + $0x10] sm:$0x7]
      %v2387 = vld [vmem:[%s165 + $0x14] sm:$0x7]
      %v2388 = vld [vmem:[%s165 + $0x18] sm:$0x7]
      %v2389 = vld [vmem:[%s165 + $0x1c] sm:$0x7]
      %v2390 = vld [vmem:[%s165 + $0x20] sm:$0x7]
      %v2391 = vld [vmem:[%s165 + $0x24] sm:$0x7]
      %v2392 = vld [vmem:[%s165 + $0x28] sm:$0x7]
      %v2393 = vld [vmem:[%s165 + $0x2c] sm:$0x7]
      %v2394 = vld [vmem:[%s165 + $0x30] sm:$0x7]
      %v2395 = vld [vmem:[%s165 + $0x34] sm:$0x7]
      %v2396 = vld [vmem:[%s165 + $0x38] sm:$0x7]
      %v2397 = vld [vmem:[%s165 + $0x3c] sm:$0x7]
      %v2399 = vshrl.u32 %v2382, 16
      %v2401 = vrot.slane %v2399, 4
      %v2402 = vshll.u32 %v2382, 16
      %v2404 = vrot.slane %v2402, 5
      %v2405 = vor.u32 %v2401, %v2404
      %v2406 = vrot.slane %v2405, 4
      %v2408 = vshrl.u32 %v2383, 16
      %v2410 = vrot.slane %v2408, 4
      %v2411 = vshll.u32 %v2383, 16
      %v2413 = vrot.slane %v2411, 5
      %v2414 = vor.u32 %v2410, %v2413
      %v2415 = vrot.slane %v2414, 4
      %v2417 = vshrl.u32 %v2384, 16
      %v2419 = vrot.slane %v2417, 4
      %v2420 = vshll.u32 %v2384, 16
      %v2422 = vrot.slane %v2420, 5
      %v2423 = vor.u32 %v2419, %v2422
      %v2424 = vrot.slane %v2423, 4
      %v2426 = vshrl.u32 %v2385, 16
      %v2428 = vrot.slane %v2426, 4
      %v2429 = vshll.u32 %v2385, 16
      %v2431 = vrot.slane %v2429, 5
      %v2432 = vor.u32 %v2428, %v2431
      %v2433 = vrot.slane %v2432, 4
      %v2435 = vshrl.u32 %v2386, 16
      %v2437 = vrot.slane %v2435, 4
      %v2438 = vshll.u32 %v2386, 16
      %v2440 = vrot.slane %v2438, 5
      %v2441 = vor.u32 %v2437, %v2440
      %v2442 = vrot.slane %v2441, 4
      %v2444 = vshrl.u32 %v2387, 16
      %v2446 = vrot.slane %v2444, 4
      %v2447 = vshll.u32 %v2387, 16
      %v2449 = vrot.slane %v2447, 5
      %v2450 = vor.u32 %v2446, %v2449
      %v2451 = vrot.slane %v2450, 4
      %v2453 = vshrl.u32 %v2388, 16
      %v2455 = vrot.slane %v2453, 4
      %v2456 = vshll.u32 %v2388, 16
      %v2458 = vrot.slane %v2456, 5
      %v2459 = vor.u32 %v2455, %v2458
      %v2460 = vrot.slane %v2459, 4
      %v2462 = vshrl.u32 %v2389, 16
      %v2464 = vrot.slane %v2462, 4
      %v2465 = vshll.u32 %v2389, 16
      %v2467 = vrot.slane %v2465, 5
      %v2468 = vor.u32 %v2464, %v2467
      %v2469 = vrot.slane %v2468, 4
      %v2471 = vshrl.u32 %v2390, 16
      %v2473 = vrot.slane %v2471, 4
      %v2474 = vshll.u32 %v2390, 16
      %v2476 = vrot.slane %v2474, 5
      %v2477 = vor.u32 %v2473, %v2476
      %v2478 = vrot.slane %v2477, 4
      %v2480 = vshrl.u32 %v2391, 16
      %v2482 = vrot.slane %v2480, 4
      %v2483 = vshll.u32 %v2391, 16
      %v2485 = vrot.slane %v2483, 5
      %v2486 = vor.u32 %v2482, %v2485
      %v2487 = vrot.slane %v2486, 4
      %v2489 = vshrl.u32 %v2392, 16
      %v2491 = vrot.slane %v2489, 4
      %v2492 = vshll.u32 %v2392, 16
      %v2494 = vrot.slane %v2492, 5
      %v2495 = vor.u32 %v2491, %v2494
      %v2496 = vrot.slane %v2495, 4
      %v2498 = vshrl.u32 %v2393, 16
      %v2500 = vrot.slane %v2498, 4
      %v2501 = vshll.u32 %v2393, 16
      %v2503 = vrot.slane %v2501, 5
      %v2504 = vor.u32 %v2500, %v2503
      %v2505 = vrot.slane %v2504, 4
      %v2507 = vshrl.u32 %v2394, 16
      %v2509 = vrot.slane %v2507, 4
      %v2510 = vshll.u32 %v2394, 16
      %v2512 = vrot.slane %v2510, 5
      %v2513 = vor.u32 %v2509, %v2512
      %v2514 = vrot.slane %v2513, 4
      %v2516 = vshrl.u32 %v2395, 16
      %v2518 = vrot.slane %v2516, 4
      %v2519 = vshll.u32 %v2395, 16
      %v2521 = vrot.slane %v2519, 5
      %v2522 = vor.u32 %v2518, %v2521
      %v2523 = vrot.slane %v2522, 4
      %v2525 = vshrl.u32 %v2396, 16
      %v2527 = vrot.slane %v2525, 4
      %v2528 = vshll.u32 %v2396, 16
      %v2530 = vrot.slane %v2528, 5
      %v2531 = vor.u32 %v2527, %v2530
      %v2532 = vrot.slane %v2531, 4
      %v2534 = vshrl.u32 %v2397, 16
      %v2536 = vrot.slane %v2534, 4
      %v2537 = vshll.u32 %v2397, 16
      %v2539 = vrot.slane %v2537, 5
      %v2540 = vor.u32 %v2536, %v2539
      %v2541 = vrot.slane %v2540, 4
      %2542 = vrot.lane.b32.xlu0 %v2406, 127
      %v2543 = vpop.permute.xlu0 %2542
      %2544 = vrot.lane.b32.xlu0 %v2415, 127
      %v2545 = vpop.permute.xlu0 %2544
      %2546 = vrot.lane.b32.xlu0 %v2424, 127
      %v2547 = vpop.permute.xlu0 %2546
      %2548 = vrot.lane.b32.xlu0 %v2433, 127
      %v2549 = vpop.permute.xlu0 %2548
      %2550 = vrot.lane.b32.xlu0 %v2442, 127
      %v2551 = vpop.permute.xlu0 %2550
      %2552 = vrot.lane.b32.xlu0 %v2451, 127
      %v2553 = vpop.permute.xlu0 %2552
      %2554 = vrot.lane.b32.xlu0 %v2460, 127
      %v2555 = vpop.permute.xlu0 %2554
      %2556 = vrot.lane.b32.xlu0 %v2469, 127
      %v2557 = vpop.permute.xlu0 %2556
      %2558 = vrot.lane.b32.xlu0 %v2478, 127
      %v2559 = vpop.permute.xlu0 %2558
      %2560 = vrot.lane.b32.xlu0 %v2487, 127
      %v2561 = vpop.permute.xlu0 %2560
      %2562 = vrot.lane.b32.xlu0 %v2496, 127
      %v2563 = vpop.permute.xlu0 %2562
      %2564 = vrot.lane.b32.xlu0 %v2505, 127
      %v2565 = vpop.permute.xlu0 %2564
      %2566 = vrot.lane.b32.xlu0 %v2514, 127
      %v2567 = vpop.permute.xlu0 %2566
      %2568 = vrot.lane.b32.xlu0 %v2523, 127
      %v2569 = vpop.permute.xlu0 %2568
      %2570 = vrot.lane.b32.xlu0 %v2532, 127
      %v2571 = vpop.permute.xlu0 %2570
      %2572 = vrot.lane.b32.xlu0 %v2541, 127
      %v2573 = vpop.permute.xlu0 %2572
      %v2590 = vcombine.low %v2543, %v2551
      %v2592 = vunpack.c.l.s4 1983009808
      %v2593 = vunpack.c.0.s8 %v2592
      %v2594 = vlaneseq
      %v2595 = vshrl.u32 %v2594, 7
      %v2596 = vsub.s32 %v2593, %v2595
      %v2597 = vrot.slane %v2590, %v2596
      %v2598 = vcombine.low %v2547, %v2555
      %v2600 = vunpack.c.l.s4 1983009808
      %v2601 = vunpack.c.0.s8 %v2600
      %v2602 = vlaneseq
      %v2603 = vshrl.u32 %v2602, 7
      %v2604 = vsub.s32 %v2601, %v2603
      %v2605 = vrot.slane %v2598, %v2604
      %v2606 = vcombine.low %v2597, %v2605
      %v2608 = vunpack.c.l.s4 1934713408
      %v2609 = vunpack.c.0.s8 %v2608
      %v2610 = vlaneseq
      %v2611 = vshrl.u32 %v2610, 7
      %v2612 = vsub.s32 %v2609, %v2611
      %v2613 = vrot.slane %v2606, %v2612
      %v2614 = vcombine.high %v2613, 0
      %v2615 = vcombine.low %v2545, %v2553
      %v2617 = vunpack.c.l.s4 1983009808
      %v2618 = vunpack.c.0.s8 %v2617
      %v2619 = vlaneseq
      %v2620 = vshrl.u32 %v2619, 7
      %v2621 = vsub.s32 %v2618, %v2620
      %v2622 = vrot.slane %v2615, %v2621
      %v2623 = vcombine.low %v2549, %v2557
      %v2625 = vunpack.c.l.s4 1983009808
      %v2626 = vunpack.c.0.s8 %v2625
      %v2627 = vlaneseq
      %v2628 = vshrl.u32 %v2627, 7
      %v2629 = vsub.s32 %v2626, %v2628
      %v2630 = vrot.slane %v2623, %v2629
      %v2631 = vcombine.low %v2622, %v2630
      %v2633 = vunpack.c.l.s4 1934713408
      %v2634 = vunpack.c.0.s8 %v2633
      %v2635 = vlaneseq
      %v2636 = vshrl.u32 %v2635, 7
      %v2637 = vsub.s32 %v2634, %v2636
      %v2638 = vrot.slane %v2631, %v2637
      %v2639 = vcombine.high %v2638, 0
      %v2640 = vcombine.low %v2559, %v2567
      %v2642 = vunpack.c.l.s4 1983009808
      %v2643 = vunpack.c.0.s8 %v2642
      %v2644 = vlaneseq
      %v2645 = vshrl.u32 %v2644, 7
      %v2646 = vsub.s32 %v2643, %v2645
      %v2647 = vrot.slane %v2640, %v2646
      %v2648 = vcombine.low %v2563, %v2571
      %v2650 = vunpack.c.l.s4 1983009808
      %v2651 = vunpack.c.0.s8 %v2650
      %v2652 = vlaneseq
      %v2653 = vshrl.u32 %v2652, 7
      %v2654 = vsub.s32 %v2651, %v2653
      %v2655 = vrot.slane %v2648, %v2654
      %v2656 = vcombine.low %v2647, %v2655
      %v2658 = vunpack.c.l.s4 1934713408
      %v2659 = vunpack.c.0.s8 %v2658
      %v2660 = vlaneseq
      %v2661 = vshrl.u32 %v2660, 7
      %v2662 = vsub.s32 %v2659, %v2661
      %v2663 = vrot.slane %v2656, %v2662
      %v2664 = vcombine.high %v2663, 0
      %v2665 = vcombine.low %v2561, %v2569
      %v2667 = vunpack.c.l.s4 1983009808
      %v2668 = vunpack.c.0.s8 %v2667
      %v2669 = vlaneseq
      %v2670 = vshrl.u32 %v2669, 7
      %v2671 = vsub.s32 %v2668, %v2670
      %v2672 = vrot.slane %v2665, %v2671
      %v2673 = vcombine.low %v2565, %v2573
      %v2675 = vunpack.c.l.s4 1983009808
      %v2676 = vunpack.c.0.s8 %v2675
      %v2677 = vlaneseq
      %v2678 = vshrl.u32 %v2677, 7
      %v2679 = vsub.s32 %v2676, %v2678
      %v2680 = vrot.slane %v2673, %v2679
      %v2681 = vcombine.low %v2672, %v2680
      %v2683 = vunpack.c.l.s4 1934713408
      %v2684 = vunpack.c.0.s8 %v2683
      %v2685 = vlaneseq
      %v2686 = vshrl.u32 %v2685, 7
      %v2687 = vsub.s32 %v2684, %v2686
      %v2688 = vrot.slane %v2681, %v2687
      %v2689 = vcombine.high %v2688, 0
      %v2692 = vpack.i.b16 %v2638, %v2613
      %v2693 = vshrl.u32 %v2613, 16
      %v2694 = vshrl.u32 %v2638, 16
      %v2695 = vpack.i.b16 %v2694, %v2693
      %v2698 = vpack.i.b16 %v2639, %v2614
      %v2699 = vshrl.u32 %v2614, 16
      %v2700 = vshrl.u32 %v2639, 16
      %v2701 = vpack.i.b16 %v2700, %v2699
      %v2704 = vpack.i.b16 %v2688, %v2663
      %v2705 = vshrl.u32 %v2663, 16
      %v2706 = vshrl.u32 %v2688, 16
      %v2707 = vpack.i.b16 %v2706, %v2705
      %v2710 = vpack.i.b16 %v2689, %v2664
      %v2711 = vshrl.u32 %v2664, 16
      %v2712 = vshrl.u32 %v2689, 16
      %v2713 = vpack.i.b16 %v2712, %v2711
      %v2714 = vunpack.c.l.b16 %v2692
      %v2715 = vunpack.c.l.b16 %v2704
      %v2716 = vpack.c.b16 %v2715, %v2714
      %v2717 = vunpack.c.l.b16 %v2695
      %v2718 = vunpack.c.l.b16 %v2707
      %v2719 = vpack.c.b16 %v2718, %v2717
      %2720 = vrot.lane.b32.xlu0 %v2719, 4
      %v2721 = vpop.permute.xlu0 %2720
      %v2722 = vunpack.c.l.b16 %v2698
      %v2723 = vunpack.c.l.b16 %v2710
      %v2724 = vpack.c.b16 %v2723, %v2722
      %2725 = vrot.lane.b32.xlu0 %v2724, 8
      %v2726 = vpop.permute.xlu0 %2725
      %v2727 = vunpack.c.l.b16 %v2701
      %v2728 = vunpack.c.l.b16 %v2713
      %v2729 = vpack.c.b16 %v2728, %v2727
      %2730 = vrot.lane.b32.xlu0 %v2729, 12
      %v2731 = vpop.permute.xlu0 %2730
      %v2734 = vsel %vm330, %v2716, %v2721
      %v2736 = vsel %vm334, %v2734, %v2726
      %v2738 = vsel %vm337, %v2736, %v2731
      %s2740 = scalar_lea.vmem %s1, 64
      %v2741 = vld [vmem:[%s2740] sm:$0xf]
      %v2742 = vld [vmem:[%s2740 + $0x4] sm:$0xf]
      %v2745 = vunpack.c.l.b16 %v2741
      %v2746 = vunpack.c.l.b16 %v2742
      %v2747 = vpack.c.b16 %v2746, %v2745
      %v2749 = vsel %vm518, %v2747, 0
      %2751 = vmatprep.subr.bf16.mxu0 0
      %2752 = vmatpush1.bf16.msra.mxu0 %v2738
      %2753 = vmatprep.subr.bf16.mxu0 0
      %2754 = vmatpush1.bf16.msra.mxu0 0
      %2755 = vmatprep.subr.bf16.mxu0 0
      %2756 = vmatpush1.bf16.msra.mxu0 0
      %2757 = vmatprep.subr.bf16.mxu0 0
      %2758 = vmatpush1.bf16.msra.mxu0 0
      %2759 = vmatprep.subr.bf16.mxu0 0
      %2760 = vmatpush1.bf16.msra.mxu0 0
      %2761 = vmatprep.subr.bf16.mxu0 0
      %2762 = vmatpush1.bf16.msra.mxu0 0
      %2763 = vmatprep.subr.bf16.mxu0 0
      %2764 = vmatpush1.bf16.msra.mxu0 0
      %2765 = vmatprep.subr.bf16.mxu0 0
      %2766 = vmatpush1.bf16.msra.mxu0 0
      %2767 = vmatprep.subr.bf16.mxu0 0
      %2768 = vmatpush1.bf16.msra.mxu0 0
      %2769 = vmatprep.subr.bf16.mxu0 0
      %2770 = vmatpush1.bf16.msra.mxu0 0
      %2771 = vmatprep.subr.bf16.mxu0 0
      %2772 = vmatpush1.bf16.msra.mxu0 0
      %2773 = vmatprep.subr.bf16.mxu0 0
      %2774 = vmatpush1.bf16.msra.mxu0 0
      %2775 = vmatprep.subr.bf16.mxu0 0
      %2776 = vmatpush1.bf16.msra.mxu0 0
      %2777 = vmatprep.subr.bf16.mxu0 0
      %2778 = vmatpush1.bf16.msra.mxu0 0
      %2779 = vmatprep.subr.bf16.mxu0 0
      %2780 = vmatpush1.bf16.msra.mxu0 0
      %2781 = vmatprep.subr.bf16.mxu0 0
      %2782 = vmatpush1.bf16.msra.mxu0 0
      %2783 = vmatprep.mubr.bf16.mxu0 0
      %2784 = vmatmul.mubr.bf16.gmra.mrb[0].mxu0 %v2749
      %v2785 = vpop.f32.mrb[0].mxu0
      %v2786 = vadd.f32 0.0, %v2785
      %v2787 = vpop.f32.mrb[0].mxu0
      %v2788 = vpop.f32.mrb[0].mxu0
      %v2789 = vadd.f32 0.0, %v2788
      %v2790 = vpop.f32.mrb[0].mxu0
      %2791 = vdwg.mxu0
      %v2792 = vadd.f32 %v2380, %v2786
      %v2793 = vadd.f32 %v2381, %v2789
      %v2794 = vld [vmem:[%s2] sm:$0xff]
      %v2795 = vld [vmem:[%s2 + $0x8] sm:$0xff]
      %2797 = vset.pattern.permute.xlu0 0
      %2798 = vperm.xlu0 %2797, %v2794
      %v2799 = vpop.permute.xlu0 %2798
      %2802 = vset.pattern.permute.xlu0 0
      %2803 = vperm.xlu0 %2802, %v2795
      %v2804 = vpop.permute.xlu0 %2803
      %v2806 = vadd.f32 %v2792, %v2799
      %v2807 = vadd.f32 %v2793, %v2804
      %vm2808 = vcmp.ge.f32.partialorder %v2806, 0.0
      %vm2809 = vcmp.ge.f32.partialorder %v2807, 0.0
      %v2810 = vmul.f32 %v2806, 0.2
      %v2811 = vmul.f32 %v2807, 0.2
      %v2812 = vsel %vm2808, %v2806, %v2810
      %v2813 = vsel %vm2809, %v2807, %v2811
      %v2814 = vmul.f32 %v2812, 1.4142135
      %v2815 = vmul.f32 %v2813, 1.4142135
      %v2816 = vpack.c.bf16 %v2815, %v2814
      %v2818 = vunpack.c.l.b16 %v2816
      %v2819 = vunpack.c.h.b16 %v2816
      %v2820 = vpack.c.b16 %v2818, %v2818
      %v2821 = vpack.c.b16 %v2819, %v2819
      %vm2824 = vcmask 125952
      %2825 = vst.msk [vmem:[%s170] sm:$0xf] %vm2824, %v2820
      %2826 = vst.msk [vmem:[%s170 + $0x4] sm:$0xf] %vm2824, %v2821
      %p2827 = scmp.lt.s32.totalorder %s14, 1
      %s2828 = scalar_select %p2827, %s14, 1
      %s2829 = smul.addr %s2828, 2
      %s2830 = smul.addr %s2829, 4
      %s2831 = scalar_lea.vmem %s3, %s2830
      // Predicated region
      $region33: #{to_style_forward.5} parent=31 // pred_check
        %p2832 = pneg %p100
      $region34: #{to_style_forward.5} parent=31 // pred_check_branch
        %2834 = sbr.rel (%p2832) target = $region36
      $region35: #{to_style_forward.5} parent=31 // pred_region
        _
      $region36: #{to_style_forward.5} parent=31 // pred_fallthru
        _
    $region32: #{to_style_forward.5} parent=5 // pred_fallthru
      _
    %p2835 = scmp.le.s32.totalorder 2, %s9
    // Predicated region
    $region37: #{to_style_forward.5} parent=5 // pred_check
      %p2836 = pneg %p2835
    $region38: #{to_style_forward.5} parent=5 // pred_check_branch
      %2838 = sbr.rel (%p2836) target = $region40
    $region39: #{to_style_forward.5} parent=5 // pred_region
      %s2839 = ssub.s32 %s9, 2
      // Predicated region
      $region41: #{to_style_forward.5} parent=39 // pred_check
        %p2840 = pneg %p106
      $region42: #{to_style_forward.5} parent=39 // pred_check_branch
        %2842 = sbr.rel (%p2840) target = $region44
      $region43: #{to_style_forward.5} parent=39 // pred_region
        %p2843 = scmp.lt.s32.totalorder %s15, 1
        %s2844 = scalar_select %p2843, %s15, 1
        %s2845 = smul.addr %s2844, 2
        %s2846 = smul.addr %s2845, 4
        %s2847 = scalar_lea.vmem %s3, %s2846
      $region44: #{to_style_forward.5} parent=39 // pred_fallthru
        _
    $region40: #{to_style_forward.5} parent=5 // pred_fallthru
      _
  $region6: #{to_style_forward.5} parent=0 // loop_footer
    %s13 = sadd.s32 1, %s9
  $region7: #{to_style_forward.5} parent=0 // loop_footer_branch
    %8 = sbr.rel target = $region3
  $region8: #{to_style_forward.5} parent=0 // loop_exit
    _

// kernel: to_style_forward.7
$region0: #{to_style_forward.7}
  #allocation0 [shape = 'u32[]', space=smem, size = 0x4, offset = 0x4, fixed_abs, tag = 'smem constant byte address 0x4 - core index']
  #allocation1 [shape = 'u32[144,128]{1,0:T(1,128)}', space=vmem, size = 0x12000, scoped, tag = 'internal scratch']
  %s0 = inlined_call_operand.vmem [shape: bf16[2,16,4], index: 0, kind: input, shape index: {}]
  %s1 = inlined_call_operand.vmem [shape: bf16[16,32], index: 1, kind: input, shape index: {}]
  %s2 = inlined_call_operand.vmem [shape: f32[1,32], index: 2, kind: input, shape index: {}]
  %s3 = inlined_call_operand.hbm [shape: f32[2,32], index: 3, kind: output, shape index: {}]
  %s4 = sld [smem:[#allocation0]]
  $region22: #{to_style_forward.7} parent=0
    _
  %s6 = ssub.s32 1, %s4
  %s7 = scalar_select 0, %s6, %s4
  $region1: #{to_style_forward.7} parent=0
    #allocation2 [shape = 'u8[1024]{0}', space=vmem, size = 0x400, scoped, tag = 'output window, operand 0, single buffered']
    #allocation3 [shape = 's32[1]{0}', space=sflag, size = 0x4, scoped, tag = 'scoped memory for to_style_forward.7']
    %8 = vsyncpa [#allocation3], 0
    // Predicated region
    $region2: #{to_style_forward.7} parent=1 // pred_check
      _
    $region3: #{to_style_forward.7} parent=1 // pred_check_branch
      %10 = sbr.rel (0) target = $region5
    $region4: #{to_style_forward.7} parent=1 // pred_region
      _
    $region5: #{to_style_forward.7} parent=1 // pred_fallthru
      _
    // Predicated region
    $region6: #{to_style_forward.7} parent=1 // pred_check
      _
    $region7: #{to_style_forward.7} parent=1 // pred_check_branch
      %12 = sbr.rel (0) target = $region9
    $region8: #{to_style_forward.7} parent=1 // pred_region
      _
    $region9: #{to_style_forward.7} parent=1 // pred_fallthru
      _
    // Predicated region
    $region10: #{to_style_forward.7} parent=1 // pred_check
      _
    $region11: #{to_style_forward.7} parent=1 // pred_check_branch
      %14 = sbr.rel (0) target = $region13
    $region12: #{to_style_forward.7} parent=1 // pred_region
      _
    $region13: #{to_style_forward.7} parent=1 // pred_fallthru
      _
    %v16 = vld [vmem:[%s0] sm:$0xf]
    %v17 = vld [vmem:[%s0 + $0x4] sm:$0xf]
    %v18 = vld [vmem:[%s0 + $0x8] sm:$0xf]
    %v19 = vld [vmem:[%s0 + $0xc] sm:$0xf]
    %v20 = vunpack.c.l.bf16 %v16
    %v21 = vunpack.c.l.bf16 %v17
    %v22 = vunpack.c.l.bf16 %v18
    %v23 = vunpack.c.l.bf16 %v19
    %vm24 = vcmask 31744
    %v25 = vsel %vm24, %v20, 0.0
    %26 = vadd.xlane.f32.xlu0 %v25
    %v27 = vpop.xlane.xlu0 %26
    %v28 = vsel %vm24, %v21, 0.0
    %29 = vadd.xlane.f32.xlu0 %v28
    %v30 = vpop.xlane.xlu0 %29
    %v31 = vsel %vm24, %v22, 0.0
    %32 = vadd.xlane.f32.xlu0 %v31
    %v33 = vpop.xlane.xlu0 %32
    %v34 = vsel %vm24, %v23, 0.0
    %35 = vadd.xlane.f32.xlu0 %v34
    %v36 = vpop.xlane.xlu0 %35
    %v37 = vrcp.pop 4.0
    %v38 = vmul.f32 %v27, %v37
    %v39 = vmul.f32 %v30, %v37
    %v40 = vmul.f32 %v33, %v37
    %v41 = vmul.f32 %v36, %v37
    %v42 = vpack.c.bf16 %v39, %v38
    %v43 = vpack.c.bf16 %v41, %v40
    %v44 = vld [vmem:[%s1] sm:$0xf]
    %v45 = vld [vmem:[%s1 + $0x4] sm:$0xf]
    %v46 = vld [vmem:[%s2] sm:$0x1]
    %v48 = vlaneseq
    %v49 = vshrl.u32 %v48, 7
    %v50 = vsub.s32 0, %v49
    %v51 = vrot.slane %v46, %v50
    %v55 = vunpack.c.l.b16 %v42
    %v56 = vunpack.c.h.b16 %v42
    %v57 = vunpack.c.l.b16 %v43
    %v58 = vunpack.c.h.b16 %v43
    %v59 = vlaneseq
    %v60 = vand.u32 %v59, 127
    %v61 = vlaneseq
    %v62 = vshrl.u32 %v61, 7
    %v63 = vsub.s32 %v60, %v62
    %v64 = vrot.slane %v55, %v63
    %v65 = vadd.s32 %v60, 4294967288
    %v66 = vlaneseq
    %v67 = vshrl.u32 %v66, 7
    %v68 = vsub.s32 %v65, %v67
    %v69 = vrot.slane %v56, %v68
    %vm70 = vcmask 130112
    %v71 = vsel %vm70, %v69, %v64
    %v72 = vlaneseq
    %v73 = vshrl.u32 %v72, 7
    %v74 = vsub.s32 %v60, %v73
    %v75 = vrot.slane %v57, %v74
    %v76 = vlaneseq
    %v77 = vshrl.u32 %v76, 7
    %v78 = vsub.s32 %v65, %v77
    %v79 = vrot.slane %v58, %v78
    %v80 = vsel %vm70, %v79, %v75
    %vm81 = vcmask 1041409
    %v82 = vsel %vm81, %v80, %v71
    %v83 = vpack.c.b16 %v82, %v82
    %v86 = vunpack.c.l.b16 %v44
    %v87 = vunpack.c.l.b16 %v45
    %v88 = vpack.c.b16 %v87, %v86
    %vm90 = vcmask 130048
    %v92 = vsel %vm90, %v83, 0
    %94 = vmatprep.subr.bf16.mxu0 0
    %95 = vmatpush1.bf16.msra.mxu0 %v88
    %96 = vmatprep.subr.bf16.mxu0 0
    %97 = vmatpush1.bf16.msra.mxu0 0
    %98 = vmatprep.subr.bf16.mxu0 0
    %99 = vmatpush1.bf16.msra.mxu0 0
    %100 = vmatprep.subr.bf16.mxu0 0
    %101 = vmatpush1.bf16.msra.mxu0 0
    %102 = vmatprep.subr.bf16.mxu0 0
    %103 = vmatpush1.bf16.msra.mxu0 0
    %104 = vmatprep.subr.bf16.mxu0 0
    %105 = vmatpush1.bf16.msra.mxu0 0
    %106 = vmatprep.subr.bf16.mxu0 0
    %107 = vmatpush1.bf16.msra.mxu0 0
    %108 = vmatprep.subr.bf16.mxu0 0
    %109 = vmatpush1.bf16.msra.mxu0 0
    %110 = vmatprep.subr.bf16.mxu0 0
    %111 = vmatpush1.bf16.msra.mxu0 0
    %112 = vmatprep.subr.bf16.mxu0 0
    %113 = vmatpush1.bf16.msra.mxu0 0
    %114 = vmatprep.subr.bf16.mxu0 0
    %115 = vmatpush1.bf16.msra.mxu0 0
    %116 = vmatprep.subr.bf16.mxu0 0
    %117 = vmatpush1.bf16.msra.mxu0 0
    %118 = vmatprep.subr.bf16.mxu0 0
    %119 = vmatpush1.bf16.msra.mxu0 0
    %120 = vmatprep.subr.bf16.mxu0 0
    %121 = vmatpush1.bf16.msra.mxu0 0
    %122 = vmatprep.subr.bf16.mxu0 0
    %123 = vmatpush1.bf16.msra.mxu0 0
    %124 = vmatprep.subr.bf16.mxu0 0
    %125 = vmatpush1.bf16.msra.mxu0 0
    %126 = vmatprep.mubr.bf16.mxu0 0
    %127 = vmatmul.mubr.bf16.gmra.mrb[0].mxu0 %v92
    %v128 = vpop.f32.mrb[0].mxu0
    %v129 = vadd.f32 %v51, %v128
    %v130 = vpop.f32.mrb[0].mxu0
    %v131 = vpop.f32.mrb[0].mxu0
    %v132 = vpop.f32.mrb[0].mxu0
    %133 = vdwg.mxu0
    %vm134 = vcmp.ge.f32.partialorder %v129, 0.0
    %v135 = vmul.f32 %v129, 0.2
    %v136 = vsel %vm134, %v129, %v135
    %v137 = vmul.f32 %v136, 1.4142135
    %vm138 = vcmask 254976
    %139 = vst.msk [vmem:[#allocation2] sm:$0x3] %vm138, %v137
    // Predicated region
    $region14: #{to_style_forward.7} parent=1 // pred_check
      _
    $region15: #{to_style_forward.7} parent=1 // pred_check_branch
      %141 = sbr.rel (0) target = $region17
    $region16: #{to_style_forward.7} parent=1 // pred_region
      %s143 = ssub.s32 32, 32
      %144 = vsyncadd [#allocation3], %s143
      %s146 = sshll.u32 [#allocation2], 4
      %s147 = int_to_ptr.vmem [resolvable:$true] %s146
      %149 = dma.vmem_to_hbm [thread:$0]  %s147, 32, %s3, [#allocation3]
    $region17: #{to_style_forward.7} parent=1 // pred_fallthru
      _
    // Predicated region
    $region18: #{to_style_forward.7} parent=1 // pred_check
      _
    $region19: #{to_style_forward.7} parent=1 // pred_check_branch
      %151 = sbr.rel (0) target = $region21
    $region20: #{to_style_forward.7} parent=1 // pred_region
      %152 = dma.done [#allocation3], 32
    $region21: #{to_style_forward.7} parent=1 // pred_fallthru
      _
    %153 = vsyncpa [#allocation3], 1

// kernel: to_style_forward.6
$region0: #{to_style_forward.6}
  #allocation0 [shape = 'u32[]', space=smem, size = 0x4, offset = 0x4, fixed_abs, tag = 'smem constant byte address 0x4 - core index']
  #allocation1 [shape = 'u32[144,128]{1,0:T(1,128)}', space=vmem, size = 0x12000, scoped, tag = 'internal scratch']
  %s0 = inlined_call_operand.vmem [shape: bf16[2,64,3,3], index: 0, kind: input, shape index: {}]
  %s1 = inlined_call_operand.vmem [shape: bf16[3,3,16,16], index: 1, kind: input, shape index: {}]
  %s2 = inlined_call_operand.vmem [shape: f32[16,1], index: 2, kind: input, shape index: {}]
  %s3 = inlined_call_operand.vmem [shape: bf16[2,16,4], index: 3, kind: output, shape index: {}]
  %s4 = sld [smem:[#allocation0]]
  $region45: #{to_style_forward.6} parent=0
    _
  %s6 = ssub.s32 1, %s4
  %s7 = scalar_select 0, %s6, %s4
  loop: start=0, step=1, limit=4
  $region2: #{to_style_forward.6} parent=0 // loop_pre_header
    _
  $region3: #{to_style_forward.6} parent=0 // loop_header
    %s9 = sphi 0, %s13
    %p10 = scmp.ge.s32.totalorder %s9, 4
    %s19 = sphi 0, %s21
    %s22 = sphi 0, %s19
    %s23 = sphi 0, %s22
    %s39 = sphi 0, %s23
    %s43 = sphi 0, %s43
    %s45 = sphi 0, %s43
    %s46 = sphi 0, %s45
    %s60 = sphi 0, %s46
    %s64 = sphi 0, %s64
    %s66 = sphi 0, %s64
    %s67 = sphi 0, %s66
    %s81 = sphi 0, %s67
    %s87 = sphi 0, %s89
    %s90 = sphi 0, %s87
    %s91 = sphi 0, %s90
    %s107 = sphi 0, %s91
  $region4: #{to_style_forward.6} parent=0 // loop_header_branch
    %12 = sbr.rel (%p10) target = $region8
  $region5: #{to_style_forward.6} parent=0 // loop_body
    %s14 = ssub.s32 %s9, 1
    %s15 = ssub.s32 %s9, 2
    %s16 = sadd.s32 %s9, 1
    %s17 = ssub.s32 %s9, %s16
    %p18 = scmp.eq.s32.totalorder %s17, 0
    %s20 = sadd.s32 %s19, 1
    %s21 = scalar_select %p18, %s19, %s20
    %p24 = pneg %p18
    %p25 = scmp.eq.s32.totalorder %s9, 1
    %p26 = por %p24, %p25
    %p27 = scmp.ne.s32.totalorder %s19, %s22
    %p28 = scmp.eq.s32.totalorder %s9, 0
    %p29 = por %p27, %p28
    %p30 = scmp.ne.s32.totalorder %s19, %s22
    %p31 = scmp.eq.s32.totalorder %s14, 1
    %p32 = por %p30, %p31
    %p33 = scmp.ne.s32.totalorder %s22, %s23
    %p34 = scmp.eq.s32.totalorder %s14, 0
    %p35 = por %p33, %p34
    %p36 = scmp.ne.s32.totalorder %s22, %s23
    %p37 = scmp.eq.s32.totalorder %s15, 1
    %p38 = por %p36, %p37
    %p40 = scmp.ne.s32.totalorder %s23, %s39
    %p41 = scmp.eq.s32.totalorder %s15, 0
    %p42 = por %p40, %p41
    %s44 = sadd.s32 %s43, 1
    %p47 = scmp.eq.s32.totalorder %s9, 1
    %p48 = scmp.ne.s32.totalorder %s43, %s45
    %p49 = scmp.eq.s32.totalorder %s9, 0
    %p50 = por %p48, %p49
    %p51 = scmp.ne.s32.totalorder %s43, %s45
    %p52 = scmp.eq.s32.totalorder %s14, 1
    %p53 = por %p51, %p52
    %p54 = scmp.ne.s32.totalorder %s45, %s46
    %p55 = scmp.eq.s32.totalorder %s14, 0
    %p56 = por %p54, %p55
    %p57 = scmp.ne.s32.totalorder %s45, %s46
    %p58 = scmp.eq.s32.totalorder %s15, 1
    %p59 = por %p57, %p58
    %p61 = scmp.ne.s32.totalorder %s46, %s60
    %p62 = scmp.eq.s32.totalorder %s15, 0
    %p63 = por %p61, %p62
    %s65 = sadd.s32 %s64, 1
    %p68 = scmp.eq.s32.totalorder %s9, 1
    %p69 = scmp.ne.s32.totalorder %s64, %s66
    %p70 = scmp.eq.s32.totalorder %s9, 0
    %p71 = por %p69, %p70
    %p72 = scmp.ne.s32.totalorder %s64, %s66
    %p73 = scmp.eq.s32.totalorder %s14, 1
    %p74 = por %p72, %p73
    %p75 = scmp.ne.s32.totalorder %s66, %s67
    %p76 = scmp.eq.s32.totalorder %s14, 0
    %p77 = por %p75, %p76
    %p78 = scmp.ne.s32.totalorder %s66, %s67
    %p79 = scmp.eq.s32.totalorder %s15, 1
    %p80 = por %p78, %p79
    %p82 = scmp.ne.s32.totalorder %s67, %s81
    %p83 = scmp.eq.s32.totalorder %s15, 0
    %p84 = por %p82, %p83
    %s85 = ssub.s32 %s9, %s16
    %p86 = scmp.eq.s32.totalorder %s85, 0
    %s88 = sadd.s32 %s87, 1
    %s89 = scalar_select %p86, %s87, %s88
    %p92 = pneg %p86
    %p93 = scmp.eq.s32.totalorder %s9, 1
    %p94 = por %p92, %p93
    %p95 = scmp.ne.s32.totalorder %s87, %s90
    %p96 = scmp.eq.s32.totalorder %s9, 0
    %p97 = por %p95, %p96
    %p98 = scmp.ne.s32.totalorder %s87, %s90
    %p99 = scmp.eq.s32.totalorder %s14, 1
    %p100 = por %p98, %p99
    %p101 = scmp.ne.s32.totalorder %s90, %s91
    %p102 = scmp.eq.s32.totalorder %s14, 0
    %p103 = por %p101, %p102
    %p104 = scmp.ne.s32.totalorder %s90, %s91
    %p105 = scmp.eq.s32.totalorder %s15, 1
    %p106 = por %p104, %p105
    %p108 = scmp.ne.s32.totalorder %s91, %s107
    %p109 = scmp.eq.s32.totalorder %s15, 0
    %p110 = por %p108, %p109
    %p111 = scmp.le.s32.totalorder 1, %s9
    %p112 = scmp.lt.s32.totalorder %s9, 3
    %p113 = pnand %p111, %p112
    %p114 = pneg %p113
    // Predicated region
    $region9: #{to_style_forward.6} parent=5 // pred_check
      _
    $region10: #{to_style_forward.6} parent=5 // pred_check_branch
      %116 = sbr.rel (%p113) target = $region12
    $region11: #{to_style_forward.6} parent=5 // pred_region
      %s117 = ssub.s32 %s9, 1
      // Predicated region
      $region13: #{to_style_forward.6} parent=11 // pred_check
        %p118 = pneg %p56
      $region14: #{to_style_forward.6} parent=11 // pred_check_branch
        %120 = sbr.rel (%p118) target = $region16
      $region15: #{to_style_forward.6} parent=11 // pred_region
        _
      $region16: #{to_style_forward.6} parent=11 // pred_fallthru
        _
      // Predicated region
      $region17: #{to_style_forward.6} parent=11 // pred_check
        %p121 = pneg %p77
      $region18: #{to_style_forward.6} parent=11 // pred_check_branch
        %123 = sbr.rel (%p121) target = $region20
      $region19: #{to_style_forward.6} parent=11 // pred_region
        _
      $region20: #{to_style_forward.6} parent=11 // pred_fallthru
        _
    $region12: #{to_style_forward.6} parent=5 // pred_fallthru
      _
    %p124 = scmp.lt.s32.totalorder %s9, 2
    // Predicated region
    $region21: #{to_style_forward.6} parent=5 // pred_check
      %p125 = pneg %p124
    $region22: #{to_style_forward.6} parent=5 // pred_check_branch
      %127 = sbr.rel (%p125) target = $region24
    $region23: #{to_style_forward.6} parent=5 // pred_region
      // Predicated region
      $region25: #{to_style_forward.6} parent=23 // pred_check
        %p128 = pneg %p29
      $region26: #{to_style_forward.6} parent=23 // pred_check_branch
        %130 = sbr.rel (%p128) target = $region28
      $region27: #{to_style_forward.6} parent=23 // pred_region
        %p131 = scmp.lt.s32.totalorder %s9, 1
        %s132 = scalar_select %p131, %s9, 1
        %s133 = smul.addr %s132, 64
        %s134 = smul.addr %s133, 2
        %s135 = scalar_lea.vmem %s0, %s134
      $region28: #{to_style_forward.6} parent=23 // pred_fallthru
        _
    $region24: #{to_style_forward.6} parent=5 // pred_fallthru
      _
    %p136 = scmp.le.s32.totalorder 1, %s9
    %p137 = scmp.lt.s32.totalorder %s9, 3
    %p138 = pnand %p136, %p137
    %p139 = pneg %p138
    // Predicated region
    $region29: #{to_style_forward.6} parent=5 // pred_check
      _
    $region30: #{to_style_forward.6} parent=5 // pred_check_branch
      %141 = sbr.rel (%p138) target = $region32
    $region31: #{to_style_forward.6} parent=5 // pred_region
      %s142 = ssub.s32 %s9, 1
      %p143 = scmp.lt.s32.totalorder %s14, 1
      %s144 = scalar_select %p143, %s14, 1
      %s145 = smul.addr %s144, 64
      %s146 = smul.addr %s145, 2
      %s147 = scalar_lea.vmem %s0, %s146
      %p148 = pneg %p35
      %p149 = pneg %p32
      %p150 = pneg %p56
      %p151 = pneg %p53
      %p152 = pneg %p77
      %p153 = pneg %p74
      %p154 = pneg %p103
      %p155 = pneg %p100
      %p156 = scmp.lt.s32.totalorder %s14, 1
      %s157 = scalar_select %p156, %s14, 1
      %s158 = smul.addr %s157, 2
      %s159 = smul.addr %s158, 4
      %s160 = scalar_lea.vmem %s3, %s159
      %p161 = scmp.lt.s32.totalorder %s14, 1
      %s162 = scalar_select %p161, %s14, 1
      %s163 = smul.addr %s162, 64
      %s164 = smul.addr %s163, 2
      %s165 = scalar_lea.vmem %s0, %s164
      %p166 = scmp.lt.s32.totalorder %s14, 1
      %s167 = scalar_select %p166, %s14, 1
      %s168 = smul.addr %s167, 2
      %s169 = smul.addr %s168, 4
      %s170 = scalar_lea.vmem %s3, %s169
      %v172 = vld [vmem:[%s165] sm:$0x1]
      %v173 = vld [vmem:[%s165 + $0x2] sm:$0x1]
      %v174 = vld [vmem:[%s165 + $0x4] sm:$0x1]
      %v175 = vld [vmem:[%s165 + $0x6] sm:$0x1]
      %v176 = vld [vmem:[%s165 + $0x8] sm:$0x1]
      %v177 = vld [vmem:[%s165 + $0xa] sm:$0x1]
      %v178 = vld [vmem:[%s165 + $0xc] sm:$0x1]
      %v179 = vld [vmem:[%s165 + $0xe] sm:$0x1]
      %v180 = vld [vmem:[%s165 + $0x10] sm:$0x1]
      %v181 = vld [vmem:[%s165 + $0x12] sm:$0x1]
      %v182 = vld [vmem:[%s165 + $0x14] sm:$0x1]
      %v183 = vld [vmem:[%s165 + $0x16] sm:$0x1]
      %v184 = vld [vmem:[%s165 + $0x18] sm:$0x1]
      %v185 = vld [vmem:[%s165 + $0x1a] sm:$0x1]
      %v186 = vld [vmem:[%s165 + $0x1c] sm:$0x1]
      %v187 = vld [vmem:[%s165 + $0x1e] sm:$0x1]
      %v188 = vcombine.low %v172, %v174
      %v190 = vunpack.c.l.s4 1934713408
      %v191 = vunpack.c.0.s8 %v190
      %v192 = vlaneseq
      %v193 = vshrl.u32 %v192, 7
      %v194 = vsub.s32 %v191, %v193
      %v195 = vrot.slane %v188, %v194
      %v196 = vcombine.low %v173, %v175
      %v198 = vunpack.c.l.s4 1934713408
      %v199 = vunpack.c.0.s8 %v198
      %v200 = vlaneseq
      %v201 = vshrl.u32 %v200, 7
      %v202 = vsub.s32 %v199, %v201
      %v203 = vrot.slane %v196, %v202
      %v204 = vcombine.low %v176, %v178
      %v206 = vunpack.c.l.s4 1934713408
      %v207 = vunpack.c.0.s8 %v206
      %v208 = vlaneseq
      %v209 = vshrl.u32 %v208, 7
      %v210 = vsub.s32 %v207, %v209
      %v211 = vrot.slane %v204, %v210
      %v212 = vcombine.low %v177, %v179
      %v214 = vunpack.c.l.s4 1934713408
      %v215 = vunpack.c.0.s8 %v214
      %v216 = vlaneseq
      %v217 = vshrl.u32 %v216, 7
      %v218 = vsub.s32 %v215, %v217
      %v219 = vrot.slane %v212, %v218
      %v220 = vcombine.low %v180, %v182
      %v222 = vunpack.c.l.s4 1934713408
      %v223 = vunpack.c.0.s8 %v222
      %v224 = vlaneseq
      %v225 = vshrl.u32 %v224, 7
      %v226 = vsub.s32 %v223, %v225
      %v227 = vrot.slane %v220, %v226
      %v228 = vcombine.low %v181, %v183
      %v230 = vunpack.c.l.s4 1934713408
      %v231 = vunpack.c.0.s8 %v230
      %v232 = vlaneseq
      %v233 = vshrl.u32 %v232, 7
      %v234 = vsub.s32 %v231, %v233
      %v235 = vrot.slane %v228, %v234
      %v236 = vcombine.low %v184, %v186
      %v238 = vunpack.c.l.s4 1934713408
      %v239 = vunpack.c.0.s8 %v238
      %v240 = vlaneseq
      %v241 = vshrl.u32 %v240, 7
      %v242 = vsub.s32 %v239, %v241
      %v243 = vrot.slane %v236, %v242
      %v244 = vcombine.low %v185, %v187
      %v246 = vunpack.c.l.s4 1934713408
      %v247 = vunpack.c.0.s8 %v246
      %v248 = vlaneseq
      %v249 = vshrl.u32 %v248, 7
      %v250 = vsub.s32 %v247, %v249
      %v251 = vrot.slane %v244, %v250
      %v254 = vpack.i.b16 %v203, %v195
      %v255 = vshrl.u32 %v195, 16
      %v256 = vshrl.u32 %v203, 16
      %v257 = vpack.i.b16 %v256, %v255
      %v260 = vpack.i.b16 %v219, %v211
      %v261 = vshrl.u32 %v211, 16
      %v262 = vshrl.u32 %v219, 16
      %v263 = vpack.i.b16 %v262, %v261
      %v266 = vpack.i.b16 %v235, %v227
      %v267 = vshrl.u32 %v227, 16
      %v268 = vshrl.u32 %v235, 16
      %v269 = vpack.i.b16 %v268, %v267
      %v272 = vpack.i.b16 %v251, %v243
      %v273 = vshrl.u32 %v243, 16
      %v274 = vshrl.u32 %v251, 16
      %v275 = vpack.i.b16 %v274, %v273
      %v276 = vcombine.low %v254, %v260
      %v277 = vcombine.low %v266, %v272
      %v279 = vunpack.c.l.s4 1983009808
      %v280 = vunpack.c.0.s8 %v279
      %v281 = vlaneseq
      %v282 = vshrl.u32 %v281, 7
      %v283 = vsub.s32 %v280, %v282
      %v284 = vrot.slane %v276, %v283
      %v286 = vunpack.c.l.s4 1983009808
      %v287 = vunpack.c.0.s8 %v286
      %v288 = vlaneseq
      %v289 = vshrl.u32 %v288, 7
      %v290 = vsub.s32 %v287, %v289
      %v291 = vrot.slane %v277, %v290
      %v292 = vcombine.low %v284, %v291
      %v293 = vcombine.low %v257, %v263
      %v294 = vcombine.low %v269, %v275
      %v296 = vunpack.c.l.s4 1983009808
      %v297 = vunpack.c.0.s8 %v296
      %v298 = vlaneseq
      %v299 = vshrl.u32 %v298, 7
      %v300 = vsub.s32 %v297, %v299
      %v301 = vrot.slane %v293, %v300
      %v303 = vunpack.c.l.s4 1983009808
      %v304 = vunpack.c.0.s8 %v303
      %v305 = vlaneseq
      %v306 = vshrl.u32 %v305, 7
      %v307 = vsub.s32 %v304, %v306
      %v308 = vrot.slane %v294, %v307
      %v309 = vcombine.low %v301, %v308
      %310 = vrot.lane.b32.xlu0 %v309, 2
      %v311 = vpop.permute.xlu0 %310
      %vm312 = vcmask 15360
      %v315 = vsel %vm312, %v292, %v311
      %v317 = vld [vmem:[%s1] sm:$0xf]
      %v318 = vld [vmem:[%s1 + $0x4] sm:$0xf]
      %s319 = scalar_lea.vmem %s165, 32
      %v320 = vld [vmem:[%s319] sm:$0x1]
      %v321 = vld [vmem:[%s319 + $0x2] sm:$0x1]
      %v322 = vld [vmem:[%s319 + $0x4] sm:$0x1]
      %v323 = vld [vmem:[%s319 + $0x6] sm:$0x1]
      %v324 = vld [vmem:[%s319 + $0x8] sm:$0x1]
      %v325 = vld [vmem:[%s319 + $0xa] sm:$0x1]
      %v326 = vld [vmem:[%s319 + $0xc] sm:$0x1]
      %v327 = vld [vmem:[%s319 + $0xe] sm:$0x1]
      %v328 = vld [vmem:[%s319 + $0x10] sm:$0x1]
      %v329 = vld [vmem:[%s319 + $0x12] sm:$0x1]
      %v330 = vld [vmem:[%s319 + $0x14] sm:$0x1]
      %v331 = vld [vmem:[%s319 + $0x16] sm:$0x1]
      %v332 = vld [vmem:[%s319 + $0x18] sm:$0x1]
      %v333 = vld [vmem:[%s319 + $0x1a] sm:$0x1]
      %v334 = vld [vmem:[%s319 + $0x1c] sm:$0x1]
      %v335 = vld [vmem:[%s319 + $0x1e] sm:$0x1]
      %v336 = vcombine.low %v320, %v322
      %v338 = vunpack.c.l.s4 1934713408
      %v339 = vunpack.c.0.s8 %v338
      %v340 = vlaneseq
      %v341 = vshrl.u32 %v340, 7
      %v342 = vsub.s32 %v339, %v341
      %v343 = vrot.slane %v336, %v342
      %v344 = vcombine.low %v321, %v323
      %v346 = vunpack.c.l.s4 1934713408
      %v347 = vunpack.c.0.s8 %v346
      %v348 = vlaneseq
      %v349 = vshrl.u32 %v348, 7
      %v350 = vsub.s32 %v347, %v349
      %v351 = vrot.slane %v344, %v350
      %v352 = vcombine.low %v324, %v326
      %v354 = vunpack.c.l.s4 1934713408
      %v355 = vunpack.c.0.s8 %v354
      %v356 = vlaneseq
      %v357 = vshrl.u32 %v356, 7
      %v358 = vsub.s32 %v355, %v357
      %v359 = vrot.slane %v352, %v358
      %v360 = vcombine.low %v325, %v327
      %v362 = vunpack.c.l.s4 1934713408
      %v363 = vunpack.c.0.s8 %v362
      %v364 = vlaneseq
      %v365 = vshrl.u32 %v364, 7
      %v366 = vsub.s32 %v363, %v365
      %v367 = vrot.slane %v360, %v366
      %v368 = vcombine.low %v328, %v330
      %v370 = vunpack.c.l.s4 1934713408
      %v371 = vunpack.c.0.s8 %v370
      %v372 = vlaneseq
      %v373 = vshrl.u32 %v372, 7
      %v374 = vsub.s32 %v371, %v373
      %v375 = vrot.slane %v368, %v374
      %v376 = vcombine.low %v329, %v331
      %v378 = vunpack.c.l.s4 1934713408
      %v379 = vunpack.c.0.s8 %v378
      %v380 = vlaneseq
      %v381 = vshrl.u32 %v380, 7
      %v382 = vsub.s32 %v379, %v381
      %v383 = vrot.slane %v376, %v382
      %v384 = vcombine.low %v332, %v334
      %v386 = vunpack.c.l.s4 1934713408
      %v387 = vunpack.c.0.s8 %v386
      %v388 = vlaneseq
      %v389 = vshrl.u32 %v388, 7
      %v390 = vsub.s32 %v387, %v389
      %v391 = vrot.slane %v384, %v390
      %v392 = vcombine.low %v333, %v335
      %v394 = vunpack.c.l.s4 1934713408
      %v395 = vunpack.c.0.s8 %v394
      %v396 = vlaneseq
      %v397 = vshrl.u32 %v396, 7
      %v398 = vsub.s32 %v395, %v397
      %v399 = vrot.slane %v392, %v398
      %v402 = vpack.i.b16 %v351, %v343
      %v403 = vshrl.u32 %v343, 16
      %v404 = vshrl.u32 %v351, 16
      %v405 = vpack.i.b16 %v404, %v403
      %v408 = vpack.i.b16 %v367, %v359
      %v409 = vshrl.u32 %v359, 16
      %v410 = vshrl.u32 %v367, 16
      %v411 = vpack.i.b16 %v410, %v409
      %v414 = vpack.i.b16 %v383, %v375
      %v415 = vshrl.u32 %v375, 16
      %v416 = vshrl.u32 %v383, 16
      %v417 = vpack.i.b16 %v416, %v415
      %v420 = vpack.i.b16 %v399, %v391
      %v421 = vshrl.u32 %v391, 16
      %v422 = vshrl.u32 %v399, 16
      %v423 = vpack.i.b16 %v422, %v421
      %v424 = vcombine.low %v402, %v408
      %v425 = vcombine.low %v414, %v420
      %v427 = vunpack.c.l.s4 1983009808
      %v428 = vunpack.c.0.s8 %v427
      %v429 = vlaneseq
      %v430 = vshrl.u32 %v429, 7
      %v431 = vsub.s32 %v428, %v430
      %v432 = vrot.slane %v424, %v431
      %v434 = vunpack.c.l.s4 1983009808
      %v435 = vunpack.c.0.s8 %v434
      %v436 = vlaneseq
      %v437 = vshrl.u32 %v436, 7
      %v438 = vsub.s32 %v435, %v437
      %v439 = vrot.slane %v425, %v438
      %v440 = vcombine.low %v432, %v439
      %v441 = vcombine.low %v405, %v411
      %v442 = vcombine.low %v417, %v423
      %v444 = vunpack.c.l.s4 1983009808
      %v445 = vunpack.c.0.s8 %v444
      %v446 = vlaneseq
      %v447 = vshrl.u32 %v446, 7
      %v448 = vsub.s32 %v445, %v447
      %v449 = vrot.slane %v441, %v448
      %v451 = vunpack.c.l.s4 1983009808
      %v452 = vunpack.c.0.s8 %v451
      %v453 = vlaneseq
      %v454 = vshrl.u32 %v453, 7
      %v455 = vsub.s32 %v452, %v454
      %v456 = vrot.slane %v442, %v455
      %v457 = vcombine.low %v449, %v456
      %458 = vrot.lane.b32.xlu0 %v457, 2
      %v459 = vpop.permute.xlu0 %458
      %v462 = vsel %vm312, %v440, %v459
      %s464 = scalar_lea.vmem %s1, 8
      %v465 = vld [vmem:[%s464] sm:$0xf]
      %v466 = vld [vmem:[%s464 + $0x4] sm:$0xf]
      %v469 = vunpack.c.l.b16 %v465
      %v470 = vunpack.c.l.b16 %v466
      %v471 = vpack.c.b16 %v470, %v469
      %vm472 = vcmask 130048
      %v474 = vsel %vm472, %v471, 0
      %476 = vmatprep.subr.bf16.mxu0 0
      %477 = vmatpush1.bf16.msra.mxu0 %v462
      %478 = vmatprep.subr.bf16.mxu0 0
      %479 = vmatpush1.bf16.msra.mxu0 0
      %480 = vmatprep.subr.bf16.mxu0 0
      %481 = vmatpush1.bf16.msra.mxu0 0
      %482 = vmatprep.subr.bf16.mxu0 0
      %483 = vmatpush1.bf16.msra.mxu0 0
      %484 = vmatprep.subr.bf16.mxu0 0
      %485 = vmatpush1.bf16.msra.mxu0 0
      %486 = vmatprep.subr.bf16.mxu0 0
      %487 = vmatpush1.bf16.msra.mxu0 0
      %488 = vmatprep.subr.bf16.mxu0 0
      %489 = vmatpush1.bf16.msra.mxu0 0
      %490 = vmatprep.subr.bf16.mxu0 0
      %491 = vmatpush1.bf16.msra.mxu0 0
      %492 = vmatprep.subr.bf16.mxu0 0
      %493 = vmatpush1.bf16.msra.mxu0 0
      %494 = vmatprep.subr.bf16.mxu0 0
      %495 = vmatpush1.bf16.msra.mxu0 0
      %496 = vmatprep.subr.bf16.mxu0 0
      %497 = vmatpush1.bf16.msra.mxu0 0
      %498 = vmatprep.subr.bf16.mxu0 0
      %499 = vmatpush1.bf16.msra.mxu0 0
      %500 = vmatprep.subr.bf16.mxu0 0
      %501 = vmatpush1.bf16.msra.mxu0 0
      %502 = vmatprep.subr.bf16.mxu0 0
      %503 = vmatpush1.bf16.msra.mxu0 0
      %504 = vmatprep.subr.bf16.mxu0 0
      %505 = vmatpush1.bf16.msra.mxu0 0
      %506 = vmatprep.subr.bf16.mxu0 0
      %507 = vmatpush1.bf16.msra.mxu0 0
      %508 = vmatprep.mubr.bf16.mxu0 0
      %509 = vmatmul.mubr.bf16.gmra.mrb[0].mxu0 %v474
      %v510 = vpop.f32.mrb[0].mxu0
      %v511 = vadd.f32 0.0, %v510
      %v512 = vpop.f32.mrb[0].mxu0
      %v513 = vpop.f32.mrb[0].mxu0
      %v514 = vadd.f32 0.0, %v513
      %v515 = vpop.f32.mrb[0].mxu0
      %516 = vdwg.mxu0
      %v519 = vunpack.c.l.b16 %v317
      %v520 = vunpack.c.l.b16 %v318
      %v521 = vpack.c.b16 %v520, %v519
      %v523 = vsel %vm472, %v521, 0
      %525 = vmatprep.subr.bf16.mxu0 0
      %526 = vmatpush1.bf16.msra.mxu0 %v315
      %527 = vmatprep.subr.bf16.mxu0 0
      %528 = vmatpush1.bf16.msra.mxu0 0
      %529 = vmatprep.subr.bf16.mxu0 0
      %530 = vmatpush1.bf16.msra.mxu0 0
      %531 = vmatprep.subr.bf16.mxu0 0
      %532 = vmatpush1.bf16.msra.mxu0 0
      %533 = vmatprep.subr.bf16.mxu0 0
      %534 = vmatpush1.bf16.msra.mxu0 0
      %535 = vmatprep.subr.bf16.mxu0 0
      %536 = vmatpush1.bf16.msra.mxu0 0
      %537 = vmatprep.subr.bf16.mxu0 0
      %538 = vmatpush1.bf16.msra.mxu0 0
      %539 = vmatprep.subr.bf16.mxu0 0
      %540 = vmatpush1.bf16.msra.mxu0 0
      %541 = vmatprep.subr.bf16.mxu0 0
      %542 = vmatpush1.bf16.msra.mxu0 0
      %543 = vmatprep.subr.bf16.mxu0 0
      %544 = vmatpush1.bf16.msra.mxu0 0
      %545 = vmatprep.subr.bf16.mxu0 0
      %546 = vmatpush1.bf16.msra.mxu0 0
      %547 = vmatprep.subr.bf16.mxu0 0
      %548 = vmatpush1.bf16.msra.mxu0 0
      %549 = vmatprep.subr.bf16.mxu0 0
      %550 = vmatpush1.bf16.msra.mxu0 0
      %551 = vmatprep.subr.bf16.mxu0 0
      %552 = vmatpush1.bf16.msra.mxu0 0
      %553 = vmatprep.subr.bf16.mxu0 0
      %554 = vmatpush1.bf16.msra.mxu0 0
      %555 = vmatprep.subr.bf16.mxu0 0
      %556 = vmatpush1.bf16.msra.mxu0 0
      %557 = vmatprep.mubr.bf16.mxu0 0
      %558 = vmatmul.mubr.bf16.gmra.mrb[0].mxu0 %v523
      %v559 = vpop.f32.mrb[0].mxu0
      %v560 = vadd.f32 %v511, %v559
      %v561 = vpop.f32.mrb[0].mxu0
      %v562 = vpop.f32.mrb[0].mxu0
      %v563 = vadd.f32 %v514, %v562
      %v564 = vpop.f32.mrb[0].mxu0
      %565 = vdwg.mxu0
      %v566 = vld [vmem:[%s165] sm:$0x1]
      %v567 = vld [vmem:[%s165 + $0x2] sm:$0x1]
      %v568 = vld [vmem:[%s165 + $0x4] sm:$0x1]
      %v569 = vld [vmem:[%s165 + $0x6] sm:$0x1]
      %v570 = vld [vmem:[%s165 + $0x8] sm:$0x1]
      %v571 = vld [vmem:[%s165 + $0xa] sm:$0x1]
      %v572 = vld [vmem:[%s165 + $0xc] sm:$0x1]
      %v573 = vld [vmem:[%s165 + $0xe] sm:$0x1]
      %v574 = vld [vmem:[%s165 + $0x10] sm:$0x1]
      %v575 = vld [vmem:[%s165 + $0x12] sm:$0x1]
      %v576 = vld [vmem:[%s165 + $0x14] sm:$0x1]
      %v577 = vld [vmem:[%s165 + $0x16] sm:$0x1]
      %v578 = vld [vmem:[%s165 + $0x18] sm:$0x1]
      %v579 = vld [vmem:[%s165 + $0x1a] sm:$0x1]
      %v580 = vld [vmem:[%s165 + $0x1c] sm:$0x1]
      %v581 = vld [vmem:[%s165 + $0x1e] sm:$0x1]
      %598 = vrot.lane.b32.xlu0 %v566, 127
      %v599 = vpop.permute.xlu0 %598
      %600 = vrot.lane.b32.xlu0 %v567, 127
      %v601 = vpop.permute.xlu0 %600
      %602 = vrot.lane.b32.xlu0 %v568, 127
      %v603 = vpop.permute.xlu0 %602
      %604 = vrot.lane.b32.xlu0 %v569, 127
      %v605 = vpop.permute.xlu0 %604
      %606 = vrot.lane.b32.xlu0 %v570, 127
      %v607 = vpop.permute.xlu0 %606
      %608 = vrot.lane.b32.xlu0 %v571, 127
      %v609 = vpop.permute.xlu0 %608
      %610 = vrot.lane.b32.xlu0 %v572, 127
      %v611 = vpop.permute.xlu0 %610
      %612 = vrot.lane.b32.xlu0 %v573, 127
      %v613 = vpop.permute.xlu0 %612
      %614 = vrot.lane.b32.xlu0 %v574, 127
      %v615 = vpop.permute.xlu0 %614
      %616 = vrot.lane.b32.xlu0 %v575, 127
      %v617 = vpop.permute.xlu0 %616
      %618 = vrot.lane.b32.xlu0 %v576, 127
      %v619 = vpop.permute.xlu0 %618
      %620 = vrot.lane.b32.xlu0 %v577, 127
      %v621 = vpop.permute.xlu0 %620
      %622 = vrot.lane.b32.xlu0 %v578, 127
      %v623 = vpop.permute.xlu0 %622
      %624 = vrot.lane.b32.xlu0 %v579, 127
      %v625 = vpop.permute.xlu0 %624
      %626 = vrot.lane.b32.xlu0 %v580, 127
      %v627 = vpop.permute.xlu0 %626
      %628 = vrot.lane.b32.xlu0 %v581, 127
      %v629 = vpop.permute.xlu0 %628
      %v646 = vcombine.low %v599, %v603
      %v648 = vunpack.c.l.s4 1934713408
      %v649 = vunpack.c.0.s8 %v648
      %v650 = vlaneseq
      %v651 = vshrl.u32 %v650, 7
      %v652 = vsub.s32 %v649, %v651
      %v653 = vrot.slane %v646, %v652
      %v654 = vcombine.low %v601, %v605
      %v656 = vunpack.c.l.s4 1934713408
      %v657 = vunpack.c.0.s8 %v656
      %v658 = vlaneseq
      %v659 = vshrl.u32 %v658, 7
      %v660 = vsub.s32 %v657, %v659
      %v661 = vrot.slane %v654, %v660
      %v662 = vcombine.low %v607, %v611
      %v664 = vunpack.c.l.s4 1934713408
      %v665 = vunpack.c.0.s8 %v664
      %v666 = vlaneseq
      %v667 = vshrl.u32 %v666, 7
      %v668 = vsub.s32 %v665, %v667
      %v669 = vrot.slane %v662, %v668
      %v670 = vcombine.low %v609, %v613
      %v672 = vunpack.c.l.s4 1934713408
      %v673 = vunpack.c.0.s8 %v672
      %v674 = vlaneseq
      %v675 = vshrl.u32 %v674, 7
      %v676 = vsub.s32 %v673, %v675
      %v677 = vrot.slane %v670, %v676
      %v678 = vcombine.low %v615, %v619
      %v680 = vunpack.c.l.s4 1934713408
      %v681 = vunpack.c.0.s8 %v680
      %v682 = vlaneseq
      %v683 = vshrl.u32 %v682, 7
      %v684 = vsub.s32 %v681, %v683
      %v685 = vrot.slane %v678, %v684
      %v686 = vcombine.low %v617, %v621
      %v688 = vunpack.c.l.s4 1934713408
      %v689 = vunpack.c.0.s8 %v688
      %v690 = vlaneseq
      %v691 = vshrl.u32 %v690, 7
      %v692 = vsub.s32 %v689, %v691
      %v693 = vrot.slane %v686, %v692
      %v694 = vcombine.low %v623, %v627
      %v696 = vunpack.c.l.s4 1934713408
      %v697 = vunpack.c.0.s8 %v696
      %v698 = vlaneseq
      %v699 = vshrl.u32 %v698, 7
      %v700 = vsub.s32 %v697, %v699
      %v701 = vrot.slane %v694, %v700
      %v702 = vcombine.low %v625, %v629
      %v704 = vunpack.c.l.s4 1934713408
      %v705 = vunpack.c.0.s8 %v704
      %v706 = vlaneseq
      %v707 = vshrl.u32 %v706, 7
      %v708 = vsub.s32 %v705, %v707
      %v709 = vrot.slane %v702, %v708
      %v712 = vpack.i.b16 %v661, %v653
      %v713 = vshrl.u32 %v653, 16
      %v714 = vshrl.u32 %v661, 16
      %v715 = vpack.i.b16 %v714, %v713
      %v718 = vpack.i.b16 %v677, %v669
      %v719 = vshrl.u32 %v669, 16
      %v720 = vshrl.u32 %v677, 16
      %v721 = vpack.i.b16 %v720, %v719
      %v724 = vpack.i.b16 %v693, %v685
      %v725 = vshrl.u32 %v685, 16
      %v726 = vshrl.u32 %v693, 16
      %v727 = vpack.i.b16 %v726, %v725
      %v730 = vpack.i.b16 %v709, %v701
      %v731 = vshrl.u32 %v701, 16
      %v732 = vshrl.u32 %v709, 16
      %v733 = vpack.i.b16 %v732, %v731
      %v734 = vcombine.low %v712, %v718
      %v735 = vcombine.low %v724, %v730
      %v737 = vunpack.c.l.s4 1983009808
      %v738 = vunpack.c.0.s8 %v737
      %v739 = vlaneseq
      %v740 = vshrl.u32 %v739, 7
      %v741 = vsub.s32 %v738, %v740
      %v742 = vrot.slane %v734, %v741
      %v744 = vunpack.c.l.s4 1983009808
      %v745 = vunpack.c.0.s8 %v744
      %v746 = vlaneseq
      %v747 = vshrl.u32 %v746, 7
      %v748 = vsub.s32 %v745, %v747
      %v749 = vrot.slane %v735, %v748
      %v750 = vcombine.low %v742, %v749
      %v751 = vcombine.low %v715, %v721
      %v752 = vcombine.low %v727, %v733
      %v754 = vunpack.c.l.s4 1983009808
      %v755 = vunpack.c.0.s8 %v754
      %v756 = vlaneseq
      %v757 = vshrl.u32 %v756, 7
      %v758 = vsub.s32 %v755, %v757
      %v759 = vrot.slane %v751, %v758
      %v761 = vunpack.c.l.s4 1983009808
      %v762 = vunpack.c.0.s8 %v761
      %v763 = vlaneseq
      %v764 = vshrl.u32 %v763, 7
      %v765 = vsub.s32 %v762, %v764
      %v766 = vrot.slane %v752, %v765
      %v767 = vcombine.low %v759, %v766
      %768 = vrot.lane.b32.xlu0 %v767, 2
      %v769 = vpop.permute.xlu0 %768
      %v772 = vsel %vm312, %v750, %v769
      %s774 = scalar_lea.vmem %s1, 16
      %v775 = vld [vmem:[%s774] sm:$0xf]
      %v776 = vld [vmem:[%s774 + $0x4] sm:$0xf]
      %v779 = vunpack.c.l.b16 %v775
      %v780 = vunpack.c.l.b16 %v776
      %v781 = vpack.c.b16 %v780, %v779
      %v783 = vsel %vm472, %v781, 0
      %785 = vmatprep.subr.bf16.mxu0 0
      %786 = vmatpush1.bf16.msra.mxu0 %v772
      %787 = vmatprep.subr.bf16.mxu0 0
      %788 = vmatpush1.bf16.msra.mxu0 0
      %789 = vmatprep.subr.bf16.mxu0 0
      %790 = vmatpush1.bf16.msra.mxu0 0
      %791 = vmatprep.subr.bf16.mxu0 0
      %792 = vmatpush1.bf16.msra.mxu0 0
      %793 = vmatprep.subr.bf16.mxu0 0
      %794 = vmatpush1.bf16.msra.mxu0 0
      %795 = vmatprep.subr.bf16.mxu0 0
      %796 = vmatpush1.bf16.msra.mxu0 0
      %797 = vmatprep.subr.bf16.mxu0 0
      %798 = vmatpush1.bf16.msra.mxu0 0
      %799 = vmatprep.subr.bf16.mxu0 0
      %800 = vmatpush1.bf16.msra.mxu0 0
      %801 = vmatprep.subr.bf16.mxu0 0
      %802 = vmatpush1.bf16.msra.mxu0 0
      %803 = vmatprep.subr.bf16.mxu0 0
      %804 = vmatpush1.bf16.msra.mxu0 0
      %805 = vmatprep.subr.bf16.mxu0 0
      %806 = vmatpush1.bf16.msra.mxu0 0
      %807 = vmatprep.subr.bf16.mxu0 0
      %808 = vmatpush1.bf16.msra.mxu0 0
      %809 = vmatprep.subr.bf16.mxu0 0
      %810 = vmatpush1.bf16.msra.mxu0 0
      %811 = vmatprep.subr.bf16.mxu0 0
      %812 = vmatpush1.bf16.msra.mxu0 0
      %813 = vmatprep.subr.bf16.mxu0 0
      %814 = vmatpush1.bf16.msra.mxu0 0
      %815 = vmatprep.subr.bf16.mxu0 0
      %816 = vmatpush1.bf16.msra.mxu0 0
      %817 = vmatprep.mubr.bf16.mxu0 0
      %818 = vmatmul.mubr.bf16.gmra.mrb[0].mxu0 %v783
      %v819 = vpop.f32.mrb[0].mxu0
      %v820 = vadd.f32 0.0, %v819
      %v821 = vpop.f32.mrb[0].mxu0
      %v822 = vpop.f32.mrb[0].mxu0
      %v823 = vadd.f32 0.0, %v822
      %v824 = vpop.f32.mrb[0].mxu0
      %825 = vdwg.mxu0
      %v826 = vadd.f32 %v560, %v820
      %v827 = vadd.f32 %v563, %v823
      %s828 = scalar_lea.vmem %s165, 64
      %v829 = vld [vmem:[%s828] sm:$0x1]
      %v830 = vld [vmem:[%s828 + $0x2] sm:$0x1]
      %v831 = vld [vmem:[%s828 + $0x4] sm:$0x1]
      %v832 = vld [vmem:[%s828 + $0x6] sm:$0x1]
      %v833 = vld [vmem:[%s828 + $0x8] sm:$0x1]
      %v834 = vld [vmem:[%s828 + $0xa] sm:$0x1]
      %v835 = vld [vmem:[%s828 + $0xc] sm:$0x1]
      %v836 = vld [vmem:[%s828 + $0xe] sm:$0x1]
      %v837 = vld [vmem:[%s828 + $0x10] sm:$0x1]
      %v838 = vld [vmem:[%s828 + $0x12] sm:$0x1]
      %v839 = vld [vmem:[%s828 + $0x14] sm:$0x1]
      %v840 = vld [vmem:[%s828 + $0x16] sm:$0x1]
      %v841 = vld [vmem:[%s828 + $0x18] sm:$0x1]
      %v842 = vld [vmem:[%s828 + $0x1a] sm:$0x1]
      %v843 = vld [vmem:[%s828 + $0x1c] sm:$0x1]
      %v844 = vld [vmem:[%s828 + $0x1e] sm:$0x1]
      %v845 = vcombine.low %v829, %v831
      %v847 = vunpack.c.l.s4 1934713408
      %v848 = vunpack.c.0.s8 %v847
      %v849 = vlaneseq
      %v850 = vshrl.u32 %v849, 7
      %v851 = vsub.s32 %v848, %v850
      %v852 = vrot.slane %v845, %v851
      %v853 = vcombine.low %v830, %v832
      %v855 = vunpack.c.l.s4 1934713408
      %v856 = vunpack.c.0.s8 %v855
      %v857 = vlaneseq
      %v858 = vshrl.u32 %v857, 7
      %v859 = vsub.s32 %v856, %v858
      %v860 = vrot.slane %v853, %v859
      %v861 = vcombine.low %v833, %v835
      %v863 = vunpack.c.l.s4 1934713408
      %v864 = vunpack.c.0.s8 %v863
      %v865 = vlaneseq
      %v866 = vshrl.u32 %v865, 7
      %v867 = vsub.s32 %v864, %v866
      %v868 = vrot.slane %v861, %v867
      %v869 = vcombine.low %v834, %v836
      %v871 = vunpack.c.l.s4 1934713408
      %v872 = vunpack.c.0.s8 %v871
      %v873 = vlaneseq
      %v874 = vshrl.u32 %v873, 7
      %v875 = vsub.s32 %v872, %v874
      %v876 = vrot.slane %v869, %v875
      %v877 = vcombine.low %v837, %v839
      %v879 = vunpack.c.l.s4 1934713408
      %v880 = vunpack.c.0.s8 %v879
      %v881 = vlaneseq
      %v882 = vshrl.u32 %v881, 7
      %v883 = vsub.s32 %v880, %v882
      %v884 = vrot.slane %v877, %v883
      %v885 = vcombine.low %v838, %v840
      %v887 = vunpack.c.l.s4 1934713408
      %v888 = vunpack.c.0.s8 %v887
      %v889 = vlaneseq
      %v890 = vshrl.u32 %v889, 7
      %v891 = vsub.s32 %v888, %v890
      %v892 = vrot.slane %v885, %v891
      %v893 = vcombine.low %v841, %v843
      %v895 = vunpack.c.l.s4 1934713408
      %v896 = vunpack.c.0.s8 %v895
      %v897 = vlaneseq
      %v898 = vshrl.u32 %v897, 7
      %v899 = vsub.s32 %v896, %v898
      %v900 = vrot.slane %v893, %v899
      %v901 = vcombine.low %v842, %v844
      %v903 = vunpack.c.l.s4 1934713408
      %v904 = vunpack.c.0.s8 %v903
      %v905 = vlaneseq
      %v906 = vshrl.u32 %v905, 7
      %v907 = vsub.s32 %v904, %v906
      %v908 = vrot.slane %v901, %v907
      %v911 = vpack.i.b16 %v860, %v852
      %v912 = vshrl.u32 %v852, 16
      %v913 = vshrl.u32 %v860, 16
      %v914 = vpack.i.b16 %v913, %v912
      %v917 = vpack.i.b16 %v876, %v868
      %v918 = vshrl.u32 %v868, 16
      %v919 = vshrl.u32 %v876, 16
      %v920 = vpack.i.b16 %v919, %v918
      %v923 = vpack.i.b16 %v892, %v884
      %v924 = vshrl.u32 %v884, 16
      %v925 = vshrl.u32 %v892, 16
      %v926 = vpack.i.b16 %v925, %v924
      %v929 = vpack.i.b16 %v908, %v900
      %v930 = vshrl.u32 %v900, 16
      %v931 = vshrl.u32 %v908, 16
      %v932 = vpack.i.b16 %v931, %v930
      %v933 = vcombine.low %v911, %v917
      %v934 = vcombine.low %v923, %v929
      %v936 = vunpack.c.l.s4 1983009808
      %v937 = vunpack.c.0.s8 %v936
      %v938 = vlaneseq
      %v939 = vshrl.u32 %v938, 7
      %v940 = vsub.s32 %v937, %v939
      %v941 = vrot.slane %v933, %v940
      %v943 = vunpack.c.l.s4 1983009808
      %v944 = vunpack.c.0.s8 %v943
      %v945 = vlaneseq
      %v946 = vshrl.u32 %v945, 7
      %v947 = vsub.s32 %v944, %v946
      %v948 = vrot.slane %v934, %v947
      %v949 = vcombine.low %v941, %v948
      %v950 = vcombine.low %v914, %v920
      %v951 = vcombine.low %v926, %v932
      %v953 = vunpack.c.l.s4 1983009808
      %v954 = vunpack.c.0.s8 %v953
      %v955 = vlaneseq
      %v956 = vshrl.u32 %v955, 7
      %v957 = vsub.s32 %v954, %v956
      %v958 = vrot.slane %v950, %v957
      %v960 = vunpack.c.l.s4 1983009808
      %v961 = vunpack.c.0.s8 %v960
      %v962 = vlaneseq
      %v963 = vshrl.u32 %v962, 7
      %v964 = vsub.s32 %v961, %v963
      %v965 = vrot.slane %v951, %v964
      %v966 = vcombine.low %v958, %v965
      %967 = vrot.lane.b32.xlu0 %v966, 2
      %v968 = vpop.permute.xlu0 %967
      %v971 = vsel %vm312, %v949, %v968
      %s973 = scalar_lea.vmem %s1, 24
      %v974 = vld [vmem:[%s973] sm:$0xf]
      %v975 = vld [vmem:[%s973 + $0x4] sm:$0xf]
      %v978 = vunpack.c.l.b16 %v974
      %v979 = vunpack.c.l.b16 %v975
      %v980 = vpack.c.b16 %v979, %v978
      %v982 = vsel %vm472, %v980, 0
      %984 = vmatprep.subr.bf16.mxu0 0
      %985 = vmatpush1.bf16.msra.mxu0 %v971
      %986 = vmatprep.subr.bf16.mxu0 0
      %987 = vmatpush1.bf16.msra.mxu0 0
      %988 = vmatprep.subr.bf16.mxu0 0
      %989 = vmatpush1.bf16.msra.mxu0 0
      %990 = vmatprep.subr.bf16.mxu0 0
      %991 = vmatpush1.bf16.msra.mxu0 0
      %992 = vmatprep.subr.bf16.mxu0 0
      %993 = vmatpush1.bf16.msra.mxu0 0
      %994 = vmatprep.subr.bf16.mxu0 0
      %995 = vmatpush1.bf16.msra.mxu0 0
      %996 = vmatprep.subr.bf16.mxu0 0
      %997 = vmatpush1.bf16.msra.mxu0 0
      %998 = vmatprep.subr.bf16.mxu0 0
      %999 = vmatpush1.bf16.msra.mxu0 0
      %1000 = vmatprep.subr.bf16.mxu0 0
      %1001 = vmatpush1.bf16.msra.mxu0 0
      %1002 = vmatprep.subr.bf16.mxu0 0
      %1003 = vmatpush1.bf16.msra.mxu0 0
      %1004 = vmatprep.subr.bf16.mxu0 0
      %1005 = vmatpush1.bf16.msra.mxu0 0
      %1006 = vmatprep.subr.bf16.mxu0 0
      %1007 = vmatpush1.bf16.msra.mxu0 0
      %1008 = vmatprep.subr.bf16.mxu0 0
      %1009 = vmatpush1.bf16.msra.mxu0 0
      %1010 = vmatprep.subr.bf16.mxu0 0
      %1011 = vmatpush1.bf16.msra.mxu0 0
      %1012 = vmatprep.subr.bf16.mxu0 0
      %1013 = vmatpush1.bf16.msra.mxu0 0
      %1014 = vmatprep.subr.bf16.mxu0 0
      %1015 = vmatpush1.bf16.msra.mxu0 0
      %1016 = vmatprep.mubr.bf16.mxu0 0
      %1017 = vmatmul.mubr.bf16.gmra.mrb[0].mxu0 %v982
      %v1018 = vpop.f32.mrb[0].mxu0
      %v1019 = vadd.f32 0.0, %v1018
      %v1020 = vpop.f32.mrb[0].mxu0
      %v1021 = vpop.f32.mrb[0].mxu0
      %v1022 = vadd.f32 0.0, %v1021
      %v1023 = vpop.f32.mrb[0].mxu0
      %1024 = vdwg.mxu0
      %v1025 = vadd.f32 %v826, %v1019
      %v1026 = vadd.f32 %v827, %v1022
      %s1027 = scalar_lea.vmem %s165, 96
      %v1028 = vld [vmem:[%s1027] sm:$0x1]
      %v1029 = vld [vmem:[%s1027 + $0x2] sm:$0x1]
      %v1030 = vld [vmem:[%s1027 + $0x4] sm:$0x1]
      %v1031 = vld [vmem:[%s1027 + $0x6] sm:$0x1]
      %v1032 = vld [vmem:[%s1027 + $0x8] sm:$0x1]
      %v1033 = vld [vmem:[%s1027 + $0xa] sm:$0x1]
      %v1034 = vld [vmem:[%s1027 + $0xc] sm:$0x1]
      %v1035 = vld [vmem:[%s1027 + $0xe] sm:$0x1]
      %v1036 = vld [vmem:[%s1027 + $0x10] sm:$0x1]
      %v1037 = vld [vmem:[%s1027 + $0x12] sm:$0x1]
      %v1038 = vld [vmem:[%s1027 + $0x14] sm:$0x1]
      %v1039 = vld [vmem:[%s1027 + $0x16] sm:$0x1]
      %v1040 = vld [vmem:[%s1027 + $0x18] sm:$0x1]
      %v1041 = vld [vmem:[%s1027 + $0x1a] sm:$0x1]
      %v1042 = vld [vmem:[%s1027 + $0x1c] sm:$0x1]
      %v1043 = vld [vmem:[%s1027 + $0x1e] sm:$0x1]
      %v1044 = vcombine.low %v1028, %v1030
      %v1046 = vunpack.c.l.s4 1934713408
      %v1047 = vunpack.c.0.s8 %v1046
      %v1048 = vlaneseq
      %v1049 = vshrl.u32 %v1048, 7
      %v1050 = vsub.s32 %v1047, %v1049
      %v1051 = vrot.slane %v1044, %v1050
      %v1052 = vcombine.low %v1029, %v1031
      %v1054 = vunpack.c.l.s4 1934713408
      %v1055 = vunpack.c.0.s8 %v1054
      %v1056 = vlaneseq
      %v1057 = vshrl.u32 %v1056, 7
      %v1058 = vsub.s32 %v1055, %v1057
      %v1059 = vrot.slane %v1052, %v1058
      %v1060 = vcombine.low %v1032, %v1034
      %v1062 = vunpack.c.l.s4 1934713408
      %v1063 = vunpack.c.0.s8 %v1062
      %v1064 = vlaneseq
      %v1065 = vshrl.u32 %v1064, 7
      %v1066 = vsub.s32 %v1063, %v1065
      %v1067 = vrot.slane %v1060, %v1066
      %v1068 = vcombine.low %v1033, %v1035
      %v1070 = vunpack.c.l.s4 1934713408
      %v1071 = vunpack.c.0.s8 %v1070
      %v1072 = vlaneseq
      %v1073 = vshrl.u32 %v1072, 7
      %v1074 = vsub.s32 %v1071, %v1073
      %v1075 = vrot.slane %v1068, %v1074
      %v1076 = vcombine.low %v1036, %v1038
      %v1078 = vunpack.c.l.s4 1934713408
      %v1079 = vunpack.c.0.s8 %v1078
      %v1080 = vlaneseq
      %v1081 = vshrl.u32 %v1080, 7
      %v1082 = vsub.s32 %v1079, %v1081
      %v1083 = vrot.slane %v1076, %v1082
      %v1084 = vcombine.low %v1037, %v1039
      %v1086 = vunpack.c.l.s4 1934713408
      %v1087 = vunpack.c.0.s8 %v1086
      %v1088 = vlaneseq
      %v1089 = vshrl.u32 %v1088, 7
      %v1090 = vsub.s32 %v1087, %v1089
      %v1091 = vrot.slane %v1084, %v1090
      %v1092 = vcombine.low %v1040, %v1042
      %v1094 = vunpack.c.l.s4 1934713408
      %v1095 = vunpack.c.0.s8 %v1094
      %v1096 = vlaneseq
      %v1097 = vshrl.u32 %v1096, 7
      %v1098 = vsub.s32 %v1095, %v1097
      %v1099 = vrot.slane %v1092, %v1098
      %v1100 = vcombine.low %v1041, %v1043
      %v1102 = vunpack.c.l.s4 1934713408
      %v1103 = vunpack.c.0.s8 %v1102
      %v1104 = vlaneseq
      %v1105 = vshrl.u32 %v1104, 7
      %v1106 = vsub.s32 %v1103, %v1105
      %v1107 = vrot.slane %v1100, %v1106
      %v1110 = vpack.i.b16 %v1059, %v1051
      %v1111 = vshrl.u32 %v1051, 16
      %v1112 = vshrl.u32 %v1059, 16
      %v1113 = vpack.i.b16 %v1112, %v1111
      %v1116 = vpack.i.b16 %v1075, %v1067
      %v1117 = vshrl.u32 %v1067, 16
      %v1118 = vshrl.u32 %v1075, 16
      %v1119 = vpack.i.b16 %v1118, %v1117
      %v1122 = vpack.i.b16 %v1091, %v1083
      %v1123 = vshrl.u32 %v1083, 16
      %v1124 = vshrl.u32 %v1091, 16
      %v1125 = vpack.i.b16 %v1124, %v1123
      %v1128 = vpack.i.b16 %v1107, %v1099
      %v1129 = vshrl.u32 %v1099, 16
      %v1130 = vshrl.u32 %v1107, 16
      %v1131 = vpack.i.b16 %v1130, %v1129
      %v1132 = vcombine.low %v1110, %v1116
      %v1133 = vcombine.low %v1122, %v1128
      %v1135 = vunpack.c.l.s4 1983009808
      %v1136 = vunpack.c.0.s8 %v1135
      %v1137 = vlaneseq
      %v1138 = vshrl.u32 %v1137, 7
      %v1139 = vsub.s32 %v1136, %v1138
      %v1140 = vrot.slane %v1132, %v1139
      %v1142 = vunpack.c.l.s4 1983009808
      %v1143 = vunpack.c.0.s8 %v1142
      %v1144 = vlaneseq
      %v1145 = vshrl.u32 %v1144, 7
      %v1146 = vsub.s32 %v1143, %v1145
      %v1147 = vrot.slane %v1133, %v1146
      %v1148 = vcombine.low %v1140, %v1147
      %v1149 = vcombine.low %v1113, %v1119
      %v1150 = vcombine.low %v1125, %v1131
      %v1152 = vunpack.c.l.s4 1983009808
      %v1153 = vunpack.c.0.s8 %v1152
      %v1154 = vlaneseq
      %v1155 = vshrl.u32 %v1154, 7
      %v1156 = vsub.s32 %v1153, %v1155
      %v1157 = vrot.slane %v1149, %v1156
      %v1159 = vunpack.c.l.s4 1983009808
      %v1160 = vunpack.c.0.s8 %v1159
      %v1161 = vlaneseq
      %v1162 = vshrl.u32 %v1161, 7
      %v1163 = vsub.s32 %v1160, %v1162
      %v1164 = vrot.slane %v1150, %v1163
      %v1165 = vcombine.low %v1157, %v1164
      %1166 = vrot.lane.b32.xlu0 %v1165, 2
      %v1167 = vpop.permute.xlu0 %1166
      %v1170 = vsel %vm312, %v1148, %v1167
      %s1172 = scalar_lea.vmem %s1, 32
      %v1173 = vld [vmem:[%s1172] sm:$0xf]
      %v1174 = vld [vmem:[%s1172 + $0x4] sm:$0xf]
      %v1177 = vunpack.c.l.b16 %v1173
      %v1178 = vunpack.c.l.b16 %v1174
      %v1179 = vpack.c.b16 %v1178, %v1177
      %v1181 = vsel %vm472, %v1179, 0
      %1183 = vmatprep.subr.bf16.mxu0 0
      %1184 = vmatpush1.bf16.msra.mxu0 %v1170
      %1185 = vmatprep.subr.bf16.mxu0 0
      %1186 = vmatpush1.bf16.msra.mxu0 0
      %1187 = vmatprep.subr.bf16.mxu0 0
      %1188 = vmatpush1.bf16.msra.mxu0 0
      %1189 = vmatprep.subr.bf16.mxu0 0
      %1190 = vmatpush1.bf16.msra.mxu0 0
      %1191 = vmatprep.subr.bf16.mxu0 0
      %1192 = vmatpush1.bf16.msra.mxu0 0
      %1193 = vmatprep.subr.bf16.mxu0 0
      %1194 = vmatpush1.bf16.msra.mxu0 0
      %1195 = vmatprep.subr.bf16.mxu0 0
      %1196 = vmatpush1.bf16.msra.mxu0 0
      %1197 = vmatprep.subr.bf16.mxu0 0
      %1198 = vmatpush1.bf16.msra.mxu0 0
      %1199 = vmatprep.subr.bf16.mxu0 0
      %1200 = vmatpush1.bf16.msra.mxu0 0
      %1201 = vmatprep.subr.bf16.mxu0 0
      %1202 = vmatpush1.bf16.msra.mxu0 0
      %1203 = vmatprep.subr.bf16.mxu0 0
      %1204 = vmatpush1.bf16.msra.mxu0 0
      %1205 = vmatprep.subr.bf16.mxu0 0
      %1206 = vmatpush1.bf16.msra.mxu0 0
      %1207 = vmatprep.subr.bf16.mxu0 0
      %1208 = vmatpush1.bf16.msra.mxu0 0
      %1209 = vmatprep.subr.bf16.mxu0 0
      %1210 = vmatpush1.bf16.msra.mxu0 0
      %1211 = vmatprep.subr.bf16.mxu0 0
      %1212 = vmatpush1.bf16.msra.mxu0 0
      %1213 = vmatprep.subr.bf16.mxu0 0
      %1214 = vmatpush1.bf16.msra.mxu0 0
      %1215 = vmatprep.mubr.bf16.mxu0 0
      %1216 = vmatmul.mubr.bf16.gmra.mrb[0].mxu0 %v1181
      %v1217 = vpop.f32.mrb[0].mxu0
      %v1218 = vadd.f32 0.0, %v1217
      %v1219 = vpop.f32.mrb[0].mxu0
      %v1220 = vpop.f32.mrb[0].mxu0
      %v1221 = vadd.f32 0.0, %v1220
      %v1222 = vpop.f32.mrb[0].mxu0
      %1223 = vdwg.mxu0
      %v1224 = vadd.f32 %v1025, %v1218
      %v1225 = vadd.f32 %v1026, %v1221
      %v1226 = vld [vmem:[%s828] sm:$0x1]
      %v1227 = vld [vmem:[%s828 + $0x2] sm:$0x1]
      %v1228 = vld [vmem:[%s828 + $0x4] sm:$0x1]
      %v1229 = vld [vmem:[%s828 + $0x6] sm:$0x1]
      %v1230 = vld [vmem:[%s828 + $0x8] sm:$0x1]
      %v1231 = vld [vmem:[%s828 + $0xa] sm:$0x1]
      %v1232 = vld [vmem:[%s828 + $0xc] sm:$0x1]
      %v1233 = vld [vmem:[%s828 + $0xe] sm:$0x1]
      %v1234 = vld [vmem:[%s828 + $0x10] sm:$0x1]
      %v1235 = vld [vmem:[%s828 + $0x12] sm:$0x1]
      %v1236 = vld [vmem:[%s828 + $0x14] sm:$0x1]
      %v1237 = vld [vmem:[%s828 + $0x16] sm:$0x1]
      %v1238 = vld [vmem:[%s828 + $0x18] sm:$0x1]
      %v1239 = vld [vmem:[%s828 + $0x1a] sm:$0x1]
      %v1240 = vld [vmem:[%s828 + $0x1c] sm:$0x1]
      %v1241 = vld [vmem:[%s828 + $0x1e] sm:$0x1]
      %1258 = vrot.lane.b32.xlu0 %v1226, 127
      %v1259 = vpop.permute.xlu0 %1258
      %1260 = vrot.lane.b32.xlu0 %v1227, 127
      %v1261 = vpop.permute.xlu0 %1260
      %1262 = vrot.lane.b32.xlu0 %v1228, 127
      %v1263 = vpop.permute.xlu0 %1262
      %1264 = vrot.lane.b32.xlu0 %v1229, 127
      %v1265 = vpop.permute.xlu0 %1264
      %1266 = vrot.lane.b32.xlu0 %v1230, 127
      %v1267 = vpop.permute.xlu0 %1266
      %1268 = vrot.lane.b32.xlu0 %v1231, 127
      %v1269 = vpop.permute.xlu0 %1268
      %1270 = vrot.lane.b32.xlu0 %v1232, 127
      %v1271 = vpop.permute.xlu0 %1270
      %1272 = vrot.lane.b32.xlu0 %v1233, 127
      %v1273 = vpop.permute.xlu0 %1272
      %1274 = vrot.lane.b32.xlu0 %v1234, 127
      %v1275 = vpop.permute.xlu0 %1274
      %1276 = vrot.lane.b32.xlu0 %v1235, 127
      %v1277 = vpop.permute.xlu0 %1276
      %1278 = vrot.lane.b32.xlu0 %v1236, 127
      %v1279 = vpop.permute.xlu0 %1278
      %1280 = vrot.lane.b32.xlu0 %v1237, 127
      %v1281 = vpop.permute.xlu0 %1280
      %1282 = vrot.lane.b32.xlu0 %v1238, 127
      %v1283 = vpop.permute.xlu0 %1282
      %1284 = vrot.lane.b32.xlu0 %v1239, 127
      %v1285 = vpop.permute.xlu0 %1284
      %1286 = vrot.lane.b32.xlu0 %v1240, 127
      %v1287 = vpop.permute.xlu0 %1286
      %1288 = vrot.lane.b32.xlu0 %v1241, 127
      %v1289 = vpop.permute.xlu0 %1288
      %v1306 = vcombine.low %v1259, %v1263
      %v1308 = vunpack.c.l.s4 1934713408
      %v1309 = vunpack.c.0.s8 %v1308
      %v1310 = vlaneseq
      %v1311 = vshrl.u32 %v1310, 7
      %v1312 = vsub.s32 %v1309, %v1311
      %v1313 = vrot.slane %v1306, %v1312
      %v1314 = vcombine.low %v1261, %v1265
      %v1316 = vunpack.c.l.s4 1934713408
      %v1317 = vunpack.c.0.s8 %v1316
      %v1318 = vlaneseq
      %v1319 = vshrl.u32 %v1318, 7
      %v1320 = vsub.s32 %v1317, %v1319
      %v1321 = vrot.slane %v1314, %v1320
      %v1322 = vcombine.low %v1267, %v1271
      %v1324 = vunpack.c.l.s4 1934713408
      %v1325 = vunpack.c.0.s8 %v1324
      %v1326 = vlaneseq
      %v1327 = vshrl.u32 %v1326, 7
      %v1328 = vsub.s32 %v1325, %v1327
      %v1329 = vrot.slane %v1322, %v1328
      %v1330 = vcombine.low %v1269, %v1273
      %v1332 = vunpack.c.l.s4 1934713408
      %v1333 = vunpack.c.0.s8 %v1332
      %v1334 = vlaneseq
      %v1335 = vshrl.u32 %v1334, 7
      %v1336 = vsub.s32 %v1333, %v1335
      %v1337 = vrot.slane %v1330, %v1336
      %v1338 = vcombine.low %v1275, %v1279
      %v1340 = vunpack.c.l.s4 1934713408
      %v1341 = vunpack.c.0.s8 %v1340
      %v1342 = vlaneseq
      %v1343 = vshrl.u32 %v1342, 7
      %v1344 = vsub.s32 %v1341, %v1343
      %v1345 = vrot.slane %v1338, %v1344
      %v1346 = vcombine.low %v1277, %v1281
      %v1348 = vunpack.c.l.s4 1934713408
      %v1349 = vunpack.c.0.s8 %v1348
      %v1350 = vlaneseq
      %v1351 = vshrl.u32 %v1350, 7
      %v1352 = vsub.s32 %v1349, %v1351
      %v1353 = vrot.slane %v1346, %v1352
      %v1354 = vcombine.low %v1283, %v1287
      %v1356 = vunpack.c.l.s4 1934713408
      %v1357 = vunpack.c.0.s8 %v1356
      %v1358 = vlaneseq
      %v1359 = vshrl.u32 %v1358, 7
      %v1360 = vsub.s32 %v1357, %v1359
      %v1361 = vrot.slane %v1354, %v1360
      %v1362 = vcombine.low %v1285, %v1289
      %v1364 = vunpack.c.l.s4 1934713408
      %v1365 = vunpack.c.0.s8 %v1364
      %v1366 = vlaneseq
      %v1367 = vshrl.u32 %v1366, 7
      %v1368 = vsub.s32 %v1365, %v1367
      %v1369 = vrot.slane %v1362, %v1368
      %v1372 = vpack.i.b16 %v1321, %v1313
      %v1373 = vshrl.u32 %v1313, 16
      %v1374 = vshrl.u32 %v1321, 16
      %v1375 = vpack.i.b16 %v1374, %v1373
      %v1378 = vpack.i.b16 %v1337, %v1329
      %v1379 = vshrl.u32 %v1329, 16
      %v1380 = vshrl.u32 %v1337, 16
      %v1381 = vpack.i.b16 %v1380, %v1379
      %v1384 = vpack.i.b16 %v1353, %v1345
      %v1385 = vshrl.u32 %v1345, 16
      %v1386 = vshrl.u32 %v1353, 16
      %v1387 = vpack.i.b16 %v1386, %v1385
      %v1390 = vpack.i.b16 %v1369, %v1361
      %v1391 = vshrl.u32 %v1361, 16
      %v1392 = vshrl.u32 %v1369, 16
      %v1393 = vpack.i.b16 %v1392, %v1391
      %v1394 = vcombine.low %v1372, %v1378
      %v1395 = vcombine.low %v1384, %v1390
      %v1397 = vunpack.c.l.s4 1983009808
      %v1398 = vunpack.c.0.s8 %v1397
      %v1399 = vlaneseq
      %v1400 = vshrl.u32 %v1399, 7
      %v1401 = vsub.s32 %v1398, %v1400
      %v1402 = vrot.slane %v1394, %v1401
      %v1404 = vunpack.c.l.s4 1983009808
      %v1405 = vunpack.c.0.s8 %v1404
      %v1406 = vlaneseq
      %v1407 = vshrl.u32 %v1406, 7
      %v1408 = vsub.s32 %v1405, %v1407
      %v1409 = vrot.slane %v1395, %v1408
      %v1410 = vcombine.low %v1402, %v1409
      %v1411 = vcombine.low %v1375, %v1381
      %v1412 = vcombine.low %v1387, %v1393
      %v1414 = vunpack.c.l.s4 1983009808
      %v1415 = vunpack.c.0.s8 %v1414
      %v1416 = vlaneseq
      %v1417 = vshrl.u32 %v1416, 7
      %v1418 = vsub.s32 %v1415, %v1417
      %v1419 = vrot.slane %v1411, %v1418
      %v1421 = vunpack.c.l.s4 1983009808
      %v1422 = vunpack.c.0.s8 %v1421
      %v1423 = vlaneseq
      %v1424 = vshrl.u32 %v1423, 7
      %v1425 = vsub.s32 %v1422, %v1424
      %v1426 = vrot.slane %v1412, %v1425
      %v1427 = vcombine.low %v1419, %v1426
      %1428 = vrot.lane.b32.xlu0 %v1427, 2
      %v1429 = vpop.permute.xlu0 %1428
      %v1432 = vsel %vm312, %v1410, %v1429
      %s1434 = scalar_lea.vmem %s1, 40
      %v1435 = vld [vmem:[%s1434] sm:$0xf]
      %v1436 = vld [vmem:[%s1434 + $0x4] sm:$0xf]
      %v1439 = vunpack.c.l.b16 %v1435
      %v1440 = vunpack.c.l.b16 %v1436
      %v1441 = vpack.c.b16 %v1440, %v1439
      %v1443 = vsel %vm472, %v1441, 0
      %1445 = vmatprep.subr.bf16.mxu0 0
      %1446 = vmatpush1.bf16.msra.mxu0 %v1432
      %1447 = vmatprep.subr.bf16.mxu0 0
      %1448 = vmatpush1.bf16.msra.mxu0 0
      %1449 = vmatprep.subr.bf16.mxu0 0
      %1450 = vmatpush1.bf16.msra.mxu0 0
      %1451 = vmatprep.subr.bf16.mxu0 0
      %1452 = vmatpush1.bf16.msra.mxu0 0
      %1453 = vmatprep.subr.bf16.mxu0 0
      %1454 = vmatpush1.bf16.msra.mxu0 0
      %1455 = vmatprep.subr.bf16.mxu0 0
      %1456 = vmatpush1.bf16.msra.mxu0 0
      %1457 = vmatprep.subr.bf16.mxu0 0
      %1458 = vmatpush1.bf16.msra.mxu0 0
      %1459 = vmatprep.subr.bf16.mxu0 0
      %1460 = vmatpush1.bf16.msra.mxu0 0
      %1461 = vmatprep.subr.bf16.mxu0 0
      %1462 = vmatpush1.bf16.msra.mxu0 0
      %1463 = vmatprep.subr.bf16.mxu0 0
      %1464 = vmatpush1.bf16.msra.mxu0 0
      %1465 = vmatprep.subr.bf16.mxu0 0
      %1466 = vmatpush1.bf16.msra.mxu0 0
      %1467 = vmatprep.subr.bf16.mxu0 0
      %1468 = vmatpush1.bf16.msra.mxu0 0
      %1469 = vmatprep.subr.bf16.mxu0 0
      %1470 = vmatpush1.bf16.msra.mxu0 0
      %1471 = vmatprep.subr.bf16.mxu0 0
      %1472 = vmatpush1.bf16.msra.mxu0 0
      %1473 = vmatprep.subr.bf16.mxu0 0
      %1474 = vmatpush1.bf16.msra.mxu0 0
      %1475 = vmatprep.subr.bf16.mxu0 0
      %1476 = vmatpush1.bf16.msra.mxu0 0
      %1477 = vmatprep.mubr.bf16.mxu0 0
      %1478 = vmatmul.mubr.bf16.gmra.mrb[0].mxu0 %v1443
      %v1479 = vpop.f32.mrb[0].mxu0
      %v1480 = vadd.f32 0.0, %v1479
      %v1481 = vpop.f32.mrb[0].mxu0
      %v1482 = vpop.f32.mrb[0].mxu0
      %v1483 = vadd.f32 0.0, %v1482
      %v1484 = vpop.f32.mrb[0].mxu0
      %1485 = vdwg.mxu0
      %v1486 = vadd.f32 %v1224, %v1480
      %v1487 = vadd.f32 %v1225, %v1483
      %v1488 = vld [vmem:[%s165] sm:$0x3]
      %v1489 = vld [vmem:[%s165 + $0x2] sm:$0x3]
      %v1490 = vld [vmem:[%s165 + $0x4] sm:$0x3]
      %v1491 = vld [vmem:[%s165 + $0x6] sm:$0x3]
      %v1492 = vld [vmem:[%s165 + $0x8] sm:$0x3]
      %v1493 = vld [vmem:[%s165 + $0xa] sm:$0x3]
      %v1494 = vld [vmem:[%s165 + $0xc] sm:$0x3]
      %v1495 = vld [vmem:[%s165 + $0xe] sm:$0x3]
      %v1496 = vld [vmem:[%s165 + $0x10] sm:$0x3]
      %v1497 = vld [vmem:[%s165 + $0x12] sm:$0x3]
      %v1498 = vld [vmem:[%s165 + $0x14] sm:$0x3]
      %v1499 = vld [vmem:[%s165 + $0x16] sm:$0x3]
      %v1500 = vld [vmem:[%s165 + $0x18] sm:$0x3]
      %v1501 = vld [vmem:[%s165 + $0x1a] sm:$0x3]
      %v1502 = vld [vmem:[%s165 + $0x1c] sm:$0x3]
      %v1503 = vld [vmem:[%s165 + $0x1e] sm:$0x3]
      %v1505 = vshrl.u32 %v1488, 16
      %v1507 = vrot.slane %v1505, 6
      %v1508 = vshll.u32 %v1488, 16
      %v1510 = vrot.slane %v1508, 7
      %v1511 = vor.u32 %v1507, %v1510
      %v1512 = vrot.slane %v1511, 2
      %v1514 = vshrl.u32 %v1489, 16
      %v1516 = vrot.slane %v1514, 6
      %v1517 = vshll.u32 %v1489, 16
      %v1519 = vrot.slane %v1517, 7
      %v1520 = vor.u32 %v1516, %v1519
      %v1521 = vrot.slane %v1520, 2
      %v1523 = vshrl.u32 %v1490, 16
      %v1525 = vrot.slane %v1523, 6
      %v1526 = vshll.u32 %v1490, 16
      %v1528 = vrot.slane %v1526, 7
      %v1529 = vor.u32 %v1525, %v1528
      %v1530 = vrot.slane %v1529, 2
      %v1532 = vshrl.u32 %v1491, 16
      %v1534 = vrot.slane %v1532, 6
      %v1535 = vshll.u32 %v1491, 16
      %v1537 = vrot.slane %v1535, 7
      %v1538 = vor.u32 %v1534, %v1537
      %v1539 = vrot.slane %v1538, 2
      %v1541 = vshrl.u32 %v1492, 16
      %v1543 = vrot.slane %v1541, 6
      %v1544 = vshll.u32 %v1492, 16
      %v1546 = vrot.slane %v1544, 7
      %v1547 = vor.u32 %v1543, %v1546
      %v1548 = vrot.slane %v1547, 2
      %v1550 = vshrl.u32 %v1493, 16
      %v1552 = vrot.slane %v1550, 6
      %v1553 = vshll.u32 %v1493, 16
      %v1555 = vrot.slane %v1553, 7
      %v1556 = vor.u32 %v1552, %v1555
      %v1557 = vrot.slane %v1556, 2
      %v1559 = vshrl.u32 %v1494, 16
      %v1561 = vrot.slane %v1559, 6
      %v1562 = vshll.u32 %v1494, 16
      %v1564 = vrot.slane %v1562, 7
      %v1565 = vor.u32 %v1561, %v1564
      %v1566 = vrot.slane %v1565, 2
      %v1568 = vshrl.u32 %v1495, 16
      %v1570 = vrot.slane %v1568, 6
      %v1571 = vshll.u32 %v1495, 16
      %v1573 = vrot.slane %v1571, 7
      %v1574 = vor.u32 %v1570, %v1573
      %v1575 = vrot.slane %v1574, 2
      %v1577 = vshrl.u32 %v1496, 16
      %v1579 = vrot.slane %v1577, 6
      %v1580 = vshll.u32 %v1496, 16
      %v1582 = vrot.slane %v1580, 7
      %v1583 = vor.u32 %v1579, %v1582
      %v1584 = vrot.slane %v1583, 2
      %v1586 = vshrl.u32 %v1497, 16
      %v1588 = vrot.slane %v1586, 6
      %v1589 = vshll.u32 %v1497, 16
      %v1591 = vrot.slane %v1589, 7
      %v1592 = vor.u32 %v1588, %v1591
      %v1593 = vrot.slane %v1592, 2
      %v1595 = vshrl.u32 %v1498, 16
      %v1597 = vrot.slane %v1595, 6
      %v1598 = vshll.u32 %v1498, 16
      %v1600 = vrot.slane %v1598, 7
      %v1601 = vor.u32 %v1597, %v1600
      %v1602 = vrot.slane %v1601, 2
      %v1604 = vshrl.u32 %v1499, 16
      %v1606 = vrot.slane %v1604, 6
      %v1607 = vshll.u32 %v1499, 16
      %v1609 = vrot.slane %v1607, 7
      %v1610 = vor.u32 %v1606, %v1609
      %v1611 = vrot.slane %v1610, 2
      %v1613 = vshrl.u32 %v1500, 16
      %v1615 = vrot.slane %v1613, 6
      %v1616 = vshll.u32 %v1500, 16
      %v1618 = vrot.slane %v1616, 7
      %v1619 = vor.u32 %v1615, %v1618
      %v1620 = vrot.slane %v1619, 2
      %v1622 = vshrl.u32 %v1501, 16
      %v1624 = vrot.slane %v1622, 6
      %v1625 = vshll.u32 %v1501, 16
      %v1627 = vrot.slane %v1625, 7
      %v1628 = vor.u32 %v1624, %v1627
      %v1629 = vrot.slane %v1628, 2
      %v1631 = vshrl.u32 %v1502, 16
      %v1633 = vrot.slane %v1631, 6
      %v1634 = vshll.u32 %v1502, 16
      %v1636 = vrot.slane %v1634, 7
      %v1637 = vor.u32 %v1633, %v1636
      %v1638 = vrot.slane %v1637, 2
      %v1640 = vshrl.u32 %v1503, 16
      %v1642 = vrot.slane %v1640, 6
      %v1643 = vshll.u32 %v1503, 16
      %v1645 = vrot.slane %v1643, 7
      %v1646 = vor.u32 %v1642, %v1645
      %v1647 = vrot.slane %v1646, 2
      %v1664 = vcombine.low %v1512, %v1530
      %v1666 = vunpack.c.l.s4 1934713408
      %v1667 = vunpack.c.0.s8 %v1666
      %v1668 = vlaneseq
      %v1669 = vshrl.u32 %v1668, 7
      %v1670 = vsub.s32 %v1667, %v1669
      %v1671 = vrot.slane %v1664, %v1670
      %v1672 = vcombine.low %v1521, %v1539
      %v1674 = vunpack.c.l.s4 1934713408
      %v1675 = vunpack.c.0.s8 %v1674
      %v1676 = vlaneseq
      %v1677 = vshrl.u32 %v1676, 7
      %v1678 = vsub.s32 %v1675, %v1677
      %v1679 = vrot.slane %v1672, %v1678
      %v1680 = vcombine.low %v1548, %v1566
      %v1682 = vunpack.c.l.s4 1934713408
      %v1683 = vunpack.c.0.s8 %v1682
      %v1684 = vlaneseq
      %v1685 = vshrl.u32 %v1684, 7
      %v1686 = vsub.s32 %v1683, %v1685
      %v1687 = vrot.slane %v1680, %v1686
      %v1688 = vcombine.low %v1557, %v1575
      %v1690 = vunpack.c.l.s4 1934713408
      %v1691 = vunpack.c.0.s8 %v1690
      %v1692 = vlaneseq
      %v1693 = vshrl.u32 %v1692, 7
      %v1694 = vsub.s32 %v1691, %v1693
      %v1695 = vrot.slane %v1688, %v1694
      %v1696 = vcombine.low %v1584, %v1602
      %v1698 = vunpack.c.l.s4 1934713408
      %v1699 = vunpack.c.0.s8 %v1698
      %v1700 = vlaneseq
      %v1701 = vshrl.u32 %v1700, 7
      %v1702 = vsub.s32 %v1699, %v1701
      %v1703 = vrot.slane %v1696, %v1702
      %v1704 = vcombine.low %v1593, %v1611
      %v1706 = vunpack.c.l.s4 1934713408
      %v1707 = vunpack.c.0.s8 %v1706
      %v1708 = vlaneseq
      %v1709 = vshrl.u32 %v1708, 7
      %v1710 = vsub.s32 %v1707, %v1709
      %v1711 = vrot.slane %v1704, %v1710
      %v1712 = vcombine.low %v1620, %v1638
      %v1714 = vunpack.c.l.s4 1934713408
      %v1715 = vunpack.c.0.s8 %v1714
      %v1716 = vlaneseq
      %v1717 = vshrl.u32 %v1716, 7
      %v1718 = vsub.s32 %v1715, %v1717
      %v1719 = vrot.slane %v1712, %v1718
      %v1720 = vcombine.low %v1629, %v1647
      %v1722 = vunpack.c.l.s4 1934713408
      %v1723 = vunpack.c.0.s8 %v1722
      %v1724 = vlaneseq
      %v1725 = vshrl.u32 %v1724, 7
      %v1726 = vsub.s32 %v1723, %v1725
      %v1727 = vrot.slane %v1720, %v1726
      %v1730 = vpack.i.b16 %v1679, %v1671
      %v1731 = vshrl.u32 %v1671, 16
      %v1732 = vshrl.u32 %v1679, 16
      %v1733 = vpack.i.b16 %v1732, %v1731
      %v1736 = vpack.i.b16 %v1695, %v1687
      %v1737 = vshrl.u32 %v1687, 16
      %v1738 = vshrl.u32 %v1695, 16
      %v1739 = vpack.i.b16 %v1738, %v1737
      %v1742 = vpack.i.b16 %v1711, %v1703
      %v1743 = vshrl.u32 %v1703, 16
      %v1744 = vshrl.u32 %v1711, 16
      %v1745 = vpack.i.b16 %v1744, %v1743
      %v1748 = vpack.i.b16 %v1727, %v1719
      %v1749 = vshrl.u32 %v1719, 16
      %v1750 = vshrl.u32 %v1727, 16
      %v1751 = vpack.i.b16 %v1750, %v1749
      %v1752 = vcombine.low %v1730, %v1736
      %v1753 = vcombine.low %v1742, %v1748
      %v1755 = vunpack.c.l.s4 1983009808
      %v1756 = vunpack.c.0.s8 %v1755
      %v1757 = vlaneseq
      %v1758 = vshrl.u32 %v1757, 7
      %v1759 = vsub.s32 %v1756, %v1758
      %v1760 = vrot.slane %v1752, %v1759
      %v1762 = vunpack.c.l.s4 1983009808
      %v1763 = vunpack.c.0.s8 %v1762
      %v1764 = vlaneseq
      %v1765 = vshrl.u32 %v1764, 7
      %v1766 = vsub.s32 %v1763, %v1765
      %v1767 = vrot.slane %v1753, %v1766
      %v1768 = vcombine.low %v1760, %v1767
      %v1769 = vcombine.low %v1733, %v1739
      %v1770 = vcombine.low %v1745, %v1751
      %v1772 = vunpack.c.l.s4 1983009808
      %v1773 = vunpack.c.0.s8 %v1772
      %v1774 = vlaneseq
      %v1775 = vshrl.u32 %v1774, 7
      %v1776 = vsub.s32 %v1773, %v1775
      %v1777 = vrot.slane %v1769, %v1776
      %v1779 = vunpack.c.l.s4 1983009808
      %v1780 = vunpack.c.0.s8 %v1779
      %v1781 = vlaneseq
      %v1782 = vshrl.u32 %v1781, 7
      %v1783 = vsub.s32 %v1780, %v1782
      %v1784 = vrot.slane %v1770, %v1783
      %v1785 = vcombine.low %v1777, %v1784
      %1786 = vrot.lane.b32.xlu0 %v1785, 2
      %v1787 = vpop.permute.xlu0 %1786
      %v1790 = vsel %vm312, %v1768, %v1787
      %s1792 = scalar_lea.vmem %s1, 48
      %v1793 = vld [vmem:[%s1792] sm:$0xf]
      %v1794 = vld [vmem:[%s1792 + $0x4] sm:$0xf]
      %v1797 = vunpack.c.l.b16 %v1793
      %v1798 = vunpack.c.l.b16 %v1794
      %v1799 = vpack.c.b16 %v1798, %v1797
      %v1801 = vsel %vm472, %v1799, 0
      %1803 = vmatprep.subr.bf16.mxu0 0
      %1804 = vmatpush1.bf16.msra.mxu0 %v1790
      %1805 = vmatprep.subr.bf16.mxu0 0
      %1806 = vmatpush1.bf16.msra.mxu0 0
      %1807 = vmatprep.subr.bf16.mxu0 0
      %1808 = vmatpush1.bf16.msra.mxu0 0
      %1809 = vmatprep.subr.bf16.mxu0 0
      %1810 = vmatpush1.bf16.msra.mxu0 0
      %1811 = vmatprep.subr.bf16.mxu0 0
      %1812 = vmatpush1.bf16.msra.mxu0 0
      %1813 = vmatprep.subr.bf16.mxu0 0
      %1814 = vmatpush1.bf16.msra.mxu0 0
      %1815 = vmatprep.subr.bf16.mxu0 0
      %1816 = vmatpush1.bf16.msra.mxu0 0
      %1817 = vmatprep.subr.bf16.mxu0 0
      %1818 = vmatpush1.bf16.msra.mxu0 0
      %1819 = vmatprep.subr.bf16.mxu0 0
      %1820 = vmatpush1.bf16.msra.mxu0 0
      %1821 = vmatprep.subr.bf16.mxu0 0
      %1822 = vmatpush1.bf16.msra.mxu0 0
      %1823 = vmatprep.subr.bf16.mxu0 0
      %1824 = vmatpush1.bf16.msra.mxu0 0
      %1825 = vmatprep.subr.bf16.mxu0 0
      %1826 = vmatpush1.bf16.msra.mxu0 0
      %1827 = vmatprep.subr.bf16.mxu0 0
      %1828 = vmatpush1.bf16.msra.mxu0 0
      %1829 = vmatprep.subr.bf16.mxu0 0
      %1830 = vmatpush1.bf16.msra.mxu0 0
      %1831 = vmatprep.subr.bf16.mxu0 0
      %1832 = vmatpush1.bf16.msra.mxu0 0
      %1833 = vmatprep.subr.bf16.mxu0 0
      %1834 = vmatpush1.bf16.msra.mxu0 0
      %1835 = vmatprep.mubr.bf16.mxu0 0
      %1836 = vmatmul.mubr.bf16.gmra.mrb[0].mxu0 %v1801
      %v1837 = vpop.f32.mrb[0].mxu0
      %v1838 = vadd.f32 0.0, %v1837
      %v1839 = vpop.f32.mrb[0].mxu0
      %v1840 = vpop.f32.mrb[0].mxu0
      %v1841 = vadd.f32 0.0, %v1840
      %v1842 = vpop.f32.mrb[0].mxu0
      %1843 = vdwg.mxu0
      %v1844 = vadd.f32 %v1486, %v1838
      %v1845 = vadd.f32 %v1487, %v1841
      %v1846 = vld [vmem:[%s319] sm:$0x3]
      %v1847 = vld [vmem:[%s319 + $0x2] sm:$0x3]
      %v1848 = vld [vmem:[%s319 + $0x4] sm:$0x3]
      %v1849 = vld [vmem:[%s319 + $0x6] sm:$0x3]
      %v1850 = vld [vmem:[%s319 + $0x8] sm:$0x3]
      %v1851 = vld [vmem:[%s319 + $0xa] sm:$0x3]
      %v1852 = vld [vmem:[%s319 + $0xc] sm:$0x3]
      %v1853 = vld [vmem:[%s319 + $0xe] sm:$0x3]
      %v1854 = vld [vmem:[%s319 + $0x10] sm:$0x3]
      %v1855 = vld [vmem:[%s319 + $0x12] sm:$0x3]
      %v1856 = vld [vmem:[%s319 + $0x14] sm:$0x3]
      %v1857 = vld [vmem:[%s319 + $0x16] sm:$0x3]
      %v1858 = vld [vmem:[%s319 + $0x18] sm:$0x3]
      %v1859 = vld [vmem:[%s319 + $0x1a] sm:$0x3]
      %v1860 = vld [vmem:[%s319 + $0x1c] sm:$0x3]
      %v1861 = vld [vmem:[%s319 + $0x1e] sm:$0x3]
      %v1863 = vshrl.u32 %v1846, 16
      %v1865 = vrot.slane %v1863, 6
      %v1866 = vshll.u32 %v1846, 16
      %v1868 = vrot.slane %v1866, 7
      %v1869 = vor.u32 %v1865, %v1868
      %v1870 = vrot.slane %v1869, 2
      %v1872 = vshrl.u32 %v1847, 16
      %v1874 = vrot.slane %v1872, 6
      %v1875 = vshll.u32 %v1847, 16
      %v1877 = vrot.slane %v1875, 7
      %v1878 = vor.u32 %v1874, %v1877
      %v1879 = vrot.slane %v1878, 2
      %v1881 = vshrl.u32 %v1848, 16
      %v1883 = vrot.slane %v1881, 6
      %v1884 = vshll.u32 %v1848, 16
      %v1886 = vrot.slane %v1884, 7
      %v1887 = vor.u32 %v1883, %v1886
      %v1888 = vrot.slane %v1887, 2
      %v1890 = vshrl.u32 %v1849, 16
      %v1892 = vrot.slane %v1890, 6
      %v1893 = vshll.u32 %v1849, 16
      %v1895 = vrot.slane %v1893, 7
      %v1896 = vor.u32 %v1892, %v1895
      %v1897 = vrot.slane %v1896, 2
      %v1899 = vshrl.u32 %v1850, 16
      %v1901 = vrot.slane %v1899, 6
      %v1902 = vshll.u32 %v1850, 16
      %v1904 = vrot.slane %v1902, 7
      %v1905 = vor.u32 %v1901, %v1904
      %v1906 = vrot.slane %v1905, 2
      %v1908 = vshrl.u32 %v1851, 16
      %v1910 = vrot.slane %v1908, 6
      %v1911 = vshll.u32 %v1851, 16
      %v1913 = vrot.slane %v1911, 7
      %v1914 = vor.u32 %v1910, %v1913
      %v1915 = vrot.slane %v1914, 2
      %v1917 = vshrl.u32 %v1852, 16
      %v1919 = vrot.slane %v1917, 6
      %v1920 = vshll.u32 %v1852, 16
      %v1922 = vrot.slane %v1920, 7
      %v1923 = vor.u32 %v1919, %v1922
      %v1924 = vrot.slane %v1923, 2
      %v1926 = vshrl.u32 %v1853, 16
      %v1928 = vrot.slane %v1926, 6
      %v1929 = vshll.u32 %v1853, 16
      %v1931 = vrot.slane %v1929, 7
      %v1932 = vor.u32 %v1928, %v1931
      %v1933 = vrot.slane %v1932, 2
      %v1935 = vshrl.u32 %v1854, 16
      %v1937 = vrot.slane %v1935, 6
      %v1938 = vshll.u32 %v1854, 16
      %v1940 = vrot.slane %v1938, 7
      %v1941 = vor.u32 %v1937, %v1940
      %v1942 = vrot.slane %v1941, 2
      %v1944 = vshrl.u32 %v1855, 16
      %v1946 = vrot.slane %v1944, 6
      %v1947 = vshll.u32 %v1855, 16
      %v1949 = vrot.slane %v1947, 7
      %v1950 = vor.u32 %v1946, %v1949
      %v1951 = vrot.slane %v1950, 2
      %v1953 = vshrl.u32 %v1856, 16
      %v1955 = vrot.slane %v1953, 6
      %v1956 = vshll.u32 %v1856, 16
      %v1958 = vrot.slane %v1956, 7
      %v1959 = vor.u32 %v1955, %v1958
      %v1960 = vrot.slane %v1959, 2
      %v1962 = vshrl.u32 %v1857, 16
      %v1964 = vrot.slane %v1962, 6
      %v1965 = vshll.u32 %v1857, 16
      %v1967 = vrot.slane %v1965, 7
      %v1968 = vor.u32 %v1964, %v1967
      %v1969 = vrot.slane %v1968, 2
      %v1971 = vshrl.u32 %v1858, 16
      %v1973 = vrot.slane %v1971, 6
      %v1974 = vshll.u32 %v1858, 16
      %v1976 = vrot.slane %v1974, 7
      %v1977 = vor.u32 %v1973, %v1976
      %v1978 = vrot.slane %v1977, 2
      %v1980 = vshrl.u32 %v1859, 16
      %v1982 = vrot.slane %v1980, 6
      %v1983 = vshll.u32 %v1859, 16
      %v1985 = vrot.slane %v1983, 7
      %v1986 = vor.u32 %v1982, %v1985
      %v1987 = vrot.slane %v1986, 2
      %v1989 = vshrl.u32 %v1860, 16
      %v1991 = vrot.slane %v1989, 6
      %v1992 = vshll.u32 %v1860, 16
      %v1994 = vrot.slane %v1992, 7
      %v1995 = vor.u32 %v1991, %v1994
      %v1996 = vrot.slane %v1995, 2
      %v1998 = vshrl.u32 %v1861, 16
      %v2000 = vrot.slane %v1998, 6
      %v2001 = vshll.u32 %v1861, 16
      %v2003 = vrot.slane %v2001, 7
      %v2004 = vor.u32 %v2000, %v2003
      %v2005 = vrot.slane %v2004, 2
      %v2022 = vcombine.low %v1870, %v1888
      %v2024 = vunpack.c.l.s4 1934713408
      %v2025 = vunpack.c.0.s8 %v2024
      %v2026 = vlaneseq
      %v2027 = vshrl.u32 %v2026, 7
      %v2028 = vsub.s32 %v2025, %v2027
      %v2029 = vrot.slane %v2022, %v2028
      %v2030 = vcombine.low %v1879, %v1897
      %v2032 = vunpack.c.l.s4 1934713408
      %v2033 = vunpack.c.0.s8 %v2032
      %v2034 = vlaneseq
      %v2035 = vshrl.u32 %v2034, 7
      %v2036 = vsub.s32 %v2033, %v2035
      %v2037 = vrot.slane %v2030, %v2036
      %v2038 = vcombine.low %v1906, %v1924
      %v2040 = vunpack.c.l.s4 1934713408
      %v2041 = vunpack.c.0.s8 %v2040
      %v2042 = vlaneseq
      %v2043 = vshrl.u32 %v2042, 7
      %v2044 = vsub.s32 %v2041, %v2043
      %v2045 = vrot.slane %v2038, %v2044
      %v2046 = vcombine.low %v1915, %v1933
      %v2048 = vunpack.c.l.s4 1934713408
      %v2049 = vunpack.c.0.s8 %v2048
      %v2050 = vlaneseq
      %v2051 = vshrl.u32 %v2050, 7
      %v2052 = vsub.s32 %v2049, %v2051
      %v2053 = vrot.slane %v2046, %v2052
      %v2054 = vcombine.low %v1942, %v1960
      %v2056 = vunpack.c.l.s4 1934713408
      %v2057 = vunpack.c.0.s8 %v2056
      %v2058 = vlaneseq
      %v2059 = vshrl.u32 %v2058, 7
      %v2060 = vsub.s32 %v2057, %v2059
      %v2061 = vrot.slane %v2054, %v2060
      %v2062 = vcombine.low %v1951, %v1969
      %v2064 = vunpack.c.l.s4 1934713408
      %v2065 = vunpack.c.0.s8 %v2064
      %v2066 = vlaneseq
      %v2067 = vshrl.u32 %v2066, 7
      %v2068 = vsub.s32 %v2065, %v2067
      %v2069 = vrot.slane %v2062, %v2068
      %v2070 = vcombine.low %v1978, %v1996
      %v2072 = vunpack.c.l.s4 1934713408
      %v2073 = vunpack.c.0.s8 %v2072
      %v2074 = vlaneseq
      %v2075 = vshrl.u32 %v2074, 7
      %v2076 = vsub.s32 %v2073, %v2075
      %v2077 = vrot.slane %v2070, %v2076
      %v2078 = vcombine.low %v1987, %v2005
      %v2080 = vunpack.c.l.s4 1934713408
      %v2081 = vunpack.c.0.s8 %v2080
      %v2082 = vlaneseq
      %v2083 = vshrl.u32 %v2082, 7
      %v2084 = vsub.s32 %v2081, %v2083
      %v2085 = vrot.slane %v2078, %v2084
      %v2088 = vpack.i.b16 %v2037, %v2029
      %v2089 = vshrl.u32 %v2029, 16
      %v2090 = vshrl.u32 %v2037, 16
      %v2091 = vpack.i.b16 %v2090, %v2089
      %v2094 = vpack.i.b16 %v2053, %v2045
      %v2095 = vshrl.u32 %v2045, 16
      %v2096 = vshrl.u32 %v2053, 16
      %v2097 = vpack.i.b16 %v2096, %v2095
      %v2100 = vpack.i.b16 %v2069, %v2061
      %v2101 = vshrl.u32 %v2061, 16
      %v2102 = vshrl.u32 %v2069, 16
      %v2103 = vpack.i.b16 %v2102, %v2101
      %v2106 = vpack.i.b16 %v2085, %v2077
      %v2107 = vshrl.u32 %v2077, 16
      %v2108 = vshrl.u32 %v2085, 16
      %v2109 = vpack.i.b16 %v2108, %v2107
      %v2110 = vcombine.low %v2088, %v2094
      %v2111 = vcombine.low %v2100, %v2106
      %v2113 = vunpack.c.l.s4 1983009808
      %v2114 = vunpack.c.0.s8 %v2113
      %v2115 = vlaneseq
      %v2116 = vshrl.u32 %v2115, 7
      %v2117 = vsub.s32 %v2114, %v2116
      %v2118 = vrot.slane %v2110, %v2117
      %v2120 = vunpack.c.l.s4 1983009808
      %v2121 = vunpack.c.0.s8 %v2120
      %v2122 = vlaneseq
      %v2123 = vshrl.u32 %v2122, 7
      %v2124 = vsub.s32 %v2121, %v2123
      %v2125 = vrot.slane %v2111, %v2124
      %v2126 = vcombine.low %v2118, %v2125
      %v2127 = vcombine.low %v2091, %v2097
      %v2128 = vcombine.low %v2103, %v2109
      %v2130 = vunpack.c.l.s4 1983009808
      %v2131 = vunpack.c.0.s8 %v2130
      %v2132 = vlaneseq
      %v2133 = vshrl.u32 %v2132, 7
      %v2134 = vsub.s32 %v2131, %v2133
      %v2135 = vrot.slane %v2127, %v2134
      %v2137 = vunpack.c.l.s4 1983009808
      %v2138 = vunpack.c.0.s8 %v2137
      %v2139 = vlaneseq
      %v2140 = vshrl.u32 %v2139, 7
      %v2141 = vsub.s32 %v2138, %v2140
      %v2142 = vrot.slane %v2128, %v2141
      %v2143 = vcombine.low %v2135, %v2142
      %2144 = vrot.lane.b32.xlu0 %v2143, 2
      %v2145 = vpop.permute.xlu0 %2144
      %v2148 = vsel %vm312, %v2126, %v2145
      %s2150 = scalar_lea.vmem %s1, 56
      %v2151 = vld [vmem:[%s2150] sm:$0xf]
      %v2152 = vld [vmem:[%s2150 + $0x4] sm:$0xf]
      %v2155 = vunpack.c.l.b16 %v2151
      %v2156 = vunpack.c.l.b16 %v2152
      %v2157 = vpack.c.b16 %v2156, %v2155
      %v2159 = vsel %vm472, %v2157, 0
      %2161 = vmatprep.subr.bf16.mxu0 0
      %2162 = vmatpush1.bf16.msra.mxu0 %v2148
      %2163 = vmatprep.subr.bf16.mxu0 0
      %2164 = vmatpush1.bf16.msra.mxu0 0
      %2165 = vmatprep.subr.bf16.mxu0 0
      %2166 = vmatpush1.bf16.msra.mxu0 0
      %2167 = vmatprep.subr.bf16.mxu0 0
      %2168 = vmatpush1.bf16.msra.mxu0 0
      %2169 = vmatprep.subr.bf16.mxu0 0
      %2170 = vmatpush1.bf16.msra.mxu0 0
      %2171 = vmatprep.subr.bf16.mxu0 0
      %2172 = vmatpush1.bf16.msra.mxu0 0
      %2173 = vmatprep.subr.bf16.mxu0 0
      %2174 = vmatpush1.bf16.msra.mxu0 0
      %2175 = vmatprep.subr.bf16.mxu0 0
      %2176 = vmatpush1.bf16.msra.mxu0 0
      %2177 = vmatprep.subr.bf16.mxu0 0
      %2178 = vmatpush1.bf16.msra.mxu0 0
      %2179 = vmatprep.subr.bf16.mxu0 0
      %2180 = vmatpush1.bf16.msra.mxu0 0
      %2181 = vmatprep.subr.bf16.mxu0 0
      %2182 = vmatpush1.bf16.msra.mxu0 0
      %2183 = vmatprep.subr.bf16.mxu0 0
      %2184 = vmatpush1.bf16.msra.mxu0 0
      %2185 = vmatprep.subr.bf16.mxu0 0
      %2186 = vmatpush1.bf16.msra.mxu0 0
      %2187 = vmatprep.subr.bf16.mxu0 0
      %2188 = vmatpush1.bf16.msra.mxu0 0
      %2189 = vmatprep.subr.bf16.mxu0 0
      %2190 = vmatpush1.bf16.msra.mxu0 0
      %2191 = vmatprep.subr.bf16.mxu0 0
      %2192 = vmatpush1.bf16.msra.mxu0 0
      %2193 = vmatprep.mubr.bf16.mxu0 0
      %2194 = vmatmul.mubr.bf16.gmra.mrb[0].mxu0 %v2159
      %v2195 = vpop.f32.mrb[0].mxu0
      %v2196 = vadd.f32 0.0, %v2195
      %v2197 = vpop.f32.mrb[0].mxu0
      %v2198 = vpop.f32.mrb[0].mxu0
      %v2199 = vadd.f32 0.0, %v2198
      %v2200 = vpop.f32.mrb[0].mxu0
      %2201 = vdwg.mxu0
      %v2202 = vadd.f32 %v1844, %v2196
      %v2203 = vadd.f32 %v1845, %v2199
      %v2204 = vld [vmem:[%s165] sm:$0x3]
      %v2205 = vld [vmem:[%s165 + $0x2] sm:$0x3]
      %v2206 = vld [vmem:[%s165 + $0x4] sm:$0x3]
      %v2207 = vld [vmem:[%s165 + $0x6] sm:$0x3]
      %v2208 = vld [vmem:[%s165 + $0x8] sm:$0x3]
      %v2209 = vld [vmem:[%s165 + $0xa] sm:$0x3]
      %v2210 = vld [vmem:[%s165 + $0xc] sm:$0x3]
      %v2211 = vld [vmem:[%s165 + $0xe] sm:$0x3]
      %v2212 = vld [vmem:[%s165 + $0x10] sm:$0x3]
      %v2213 = vld [vmem:[%s165 + $0x12] sm:$0x3]
      %v2214 = vld [vmem:[%s165 + $0x14] sm:$0x3]
      %v2215 = vld [vmem:[%s165 + $0x16] sm:$0x3]
      %v2216 = vld [vmem:[%s165 + $0x18] sm:$0x3]
      %v2217 = vld [vmem:[%s165 + $0x1a] sm:$0x3]
      %v2218 = vld [vmem:[%s165 + $0x1c] sm:$0x3]
      %v2219 = vld [vmem:[%s165 + $0x1e] sm:$0x3]
      %v2221 = vshrl.u32 %v2204, 16
      %v2223 = vrot.slane %v2221, 6
      %v2224 = vshll.u32 %v2204, 16
      %v2226 = vrot.slane %v2224, 7
      %v2227 = vor.u32 %v2223, %v2226
      %v2228 = vrot.slane %v2227, 2
      %v2230 = vshrl.u32 %v2205, 16
      %v2232 = vrot.slane %v2230, 6
      %v2233 = vshll.u32 %v2205, 16
      %v2235 = vrot.slane %v2233, 7
      %v2236 = vor.u32 %v2232, %v2235
      %v2237 = vrot.slane %v2236, 2
      %v2239 = vshrl.u32 %v2206, 16
      %v2241 = vrot.slane %v2239, 6
      %v2242 = vshll.u32 %v2206, 16
      %v2244 = vrot.slane %v2242, 7
      %v2245 = vor.u32 %v2241, %v2244
      %v2246 = vrot.slane %v2245, 2
      %v2248 = vshrl.u32 %v2207, 16
      %v2250 = vrot.slane %v2248, 6
      %v2251 = vshll.u32 %v2207, 16
      %v2253 = vrot.slane %v2251, 7
      %v2254 = vor.u32 %v2250, %v2253
      %v2255 = vrot.slane %v2254, 2
      %v2257 = vshrl.u32 %v2208, 16
      %v2259 = vrot.slane %v2257, 6
      %v2260 = vshll.u32 %v2208, 16
      %v2262 = vrot.slane %v2260, 7
      %v2263 = vor.u32 %v2259, %v2262
      %v2264 = vrot.slane %v2263, 2
      %v2266 = vshrl.u32 %v2209, 16
      %v2268 = vrot.slane %v2266, 6
      %v2269 = vshll.u32 %v2209, 16
      %v2271 = vrot.slane %v2269, 7
      %v2272 = vor.u32 %v2268, %v2271
      %v2273 = vrot.slane %v2272, 2
      %v2275 = vshrl.u32 %v2210, 16
      %v2277 = vrot.slane %v2275, 6
      %v2278 = vshll.u32 %v2210, 16
      %v2280 = vrot.slane %v2278, 7
      %v2281 = vor.u32 %v2277, %v2280
      %v2282 = vrot.slane %v2281, 2
      %v2284 = vshrl.u32 %v2211, 16
      %v2286 = vrot.slane %v2284, 6
      %v2287 = vshll.u32 %v2211, 16
      %v2289 = vrot.slane %v2287, 7
      %v2290 = vor.u32 %v2286, %v2289
      %v2291 = vrot.slane %v2290, 2
      %v2293 = vshrl.u32 %v2212, 16
      %v2295 = vrot.slane %v2293, 6
      %v2296 = vshll.u32 %v2212, 16
      %v2298 = vrot.slane %v2296, 7
      %v2299 = vor.u32 %v2295, %v2298
      %v2300 = vrot.slane %v2299, 2
      %v2302 = vshrl.u32 %v2213, 16
      %v2304 = vrot.slane %v2302, 6
      %v2305 = vshll.u32 %v2213, 16
      %v2307 = vrot.slane %v2305, 7
      %v2308 = vor.u32 %v2304, %v2307
      %v2309 = vrot.slane %v2308, 2
      %v2311 = vshrl.u32 %v2214, 16
      %v2313 = vrot.slane %v2311, 6
      %v2314 = vshll.u32 %v2214, 16
      %v2316 = vrot.slane %v2314, 7
      %v2317 = vor.u32 %v2313, %v2316
      %v2318 = vrot.slane %v2317, 2
      %v2320 = vshrl.u32 %v2215, 16
      %v2322 = vrot.slane %v2320, 6
      %v2323 = vshll.u32 %v2215, 16
      %v2325 = vrot.slane %v2323, 7
      %v2326 = vor.u32 %v2322, %v2325
      %v2327 = vrot.slane %v2326, 2
      %v2329 = vshrl.u32 %v2216, 16
      %v2331 = vrot.slane %v2329, 6
      %v2332 = vshll.u32 %v2216, 16
      %v2334 = vrot.slane %v2332, 7
      %v2335 = vor.u32 %v2331, %v2334
      %v2336 = vrot.slane %v2335, 2
      %v2338 = vshrl.u32 %v2217, 16
      %v2340 = vrot.slane %v2338, 6
      %v2341 = vshll.u32 %v2217, 16
      %v2343 = vrot.slane %v2341, 7
      %v2344 = vor.u32 %v2340, %v2343
      %v2345 = vrot.slane %v2344, 2
      %v2347 = vshrl.u32 %v2218, 16
      %v2349 = vrot.slane %v2347, 6
      %v2350 = vshll.u32 %v2218, 16
      %v2352 = vrot.slane %v2350, 7
      %v2353 = vor.u32 %v2349, %v2352
      %v2354 = vrot.slane %v2353, 2
      %v2356 = vshrl.u32 %v2219, 16
      %v2358 = vrot.slane %v2356, 6
      %v2359 = vshll.u32 %v2219, 16
      %v2361 = vrot.slane %v2359, 7
      %v2362 = vor.u32 %v2358, %v2361
      %v2363 = vrot.slane %v2362, 2
      %2364 = vrot.lane.b32.xlu0 %v2228, 127
      %v2365 = vpop.permute.xlu0 %2364
      %2366 = vrot.lane.b32.xlu0 %v2237, 127
      %v2367 = vpop.permute.xlu0 %2366
      %2368 = vrot.lane.b32.xlu0 %v2246, 127
      %v2369 = vpop.permute.xlu0 %2368
      %2370 = vrot.lane.b32.xlu0 %v2255, 127
      %v2371 = vpop.permute.xlu0 %2370
      %2372 = vrot.lane.b32.xlu0 %v2264, 127
      %v2373 = vpop.permute.xlu0 %2372
      %2374 = vrot.lane.b32.xlu0 %v2273, 127
      %v2375 = vpop.permute.xlu0 %2374
      %2376 = vrot.lane.b32.xlu0 %v2282, 127
      %v2377 = vpop.permute.xlu0 %2376
      %2378 = vrot.lane.b32.xlu0 %v2291, 127
      %v2379 = vpop.permute.xlu0 %2378
      %2380 = vrot.lane.b32.xlu0 %v2300, 127
      %v2381 = vpop.permute.xlu0 %2380
      %2382 = vrot.lane.b32.xlu0 %v2309, 127
      %v2383 = vpop.permute.xlu0 %2382
      %2384 = vrot.lane.b32.xlu0 %v2318, 127
      %v2385 = vpop.permute.xlu0 %2384
      %2386 = vrot.lane.b32.xlu0 %v2327, 127
      %v2387 = vpop.permute.xlu0 %2386
      %2388 = vrot.lane.b32.xlu0 %v2336, 127
      %v2389 = vpop.permute.xlu0 %2388
      %2390 = vrot.lane.b32.xlu0 %v2345, 127
      %v2391 = vpop.permute.xlu0 %2390
      %2392 = vrot.lane.b32.xlu0 %v2354, 127
      %v2393 = vpop.permute.xlu0 %2392
      %2394 = vrot.lane.b32.xlu0 %v2363, 127
      %v2395 = vpop.permute.xlu0 %2394
      %v2412 = vcombine.low %v2365, %v2369
      %v2414 = vunpack.c.l.s4 1934713408
      %v2415 = vunpack.c.0.s8 %v2414
      %v2416 = vlaneseq
      %v2417 = vshrl.u32 %v2416, 7
      %v2418 = vsub.s32 %v2415, %v2417
      %v2419 = vrot.slane %v2412, %v2418
      %v2420 = vcombine.low %v2367, %v2371
      %v2422 = vunpack.c.l.s4 1934713408
      %v2423 = vunpack.c.0.s8 %v2422
      %v2424 = vlaneseq
      %v2425 = vshrl.u32 %v2424, 7
      %v2426 = vsub.s32 %v2423, %v2425
      %v2427 = vrot.slane %v2420, %v2426
      %v2428 = vcombine.low %v2373, %v2377
      %v2430 = vunpack.c.l.s4 1934713408
      %v2431 = vunpack.c.0.s8 %v2430
      %v2432 = vlaneseq
      %v2433 = vshrl.u32 %v2432, 7
      %v2434 = vsub.s32 %v2431, %v2433
      %v2435 = vrot.slane %v2428, %v2434
      %v2436 = vcombine.low %v2375, %v2379
      %v2438 = vunpack.c.l.s4 1934713408
      %v2439 = vunpack.c.0.s8 %v2438
      %v2440 = vlaneseq
      %v2441 = vshrl.u32 %v2440, 7
      %v2442 = vsub.s32 %v2439, %v2441
      %v2443 = vrot.slane %v2436, %v2442
      %v2444 = vcombine.low %v2381, %v2385
      %v2446 = vunpack.c.l.s4 1934713408
      %v2447 = vunpack.c.0.s8 %v2446
      %v2448 = vlaneseq
      %v2449 = vshrl.u32 %v2448, 7
      %v2450 = vsub.s32 %v2447, %v2449
      %v2451 = vrot.slane %v2444, %v2450
      %v2452 = vcombine.low %v2383, %v2387
      %v2454 = vunpack.c.l.s4 1934713408
      %v2455 = vunpack.c.0.s8 %v2454
      %v2456 = vlaneseq
      %v2457 = vshrl.u32 %v2456, 7
      %v2458 = vsub.s32 %v2455, %v2457
      %v2459 = vrot.slane %v2452, %v2458
      %v2460 = vcombine.low %v2389, %v2393
      %v2462 = vunpack.c.l.s4 1934713408
      %v2463 = vunpack.c.0.s8 %v2462
      %v2464 = vlaneseq
      %v2465 = vshrl.u32 %v2464, 7
      %v2466 = vsub.s32 %v2463, %v2465
      %v2467 = vrot.slane %v2460, %v2466
      %v2468 = vcombine.low %v2391, %v2395
      %v2470 = vunpack.c.l.s4 1934713408
      %v2471 = vunpack.c.0.s8 %v2470
      %v2472 = vlaneseq
      %v2473 = vshrl.u32 %v2472, 7
      %v2474 = vsub.s32 %v2471, %v2473
      %v2475 = vrot.slane %v2468, %v2474
      %v2478 = vpack.i.b16 %v2427, %v2419
      %v2479 = vshrl.u32 %v2419, 16
      %v2480 = vshrl.u32 %v2427, 16
      %v2481 = vpack.i.b16 %v2480, %v2479
      %v2484 = vpack.i.b16 %v2443, %v2435
      %v2485 = vshrl.u32 %v2435, 16
      %v2486 = vshrl.u32 %v2443, 16
      %v2487 = vpack.i.b16 %v2486, %v2485
      %v2490 = vpack.i.b16 %v2459, %v2451
      %v2491 = vshrl.u32 %v2451, 16
      %v2492 = vshrl.u32 %v2459, 16
      %v2493 = vpack.i.b16 %v2492, %v2491
      %v2496 = vpack.i.b16 %v2475, %v2467
      %v2497 = vshrl.u32 %v2467, 16
      %v2498 = vshrl.u32 %v2475, 16
      %v2499 = vpack.i.b16 %v2498, %v2497
      %v2500 = vcombine.low %v2478, %v2484
      %v2501 = vcombine.low %v2490, %v2496
      %v2503 = vunpack.c.l.s4 1983009808
      %v2504 = vunpack.c.0.s8 %v2503
      %v2505 = vlaneseq
      %v2506 = vshrl.u32 %v2505, 7
      %v2507 = vsub.s32 %v2504, %v2506
      %v2508 = vrot.slane %v2500, %v2507
      %v2510 = vunpack.c.l.s4 1983009808
      %v2511 = vunpack.c.0.s8 %v2510
      %v2512 = vlaneseq
      %v2513 = vshrl.u32 %v2512, 7
      %v2514 = vsub.s32 %v2511, %v2513
      %v2515 = vrot.slane %v2501, %v2514
      %v2516 = vcombine.low %v2508, %v2515
      %v2517 = vcombine.low %v2481, %v2487
      %v2518 = vcombine.low %v2493, %v2499
      %v2520 = vunpack.c.l.s4 1983009808
      %v2521 = vunpack.c.0.s8 %v2520
      %v2522 = vlaneseq
      %v2523 = vshrl.u32 %v2522, 7
      %v2524 = vsub.s32 %v2521, %v2523
      %v2525 = vrot.slane %v2517, %v2524
      %v2527 = vunpack.c.l.s4 1983009808
      %v2528 = vunpack.c.0.s8 %v2527
      %v2529 = vlaneseq
      %v2530 = vshrl.u32 %v2529, 7
      %v2531 = vsub.s32 %v2528, %v2530
      %v2532 = vrot.slane %v2518, %v2531
      %v2533 = vcombine.low %v2525, %v2532
      %2534 = vrot.lane.b32.xlu0 %v2533, 2
      %v2535 = vpop.permute.xlu0 %2534
      %v2538 = vsel %vm312, %v2516, %v2535
      %s2540 = scalar_lea.vmem %s1, 64
      %v2541 = vld [vmem:[%s2540] sm:$0xf]
      %v2542 = vld [vmem:[%s2540 + $0x4] sm:$0xf]
      %v2545 = vunpack.c.l.b16 %v2541
      %v2546 = vunpack.c.l.b16 %v2542
      %v2547 = vpack.c.b16 %v2546, %v2545
      %v2549 = vsel %vm472, %v2547, 0
      %2551 = vmatprep.subr.bf16.mxu0 0
      %2552 = vmatpush1.bf16.msra.mxu0 %v2538
      %2553 = vmatprep.subr.bf16.mxu0 0
      %2554 = vmatpush1.bf16.msra.mxu0 0
      %2555 = vmatprep.subr.bf16.mxu0 0
      %2556 = vmatpush1.bf16.msra.mxu0 0
      %2557 = vmatprep.subr.bf16.mxu0 0
      %2558 = vmatpush1.bf16.msra.mxu0 0
      %2559 = vmatprep.subr.bf16.mxu0 0
      %2560 = vmatpush1.bf16.msra.mxu0 0
      %2561 = vmatprep.subr.bf16.mxu0 0
      %2562 = vmatpush1.bf16.msra.mxu0 0
      %2563 = vmatprep.subr.bf16.mxu0 0
      %2564 = vmatpush1.bf16.msra.mxu0 0
      %2565 = vmatprep.subr.bf16.mxu0 0
      %2566 = vmatpush1.bf16.msra.mxu0 0
      %2567 = vmatprep.subr.bf16.mxu0 0
      %2568 = vmatpush1.bf16.msra.mxu0 0
      %2569 = vmatprep.subr.bf16.mxu0 0
      %2570 = vmatpush1.bf16.msra.mxu0 0
      %2571 = vmatprep.subr.bf16.mxu0 0
      %2572 = vmatpush1.bf16.msra.mxu0 0
      %2573 = vmatprep.subr.bf16.mxu0 0
      %2574 = vmatpush1.bf16.msra.mxu0 0
      %2575 = vmatprep.subr.bf16.mxu0 0
      %2576 = vmatpush1.bf16.msra.mxu0 0
      %2577 = vmatprep.subr.bf16.mxu0 0
      %2578 = vmatpush1.bf16.msra.mxu0 0
      %2579 = vmatprep.subr.bf16.mxu0 0
      %2580 = vmatpush1.bf16.msra.mxu0 0
      %2581 = vmatprep.subr.bf16.mxu0 0
      %2582 = vmatpush1.bf16.msra.mxu0 0
      %2583 = vmatprep.mubr.bf16.mxu0 0
      %2584 = vmatmul.mubr.bf16.gmra.mrb[0].mxu0 %v2549
      %v2585 = vpop.f32.mrb[0].mxu0
      %v2586 = vadd.f32 0.0, %v2585
      %v2587 = vpop.f32.mrb[0].mxu0
      %v2588 = vpop.f32.mrb[0].mxu0
      %v2589 = vadd.f32 0.0, %v2588
      %v2590 = vpop.f32.mrb[0].mxu0
      %2591 = vdwg.mxu0
      %v2592 = vadd.f32 %v2202, %v2586
      %v2593 = vadd.f32 %v2203, %v2589
      %v2594 = vld [vmem:[%s2] sm:$0xff]
      %v2595 = vld [vmem:[%s2 + $0x8] sm:$0xff]
      %2597 = vset.pattern.permute.xlu0 0
      %2598 = vperm.xlu0 %2597, %v2594
      %v2599 = vpop.permute.xlu0 %2598
      %2602 = vset.pattern.permute.xlu0 0
      %2603 = vperm.xlu0 %2602, %v2595
      %v2604 = vpop.permute.xlu0 %2603
      %v2606 = vadd.f32 %v2592, %v2599
      %v2607 = vadd.f32 %v2593, %v2604
      %vm2608 = vcmp.ge.f32.partialorder %v2606, 0.0
      %vm2609 = vcmp.ge.f32.partialorder %v2607, 0.0
      %v2610 = vmul.f32 %v2606, 0.2
      %v2611 = vmul.f32 %v2607, 0.2
      %v2612 = vsel %vm2608, %v2606, %v2610
      %v2613 = vsel %vm2609, %v2607, %v2611
      %v2614 = vmul.f32 %v2612, 1.4142135
      %v2615 = vmul.f32 %v2613, 1.4142135
      %v2616 = vpack.c.bf16 %v2615, %v2614
      %v2618 = vunpack.c.l.b16 %v2616
      %v2619 = vunpack.c.h.b16 %v2616
      %v2620 = vpack.c.b16 %v2618, %v2618
      %v2621 = vpack.c.b16 %v2619, %v2619
      %vm2624 = vcmask 27648
      %2625 = vst.msk [vmem:[%s170] sm:$0xf] %vm2624, %v2620
      %2626 = vst.msk [vmem:[%s170 + $0x4] sm:$0xf] %vm2624, %v2621
      %p2627 = scmp.lt.s32.totalorder %s14, 1
      %s2628 = scalar_select %p2627, %s14, 1
      %s2629 = smul.addr %s2628, 2
      %s2630 = smul.addr %s2629, 4
      %s2631 = scalar_lea.vmem %s3, %s2630
      // Predicated region
      $region33: #{to_style_forward.6} parent=31 // pred_check
        %p2632 = pneg %p100
      $region34: #{to_style_forward.6} parent=31 // pred_check_branch
        %2634 = sbr.rel (%p2632) target = $region36
      $region35: #{to_style_forward.6} parent=31 // pred_region
        _
      $region36: #{to_style_forward.6} parent=31 // pred_fallthru
        _
    $region32: #{to_style_forward.6} parent=5 // pred_fallthru
      _
    %p2635 = scmp.le.s32.totalorder 2, %s9
    // Predicated region
    $region37: #{to_style_forward.6} parent=5 // pred_check
      %p2636 = pneg %p2635
    $region38: #{to_style_forward.6} parent=5 // pred_check_branch
      %2638 = sbr.rel (%p2636) target = $region40
    $region39: #{to_style_forward.6} parent=5 // pred_region
      %s2639 = ssub.s32 %s9, 2
      // Predicated region
      $region41: #{to_style_forward.6} parent=39 // pred_check
        %p2640 = pneg %p106
      $region42: #{to_style_forward.6} parent=39 // pred_check_branch
        %2642 = sbr.rel (%p2640) target = $region44
      $region43: #{to_style_forward.6} parent=39 // pred_region
        %p2643 = scmp.lt.s32.totalorder %s15, 1
        %s2644 = scalar_select %p2643, %s15, 1
        %s2645 = smul.addr %s2644, 2
        %s2646 = smul.addr %s2645, 4
        %s2647 = scalar_lea.vmem %s3, %s2646
      $region44: #{to_style_forward.6} parent=39 // pred_fallthru
        _
    $region40: #{to_style_forward.6} parent=5 // pred_fallthru
      _
  $region6: #{to_style_forward.6} parent=0 // loop_footer
    %s13 = sadd.s32 1, %s9
  $region7: #{to_style_forward.6} parent=0 // loop_footer_branch
    %8 = sbr.rel target = $region3
  $region8: #{to_style_forward.6} parent=0 // loop_exit
    _

</llo_original>
